<compile_context>
chip_gen: v7x
topology: tpu7x:2x2x1
jax: 0.10.0
libtpu: 0.0.40
codegen_flags: <defaults>
</compile_context>

<pallas_src>
import functools

import jax
import jax.numpy as jnp
from jax.experimental import pallas as pl
from jax.experimental.pallas import tpu as pltpu

IN_EPS = 1e-5          # nn.InstanceNorm3d default eps
LRELU_SLOPE = 0.2      # relufactor
VMEM_LIMIT_BYTES = 32 * 1024 * 1024


# ---------------------------------------------------------------------------
# Pallas kernels
# ---------------------------------------------------------------------------

def _conv_stats_kernel(x0_ref, x1_ref, x2_ref, w_ref, mask_ref, y_ref, ss_ref,
                       *, cin, cout, w_out, m_rows):
    """Pass 1: 3x3x3 conv (27 shifted matmuls) + per-channel sum / sum-of-squares.

    Grid = (N, D): one output depth slice per step.
      x{0,1,2}_ref : (1, 1, pp_ext, cin) bf16 reflect-padded depth slabs d, d+1, d+2,
                     flattened row-major over (H+2, W+2) and zero-padded to pp_ext rows.
      w_ref        : (27*cin, cout) bf16 weights in (kd, kh, kw, ci) row order.
      mask_ref     : (m_rows, 1) f32 0/1 mask of the 2 garbage columns per padded row.
      y_ref        : (1, 1, m_rows, cout) bf16 conv result, "padded-row" layout
                     (m_rows = H*(W+2); garbage columns zeroed).
      ss_ref       : (1, 2, cout) f32 running [sum, sum_of_squares], accumulated over the
                     depth grid axis (reduction axis -> "arbitrary").
    """
    d = pl.program_id(1)
    wp = w_out + 2
    slabs = (x0_ref, x1_ref, x2_ref)

    acc = jnp.zeros((m_rows, cout), jnp.float32)
    for kd in range(3):
        for kh in range(3):
            for kw in range(3):
                off = kh * wp + kw                                  # static row shift
                xs = slabs[kd][0, 0, off:off + m_rows, :]           # (m_rows, cin) bf16
                r0 = (kd * 9 + kh * 3 + kw) * cin
                acc = acc + jnp.dot(xs, w_ref[r0:r0 + cin, :],
                                    preferred_element_type=jnp.float32)

    acc = acc * mask_ref[...]            # zero the 2 out-of-image columns of each row
    y_ref[0, 0] = acc.astype(y_ref.dtype)

    # One-pass variance inputs (f32): sum and sum of squares over this depth slice.
    stats = jnp.concatenate(
        [jnp.sum(acc, axis=0, keepdims=True),
         jnp.sum(acc * acc, axis=0, keepdims=True)], axis=0)        # (2, cout)

    @pl.when(d == 0)
    def _():
        ss_ref[...] = jnp.zeros_like(ss_ref)

    ss_ref[...] += stats[None]


def _norm_act_kernel(y_ref, ms_ref, o_ref):
    """Pass 2: InstanceNorm3d(affine=False) + LeakyReLU(0.2) on one depth slice.

      y_ref  : (1, 1, m_rows, cout) bf16 conv output (padded-row layout).
      ms_ref : (1, 2, cout) f32: row 0 = per-channel mean, row 1 = rsqrt(var + eps).
      o_ref  : (1, 1, m_rows, cout).
    """
    y = y_ref[0, 0].astype(jnp.float32)
    ms = ms_ref[0]                                   # (2, cout)
    z = (y - ms[0:1, :]) * ms[1:2, :]
    z = jnp.where(z >= 0.0, z, LRELU_SLOPE * z)
    o_ref[0, 0] = z.astype(o_ref.dtype)


# ---------------------------------------------------------------------------
# Wrapper
# ---------------------------------------------------------------------------

def general_conv3d_forward(x, w, b=None, *, eps=IN_EPS, out_dtype=jnp.bfloat16):
    """Forward of general_conv3d (default config) on NDHWC inputs.

      x : (N, D, H, W, Cin) float
      w : (3, 3, 3, Cin, Cout)  (DHWIO)
      b : (Cout,) conv bias -- accepted for interface parity but skipped: InstanceNorm
          with affine=False subtracts the per-channel spatial mean, so it cancels exactly.
    Returns (N, D, H, W, Cout) in `out_dtype`.
    """
    del b
    n, dd, hh, ww, cin = x.shape
    cout = w.shape[-1]
    assert w.shape == (3, 3, 3, cin, cout), "expected a 3x3x3 DHWIO weight"
    assert dd >= 2 and hh >= 2 and ww >= 2, "reflect padding needs every spatial dim >= 2"

    wp = ww + 2
    m_rows = hh * wp                           # conv computed in padded-row layout
    pp = (hh + 2) * wp
    pp_ext = ((pp + 2 + 7) // 8) * 8           # room for the largest shift (+2), 8-aligned

    # bf16 inputs / weights; f32 accumulation and statistics.
    xb = x.astype(jnp.bfloat16)
    wb = w.astype(jnp.bfloat16).reshape(27 * cin, cout)

    # Reflect-pad once (~1.4x, instead of a 27x im2col tensor) and flatten each depth slab
    # so the kernel only needs contiguous row slices (no in-kernel gather / reshape).
    xp = jnp.pad(xb, ((0, 0), (1, 1), (1, 1), (1, 1), (0, 0)), mode="reflect")
    xp = xp.reshape(n, dd + 2, pp, cin)
    xp = jnp.pad(xp, ((0, 0), (0, 0), (0, pp_ext - pp), (0, 0)))

    # 0/1 mask of the 2 garbage columns of the padded-row layout.
    col = jnp.arange(m_rows, dtype=jnp.int32) % wp
    mask = (col < ww).astype(jnp.float32).reshape(m_rows, 1)

    def slab_spec(kd):
        return pl.BlockSpec((1, 1, pp_ext, cin),
                            lambda i, j, kd=kd: (i, j + kd, 0, 0))

    conv_kernel = functools.partial(_conv_stats_kernel, cin=cin, cout=cout,
                                    w_out=ww, m_rows=m_rows)

    # Pass 1: conv + statistics accumulation (batch parallel, depth = reduction axis).
    y, stats = pl.pallas_call(
        conv_kernel,
        grid=(n, dd),
        in_specs=[
            slab_spec(0), slab_spec(1), slab_spec(2),
            pl.BlockSpec((27 * cin, cout), lambda i, j: (0, 0)),
            pl.BlockSpec((m_rows, 1), lambda i, j: (0, 0)),
        ],
        out_specs=[
            pl.BlockSpec((1, 1, m_rows, cout), lambda i, j: (i, j, 0, 0)),
            pl.BlockSpec((1, 2, cout), lambda i, j: (i, 0, 0)),
        ],
        out_shape=[
            jax.ShapeDtypeStruct((n, dd, m_rows, cout), jnp.bfloat16),
            jax.ShapeDtypeStruct((n, 2, cout), jnp.float32),
        ],
        compiler_params=pltpu.CompilerParams(
            dimension_semantics=("parallel", "arbitrary"),
            vmem_limit_bytes=VMEM_LIMIT_BYTES,
        ),
    )(xp, xp, xp, wb, mask)

    # Tiny (N, Cout) finalization in plain JAX: one-pass biased variance, f32.
    count = float(dd * hh * ww)
    mean = stats[:, 0, :] / count
    var = jnp.maximum(stats[:, 1, :] / count - mean * mean, 0.0)
    ms = jnp.stack([mean, jax.lax.rsqrt(var + eps)], axis=1)         # (N, 2, Cout) f32

    # Pass 2: normalize + LeakyReLU (both grid axes independent -> parallel).
    out = pl.pallas_call(
        _norm_act_kernel,
        grid=(n, dd),
        in_specs=[
            pl.BlockSpec((1, 1, m_rows, cout), lambda i, j: (i, j, 0, 0)),
            pl.BlockSpec((1, 2, cout), lambda i, j: (i, 0, 0)),
        ],
        out_specs=pl.BlockSpec((1, 1, m_rows, cout), lambda i, j: (i, j, 0, 0)),
        out_shape=jax.ShapeDtypeStruct((n, dd, m_rows, cout), out_dtype),
        compiler_params=pltpu.CompilerParams(
            dimension_semantics=("parallel", "parallel"),
            vmem_limit_bytes=VMEM_LIMIT_BYTES,
        ),
    )(y, ms)

    # Drop the 2 padded columns of each row: (N, D, H, W+2, C) -> (N, D, H, W, C).
    return out.reshape(n, dd, hh, wp, cout)[:, :, :, :ww, :]


# ---------------------------------------------------------------------------
# Pure-JAX reference (same bf16 input rounding) for a correctness check
# ---------------------------------------------------------------------------

def general_conv3d_reference(x, w, b, eps=IN_EPS):
    xb = x.astype(jnp.bfloat16).astype(jnp.float32)
    wb = w.astype(jnp.bfloat16).astype(jnp.float32)
    xp = jnp.pad(xb, ((0, 0), (1, 1), (1, 1), (1, 1), (0, 0)), mode="reflect")
    y = jax.lax.conv_general_dilated(
        xp, wb, window_strides=(1, 1, 1), padding="VALID",
        dimension_numbers=("NDHWC", "DHWIO", "NDHWC")) + b
    mean = jnp.mean(y, axis=(1, 2, 3), keepdims=True)
    var = jnp.mean(jnp.square(y - mean), axis=(1, 2, 3), keepdims=True)
    z = (y - mean) * jax.lax.rsqrt(var + eps)
    return jnp.where(z >= 0.0, z, LRELU_SLOPE * z)


if __name__ == "__main__":
    key = jax.random.PRNGKey(0)
    kx, kw, kb = jax.random.split(key, 3)

    n, d, h, w_sp = 2, 16, 16, 16
    cin, cout = 16, 32

    x = jax.random.normal(kx, (n, d, h, w_sp, cin), jnp.float32)
    wgt = jax.random.normal(kw, (3, 3, 3, cin, cout), jnp.float32) / jnp.sqrt(27.0 * cin)
    bias = jax.random.normal(kb, (cout,), jnp.float32) * 0.01   # cancelled by InstanceNorm

    fwd = jax.jit(general_conv3d_forward)
    out = fwd(x, wgt, bias)
    jax.block_until_ready(out)

    assert out.shape == (n, d, h, w_sp, cout)
    out_f32 = out.astype(jnp.float32)
    assert bool(jnp.all(jnp.isfinite(out_f32)))

    ref = general_conv3d_reference(x, wgt, bias)
    err = float(jnp.max(jnp.abs(out_f32 - ref)))
    assert err < 0.1, f"max abs error vs reference too large: {err}"

    print("KERNEL_OK")
</pallas_src>

<mosaic_0001>
module attributes {stable_mosaic.version = 11 : i64} {
  func.func @_conv_stats_kernel(%arg0: i32, %arg1: i32, %arg2: memref<1x1x328x16xbf16, #tpu.memory_space<vmem>>, %arg3: memref<1x1x328x16xbf16, #tpu.memory_space<vmem>>, %arg4: memref<1x1x328x16xbf16, #tpu.memory_space<vmem>>, %arg5: memref<432x32xbf16, #tpu.memory_space<vmem>>, %arg6: memref<288x1xf32, #tpu.memory_space<vmem>>, %arg7: memref<1x1x288x32xbf16, #tpu.memory_space<vmem>>, %arg8: memref<1x2x32xf32, #tpu.memory_space<vmem>>) attributes {dimension_semantics = [#tpu.dimension_semantics<parallel>, #tpu.dimension_semantics<arbitrary>], iteration_bounds = array<i64: 2, 16>, scalar_prefetch = 0 : i64, scratch_operands = 0 : i64, tpu.core_type = #tpu.core_type<tc>, window_params = [{transform_indices = @transform_0, window_bounds = array<i64: 1, 1, 328, 16>}, {transform_indices = @transform_1, window_bounds = array<i64: 1, 1, 328, 16>}, {transform_indices = @transform_2, window_bounds = array<i64: 1, 1, 328, 16>}, {pipeline_mode = #tpu.pipeline_mode<synchronous>, transform_indices = @transform_3, window_bounds = array<i64: 432, 32>}, {pipeline_mode = #tpu.pipeline_mode<synchronous>, transform_indices = @transform_4, window_bounds = array<i64: 288, 1>}, {transform_indices = @transform_5, window_bounds = array<i64: 1, 1, 288, 32>}, {transform_indices = @transform_6, window_bounds = array<i64: 1, 2, 32>}]} {
    %cst = arith.constant 0.000000e+00 : f32
    %0 = vector.broadcast %cst : f32 to vector<288x32xf32>
    %c0 = arith.constant 0 : index
    %c0_0 = arith.constant 0 : index
    %c0_1 = arith.constant 0 : index
    %c0_2 = arith.constant 0 : index
    %1 = vector.load %arg2[%c0, %c0_0, %c0_1, %c0_2] : memref<1x1x328x16xbf16, #tpu.memory_space<vmem>>, vector<1x1x288x16xbf16>
    %2 = vector.shape_cast %1 : vector<1x1x288x16xbf16> to vector<288x16xbf16>
    %c0_3 = arith.constant 0 : index
    %c0_4 = arith.constant 0 : index
    %3 = vector.load %arg5[%c0_3, %c0_4] : memref<432x32xbf16, #tpu.memory_space<vmem>>, vector<16x32xbf16>
    %cst_5 = arith.constant dense<0.000000e+00> : vector<288x32xf32>
    %4 = tpu.matmul %2, %3, %cst_5 {dimension_numbers = #tpu.dot_dimension_numbers<[1], [0], [0], [1], [0, 0, 1, 1], [], []>} : vector<288x16xbf16>, vector<16x32xbf16>, vector<288x32xf32> -> vector<288x32xf32>
    %5 = arith.addf %0, %4 : vector<288x32xf32>
    %c0_6 = arith.constant 0 : index
    %c0_7 = arith.constant 0 : index
    %c1 = arith.constant 1 : index
    %c0_8 = arith.constant 0 : index
    %6 = vector.load %arg2[%c0_6, %c0_7, %c1, %c0_8] : memref<1x1x328x16xbf16, #tpu.memory_space<vmem>>, vector<1x1x288x16xbf16>
    %7 = vector.shape_cast %6 : vector<1x1x288x16xbf16> to vector<288x16xbf16>
    %c16 = arith.constant 16 : index
    %c0_9 = arith.constant 0 : index
    %8 = vector.load %arg5[%c16, %c0_9] : memref<432x32xbf16, #tpu.memory_space<vmem>>, vector<16x32xbf16>
    %cst_10 = arith.constant dense<0.000000e+00> : vector<288x32xf32>
    %9 = tpu.matmul %7, %8, %cst_10 {dimension_numbers = #tpu.dot_dimension_numbers<[1], [0], [0], [1], [0, 0, 1, 1], [], []>} : vector<288x16xbf16>, vector<16x32xbf16>, vector<288x32xf32> -> vector<288x32xf32>
    %10 = arith.addf %5, %9 : vector<288x32xf32>
    %c0_11 = arith.constant 0 : index
    %c0_12 = arith.constant 0 : index
    %c2 = arith.constant 2 : index
    %c0_13 = arith.constant 0 : index
    %11 = vector.load %arg2[%c0_11, %c0_12, %c2, %c0_13] : memref<1x1x328x16xbf16, #tpu.memory_space<vmem>>, vector<1x1x288x16xbf16>
    %12 = vector.shape_cast %11 : vector<1x1x288x16xbf16> to vector<288x16xbf16>
    %c32 = arith.constant 32 : index
    %c0_14 = arith.constant 0 : index
    %13 = vector.load %arg5[%c32, %c0_14] : memref<432x32xbf16, #tpu.memory_space<vmem>>, vector<16x32xbf16>
    %cst_15 = arith.constant dense<0.000000e+00> : vector<288x32xf32>
    %14 = tpu.matmul %12, %13, %cst_15 {dimension_numbers = #tpu.dot_dimension_numbers<[1], [0], [0], [1], [0, 0, 1, 1], [], []>} : vector<288x16xbf16>, vector<16x32xbf16>, vector<288x32xf32> -> vector<288x32xf32>
    %15 = arith.addf %10, %14 : vector<288x32xf32>
    %c0_16 = arith.constant 0 : index
    %c0_17 = arith.constant 0 : index
    %c18 = arith.constant 18 : index
    %c0_18 = arith.constant 0 : index
    %16 = vector.load %arg2[%c0_16, %c0_17, %c18, %c0_18] : memref<1x1x328x16xbf16, #tpu.memory_space<vmem>>, vector<1x1x288x16xbf16>
    %17 = vector.shape_cast %16 : vector<1x1x288x16xbf16> to vector<288x16xbf16>
    %c48 = arith.constant 48 : index
    %c0_19 = arith.constant 0 : index
    %18 = vector.load %arg5[%c48, %c0_19] : memref<432x32xbf16, #tpu.memory_space<vmem>>, vector<16x32xbf16>
    %cst_20 = arith.constant dense<0.000000e+00> : vector<288x32xf32>
    %19 = tpu.matmul %17, %18, %cst_20 {dimension_numbers = #tpu.dot_dimension_numbers<[1], [0], [0], [1], [0, 0, 1, 1], [], []>} : vector<288x16xbf16>, vector<16x32xbf16>, vector<288x32xf32> -> vector<288x32xf32>
    %20 = arith.addf %15, %19 : vector<288x32xf32>
    %c0_21 = arith.constant 0 : index
    %c0_22 = arith.constant 0 : index
    %c19 = arith.constant 19 : index
    %c0_23 = arith.constant 0 : index
    %21 = vector.load %arg2[%c0_21, %c0_22, %c19, %c0_23] : memref<1x1x328x16xbf16, #tpu.memory_space<vmem>>, vector<1x1x288x16xbf16>
    %22 = vector.shape_cast %21 : vector<1x1x288x16xbf16> to vector<288x16xbf16>
    %c64 = arith.constant 64 : index
    %c0_24 = arith.constant 0 : index
    %23 = vector.load %arg5[%c64, %c0_24] : memref<432x32xbf16, #tpu.memory_space<vmem>>, vector<16x32xbf16>
    %cst_25 = arith.constant dense<0.000000e+00> : vector<288x32xf32>
    %24 = tpu.matmul %22, %23, %cst_25 {dimension_numbers = #tpu.dot_dimension_numbers<[1], [0], [0], [1], [0, 0, 1, 1], [], []>} : vector<288x16xbf16>, vector<16x32xbf16>, vector<288x32xf32> -> vector<288x32xf32>
    %25 = arith.addf %20, %24 : vector<288x32xf32>
    %c0_26 = arith.constant 0 : index
    %c0_27 = arith.constant 0 : index
    %c20 = arith.constant 20 : index
    %c0_28 = arith.constant 0 : index
    %26 = vector.load %arg2[%c0_26, %c0_27, %c20, %c0_28] : memref<1x1x328x16xbf16, #tpu.memory_space<vmem>>, vector<1x1x288x16xbf16>
    %27 = vector.shape_cast %26 : vector<1x1x288x16xbf16> to vector<288x16xbf16>
    %c80 = arith.constant 80 : index
    %c0_29 = arith.constant 0 : index
    %28 = vector.load %arg5[%c80, %c0_29] : memref<432x32xbf16, #tpu.memory_space<vmem>>, vector<16x32xbf16>
    %cst_30 = arith.constant dense<0.000000e+00> : vector<288x32xf32>
    %29 = tpu.matmul %27, %28, %cst_30 {dimension_numbers = #tpu.dot_dimension_numbers<[1], [0], [0], [1], [0, 0, 1, 1], [], []>} : vector<288x16xbf16>, vector<16x32xbf16>, vector<288x32xf32> -> vector<288x32xf32>
    %30 = arith.addf %25, %29 : vector<288x32xf32>
    %c0_31 = arith.constant 0 : index
    %c0_32 = arith.constant 0 : index
    %c36 = arith.constant 36 : index
    %c0_33 = arith.constant 0 : index
    %31 = vector.load %arg2[%c0_31, %c0_32, %c36, %c0_33] : memref<1x1x328x16xbf16, #tpu.memory_space<vmem>>, vector<1x1x288x16xbf16>
    %32 = vector.shape_cast %31 : vector<1x1x288x16xbf16> to vector<288x16xbf16>
    %c96 = arith.constant 96 : index
    %c0_34 = arith.constant 0 : index
    %33 = vector.load %arg5[%c96, %c0_34] : memref<432x32xbf16, #tpu.memory_space<vmem>>, vector<16x32xbf16>
    %cst_35 = arith.constant dense<0.000000e+00> : vector<288x32xf32>
    %34 = tpu.matmul %32, %33, %cst_35 {dimension_numbers = #tpu.dot_dimension_numbers<[1], [0], [0], [1], [0, 0, 1, 1], [], []>} : vector<288x16xbf16>, vector<16x32xbf16>, vector<288x32xf32> -> vector<288x32xf32>
    %35 = arith.addf %30, %34 : vector<288x32xf32>
    %c0_36 = arith.constant 0 : index
    %c0_37 = arith.constant 0 : index
    %c37 = arith.constant 37 : index
    %c0_38 = arith.constant 0 : index
    %36 = vector.load %arg2[%c0_36, %c0_37, %c37, %c0_38] : memref<1x1x328x16xbf16, #tpu.memory_space<vmem>>, vector<1x1x288x16xbf16>
    %37 = vector.shape_cast %36 : vector<1x1x288x16xbf16> to vector<288x16xbf16>
    %c112 = arith.constant 112 : index
    %c0_39 = arith.constant 0 : index
    %38 = vector.load %arg5[%c112, %c0_39] : memref<432x32xbf16, #tpu.memory_space<vmem>>, vector<16x32xbf16>
    %cst_40 = arith.constant dense<0.000000e+00> : vector<288x32xf32>
    %39 = tpu.matmul %37, %38, %cst_40 {dimension_numbers = #tpu.dot_dimension_numbers<[1], [0], [0], [1], [0, 0, 1, 1], [], []>} : vector<288x16xbf16>, vector<16x32xbf16>, vector<288x32xf32> -> vector<288x32xf32>
    %40 = arith.addf %35, %39 : vector<288x32xf32>
    %c0_41 = arith.constant 0 : index
    %c0_42 = arith.constant 0 : index
    %c38 = arith.constant 38 : index
    %c0_43 = arith.constant 0 : index
    %41 = vector.load %arg2[%c0_41, %c0_42, %c38, %c0_43] : memref<1x1x328x16xbf16, #tpu.memory_space<vmem>>, vector<1x1x288x16xbf16>
    %42 = vector.shape_cast %41 : vector<1x1x288x16xbf16> to vector<288x16xbf16>
    %c128 = arith.constant 128 : index
    %c0_44 = arith.constant 0 : index
    %43 = vector.load %arg5[%c128, %c0_44] : memref<432x32xbf16, #tpu.memory_space<vmem>>, vector<16x32xbf16>
    %cst_45 = arith.constant dense<0.000000e+00> : vector<288x32xf32>
    %44 = tpu.matmul %42, %43, %cst_45 {dimension_numbers = #tpu.dot_dimension_numbers<[1], [0], [0], [1], [0, 0, 1, 1], [], []>} : vector<288x16xbf16>, vector<16x32xbf16>, vector<288x32xf32> -> vector<288x32xf32>
    %45 = arith.addf %40, %44 : vector<288x32xf32>
    %c0_46 = arith.constant 0 : index
    %c0_47 = arith.constant 0 : index
    %c0_48 = arith.constant 0 : index
    %c0_49 = arith.constant 0 : index
    %46 = vector.load %arg3[%c0_46, %c0_47, %c0_48, %c0_49] : memref<1x1x328x16xbf16, #tpu.memory_space<vmem>>, vector<1x1x288x16xbf16>
    %47 = vector.shape_cast %46 : vector<1x1x288x16xbf16> to vector<288x16xbf16>
    %c144 = arith.constant 144 : index
    %c0_50 = arith.constant 0 : index
    %48 = vector.load %arg5[%c144, %c0_50] : memref<432x32xbf16, #tpu.memory_space<vmem>>, vector<16x32xbf16>
    %cst_51 = arith.constant dense<0.000000e+00> : vector<288x32xf32>
    %49 = tpu.matmul %47, %48, %cst_51 {dimension_numbers = #tpu.dot_dimension_numbers<[1], [0], [0], [1], [0, 0, 1, 1], [], []>} : vector<288x16xbf16>, vector<16x32xbf16>, vector<288x32xf32> -> vector<288x32xf32>
    %50 = arith.addf %45, %49 : vector<288x32xf32>
    %c0_52 = arith.constant 0 : index
    %c0_53 = arith.constant 0 : index
    %c1_54 = arith.constant 1 : index
    %c0_55 = arith.constant 0 : index
    %51 = vector.load %arg3[%c0_52, %c0_53, %c1_54, %c0_55] : memref<1x1x328x16xbf16, #tpu.memory_space<vmem>>, vector<1x1x288x16xbf16>
    %52 = vector.shape_cast %51 : vector<1x1x288x16xbf16> to vector<288x16xbf16>
    %c160 = arith.constant 160 : index
    %c0_56 = arith.constant 0 : index
    %53 = vector.load %arg5[%c160, %c0_56] : memref<432x32xbf16, #tpu.memory_space<vmem>>, vector<16x32xbf16>
    %cst_57 = arith.constant dense<0.000000e+00> : vector<288x32xf32>
    %54 = tpu.matmul %52, %53, %cst_57 {dimension_numbers = #tpu.dot_dimension_numbers<[1], [0], [0], [1], [0, 0, 1, 1], [], []>} : vector<288x16xbf16>, vector<16x32xbf16>, vector<288x32xf32> -> vector<288x32xf32>
    %55 = arith.addf %50, %54 : vector<288x32xf32>
    %c0_58 = arith.constant 0 : index
    %c0_59 = arith.constant 0 : index
    %c2_60 = arith.constant 2 : index
    %c0_61 = arith.constant 0 : index
    %56 = vector.load %arg3[%c0_58, %c0_59, %c2_60, %c0_61] : memref<1x1x328x16xbf16, #tpu.memory_space<vmem>>, vector<1x1x288x16xbf16>
    %57 = vector.shape_cast %56 : vector<1x1x288x16xbf16> to vector<288x16xbf16>
    %c176 = arith.constant 176 : index
    %c0_62 = arith.constant 0 : index
    %58 = vector.load %arg5[%c176, %c0_62] : memref<432x32xbf16, #tpu.memory_space<vmem>>, vector<16x32xbf16>
    %cst_63 = arith.constant dense<0.000000e+00> : vector<288x32xf32>
    %59 = tpu.matmul %57, %58, %cst_63 {dimension_numbers = #tpu.dot_dimension_numbers<[1], [0], [0], [1], [0, 0, 1, 1], [], []>} : vector<288x16xbf16>, vector<16x32xbf16>, vector<288x32xf32> -> vector<288x32xf32>
    %60 = arith.addf %55, %59 : vector<288x32xf32>
    %c0_64 = arith.constant 0 : index
    %c0_65 = arith.constant 0 : index
    %c18_66 = arith.constant 18 : index
    %c0_67 = arith.constant 0 : index
    %61 = vector.load %arg3[%c0_64, %c0_65, %c18_66, %c0_67] : memref<1x1x328x16xbf16, #tpu.memory_space<vmem>>, vector<1x1x288x16xbf16>
    %62 = vector.shape_cast %61 : vector<1x1x288x16xbf16> to vector<288x16xbf16>
    %c192 = arith.constant 192 : index
    %c0_68 = arith.constant 0 : index
    %63 = vector.load %arg5[%c192, %c0_68] : memref<432x32xbf16, #tpu.memory_space<vmem>>, vector<16x32xbf16>
    %cst_69 = arith.constant dense<0.000000e+00> : vector<288x32xf32>
    %64 = tpu.matmul %62, %63, %cst_69 {dimension_numbers = #tpu.dot_dimension_numbers<[1], [0], [0], [1], [0, 0, 1, 1], [], []>} : vector<288x16xbf16>, vector<16x32xbf16>, vector<288x32xf32> -> vector<288x32xf32>
    %65 = arith.addf %60, %64 : vector<288x32xf32>
    %c0_70 = arith.constant 0 : index
    %c0_71 = arith.constant 0 : index
    %c19_72 = arith.constant 19 : index
    %c0_73 = arith.constant 0 : index
    %66 = vector.load %arg3[%c0_70, %c0_71, %c19_72, %c0_73] : memref<1x1x328x16xbf16, #tpu.memory_space<vmem>>, vector<1x1x288x16xbf16>
    %67 = vector.shape_cast %66 : vector<1x1x288x16xbf16> to vector<288x16xbf16>
    %c208 = arith.constant 208 : index
    %c0_74 = arith.constant 0 : index
    %68 = vector.load %arg5[%c208, %c0_74] : memref<432x32xbf16, #tpu.memory_space<vmem>>, vector<16x32xbf16>
    %cst_75 = arith.constant dense<0.000000e+00> : vector<288x32xf32>
    %69 = tpu.matmul %67, %68, %cst_75 {dimension_numbers = #tpu.dot_dimension_numbers<[1], [0], [0], [1], [0, 0, 1, 1], [], []>} : vector<288x16xbf16>, vector<16x32xbf16>, vector<288x32xf32> -> vector<288x32xf32>
    %70 = arith.addf %65, %69 : vector<288x32xf32>
    %c0_76 = arith.constant 0 : index
    %c0_77 = arith.constant 0 : index
    %c20_78 = arith.constant 20 : index
    %c0_79 = arith.constant 0 : index
    %71 = vector.load %arg3[%c0_76, %c0_77, %c20_78, %c0_79] : memref<1x1x328x16xbf16, #tpu.memory_space<vmem>>, vector<1x1x288x16xbf16>
    %72 = vector.shape_cast %71 : vector<1x1x288x16xbf16> to vector<288x16xbf16>
    %c224 = arith.constant 224 : index
    %c0_80 = arith.constant 0 : index
    %73 = vector.load %arg5[%c224, %c0_80] : memref<432x32xbf16, #tpu.memory_space<vmem>>, vector<16x32xbf16>
    %cst_81 = arith.constant dense<0.000000e+00> : vector<288x32xf32>
    %74 = tpu.matmul %72, %73, %cst_81 {dimension_numbers = #tpu.dot_dimension_numbers<[1], [0], [0], [1], [0, 0, 1, 1], [], []>} : vector<288x16xbf16>, vector<16x32xbf16>, vector<288x32xf32> -> vector<288x32xf32>
    %75 = arith.addf %70, %74 : vector<288x32xf32>
    %c0_82 = arith.constant 0 : index
    %c0_83 = arith.constant 0 : index
    %c36_84 = arith.constant 36 : index
    %c0_85 = arith.constant 0 : index
    %76 = vector.load %arg3[%c0_82, %c0_83, %c36_84, %c0_85] : memref<1x1x328x16xbf16, #tpu.memory_space<vmem>>, vector<1x1x288x16xbf16>
    %77 = vector.shape_cast %76 : vector<1x1x288x16xbf16> to vector<288x16xbf16>
    %c240 = arith.constant 240 : index
    %c0_86 = arith.constant 0 : index
    %78 = vector.load %arg5[%c240, %c0_86] : memref<432x32xbf16, #tpu.memory_space<vmem>>, vector<16x32xbf16>
    %cst_87 = arith.constant dense<0.000000e+00> : vector<288x32xf32>
    %79 = tpu.matmul %77, %78, %cst_87 {dimension_numbers = #tpu.dot_dimension_numbers<[1], [0], [0], [1], [0, 0, 1, 1], [], []>} : vector<288x16xbf16>, vector<16x32xbf16>, vector<288x32xf32> -> vector<288x32xf32>
    %80 = arith.addf %75, %79 : vector<288x32xf32>
    %c0_88 = arith.constant 0 : index
    %c0_89 = arith.constant 0 : index
    %c37_90 = arith.constant 37 : index
    %c0_91 = arith.constant 0 : index
    %81 = vector.load %arg3[%c0_88, %c0_89, %c37_90, %c0_91] : memref<1x1x328x16xbf16, #tpu.memory_space<vmem>>, vector<1x1x288x16xbf16>
    %82 = vector.shape_cast %81 : vector<1x1x288x16xbf16> to vector<288x16xbf16>
    %c256 = arith.constant 256 : index
    %c0_92 = arith.constant 0 : index
    %83 = vector.load %arg5[%c256, %c0_92] : memref<432x32xbf16, #tpu.memory_space<vmem>>, vector<16x32xbf16>
    %cst_93 = arith.constant dense<0.000000e+00> : vector<288x32xf32>
    %84 = tpu.matmul %82, %83, %cst_93 {dimension_numbers = #tpu.dot_dimension_numbers<[1], [0], [0], [1], [0, 0, 1, 1], [], []>} : vector<288x16xbf16>, vector<16x32xbf16>, vector<288x32xf32> -> vector<288x32xf32>
    %85 = arith.addf %80, %84 : vector<288x32xf32>
    %c0_94 = arith.constant 0 : index
    %c0_95 = arith.constant 0 : index
    %c38_96 = arith.constant 38 : index
    %c0_97 = arith.constant 0 : index
    %86 = vector.load %arg3[%c0_94, %c0_95, %c38_96, %c0_97] : memref<1x1x328x16xbf16, #tpu.memory_space<vmem>>, vector<1x1x288x16xbf16>
    %87 = vector.shape_cast %86 : vector<1x1x288x16xbf16> to vector<288x16xbf16>
    %c272 = arith.constant 272 : index
    %c0_98 = arith.constant 0 : index
    %88 = vector.load %arg5[%c272, %c0_98] : memref<432x32xbf16, #tpu.memory_space<vmem>>, vector<16x32xbf16>
    %cst_99 = arith.constant dense<0.000000e+00> : vector<288x32xf32>
    %89 = tpu.matmul %87, %88, %cst_99 {dimension_numbers = #tpu.dot_dimension_numbers<[1], [0], [0], [1], [0, 0, 1, 1], [], []>} : vector<288x16xbf16>, vector<16x32xbf16>, vector<288x32xf32> -> vector<288x32xf32>
    %90 = arith.addf %85, %89 : vector<288x32xf32>
    %c0_100 = arith.constant 0 : index
    %c0_101 = arith.constant 0 : index
    %c0_102 = arith.constant 0 : index
    %c0_103 = arith.constant 0 : index
    %91 = vector.load %arg4[%c0_100, %c0_101, %c0_102, %c0_103] : memref<1x1x328x16xbf16, #tpu.memory_space<vmem>>, vector<1x1x288x16xbf16>
    %92 = vector.shape_cast %91 : vector<1x1x288x16xbf16> to vector<288x16xbf16>
    %c288 = arith.constant 288 : index
    %c0_104 = arith.constant 0 : index
    %93 = vector.load %arg5[%c288, %c0_104] : memref<432x32xbf16, #tpu.memory_space<vmem>>, vector<16x32xbf16>
    %cst_105 = arith.constant dense<0.000000e+00> : vector<288x32xf32>
    %94 = tpu.matmul %92, %93, %cst_105 {dimension_numbers = #tpu.dot_dimension_numbers<[1], [0], [0], [1], [0, 0, 1, 1], [], []>} : vector<288x16xbf16>, vector<16x32xbf16>, vector<288x32xf32> -> vector<288x32xf32>
    %95 = arith.addf %90, %94 : vector<288x32xf32>
    %c0_106 = arith.constant 0 : index
    %c0_107 = arith.constant 0 : index
    %c1_108 = arith.constant 1 : index
    %c0_109 = arith.constant 0 : index
    %96 = vector.load %arg4[%c0_106, %c0_107, %c1_108, %c0_109] : memref<1x1x328x16xbf16, #tpu.memory_space<vmem>>, vector<1x1x288x16xbf16>
    %97 = vector.shape_cast %96 : vector<1x1x288x16xbf16> to vector<288x16xbf16>
    %c304 = arith.constant 304 : index
    %c0_110 = arith.constant 0 : index
    %98 = vector.load %arg5[%c304, %c0_110] : memref<432x32xbf16, #tpu.memory_space<vmem>>, vector<16x32xbf16>
    %cst_111 = arith.constant dense<0.000000e+00> : vector<288x32xf32>
    %99 = tpu.matmul %97, %98, %cst_111 {dimension_numbers = #tpu.dot_dimension_numbers<[1], [0], [0], [1], [0, 0, 1, 1], [], []>} : vector<288x16xbf16>, vector<16x32xbf16>, vector<288x32xf32> -> vector<288x32xf32>
    %100 = arith.addf %95, %99 : vector<288x32xf32>
    %c0_112 = arith.constant 0 : index
    %c0_113 = arith.constant 0 : index
    %c2_114 = arith.constant 2 : index
    %c0_115 = arith.constant 0 : index
    %101 = vector.load %arg4[%c0_112, %c0_113, %c2_114, %c0_115] : memref<1x1x328x16xbf16, #tpu.memory_space<vmem>>, vector<1x1x288x16xbf16>
    %102 = vector.shape_cast %101 : vector<1x1x288x16xbf16> to vector<288x16xbf16>
    %c320 = arith.constant 320 : index
    %c0_116 = arith.constant 0 : index
    %103 = vector.load %arg5[%c320, %c0_116] : memref<432x32xbf16, #tpu.memory_space<vmem>>, vector<16x32xbf16>
    %cst_117 = arith.constant dense<0.000000e+00> : vector<288x32xf32>
    %104 = tpu.matmul %102, %103, %cst_117 {dimension_numbers = #tpu.dot_dimension_numbers<[1], [0], [0], [1], [0, 0, 1, 1], [], []>} : vector<288x16xbf16>, vector<16x32xbf16>, vector<288x32xf32> -> vector<288x32xf32>
    %105 = arith.addf %100, %104 : vector<288x32xf32>
    %c0_118 = arith.constant 0 : index
    %c0_119 = arith.constant 0 : index
    %c18_120 = arith.constant 18 : index
    %c0_121 = arith.constant 0 : index
    %106 = vector.load %arg4[%c0_118, %c0_119, %c18_120, %c0_121] : memref<1x1x328x16xbf16, #tpu.memory_space<vmem>>, vector<1x1x288x16xbf16>
    %107 = vector.shape_cast %106 : vector<1x1x288x16xbf16> to vector<288x16xbf16>
    %c336 = arith.constant 336 : index
    %c0_122 = arith.constant 0 : index
    %108 = vector.load %arg5[%c336, %c0_122] : memref<432x32xbf16, #tpu.memory_space<vmem>>, vector<16x32xbf16>
    %cst_123 = arith.constant dense<0.000000e+00> : vector<288x32xf32>
    %109 = tpu.matmul %107, %108, %cst_123 {dimension_numbers = #tpu.dot_dimension_numbers<[1], [0], [0], [1], [0, 0, 1, 1], [], []>} : vector<288x16xbf16>, vector<16x32xbf16>, vector<288x32xf32> -> vector<288x32xf32>
    %110 = arith.addf %105, %109 : vector<288x32xf32>
    %c0_124 = arith.constant 0 : index
    %c0_125 = arith.constant 0 : index
    %c19_126 = arith.constant 19 : index
    %c0_127 = arith.constant 0 : index
    %111 = vector.load %arg4[%c0_124, %c0_125, %c19_126, %c0_127] : memref<1x1x328x16xbf16, #tpu.memory_space<vmem>>, vector<1x1x288x16xbf16>
    %112 = vector.shape_cast %111 : vector<1x1x288x16xbf16> to vector<288x16xbf16>
    %c352 = arith.constant 352 : index
    %c0_128 = arith.constant 0 : index
    %113 = vector.load %arg5[%c352, %c0_128] : memref<432x32xbf16, #tpu.memory_space<vmem>>, vector<16x32xbf16>
    %cst_129 = arith.constant dense<0.000000e+00> : vector<288x32xf32>
    %114 = tpu.matmul %112, %113, %cst_129 {dimension_numbers = #tpu.dot_dimension_numbers<[1], [0], [0], [1], [0, 0, 1, 1], [], []>} : vector<288x16xbf16>, vector<16x32xbf16>, vector<288x32xf32> -> vector<288x32xf32>
    %115 = arith.addf %110, %114 : vector<288x32xf32>
    %c0_130 = arith.constant 0 : index
    %c0_131 = arith.constant 0 : index
    %c20_132 = arith.constant 20 : index
    %c0_133 = arith.constant 0 : index
    %116 = vector.load %arg4[%c0_130, %c0_131, %c20_132, %c0_133] : memref<1x1x328x16xbf16, #tpu.memory_space<vmem>>, vector<1x1x288x16xbf16>
    %117 = vector.shape_cast %116 : vector<1x1x288x16xbf16> to vector<288x16xbf16>
    %c368 = arith.constant 368 : index
    %c0_134 = arith.constant 0 : index
    %118 = vector.load %arg5[%c368, %c0_134] : memref<432x32xbf16, #tpu.memory_space<vmem>>, vector<16x32xbf16>
    %cst_135 = arith.constant dense<0.000000e+00> : vector<288x32xf32>
    %119 = tpu.matmul %117, %118, %cst_135 {dimension_numbers = #tpu.dot_dimension_numbers<[1], [0], [0], [1], [0, 0, 1, 1], [], []>} : vector<288x16xbf16>, vector<16x32xbf16>, vector<288x32xf32> -> vector<288x32xf32>
    %120 = arith.addf %115, %119 : vector<288x32xf32>
    %c0_136 = arith.constant 0 : index
    %c0_137 = arith.constant 0 : index
    %c36_138 = arith.constant 36 : index
    %c0_139 = arith.constant 0 : index
    %121 = vector.load %arg4[%c0_136, %c0_137, %c36_138, %c0_139] : memref<1x1x328x16xbf16, #tpu.memory_space<vmem>>, vector<1x1x288x16xbf16>
    %122 = vector.shape_cast %121 : vector<1x1x288x16xbf16> to vector<288x16xbf16>
    %c384 = arith.constant 384 : index
    %c0_140 = arith.constant 0 : index
    %123 = vector.load %arg5[%c384, %c0_140] : memref<432x32xbf16, #tpu.memory_space<vmem>>, vector<16x32xbf16>
    %cst_141 = arith.constant dense<0.000000e+00> : vector<288x32xf32>
    %124 = tpu.matmul %122, %123, %cst_141 {dimension_numbers = #tpu.dot_dimension_numbers<[1], [0], [0], [1], [0, 0, 1, 1], [], []>} : vector<288x16xbf16>, vector<16x32xbf16>, vector<288x32xf32> -> vector<288x32xf32>
    %125 = arith.addf %120, %124 : vector<288x32xf32>
    %c0_142 = arith.constant 0 : index
    %c0_143 = arith.constant 0 : index
    %c37_144 = arith.constant 37 : index
    %c0_145 = arith.constant 0 : index
    %126 = vector.load %arg4[%c0_142, %c0_143, %c37_144, %c0_145] : memref<1x1x328x16xbf16, #tpu.memory_space<vmem>>, vector<1x1x288x16xbf16>
    %127 = vector.shape_cast %126 : vector<1x1x288x16xbf16> to vector<288x16xbf16>
    %c400 = arith.constant 400 : index
    %c0_146 = arith.constant 0 : index
    %128 = vector.load %arg5[%c400, %c0_146] : memref<432x32xbf16, #tpu.memory_space<vmem>>, vector<16x32xbf16>
    %cst_147 = arith.constant dense<0.000000e+00> : vector<288x32xf32>
    %129 = tpu.matmul %127, %128, %cst_147 {dimension_numbers = #tpu.dot_dimension_numbers<[1], [0], [0], [1], [0, 0, 1, 1], [], []>} : vector<288x16xbf16>, vector<16x32xbf16>, vector<288x32xf32> -> vector<288x32xf32>
    %130 = arith.addf %125, %129 : vector<288x32xf32>
    %c0_148 = arith.constant 0 : index
    %c0_149 = arith.constant 0 : index
    %c38_150 = arith.constant 38 : index
    %c0_151 = arith.constant 0 : index
    %131 = vector.load %arg4[%c0_148, %c0_149, %c38_150, %c0_151] : memref<1x1x328x16xbf16, #tpu.memory_space<vmem>>, vector<1x1x288x16xbf16>
    %132 = vector.shape_cast %131 : vector<1x1x288x16xbf16> to vector<288x16xbf16>
    %c416 = arith.constant 416 : index
    %c0_152 = arith.constant 0 : index
    %133 = vector.load %arg5[%c416, %c0_152] : memref<432x32xbf16, #tpu.memory_space<vmem>>, vector<16x32xbf16>
    %cst_153 = arith.constant dense<0.000000e+00> : vector<288x32xf32>
    %134 = tpu.matmul %132, %133, %cst_153 {dimension_numbers = #tpu.dot_dimension_numbers<[1], [0], [0], [1], [0, 0, 1, 1], [], []>} : vector<288x16xbf16>, vector<16x32xbf16>, vector<288x32xf32> -> vector<288x32xf32>
    %135 = arith.addf %130, %134 : vector<288x32xf32>
    %c0_154 = arith.constant 0 : index
    %c0_155 = arith.constant 0 : index
    %136 = vector.load %arg6[%c0_154, %c0_155] : memref<288x1xf32, #tpu.memory_space<vmem>>, vector<288x1xf32>
    %137 = vector.broadcast %136 : vector<288x1xf32> to vector<288x32xf32>
    %138 = arith.mulf %135, %137 : vector<288x32xf32>
    %139 = arith.truncf %138 : vector<288x32xf32> to vector<288x32xbf16>
    %c0_156 = arith.constant 0 : index
    %c0_157 = arith.constant 0 : index
    %c0_158 = arith.constant 0 : index
    %c0_159 = arith.constant 0 : index
    %140 = vector.load %arg7[%c0_156, %c0_157, %c0_158, %c0_159] : memref<1x1x288x32xbf16, #tpu.memory_space<vmem>>, vector<1x1x288x32xbf16>
    %141 = vector.shape_cast %140 : vector<1x1x288x32xbf16> to vector<288x32xbf16>
    %142 = vector.shape_cast %139 : vector<288x32xbf16> to vector<1x1x288x32xbf16>
    tpu.vector_store %arg7[%c0_156, %c0_157, %c0_158, %c0_159], %142 {strides = array<i32>} : memref<1x1x288x32xbf16, #tpu.memory_space<vmem>>, vector<1x1x288x32xbf16>,
    %cst_160 = arith.constant dense<0.000000e+00> : vector<32xf32>
    %143 = vector.multi_reduction <add>, %138, %cst_160 [0] : vector<288x32xf32> to vector<32xf32>
    %144 = vector.shape_cast %143 : vector<32xf32> to vector<1x32xf32>
    %145 = arith.mulf %138, %138 : vector<288x32xf32>
    %cst_161 = arith.constant dense<0.000000e+00> : vector<32xf32>
    %146 = vector.multi_reduction <add>, %145, %cst_161 [0] : vector<288x32xf32> to vector<32xf32>
    %147 = vector.shape_cast %146 : vector<32xf32> to vector<1x32xf32>
    %148 = tpu.concatenate %144, %147 in 0 : vector<1x32xf32>, vector<1x32xf32> -> vector<2x32xf32>
    %c0_i32 = arith.constant 0 : i32
    %149 = arith.cmpi eq, %arg1, %c0_i32 : i32
    %150 = arith.extui %149 : i1 to i32
    %c0_i32_162 = arith.constant 0 : i32
    %151 = arith.cmpi ne, %150, %c0_i32_162 : i32
    scf.if %151 {
      %cst_169 = arith.constant 0.000000e+00 : f32
      %156 = vector.broadcast %cst_169 : f32 to vector<1x2x32xf32>
      %c0_170 = arith.constant 0 : index
      %c0_171 = arith.constant 0 : index
      %c0_172 = arith.constant 0 : index
      %157 = vector.load %arg8[%c0_170, %c0_171, %c0_172] : memref<1x2x32xf32, #tpu.memory_space<vmem>>, vector<1x2x32xf32>
      tpu.vector_store %arg8[%c0_170, %c0_171, %c0_172], %156 {strides = array<i32>} : memref<1x2x32xf32, #tpu.memory_space<vmem>>, vector<1x2x32xf32>,
    } else {
    }
    %c0_163 = arith.constant 0 : index
    %c0_164 = arith.constant 0 : index
    %c0_165 = arith.constant 0 : index
    %152 = vector.load %arg8[%c0_163, %c0_164, %c0_165] : memref<1x2x32xf32, #tpu.memory_space<vmem>>, vector<1x2x32xf32>
    %153 = vector.shape_cast %148 : vector<2x32xf32> to vector<1x2x32xf32>
    %154 = arith.addf %152, %153 : vector<1x2x32xf32>
    %c0_166 = arith.constant 0 : index
    %c0_167 = arith.constant 0 : index
    %c0_168 = arith.constant 0 : index
    %155 = vector.load %arg8[%c0_166, %c0_167, %c0_168] : memref<1x2x32xf32, #tpu.memory_space<vmem>>, vector<1x2x32xf32>
    tpu.vector_store %arg8[%c0_166, %c0_167, %c0_168], %154 {strides = array<i32>} : memref<1x2x32xf32, #tpu.memory_space<vmem>>, vector<1x2x32xf32>,
    return
  }
  func.func @transform_0(%arg0: i32, %arg1: i32) -> (i32, i32, i32, i32) {
    %c0_i32 = arith.constant 0 : i32
    %0 = arith.addi %arg1, %c0_i32 : i32
    %c0_i32_0 = arith.constant 0 : i32
    %c0_i32_1 = arith.constant 0 : i32
    %c0_i32_2 = arith.constant 0 : i32
    return %arg0, %0, %c0_i32_0, %c0_i32_1 : i32, i32, i32, i32
  }
  func.func @transform_1(%arg0: i32, %arg1: i32) -> (i32, i32, i32, i32) {
    %c1_i32 = arith.constant 1 : i32
    %0 = arith.addi %arg1, %c1_i32 : i32
    %c0_i32 = arith.constant 0 : i32
    %c0_i32_0 = arith.constant 0 : i32
    %c0_i32_1 = arith.constant 0 : i32
    return %arg0, %0, %c0_i32, %c0_i32_0 : i32, i32, i32, i32
  }
  func.func @transform_2(%arg0: i32, %arg1: i32) -> (i32, i32, i32, i32) {
    %c2_i32 = arith.constant 2 : i32
    %0 = arith.addi %arg1, %c2_i32 : i32
    %c0_i32 = arith.constant 0 : i32
    %c0_i32_0 = arith.constant 0 : i32
    %c0_i32_1 = arith.constant 0 : i32
    return %arg0, %0, %c0_i32, %c0_i32_0 : i32, i32, i32, i32
  }
  func.func @transform_3(%arg0: i32, %arg1: i32) -> (i32, i32) {
    %c0_i32 = arith.constant 0 : i32
    %c0_i32_0 = arith.constant 0 : i32
    %c0_i32_1 = arith.constant 0 : i32
    return %c0_i32, %c0_i32_0 : i32, i32
  }
  func.func @transform_4(%arg0: i32, %arg1: i32) -> (i32, i32) {
    %c0_i32 = arith.constant 0 : i32
    %c0_i32_0 = arith.constant 0 : i32
    %c0_i32_1 = arith.constant 0 : i32
    return %c0_i32, %c0_i32_0 : i32, i32
  }
  func.func @transform_5(%arg0: i32, %arg1: i32) -> (i32, i32, i32, i32) {
    %c0_i32 = arith.constant 0 : i32
    %c0_i32_0 = arith.constant 0 : i32
    %c0_i32_1 = arith.constant 0 : i32
    return %arg0, %arg1, %c0_i32, %c0_i32_0 : i32, i32, i32, i32
  }
  func.func @transform_6(%arg0: i32, %arg1: i32) -> (i32, i32, i32) {
    %c0_i32 = arith.constant 0 : i32
    %c0_i32_0 = arith.constant 0 : i32
    %c0_i32_1 = arith.constant 0 : i32
    return %arg0, %c0_i32, %c0_i32_0 : i32, i32, i32
  }
}

module attributes {stable_mosaic.version = 11 : i64} {
  func.func @_norm_act_kernel(%arg0: i32, %arg1: i32, %arg2: memref<1x1x288x32xbf16, #tpu.memory_space<vmem>>, %arg3: memref<1x2x32xf32, #tpu.memory_space<vmem>>, %arg4: memref<1x1x288x32xbf16, #tpu.memory_space<vmem>>) attributes {dimension_semantics = [#tpu.dimension_semantics<parallel>, #tpu.dimension_semantics<parallel>], iteration_bounds = array<i64: 2, 16>, scalar_prefetch = 0 : i64, scratch_operands = 0 : i64, tpu.core_type = #tpu.core_type<tc>, window_params = [{transform_indices = @transform_0, window_bounds = array<i64: 1, 1, 288, 32>}, {transform_indices = @transform_1, window_bounds = array<i64: 1, 2, 32>}, {transform_indices = @transform_2, window_bounds = array<i64: 1, 1, 288, 32>}]} {
    %c0 = arith.constant 0 : index
    %c0_0 = arith.constant 0 : index
    %c0_1 = arith.constant 0 : index
    %c0_2 = arith.constant 0 : index
    %0 = vector.load %arg2[%c0, %c0_0, %c0_1, %c0_2] : memref<1x1x288x32xbf16, #tpu.memory_space<vmem>>, vector<1x1x288x32xbf16>
    %1 = vector.shape_cast %0 : vector<1x1x288x32xbf16> to vector<288x32xbf16>
    %2 = arith.extf %1 : vector<288x32xbf16> to vector<288x32xf32>
    %c0_3 = arith.constant 0 : index
    %c0_4 = arith.constant 0 : index
    %c0_5 = arith.constant 0 : index
    %3 = vector.load %arg3[%c0_3, %c0_4, %c0_5] : memref<1x2x32xf32, #tpu.memory_space<vmem>>, vector<1x2x32xf32>
    %4 = vector.shape_cast %3 : vector<1x2x32xf32> to vector<2x32xf32>
    %5 = vector.extract_strided_slice %4 {offsets = [0, 0], sizes = [1, 32], strides = [1, 1]} : vector<2x32xf32> to vector<1x32xf32>
    %6 = vector.broadcast %5 : vector<1x32xf32> to vector<288x32xf32>
    %7 = arith.subf %2, %6 : vector<288x32xf32>
    %8 = vector.extract_strided_slice %4 {offsets = [1, 0], sizes = [1, 32], strides = [1, 1]} : vector<2x32xf32> to vector<1x32xf32>
    %9 = vector.broadcast %8 : vector<1x32xf32> to vector<288x32xf32>
    %10 = arith.mulf %7, %9 : vector<288x32xf32>
    %cst = arith.constant 0.000000e+00 : f32
    %11 = vector.broadcast %cst : f32 to vector<288x32xf32>
    %12 = arith.cmpf oge, %10, %11 : vector<288x32xf32>
    %cst_6 = arith.constant 2.000000e-01 : f32
    %13 = vector.broadcast %cst_6 : f32 to vector<288x32xf32>
    %14 = arith.mulf %13, %10 : vector<288x32xf32>
    %15 = arith.select %12, %10, %14 : vector<288x32xi1>, vector<288x32xf32>
    %16 = arith.truncf %15 : vector<288x32xf32> to vector<288x32xbf16>
    %c0_7 = arith.constant 0 : index
    %c0_8 = arith.constant 0 : index
    %c0_9 = arith.constant 0 : index
    %c0_10 = arith.constant 0 : index
    %17 = vector.load %arg4[%c0_7, %c0_8, %c0_9, %c0_10] : memref<1x1x288x32xbf16, #tpu.memory_space<vmem>>, vector<1x1x288x32xbf16>
    %18 = vector.shape_cast %17 : vector<1x1x288x32xbf16> to vector<288x32xbf16>
    %19 = vector.shape_cast %16 : vector<288x32xbf16> to vector<1x1x288x32xbf16>
    tpu.vector_store %arg4[%c0_7, %c0_8, %c0_9, %c0_10], %19 {strides = array<i32>} : memref<1x1x288x32xbf16, #tpu.memory_space<vmem>>, vector<1x1x288x32xbf16>,
    return
  }
  func.func @transform_0(%arg0: i32, %arg1: i32) -> (i32, i32, i32, i32) {
    %c0_i32 = arith.constant 0 : i32
    %c0_i32_0 = arith.constant 0 : i32
    %c0_i32_1 = arith.constant 0 : i32
    return %arg0, %arg1, %c0_i32, %c0_i32_0 : i32, i32, i32, i32
  }
  func.func @transform_1(%arg0: i32, %arg1: i32) -> (i32, i32, i32) {
    %c0_i32 = arith.constant 0 : i32
    %c0_i32_0 = arith.constant 0 : i32
    %c0_i32_1 = arith.constant 0 : i32
    return %arg0, %c0_i32, %c0_i32_0 : i32, i32, i32
  }
  func.func @transform_2(%arg0: i32, %arg1: i32) -> (i32, i32, i32, i32) {
    %c0_i32 = arith.constant 0 : i32
    %c0_i32_0 = arith.constant 0 : i32
    %c0_i32_1 = arith.constant 0 : i32
    return %arg0, %arg1, %c0_i32, %c0_i32_0 : i32, i32, i32, i32
  }
}

</mosaic_0001>

<llo_original>
// kernel: general_conv3d_forward.3
$region0: #{general_conv3d_forward.3}
  #allocation0 [shape = 'u32[]', space=smem, size = 0x4, offset = 0x4, fixed_abs, tag = 'smem constant byte address 0x4 - core index']
  #allocation1 [shape = 'u32[144,128]{1,0:T(1,128)}', space=vmem, size = 0x12000, scoped, tag = 'internal scratch']
  %s0 = inlined_call_operand.vmem [shape: bf16[2,16,288,32], index: 0, kind: input, shape index: {}]
  %s1 = inlined_call_operand.vmem [shape: f32[2,2,32], index: 1, kind: input, shape index: {}]
  %s2 = inlined_call_operand.vmem [shape: bf16[2,16,288,32], index: 2, kind: output, shape index: {}]
  %s3 = sld [smem:[#allocation0]]
  $region41: #{general_conv3d_forward.3} parent=0
    _
  %s5 = ssub.s32 1, %s3
  %s6 = scalar_select 0, %s5, %s3
  loop: start=0, step=1, limit=34
  $region2: #{general_conv3d_forward.3} parent=0 // loop_pre_header
    _
  $region3: #{general_conv3d_forward.3} parent=0 // loop_header
    %s8 = sphi 0, %s12
    %p9 = scmp.ge.s32.totalorder %s8, 34
    %s15 = sphi 0, %s27
    %s16 = sphi 0, %s23
    %s17 = sphi 0, %s15
    %s18 = sphi 0, %s16
    %s19 = sphi 0, %s17
    %s20 = sphi 0, %s18
    %s32 = sphi 0, %s34
    %s35 = sphi 0, %s32
    %s36 = sphi 0, %s35
    %s52 = sphi 0, %s36
    %s58 = sphi 0, %s60
    %s61 = sphi 0, %s58
    %s62 = sphi 0, %s61
    %s78 = sphi 0, %s62
    %s86 = sphi 0, %s88
    %s89 = sphi 0, %s86
    %s90 = sphi 0, %s89
    %s106 = sphi 0, %s90
  $region4: #{general_conv3d_forward.3} parent=0 // loop_header_branch
    %11 = sbr.rel (%p9) target = $region8
  $region5: #{general_conv3d_forward.3} parent=0 // loop_body
    %s13 = ssub.s32 %s8, 1
    %s14 = ssub.s32 %s8, 2
    %s21 = sadd.s32 1, %s16
    %p22 = scmp.ge.s32.totalorder %s21, 16
    %s23 = scalar_select %p22, 0, %s21
    %s24 = sadd.s32 1, %s15
    %s25 = scalar_select %p22, %s24, %s15
    %p26 = scmp.ge.s32.totalorder %s25, 2
    %s27 = scalar_select %p26, 0, %s25
    %s28 = ssub.s32 %s15, %s27
    %s29 = ssub.s32 %s16, %s23
    %s30 = sor.u32 %s28, %s29
    %p31 = scmp.eq.s32.totalorder %s30, 0
    %s33 = sadd.s32 %s32, 1
    %s34 = scalar_select %p31, %s32, %s33
    %p37 = pneg %p31
    %p38 = scmp.eq.s32.totalorder %s8, 31
    %p39 = por %p37, %p38
    %p40 = scmp.ne.s32.totalorder %s32, %s35
    %p41 = scmp.eq.s32.totalorder %s8, 0
    %p42 = por %p40, %p41
    %p43 = scmp.ne.s32.totalorder %s32, %s35
    %p44 = scmp.eq.s32.totalorder %s13, 31
    %p45 = por %p43, %p44
    %p46 = scmp.ne.s32.totalorder %s35, %s36
    %p47 = scmp.eq.s32.totalorder %s13, 0
    %p48 = por %p46, %p47
    %p49 = scmp.ne.s32.totalorder %s35, %s36
    %p50 = scmp.eq.s32.totalorder %s14, 31
    %p51 = por %p49, %p50
    %p53 = scmp.ne.s32.totalorder %s36, %s52
    %p54 = scmp.eq.s32.totalorder %s14, 0
    %p55 = por %p53, %p54
    %s56 = ssub.s32 %s15, %s27
    %p57 = scmp.eq.s32.totalorder %s56, 0
    %s59 = sadd.s32 %s58, 1
    %s60 = scalar_select %p57, %s58, %s59
    %p63 = pneg %p57
    %p64 = scmp.eq.s32.totalorder %s8, 31
    %p65 = por %p63, %p64
    %p66 = scmp.ne.s32.totalorder %s58, %s61
    %p67 = scmp.eq.s32.totalorder %s8, 0
    %p68 = por %p66, %p67
    %p69 = scmp.ne.s32.totalorder %s58, %s61
    %p70 = scmp.eq.s32.totalorder %s13, 31
    %p71 = por %p69, %p70
    %p72 = scmp.ne.s32.totalorder %s61, %s62
    %p73 = scmp.eq.s32.totalorder %s13, 0
    %p74 = por %p72, %p73
    %p75 = scmp.ne.s32.totalorder %s61, %s62
    %p76 = scmp.eq.s32.totalorder %s14, 31
    %p77 = por %p75, %p76
    %p79 = scmp.ne.s32.totalorder %s62, %s78
    %p80 = scmp.eq.s32.totalorder %s14, 0
    %p81 = por %p79, %p80
    %s82 = ssub.s32 %s15, %s27
    %s83 = ssub.s32 %s16, %s23
    %s84 = sor.u32 %s82, %s83
    %p85 = scmp.eq.s32.totalorder %s84, 0
    %s87 = sadd.s32 %s86, 1
    %s88 = scalar_select %p85, %s86, %s87
    %p91 = pneg %p85
    %p92 = scmp.eq.s32.totalorder %s8, 31
    %p93 = por %p91, %p92
    %p94 = scmp.ne.s32.totalorder %s86, %s89
    %p95 = scmp.eq.s32.totalorder %s8, 0
    %p96 = por %p94, %p95
    %p97 = scmp.ne.s32.totalorder %s86, %s89
    %p98 = scmp.eq.s32.totalorder %s13, 31
    %p99 = por %p97, %p98
    %p100 = scmp.ne.s32.totalorder %s89, %s90
    %p101 = scmp.eq.s32.totalorder %s13, 0
    %p102 = por %p100, %p101
    %p103 = scmp.ne.s32.totalorder %s89, %s90
    %p104 = scmp.eq.s32.totalorder %s14, 31
    %p105 = por %p103, %p104
    %p107 = scmp.ne.s32.totalorder %s90, %s106
    %p108 = scmp.eq.s32.totalorder %s14, 0
    %p109 = por %p107, %p108
    %p110 = scmp.le.s32.totalorder 1, %s8
    %p111 = scmp.lt.s32.totalorder %s8, 33
    %p112 = pnand %p110, %p111
    %p113 = pneg %p112
    // Predicated region
    $region9: #{general_conv3d_forward.3} parent=5 // pred_check
      _
    $region10: #{general_conv3d_forward.3} parent=5 // pred_check_branch
      %115 = sbr.rel (%p112) target = $region12
    $region11: #{general_conv3d_forward.3} parent=5 // pred_region
      %s116 = ssub.s32 %s8, 1
    $region12: #{general_conv3d_forward.3} parent=5 // pred_fallthru
      _
    %p117 = scmp.lt.s32.totalorder %s8, 32
    // Predicated region
    $region13: #{general_conv3d_forward.3} parent=5 // pred_check
      %p118 = pneg %p117
    $region14: #{general_conv3d_forward.3} parent=5 // pred_check_branch
      %120 = sbr.rel (%p118) target = $region16
    $region15: #{general_conv3d_forward.3} parent=5 // pred_region
      // Predicated region
      $region17: #{general_conv3d_forward.3} parent=15 // pred_check
        %p121 = pneg %p42
      $region18: #{general_conv3d_forward.3} parent=15 // pred_check_branch
        %123 = sbr.rel (%p121) target = $region20
      $region19: #{general_conv3d_forward.3} parent=15 // pred_region
        %p124 = scmp.lt.s32.totalorder %s15, 1
        %s125 = scalar_select %p124, %s15, 1
        %p126 = scmp.lt.s32.totalorder %s16, 15
        %s127 = scalar_select %p126, %s16, 15
        %s128 = smul.addr %s127, 36
        %s129 = smul.addr %s125, 576
        %s130 = sadd.s32 %s128, %s129
        %s131 = smul.addr %s130, 4
        %s132 = scalar_lea.vmem %s0, %s131
      $region20: #{general_conv3d_forward.3} parent=15 // pred_fallthru
        _
      // Predicated region
      $region21: #{general_conv3d_forward.3} parent=15 // pred_check
        %p133 = pneg %p68
      $region22: #{general_conv3d_forward.3} parent=15 // pred_check_branch
        %135 = sbr.rel (%p133) target = $region24
      $region23: #{general_conv3d_forward.3} parent=15 // pred_region
        %p136 = scmp.lt.s32.totalorder %s15, 1
        %s137 = scalar_select %p136, %s15, 1
        %s138 = smul.addr %s137, 2
        %s139 = scalar_lea.vmem %s1, %s138
      $region24: #{general_conv3d_forward.3} parent=15 // pred_fallthru
        _
    $region16: #{general_conv3d_forward.3} parent=5 // pred_fallthru
      _
    %p140 = scmp.le.s32.totalorder 1, %s8
    %p141 = scmp.lt.s32.totalorder %s8, 33
    %p142 = pnand %p140, %p141
    %p143 = pneg %p142
    // Predicated region
    $region25: #{general_conv3d_forward.3} parent=5 // pred_check
      _
    $region26: #{general_conv3d_forward.3} parent=5 // pred_check_branch
      %145 = sbr.rel (%p142) target = $region28
    $region27: #{general_conv3d_forward.3} parent=5 // pred_region
      %s146 = ssub.s32 %s8, 1
      %p147 = scmp.lt.s32.totalorder %s17, 1
      %s148 = scalar_select %p147, %s17, 1
      %p149 = scmp.lt.s32.totalorder %s18, 15
      %s150 = scalar_select %p149, %s18, 15
      %s151 = smul.addr %s150, 36
      %s152 = smul.addr %s148, 576
      %s153 = sadd.s32 %s151, %s152
      %s154 = smul.addr %s153, 4
      %s155 = scalar_lea.vmem %s0, %s154
      %p156 = pneg %p48
      %p157 = pneg %p45
      %p158 = scmp.lt.s32.totalorder %s17, 1
      %s159 = scalar_select %p158, %s17, 1
      %s160 = smul.addr %s159, 2
      %s161 = scalar_lea.vmem %s1, %s160
      %p162 = pneg %p74
      %p163 = pneg %p71
      %p164 = pneg %p102
      %p165 = pneg %p99
      %p166 = scmp.lt.s32.totalorder %s17, 1
      %s167 = scalar_select %p166, %s17, 1
      %p168 = scmp.lt.s32.totalorder %s18, 15
      %s169 = scalar_select %p168, %s18, 15
      %s170 = smul.addr %s169, 36
      %s171 = smul.addr %s167, 576
      %s172 = sadd.s32 %s170, %s171
      %s173 = smul.addr %s172, 4
      %s174 = scalar_lea.vmem %s2, %s173
      %p175 = scmp.lt.s32.totalorder %s17, 1
      %s176 = scalar_select %p175, %s17, 1
      %p177 = scmp.lt.s32.totalorder %s18, 15
      %s178 = scalar_select %p177, %s18, 15
      %s179 = smul.addr %s178, 36
      %s180 = smul.addr %s176, 576
      %s181 = sadd.s32 %s179, %s180
      %s182 = smul.addr %s181, 4
      %s183 = scalar_lea.vmem %s0, %s182
      %p184 = scmp.lt.s32.totalorder %s17, 1
      %s185 = scalar_select %p184, %s17, 1
      %s186 = smul.addr %s185, 2
      %s187 = scalar_lea.vmem %s1, %s186
      %p188 = scmp.lt.s32.totalorder %s17, 1
      %s189 = scalar_select %p188, %s17, 1
      %p190 = scmp.lt.s32.totalorder %s18, 15
      %s191 = scalar_select %p190, %s18, 15
      %s192 = smul.addr %s191, 36
      %s193 = smul.addr %s189, 576
      %s194 = sadd.s32 %s192, %s193
      %s195 = smul.addr %s194, 4
      %s196 = scalar_lea.vmem %s2, %s195
      %v197 = vld [vmem:[%s183] sm:$0xf]
      %v198 = vld [vmem:[%s183 + $0x4] sm:$0xf]
      %v199 = vld [vmem:[%s183 + $0x8] sm:$0xf]
      %v200 = vld [vmem:[%s183 + $0xc] sm:$0xf]
      %v201 = vld [vmem:[%s183 + $0x10] sm:$0xf]
      %v202 = vld [vmem:[%s183 + $0x14] sm:$0xf]
      %v203 = vld [vmem:[%s183 + $0x18] sm:$0xf]
      %v204 = vld [vmem:[%s183 + $0x1c] sm:$0xf]
      %v205 = vld [vmem:[%s183 + $0x20] sm:$0xf]
      %v206 = vld [vmem:[%s183 + $0x24] sm:$0xf]
      %v207 = vld [vmem:[%s183 + $0x28] sm:$0xf]
      %v208 = vld [vmem:[%s183 + $0x2c] sm:$0xf]
      %v209 = vld [vmem:[%s183 + $0x30] sm:$0xf]
      %v210 = vld [vmem:[%s183 + $0x34] sm:$0xf]
      %v211 = vld [vmem:[%s183 + $0x38] sm:$0xf]
      %v212 = vld [vmem:[%s183 + $0x3c] sm:$0xf]
      %v213 = vld [vmem:[%s183 + $0x40] sm:$0xf]
      %v214 = vld [vmem:[%s183 + $0x44] sm:$0xf]
      %v215 = vld [vmem:[%s183 + $0x48] sm:$0xf]
      %v216 = vld [vmem:[%s183 + $0x4c] sm:$0xf]
      %v217 = vld [vmem:[%s183 + $0x50] sm:$0xf]
      %v218 = vld [vmem:[%s183 + $0x54] sm:$0xf]
      %v219 = vld [vmem:[%s183 + $0x58] sm:$0xf]
      %v220 = vld [vmem:[%s183 + $0x5c] sm:$0xf]
      %v221 = vld [vmem:[%s183 + $0x60] sm:$0xf]
      %v222 = vld [vmem:[%s183 + $0x64] sm:$0xf]
      %v223 = vld [vmem:[%s183 + $0x68] sm:$0xf]
      %v224 = vld [vmem:[%s183 + $0x6c] sm:$0xf]
      %v225 = vld [vmem:[%s183 + $0x70] sm:$0xf]
      %v226 = vld [vmem:[%s183 + $0x74] sm:$0xf]
      %v227 = vld [vmem:[%s183 + $0x78] sm:$0xf]
      %v228 = vld [vmem:[%s183 + $0x7c] sm:$0xf]
      %v229 = vld [vmem:[%s183 + $0x80] sm:$0xf]
      %v230 = vld [vmem:[%s183 + $0x84] sm:$0xf]
      %v231 = vld [vmem:[%s183 + $0x88] sm:$0xf]
      %v232 = vld [vmem:[%s183 + $0x8c] sm:$0xf]
      %v233 = vunpack.c.l.bf16 %v197
      %v234 = vunpack.c.l.bf16 %v198
      %v235 = vunpack.c.l.bf16 %v199
      %v236 = vunpack.c.l.bf16 %v200
      %v237 = vunpack.c.l.bf16 %v201
      %v238 = vunpack.c.l.bf16 %v202
      %v239 = vunpack.c.l.bf16 %v203
      %v240 = vunpack.c.l.bf16 %v204
      %v241 = vunpack.c.l.bf16 %v205
      %v242 = vunpack.c.l.bf16 %v206
      %v243 = vunpack.c.l.bf16 %v207
      %v244 = vunpack.c.l.bf16 %v208
      %v245 = vunpack.c.l.bf16 %v209
      %v246 = vunpack.c.l.bf16 %v210
      %v247 = vunpack.c.l.bf16 %v211
      %v248 = vunpack.c.l.bf16 %v212
      %v249 = vunpack.c.l.bf16 %v213
      %v250 = vunpack.c.l.bf16 %v214
      %v251 = vunpack.c.l.bf16 %v215
      %v252 = vunpack.c.l.bf16 %v216
      %v253 = vunpack.c.l.bf16 %v217
      %v254 = vunpack.c.l.bf16 %v218
      %v255 = vunpack.c.l.bf16 %v219
      %v256 = vunpack.c.l.bf16 %v220
      %v257 = vunpack.c.l.bf16 %v221
      %v258 = vunpack.c.l.bf16 %v222
      %v259 = vunpack.c.l.bf16 %v223
      %v260 = vunpack.c.l.bf16 %v224
      %v261 = vunpack.c.l.bf16 %v225
      %v262 = vunpack.c.l.bf16 %v226
      %v263 = vunpack.c.l.bf16 %v227
      %v264 = vunpack.c.l.bf16 %v228
      %v265 = vunpack.c.l.bf16 %v229
      %v266 = vunpack.c.l.bf16 %v230
      %v267 = vunpack.c.l.bf16 %v231
      %v268 = vunpack.c.l.bf16 %v232
      %v269 = vld [vmem:[%s187] sm:$0x3]
      %v270 = vlaneseq
      %v271 = vshrl.u32 %v270, 7
      %v272 = vsub.s32 0, %v271
      %v273 = vrot.slane %v269, %v272
      %v274 = vsub.f32 %v233, %v273
      %v275 = vsub.f32 %v234, %v273
      %v276 = vsub.f32 %v235, %v273
      %v277 = vsub.f32 %v236, %v273
      %v278 = vsub.f32 %v237, %v273
      %v279 = vsub.f32 %v238, %v273
      %v280 = vsub.f32 %v239, %v273
      %v281 = vsub.f32 %v240, %v273
      %v282 = vsub.f32 %v241, %v273
      %v283 = vsub.f32 %v242, %v273
      %v284 = vsub.f32 %v243, %v273
      %v285 = vsub.f32 %v244, %v273
      %v286 = vsub.f32 %v245, %v273
      %v287 = vsub.f32 %v246, %v273
      %v288 = vsub.f32 %v247, %v273
      %v289 = vsub.f32 %v248, %v273
      %v290 = vsub.f32 %v249, %v273
      %v291 = vsub.f32 %v250, %v273
      %v292 = vsub.f32 %v251, %v273
      %v293 = vsub.f32 %v252, %v273
      %v294 = vsub.f32 %v253, %v273
      %v295 = vsub.f32 %v254, %v273
      %v296 = vsub.f32 %v255, %v273
      %v297 = vsub.f32 %v256, %v273
      %v298 = vsub.f32 %v257, %v273
      %v299 = vsub.f32 %v258, %v273
      %v300 = vsub.f32 %v259, %v273
      %v301 = vsub.f32 %v260, %v273
      %v302 = vsub.f32 %v261, %v273
      %v303 = vsub.f32 %v262, %v273
      %v304 = vsub.f32 %v263, %v273
      %v305 = vsub.f32 %v264, %v273
      %v306 = vsub.f32 %v265, %v273
      %v307 = vsub.f32 %v266, %v273
      %v308 = vsub.f32 %v267, %v273
      %v309 = vsub.f32 %v268, %v273
      %v310 = vlaneseq
      %v311 = vshrl.u32 %v310, 7
      %v312 = vsub.s32 1, %v311
      %v313 = vrot.slane %v269, %v312
      %v314 = vmul.f32 %v274, %v313
      %v315 = vmul.f32 %v275, %v313
      %v316 = vmul.f32 %v276, %v313
      %v317 = vmul.f32 %v277, %v313
      %v318 = vmul.f32 %v278, %v313
      %v319 = vmul.f32 %v279, %v313
      %v320 = vmul.f32 %v280, %v313
      %v321 = vmul.f32 %v281, %v313
      %v322 = vmul.f32 %v282, %v313
      %v323 = vmul.f32 %v283, %v313
      %v324 = vmul.f32 %v284, %v313
      %v325 = vmul.f32 %v285, %v313
      %v326 = vmul.f32 %v286, %v313
      %v327 = vmul.f32 %v287, %v313
      %v328 = vmul.f32 %v288, %v313
      %v329 = vmul.f32 %v289, %v313
      %v330 = vmul.f32 %v290, %v313
      %v331 = vmul.f32 %v291, %v313
      %v332 = vmul.f32 %v292, %v313
      %v333 = vmul.f32 %v293, %v313
      %v334 = vmul.f32 %v294, %v313
      %v335 = vmul.f32 %v295, %v313
      %v336 = vmul.f32 %v296, %v313
      %v337 = vmul.f32 %v297, %v313
      %v338 = vmul.f32 %v298, %v313
      %v339 = vmul.f32 %v299, %v313
      %v340 = vmul.f32 %v300, %v313
      %v341 = vmul.f32 %v301, %v313
      %v342 = vmul.f32 %v302, %v313
      %v343 = vmul.f32 %v303, %v313
      %v344 = vmul.f32 %v304, %v313
      %v345 = vmul.f32 %v305, %v313
      %v346 = vmul.f32 %v306, %v313
      %v347 = vmul.f32 %v307, %v313
      %v348 = vmul.f32 %v308, %v313
      %v349 = vmul.f32 %v309, %v313
      %vm350 = vcmp.ge.f32.partialorder %v314, 0.0
      %vm351 = vcmp.ge.f32.partialorder %v315, 0.0
      %vm352 = vcmp.ge.f32.partialorder %v316, 0.0
      %vm353 = vcmp.ge.f32.partialorder %v317, 0.0
      %vm354 = vcmp.ge.f32.partialorder %v318, 0.0
      %vm355 = vcmp.ge.f32.partialorder %v319, 0.0
      %vm356 = vcmp.ge.f32.partialorder %v320, 0.0
      %vm357 = vcmp.ge.f32.partialorder %v321, 0.0
      %vm358 = vcmp.ge.f32.partialorder %v322, 0.0
      %vm359 = vcmp.ge.f32.partialorder %v323, 0.0
      %vm360 = vcmp.ge.f32.partialorder %v324, 0.0
      %vm361 = vcmp.ge.f32.partialorder %v325, 0.0
      %vm362 = vcmp.ge.f32.partialorder %v326, 0.0
      %vm363 = vcmp.ge.f32.partialorder %v327, 0.0
      %vm364 = vcmp.ge.f32.partialorder %v328, 0.0
      %vm365 = vcmp.ge.f32.partialorder %v329, 0.0
      %vm366 = vcmp.ge.f32.partialorder %v330, 0.0
      %vm367 = vcmp.ge.f32.partialorder %v331, 0.0
      %vm368 = vcmp.ge.f32.partialorder %v332, 0.0
      %vm369 = vcmp.ge.f32.partialorder %v333, 0.0
      %vm370 = vcmp.ge.f32.partialorder %v334, 0.0
      %vm371 = vcmp.ge.f32.partialorder %v335, 0.0
      %vm372 = vcmp.ge.f32.partialorder %v336, 0.0
      %vm373 = vcmp.ge.f32.partialorder %v337, 0.0
      %vm374 = vcmp.ge.f32.partialorder %v338, 0.0
      %vm375 = vcmp.ge.f32.partialorder %v339, 0.0
      %vm376 = vcmp.ge.f32.partialorder %v340, 0.0
      %vm377 = vcmp.ge.f32.partialorder %v341, 0.0
      %vm378 = vcmp.ge.f32.partialorder %v342, 0.0
      %vm379 = vcmp.ge.f32.partialorder %v343, 0.0
      %vm380 = vcmp.ge.f32.partialorder %v344, 0.0
      %vm381 = vcmp.ge.f32.partialorder %v345, 0.0
      %vm382 = vcmp.ge.f32.partialorder %v346, 0.0
      %vm383 = vcmp.ge.f32.partialorder %v347, 0.0
      %vm384 = vcmp.ge.f32.partialorder %v348, 0.0
      %vm385 = vcmp.ge.f32.partialorder %v349, 0.0
      %v386 = vmul.f32 %v314, 0.2
      %v387 = vmul.f32 %v315, 0.2
      %v388 = vmul.f32 %v316, 0.2
      %v389 = vmul.f32 %v317, 0.2
      %v390 = vmul.f32 %v318, 0.2
      %v391 = vmul.f32 %v319, 0.2
      %v392 = vmul.f32 %v320, 0.2
      %v393 = vmul.f32 %v321, 0.2
      %v394 = vmul.f32 %v322, 0.2
      %v395 = vmul.f32 %v323, 0.2
      %v396 = vmul.f32 %v324, 0.2
      %v397 = vmul.f32 %v325, 0.2
      %v398 = vmul.f32 %v326, 0.2
      %v399 = vmul.f32 %v327, 0.2
      %v400 = vmul.f32 %v328, 0.2
      %v401 = vmul.f32 %v329, 0.2
      %v402 = vmul.f32 %v330, 0.2
      %v403 = vmul.f32 %v331, 0.2
      %v404 = vmul.f32 %v332, 0.2
      %v405 = vmul.f32 %v333, 0.2
      %v406 = vmul.f32 %v334, 0.2
      %v407 = vmul.f32 %v335, 0.2
      %v408 = vmul.f32 %v336, 0.2
      %v409 = vmul.f32 %v337, 0.2
      %v410 = vmul.f32 %v338, 0.2
      %v411 = vmul.f32 %v339, 0.2
      %v412 = vmul.f32 %v340, 0.2
      %v413 = vmul.f32 %v341, 0.2
      %v414 = vmul.f32 %v342, 0.2
      %v415 = vmul.f32 %v343, 0.2
      %v416 = vmul.f32 %v344, 0.2
      %v417 = vmul.f32 %v345, 0.2
      %v418 = vmul.f32 %v346, 0.2
      %v419 = vmul.f32 %v347, 0.2
      %v420 = vmul.f32 %v348, 0.2
      %v421 = vmul.f32 %v349, 0.2
      %v422 = vsel %vm350, %v314, %v386
      %v423 = vsel %vm351, %v315, %v387
      %v424 = vsel %vm352, %v316, %v388
      %v425 = vsel %vm353, %v317, %v389
      %v426 = vsel %vm354, %v318, %v390
      %v427 = vsel %vm355, %v319, %v391
      %v428 = vsel %vm356, %v320, %v392
      %v429 = vsel %vm357, %v321, %v393
      %v430 = vsel %vm358, %v322, %v394
      %v431 = vsel %vm359, %v323, %v395
      %v432 = vsel %vm360, %v324, %v396
      %v433 = vsel %vm361, %v325, %v397
      %v434 = vsel %vm362, %v326, %v398
      %v435 = vsel %vm363, %v327, %v399
      %v436 = vsel %vm364, %v328, %v400
      %v437 = vsel %vm365, %v329, %v401
      %v438 = vsel %vm366, %v330, %v402
      %v439 = vsel %vm367, %v331, %v403
      %v440 = vsel %vm368, %v332, %v404
      %v441 = vsel %vm369, %v333, %v405
      %v442 = vsel %vm370, %v334, %v406
      %v443 = vsel %vm371, %v335, %v407
      %v444 = vsel %vm372, %v336, %v408
      %v445 = vsel %vm373, %v337, %v409
      %v446 = vsel %vm374, %v338, %v410
      %v447 = vsel %vm375, %v339, %v411
      %v448 = vsel %vm376, %v340, %v412
      %v449 = vsel %vm377, %v341, %v413
      %v450 = vsel %vm378, %v342, %v414
      %v451 = vsel %vm379, %v343, %v415
      %v452 = vsel %vm380, %v344, %v416
      %v453 = vsel %vm381, %v345, %v417
      %v454 = vsel %vm382, %v346, %v418
      %v455 = vsel %vm383, %v347, %v419
      %v456 = vsel %vm384, %v348, %v420
      %v457 = vsel %vm385, %v349, %v421
      %v458 = vpack.c.bf16 %v423, %v422
      %v459 = vpack.c.bf16 %v425, %v424
      %v460 = vpack.c.bf16 %v427, %v426
      %v461 = vpack.c.bf16 %v429, %v428
      %v462 = vpack.c.bf16 %v431, %v430
      %v463 = vpack.c.bf16 %v433, %v432
      %v464 = vpack.c.bf16 %v435, %v434
      %v465 = vpack.c.bf16 %v437, %v436
      %v466 = vpack.c.bf16 %v439, %v438
      %v467 = vpack.c.bf16 %v441, %v440
      %v468 = vpack.c.bf16 %v443, %v442
      %v469 = vpack.c.bf16 %v445, %v444
      %v470 = vpack.c.bf16 %v447, %v446
      %v471 = vpack.c.bf16 %v449, %v448
      %v472 = vpack.c.bf16 %v451, %v450
      %v473 = vpack.c.bf16 %v453, %v452
      %v474 = vpack.c.bf16 %v455, %v454
      %v475 = vpack.c.bf16 %v457, %v456
      %v494 = vunpack.c.l.b16 %v458
      %v495 = vunpack.c.h.b16 %v458
      %v496 = vunpack.c.l.b16 %v459
      %v497 = vunpack.c.h.b16 %v459
      %v498 = vunpack.c.l.b16 %v460
      %v499 = vunpack.c.h.b16 %v460
      %v500 = vunpack.c.l.b16 %v461
      %v501 = vunpack.c.h.b16 %v461
      %v502 = vunpack.c.l.b16 %v462
      %v503 = vunpack.c.h.b16 %v462
      %v504 = vunpack.c.l.b16 %v463
      %v505 = vunpack.c.h.b16 %v463
      %v506 = vunpack.c.l.b16 %v464
      %v507 = vunpack.c.h.b16 %v464
      %v508 = vunpack.c.l.b16 %v465
      %v509 = vunpack.c.h.b16 %v465
      %v510 = vunpack.c.l.b16 %v466
      %v511 = vunpack.c.h.b16 %v466
      %v512 = vunpack.c.l.b16 %v467
      %v513 = vunpack.c.h.b16 %v467
      %v514 = vunpack.c.l.b16 %v468
      %v515 = vunpack.c.h.b16 %v468
      %v516 = vunpack.c.l.b16 %v469
      %v517 = vunpack.c.h.b16 %v469
      %v518 = vunpack.c.l.b16 %v470
      %v519 = vunpack.c.h.b16 %v470
      %v520 = vunpack.c.l.b16 %v471
      %v521 = vunpack.c.h.b16 %v471
      %v522 = vunpack.c.l.b16 %v472
      %v523 = vunpack.c.h.b16 %v472
      %v524 = vunpack.c.l.b16 %v473
      %v525 = vunpack.c.h.b16 %v473
      %v526 = vunpack.c.l.b16 %v474
      %v527 = vunpack.c.h.b16 %v474
      %v528 = vunpack.c.l.b16 %v475
      %v529 = vunpack.c.h.b16 %v475
      %v530 = vpack.c.b16 %v494, %v494
      %v531 = vpack.c.b16 %v495, %v495
      %v532 = vpack.c.b16 %v496, %v496
      %v533 = vpack.c.b16 %v497, %v497
      %v534 = vpack.c.b16 %v498, %v498
      %v535 = vpack.c.b16 %v499, %v499
      %v536 = vpack.c.b16 %v500, %v500
      %v537 = vpack.c.b16 %v501, %v501
      %v538 = vpack.c.b16 %v502, %v502
      %v539 = vpack.c.b16 %v503, %v503
      %v540 = vpack.c.b16 %v504, %v504
      %v541 = vpack.c.b16 %v505, %v505
      %v542 = vpack.c.b16 %v506, %v506
      %v543 = vpack.c.b16 %v507, %v507
      %v544 = vpack.c.b16 %v508, %v508
      %v545 = vpack.c.b16 %v509, %v509
      %v546 = vpack.c.b16 %v510, %v510
      %v547 = vpack.c.b16 %v511, %v511
      %v548 = vpack.c.b16 %v512, %v512
      %v549 = vpack.c.b16 %v513, %v513
      %v550 = vpack.c.b16 %v514, %v514
      %v551 = vpack.c.b16 %v515, %v515
      %v552 = vpack.c.b16 %v516, %v516
      %v553 = vpack.c.b16 %v517, %v517
      %v554 = vpack.c.b16 %v518, %v518
      %v555 = vpack.c.b16 %v519, %v519
      %v556 = vpack.c.b16 %v520, %v520
      %v557 = vpack.c.b16 %v521, %v521
      %v558 = vpack.c.b16 %v522, %v522
      %v559 = vpack.c.b16 %v523, %v523
      %v560 = vpack.c.b16 %v524, %v524
      %v561 = vpack.c.b16 %v525, %v525
      %v562 = vpack.c.b16 %v526, %v526
      %v563 = vpack.c.b16 %v527, %v527
      %v564 = vpack.c.b16 %v528, %v528
      %v565 = vpack.c.b16 %v529, %v529
      %vm602 = vcmask 257024
      %603 = vst.msk [vmem:[%s196] sm:$0xf] %vm602, %v530
      %604 = vst.msk [vmem:[%s196 + $0x4] sm:$0xf] %vm602, %v531
      %605 = vst.msk [vmem:[%s196 + $0x8] sm:$0xf] %vm602, %v532
      %606 = vst.msk [vmem:[%s196 + $0xc] sm:$0xf] %vm602, %v533
      %607 = vst.msk [vmem:[%s196 + $0x10] sm:$0xf] %vm602, %v534
      %608 = vst.msk [vmem:[%s196 + $0x14] sm:$0xf] %vm602, %v535
      %609 = vst.msk [vmem:[%s196 + $0x18] sm:$0xf] %vm602, %v536
      %610 = vst.msk [vmem:[%s196 + $0x1c] sm:$0xf] %vm602, %v537
      %611 = vst.msk [vmem:[%s196 + $0x20] sm:$0xf] %vm602, %v538
      %612 = vst.msk [vmem:[%s196 + $0x24] sm:$0xf] %vm602, %v539
      %613 = vst.msk [vmem:[%s196 + $0x28] sm:$0xf] %vm602, %v540
      %614 = vst.msk [vmem:[%s196 + $0x2c] sm:$0xf] %vm602, %v541
      %615 = vst.msk [vmem:[%s196 + $0x30] sm:$0xf] %vm602, %v542
      %616 = vst.msk [vmem:[%s196 + $0x34] sm:$0xf] %vm602, %v543
      %617 = vst.msk [vmem:[%s196 + $0x38] sm:$0xf] %vm602, %v544
      %618 = vst.msk [vmem:[%s196 + $0x3c] sm:$0xf] %vm602, %v545
      %619 = vst.msk [vmem:[%s196 + $0x40] sm:$0xf] %vm602, %v546
      %620 = vst.msk [vmem:[%s196 + $0x44] sm:$0xf] %vm602, %v547
      %621 = vst.msk [vmem:[%s196 + $0x48] sm:$0xf] %vm602, %v548
      %622 = vst.msk [vmem:[%s196 + $0x4c] sm:$0xf] %vm602, %v549
      %623 = vst.msk [vmem:[%s196 + $0x50] sm:$0xf] %vm602, %v550
      %624 = vst.msk [vmem:[%s196 + $0x54] sm:$0xf] %vm602, %v551
      %625 = vst.msk [vmem:[%s196 + $0x58] sm:$0xf] %vm602, %v552
      %626 = vst.msk [vmem:[%s196 + $0x5c] sm:$0xf] %vm602, %v553
      %627 = vst.msk [vmem:[%s196 + $0x60] sm:$0xf] %vm602, %v554
      %628 = vst.msk [vmem:[%s196 + $0x64] sm:$0xf] %vm602, %v555
      %629 = vst.msk [vmem:[%s196 + $0x68] sm:$0xf] %vm602, %v556
      %630 = vst.msk [vmem:[%s196 + $0x6c] sm:$0xf] %vm602, %v557
      %631 = vst.msk [vmem:[%s196 + $0x70] sm:$0xf] %vm602, %v558
      %632 = vst.msk [vmem:[%s196 + $0x74] sm:$0xf] %vm602, %v559
      %633 = vst.msk [vmem:[%s196 + $0x78] sm:$0xf] %vm602, %v560
      %634 = vst.msk [vmem:[%s196 + $0x7c] sm:$0xf] %vm602, %v561
      %635 = vst.msk [vmem:[%s196 + $0x80] sm:$0xf] %vm602, %v562
      %636 = vst.msk [vmem:[%s196 + $0x84] sm:$0xf] %vm602, %v563
      %637 = vst.msk [vmem:[%s196 + $0x88] sm:$0xf] %vm602, %v564
      %638 = vst.msk [vmem:[%s196 + $0x8c] sm:$0xf] %vm602, %v565
      %p639 = scmp.lt.s32.totalorder %s17, 1
      %s640 = scalar_select %p639, %s17, 1
      %p641 = scmp.lt.s32.totalorder %s18, 15
      %s642 = scalar_select %p641, %s18, 15
      %s643 = smul.addr %s642, 36
      %s644 = smul.addr %s640, 576
      %s645 = sadd.s32 %s643, %s644
      %s646 = smul.addr %s645, 4
      %s647 = scalar_lea.vmem %s2, %s646
      // Predicated region
      $region29: #{general_conv3d_forward.3} parent=27 // pred_check
        %p648 = pneg %p99
      $region30: #{general_conv3d_forward.3} parent=27 // pred_check_branch
        %650 = sbr.rel (%p648) target = $region32
      $region31: #{general_conv3d_forward.3} parent=27 // pred_region
        _
      $region32: #{general_conv3d_forward.3} parent=27 // pred_fallthru
        _
    $region28: #{general_conv3d_forward.3} parent=5 // pred_fallthru
      _
    %p651 = scmp.le.s32.totalorder 2, %s8
    // Predicated region
    $region33: #{general_conv3d_forward.3} parent=5 // pred_check
      %p652 = pneg %p651
    $region34: #{general_conv3d_forward.3} parent=5 // pred_check_branch
      %654 = sbr.rel (%p652) target = $region36
    $region35: #{general_conv3d_forward.3} parent=5 // pred_region
      %s655 = ssub.s32 %s8, 2
      // Predicated region
      $region37: #{general_conv3d_forward.3} parent=35 // pred_check
        %p656 = pneg %p105
      $region38: #{general_conv3d_forward.3} parent=35 // pred_check_branch
        %658 = sbr.rel (%p656) target = $region40
      $region39: #{general_conv3d_forward.3} parent=35 // pred_region
        %p659 = scmp.lt.s32.totalorder %s19, 1
        %s660 = scalar_select %p659, %s19, 1
        %p661 = scmp.lt.s32.totalorder %s20, 15
        %s662 = scalar_select %p661, %s20, 15
        %s663 = smul.addr %s662, 36
        %s664 = smul.addr %s660, 576
        %s665 = sadd.s32 %s663, %s664
        %s666 = smul.addr %s665, 4
        %s667 = scalar_lea.vmem %s2, %s666
      $region40: #{general_conv3d_forward.3} parent=35 // pred_fallthru
        _
    $region36: #{general_conv3d_forward.3} parent=5 // pred_fallthru
      _
  $region6: #{general_conv3d_forward.3} parent=0 // loop_footer
    %s12 = sadd.s32 1, %s8
  $region7: #{general_conv3d_forward.3} parent=0 // loop_footer_branch
    %7 = sbr.rel target = $region3
  $region8: #{general_conv3d_forward.3} parent=0 // loop_exit
    _

// kernel: general_conv3d_forward.2
$region0: #{general_conv3d_forward.2}
  #allocation0 [shape = 'u32[]', space=smem, size = 0x4, offset = 0x4, fixed_abs, tag = 'smem constant byte address 0x4 - core index']
  #allocation1 [shape = 'u32[144,128]{1,0:T(1,128)}', space=vmem, size = 0x12000, scoped, tag = 'internal scratch']
  %s0 = inlined_call_operand.vmem [shape: bf16[2,18,328,16], index: 0, kind: input, shape index: {}, may-alias: {0,1,2}]
  %s1 = inlined_call_operand.vmem [shape: bf16[2,18,328,16], index: 1, kind: input, shape index: {}, may-alias: {0,1,2}]
  %s2 = inlined_call_operand.vmem [shape: bf16[2,18,328,16], index: 2, kind: input, shape index: {}, may-alias: {0,1,2}]
  %s3 = inlined_call_operand.vmem [shape: bf16[432,32], index: 3, kind: input, shape index: {}]
  %s4 = inlined_call_operand.vmem [shape: f32[288,1], index: 4, kind: input, shape index: {}]
  %s5 = inlined_call_operand.vmem [shape: bf16[2,16,288,32], index: 5, kind: output, shape index: {0}]
  %s6 = inlined_call_operand.vmem [shape: f32[2,2,32], index: 6, kind: output, shape index: {1}]
  %7 = xla_tuple %s5, %s6
  %s8 = sld [smem:[#allocation0]]
  $region65: #{general_conv3d_forward.2} parent=0
    _
  %s10 = ssub.s32 1, %s8
  %s11 = scalar_select 0, %s10, %s8
  loop: start=0, step=1, limit=34
  $region2: #{general_conv3d_forward.2} parent=0 // loop_pre_header
    _
  $region3: #{general_conv3d_forward.2} parent=0 // loop_header
    %s13 = sphi 0, %s17
    %p14 = scmp.ge.s32.totalorder %s13, 34
    %s20 = sphi 0, %s32
    %s21 = sphi 0, %s28
    %s22 = sphi 0, %s20
    %s23 = sphi 0, %s21
    %s24 = sphi 0, %s22
    %s25 = sphi 0, %s23
    %s37 = sphi 0, %s39
    %s40 = sphi 0, %s37
    %s41 = sphi 0, %s40
    %s57 = sphi 0, %s41
    %s67 = sphi 0, %s69
    %s70 = sphi 0, %s67
    %s71 = sphi 0, %s70
    %s87 = sphi 0, %s71
    %s97 = sphi 0, %s99
    %s100 = sphi 0, %s97
    %s101 = sphi 0, %s100
    %s117 = sphi 0, %s101
    %s121 = sphi 0, %s121
    %s123 = sphi 0, %s121
    %s124 = sphi 0, %s123
    %s138 = sphi 0, %s124
    %s142 = sphi 0, %s142
    %s144 = sphi 0, %s142
    %s145 = sphi 0, %s144
    %s159 = sphi 0, %s145
    %s167 = sphi 0, %s169
    %s170 = sphi 0, %s167
    %s171 = sphi 0, %s170
    %s187 = sphi 0, %s171
    %s193 = sphi 0, %s195
    %s196 = sphi 0, %s193
    %s197 = sphi 0, %s196
    %s213 = sphi 0, %s197
  $region4: #{general_conv3d_forward.2} parent=0 // loop_header_branch
    %16 = sbr.rel (%p14) target = $region8
  $region5: #{general_conv3d_forward.2} parent=0 // loop_body
    %s18 = ssub.s32 %s13, 1
    %s19 = ssub.s32 %s13, 2
    %s26 = sadd.s32 1, %s21
    %p27 = scmp.ge.s32.totalorder %s26, 16
    %s28 = scalar_select %p27, 0, %s26
    %s29 = sadd.s32 1, %s20
    %s30 = scalar_select %p27, %s29, %s20
    %p31 = scmp.ge.s32.totalorder %s30, 2
    %s32 = scalar_select %p31, 0, %s30
    %s33 = ssub.s32 %s20, %s32
    %s34 = ssub.s32 %s21, %s28
    %s35 = sor.u32 %s33, %s34
    %p36 = scmp.eq.s32.totalorder %s35, 0
    %s38 = sadd.s32 %s37, 1
    %s39 = scalar_select %p36, %s37, %s38
    %p42 = pneg %p36
    %p43 = scmp.eq.s32.totalorder %s13, 31
    %p44 = por %p42, %p43
    %p45 = scmp.ne.s32.totalorder %s37, %s40
    %p46 = scmp.eq.s32.totalorder %s13, 0
    %p47 = por %p45, %p46
    %p48 = scmp.ne.s32.totalorder %s37, %s40
    %p49 = scmp.eq.s32.totalorder %s18, 31
    %p50 = por %p48, %p49
    %p51 = scmp.ne.s32.totalorder %s40, %s41
    %p52 = scmp.eq.s32.totalorder %s18, 0
    %p53 = por %p51, %p52
    %p54 = scmp.ne.s32.totalorder %s40, %s41
    %p55 = scmp.eq.s32.totalorder %s19, 31
    %p56 = por %p54, %p55
    %p58 = scmp.ne.s32.totalorder %s41, %s57
    %p59 = scmp.eq.s32.totalorder %s19, 0
    %p60 = por %p58, %p59
    %s61 = sadd.s32 %s21, 1
    %s62 = sadd.s32 %s28, 1
    %s63 = ssub.s32 %s20, %s32
    %s64 = ssub.s32 %s61, %s62
    %s65 = sor.u32 %s63, %s64
    %p66 = scmp.eq.s32.totalorder %s65, 0
    %s68 = sadd.s32 %s67, 1
    %s69 = scalar_select %p66, %s67, %s68
    %p72 = pneg %p66
    %p73 = scmp.eq.s32.totalorder %s13, 31
    %p74 = por %p72, %p73
    %p75 = scmp.ne.s32.totalorder %s67, %s70
    %p76 = scmp.eq.s32.totalorder %s13, 0
    %p77 = por %p75, %p76
    %p78 = scmp.ne.s32.totalorder %s67, %s70
    %p79 = scmp.eq.s32.totalorder %s18, 31
    %p80 = por %p78, %p79
    %p81 = scmp.ne.s32.totalorder %s70, %s71
    %p82 = scmp.eq.s32.totalorder %s18, 0
    %p83 = por %p81, %p82
    %p84 = scmp.ne.s32.totalorder %s70, %s71
    %p85 = scmp.eq.s32.totalorder %s19, 31
    %p86 = por %p84, %p85
    %p88 = scmp.ne.s32.totalorder %s71, %s87
    %p89 = scmp.eq.s32.totalorder %s19, 0
    %p90 = por %p88, %p89
    %s91 = sadd.s32 %s21, 2
    %s92 = sadd.s32 %s28, 2
    %s93 = ssub.s32 %s20, %s32
    %s94 = ssub.s32 %s91, %s92
    %s95 = sor.u32 %s93, %s94
    %p96 = scmp.eq.s32.totalorder %s95, 0
    %s98 = sadd.s32 %s97, 1
    %s99 = scalar_select %p96, %s97, %s98
    %p102 = pneg %p96
    %p103 = scmp.eq.s32.totalorder %s13, 31
    %p104 = por %p102, %p103
    %p105 = scmp.ne.s32.totalorder %s97, %s100
    %p106 = scmp.eq.s32.totalorder %s13, 0
    %p107 = por %p105, %p106
    %p108 = scmp.ne.s32.totalorder %s97, %s100
    %p109 = scmp.eq.s32.totalorder %s18, 31
    %p110 = por %p108, %p109
    %p111 = scmp.ne.s32.totalorder %s100, %s101
    %p112 = scmp.eq.s32.totalorder %s18, 0
    %p113 = por %p111, %p112
    %p114 = scmp.ne.s32.totalorder %s100, %s101
    %p115 = scmp.eq.s32.totalorder %s19, 31
    %p116 = por %p114, %p115
    %p118 = scmp.ne.s32.totalorder %s101, %s117
    %p119 = scmp.eq.s32.totalorder %s19, 0
    %p120 = por %p118, %p119
    %s122 = sadd.s32 %s121, 1
    %p125 = scmp.eq.s32.totalorder %s13, 31
    %p126 = scmp.ne.s32.totalorder %s121, %s123
    %p127 = scmp.eq.s32.totalorder %s13, 0
    %p128 = por %p126, %p127
    %p129 = scmp.ne.s32.totalorder %s121, %s123
    %p130 = scmp.eq.s32.totalorder %s18, 31
    %p131 = por %p129, %p130
    %p132 = scmp.ne.s32.totalorder %s123, %s124
    %p133 = scmp.eq.s32.totalorder %s18, 0
    %p134 = por %p132, %p133
    %p135 = scmp.ne.s32.totalorder %s123, %s124
    %p136 = scmp.eq.s32.totalorder %s19, 31
    %p137 = por %p135, %p136
    %p139 = scmp.ne.s32.totalorder %s124, %s138
    %p140 = scmp.eq.s32.totalorder %s19, 0
    %p141 = por %p139, %p140
    %s143 = sadd.s32 %s142, 1
    %p146 = scmp.eq.s32.totalorder %s13, 31
    %p147 = scmp.ne.s32.totalorder %s142, %s144
    %p148 = scmp.eq.s32.totalorder %s13, 0
    %p149 = por %p147, %p148
    %p150 = scmp.ne.s32.totalorder %s142, %s144
    %p151 = scmp.eq.s32.totalorder %s18, 31
    %p152 = por %p150, %p151
    %p153 = scmp.ne.s32.totalorder %s144, %s145
    %p154 = scmp.eq.s32.totalorder %s18, 0
    %p155 = por %p153, %p154
    %p156 = scmp.ne.s32.totalorder %s144, %s145
    %p157 = scmp.eq.s32.totalorder %s19, 31
    %p158 = por %p156, %p157
    %p160 = scmp.ne.s32.totalorder %s145, %s159
    %p161 = scmp.eq.s32.totalorder %s19, 0
    %p162 = por %p160, %p161
    %s163 = ssub.s32 %s20, %s32
    %s164 = ssub.s32 %s21, %s28
    %s165 = sor.u32 %s163, %s164
    %p166 = scmp.eq.s32.totalorder %s165, 0
    %s168 = sadd.s32 %s167, 1
    %s169 = scalar_select %p166, %s167, %s168
    %p172 = pneg %p166
    %p173 = scmp.eq.s32.totalorder %s13, 31
    %p174 = por %p172, %p173
    %p175 = scmp.ne.s32.totalorder %s167, %s170
    %p176 = scmp.eq.s32.totalorder %s13, 0
    %p177 = por %p175, %p176
    %p178 = scmp.ne.s32.totalorder %s167, %s170
    %p179 = scmp.eq.s32.totalorder %s18, 31
    %p180 = por %p178, %p179
    %p181 = scmp.ne.s32.totalorder %s170, %s171
    %p182 = scmp.eq.s32.totalorder %s18, 0
    %p183 = por %p181, %p182
    %p184 = scmp.ne.s32.totalorder %s170, %s171
    %p185 = scmp.eq.s32.totalorder %s19, 31
    %p186 = por %p184, %p185
    %p188 = scmp.ne.s32.totalorder %s171, %s187
    %p189 = scmp.eq.s32.totalorder %s19, 0
    %p190 = por %p188, %p189
    %s191 = ssub.s32 %s20, %s32
    %p192 = scmp.eq.s32.totalorder %s191, 0
    %s194 = sadd.s32 %s193, 1
    %s195 = scalar_select %p192, %s193, %s194
    %p198 = pneg %p192
    %p199 = scmp.eq.s32.totalorder %s13, 31
    %p200 = por %p198, %p199
    %p201 = scmp.ne.s32.totalorder %s193, %s196
    %p202 = scmp.eq.s32.totalorder %s13, 0
    %p203 = por %p201, %p202
    %p204 = scmp.ne.s32.totalorder %s193, %s196
    %p205 = scmp.eq.s32.totalorder %s18, 31
    %p206 = por %p204, %p205
    %p207 = scmp.ne.s32.totalorder %s196, %s197
    %p208 = scmp.eq.s32.totalorder %s18, 0
    %p209 = por %p207, %p208
    %p210 = scmp.ne.s32.totalorder %s196, %s197
    %p211 = scmp.eq.s32.totalorder %s19, 31
    %p212 = por %p210, %p211
    %p214 = scmp.ne.s32.totalorder %s197, %s213
    %p215 = scmp.eq.s32.totalorder %s19, 0
    %p216 = por %p214, %p215
    %p217 = scmp.le.s32.totalorder 1, %s13
    %p218 = scmp.lt.s32.totalorder %s13, 33
    %p219 = pnand %p217, %p218
    %p220 = pneg %p219
    // Predicated region
    $region9: #{general_conv3d_forward.2} parent=5 // pred_check
      _
    $region10: #{general_conv3d_forward.2} parent=5 // pred_check_branch
      %222 = sbr.rel (%p219) target = $region12
    $region11: #{general_conv3d_forward.2} parent=5 // pred_region
      %s223 = ssub.s32 %s13, 1
      // Predicated region
      $region13: #{general_conv3d_forward.2} parent=11 // pred_check
        %p224 = pneg %p134
      $region14: #{general_conv3d_forward.2} parent=11 // pred_check_branch
        %226 = sbr.rel (%p224) target = $region16
      $region15: #{general_conv3d_forward.2} parent=11 // pred_region
        _
      $region16: #{general_conv3d_forward.2} parent=11 // pred_fallthru
        _
      // Predicated region
      $region17: #{general_conv3d_forward.2} parent=11 // pred_check
        %p227 = pneg %p155
      $region18: #{general_conv3d_forward.2} parent=11 // pred_check_branch
        %229 = sbr.rel (%p227) target = $region20
      $region19: #{general_conv3d_forward.2} parent=11 // pred_region
        _
      $region20: #{general_conv3d_forward.2} parent=11 // pred_fallthru
        _
    $region12: #{general_conv3d_forward.2} parent=5 // pred_fallthru
      _
    %p230 = scmp.lt.s32.totalorder %s13, 32
    // Predicated region
    $region21: #{general_conv3d_forward.2} parent=5 // pred_check
      %p231 = pneg %p230
    $region22: #{general_conv3d_forward.2} parent=5 // pred_check_branch
      %233 = sbr.rel (%p231) target = $region24
    $region23: #{general_conv3d_forward.2} parent=5 // pred_region
      // Predicated region
      $region25: #{general_conv3d_forward.2} parent=23 // pred_check
        %p234 = pneg %p47
      $region26: #{general_conv3d_forward.2} parent=23 // pred_check_branch
        %236 = sbr.rel (%p234) target = $region28
      $region27: #{general_conv3d_forward.2} parent=23 // pred_region
        %p237 = scmp.lt.s32.totalorder %s20, 1
        %s238 = scalar_select %p237, %s20, 1
        %p239 = scmp.lt.s32.totalorder %s21, 17
        %s240 = scalar_select %p239, %s21, 17
        %s241 = smul.addr %s240, 41
        %s242 = smul.addr %s238, 738
        %s243 = sadd.s32 %s241, %s242
        %s244 = smul.addr %s243, 4
        %s245 = scalar_lea.vmem %s0, %s244
      $region28: #{general_conv3d_forward.2} parent=23 // pred_fallthru
        _
      // Predicated region
      $region29: #{general_conv3d_forward.2} parent=23 // pred_check
        %p246 = pneg %p77
      $region30: #{general_conv3d_forward.2} parent=23 // pred_check_branch
        %248 = sbr.rel (%p246) target = $region32
      $region31: #{general_conv3d_forward.2} parent=23 // pred_region
        %s249 = sadd.s32 %s21, 1
        %p250 = scmp.lt.s32.totalorder %s20, 1
        %s251 = scalar_select %p250, %s20, 1
        %p252 = scmp.lt.s32.totalorder %s249, 17
        %s253 = scalar_select %p252, %s249, 17
        %s254 = smul.addr %s253, 41
        %s255 = smul.addr %s251, 738
        %s256 = sadd.s32 %s254, %s255
        %s257 = smul.addr %s256, 4
        %s258 = scalar_lea.vmem %s1, %s257
        %s259 = sadd.s32 %s21, 1
      $region32: #{general_conv3d_forward.2} parent=23 // pred_fallthru
        _
      // Predicated region
      $region33: #{general_conv3d_forward.2} parent=23 // pred_check
        %p260 = pneg %p107
      $region34: #{general_conv3d_forward.2} parent=23 // pred_check_branch
        %262 = sbr.rel (%p260) target = $region36
      $region35: #{general_conv3d_forward.2} parent=23 // pred_region
        %s263 = sadd.s32 %s21, 2
        %p264 = scmp.lt.s32.totalorder %s20, 1
        %s265 = scalar_select %p264, %s20, 1
        %p266 = scmp.lt.s32.totalorder %s263, 17
        %s267 = scalar_select %p266, %s263, 17
        %s268 = smul.addr %s267, 41
        %s269 = smul.addr %s265, 738
        %s270 = sadd.s32 %s268, %s269
        %s271 = smul.addr %s270, 4
        %s272 = scalar_lea.vmem %s2, %s271
        %s273 = sadd.s32 %s21, 2
      $region36: #{general_conv3d_forward.2} parent=23 // pred_fallthru
        _
    $region24: #{general_conv3d_forward.2} parent=5 // pred_fallthru
      _
    %p274 = scmp.le.s32.totalorder 1, %s13
    %p275 = scmp.lt.s32.totalorder %s13, 33
    %p276 = pnand %p274, %p275
    %p277 = pneg %p276
    // Predicated region
    $region37: #{general_conv3d_forward.2} parent=5 // pred_check
      _
    $region38: #{general_conv3d_forward.2} parent=5 // pred_check_branch
      %279 = sbr.rel (%p276) target = $region40
    $region39: #{general_conv3d_forward.2} parent=5 // pred_region
      %s280 = ssub.s32 %s13, 1
      %p281 = scmp.lt.s32.totalorder %s22, 1
      %s282 = scalar_select %p281, %s22, 1
      %p283 = scmp.lt.s32.totalorder %s23, 17
      %s284 = scalar_select %p283, %s23, 17
      %s285 = smul.addr %s284, 41
      %s286 = smul.addr %s282, 738
      %s287 = sadd.s32 %s285, %s286
      %s288 = smul.addr %s287, 4
      %s289 = scalar_lea.vmem %s0, %s288
      %p290 = pneg %p53
      %p291 = pneg %p50
      %s292 = sadd.s32 %s23, 1
      %p293 = scmp.lt.s32.totalorder %s22, 1
      %s294 = scalar_select %p293, %s22, 1
      %p295 = scmp.lt.s32.totalorder %s292, 17
      %s296 = scalar_select %p295, %s292, 17
      %s297 = smul.addr %s296, 41
      %s298 = smul.addr %s294, 738
      %s299 = sadd.s32 %s297, %s298
      %s300 = smul.addr %s299, 4
      %s301 = scalar_lea.vmem %s1, %s300
      %p302 = pneg %p83
      %p303 = pneg %p80
      %s304 = sadd.s32 %s23, 2
      %p305 = scmp.lt.s32.totalorder %s22, 1
      %s306 = scalar_select %p305, %s22, 1
      %p307 = scmp.lt.s32.totalorder %s304, 17
      %s308 = scalar_select %p307, %s304, 17
      %s309 = smul.addr %s308, 41
      %s310 = smul.addr %s306, 738
      %s311 = sadd.s32 %s309, %s310
      %s312 = smul.addr %s311, 4
      %s313 = scalar_lea.vmem %s2, %s312
      %p314 = pneg %p113
      %p315 = pneg %p110
      %p316 = pneg %p134
      %p317 = pneg %p131
      %p318 = pneg %p155
      %p319 = pneg %p152
      %p320 = pneg %p183
      %p321 = pneg %p180
      %p322 = scmp.lt.s32.totalorder %s22, 1
      %s323 = scalar_select %p322, %s22, 1
      %p324 = scmp.lt.s32.totalorder %s23, 15
      %s325 = scalar_select %p324, %s23, 15
      %s326 = smul.addr %s325, 36
      %s327 = smul.addr %s323, 576
      %s328 = sadd.s32 %s326, %s327
      %s329 = smul.addr %s328, 4
      %s330 = scalar_lea.vmem %s5, %s329
      %p331 = pneg %p209
      %p332 = pneg %p206
      %p333 = scmp.lt.s32.totalorder %s22, 1
      %s334 = scalar_select %p333, %s22, 1
      %s335 = smul.addr %s334, 2
      %s336 = scalar_lea.vmem %s6, %s335
      %p337 = scmp.lt.s32.totalorder %s22, 1
      %s338 = scalar_select %p337, %s22, 1
      %p339 = scmp.lt.s32.totalorder %s23, 17
      %s340 = scalar_select %p339, %s23, 17
      %s341 = smul.addr %s340, 41
      %s342 = smul.addr %s338, 738
      %s343 = sadd.s32 %s341, %s342
      %s344 = smul.addr %s343, 4
      %s345 = scalar_lea.vmem %s0, %s344
      %s346 = sadd.s32 %s23, 1
      %p347 = scmp.lt.s32.totalorder %s22, 1
      %s348 = scalar_select %p347, %s22, 1
      %p349 = scmp.lt.s32.totalorder %s346, 17
      %s350 = scalar_select %p349, %s346, 17
      %s351 = smul.addr %s350, 41
      %s352 = smul.addr %s348, 738
      %s353 = sadd.s32 %s351, %s352
      %s354 = smul.addr %s353, 4
      %s355 = scalar_lea.vmem %s1, %s354
      %s356 = sadd.s32 %s23, 1
      %s357 = sadd.s32 %s23, 2
      %p358 = scmp.lt.s32.totalorder %s22, 1
      %s359 = scalar_select %p358, %s22, 1
      %p360 = scmp.lt.s32.totalorder %s357, 17
      %s361 = scalar_select %p360, %s357, 17
      %s362 = smul.addr %s361, 41
      %s363 = smul.addr %s359, 738
      %s364 = sadd.s32 %s362, %s363
      %s365 = smul.addr %s364, 4
      %s366 = scalar_lea.vmem %s2, %s365
      %s367 = sadd.s32 %s23, 2
      %p368 = scmp.lt.s32.totalorder %s22, 1
      %s369 = scalar_select %p368, %s22, 1
      %p370 = scmp.lt.s32.totalorder %s23, 15
      %s371 = scalar_select %p370, %s23, 15
      %s372 = smul.addr %s371, 36
      %s373 = smul.addr %s369, 576
      %s374 = sadd.s32 %s372, %s373
      %s375 = smul.addr %s374, 4
      %s376 = scalar_lea.vmem %s5, %s375
      %p377 = scmp.lt.s32.totalorder %s22, 1
      %s378 = scalar_select %p377, %s22, 1
      %s379 = smul.addr %s378, 2
      %s380 = scalar_lea.vmem %s6, %s379
      %v382 = vld [vmem:[%s345] sm:$0xf]
      %v383 = vld [vmem:[%s345 + $0x4] sm:$0xf]
      %v384 = vld [vmem:[%s345 + $0x8] sm:$0xf]
      %v385 = vld [vmem:[%s345 + $0xc] sm:$0xf]
      %v386 = vld [vmem:[%s345 + $0x10] sm:$0xf]
      %v387 = vld [vmem:[%s345 + $0x14] sm:$0xf]
      %v388 = vld [vmem:[%s345 + $0x18] sm:$0xf]
      %v389 = vld [vmem:[%s345 + $0x1c] sm:$0xf]
      %v390 = vld [vmem:[%s345 + $0x20] sm:$0xf]
      %v391 = vld [vmem:[%s345 + $0x24] sm:$0xf]
      %v392 = vld [vmem:[%s345 + $0x28] sm:$0xf]
      %v393 = vld [vmem:[%s345 + $0x2c] sm:$0xf]
      %v394 = vld [vmem:[%s345 + $0x30] sm:$0xf]
      %v395 = vld [vmem:[%s345 + $0x34] sm:$0xf]
      %v396 = vld [vmem:[%s345 + $0x38] sm:$0xf]
      %v397 = vld [vmem:[%s345 + $0x3c] sm:$0xf]
      %v398 = vld [vmem:[%s345 + $0x40] sm:$0xf]
      %v399 = vld [vmem:[%s345 + $0x44] sm:$0xf]
      %v400 = vld [vmem:[%s345 + $0x48] sm:$0xf]
      %v401 = vld [vmem:[%s345 + $0x4c] sm:$0xf]
      %v402 = vld [vmem:[%s345 + $0x50] sm:$0xf]
      %v403 = vld [vmem:[%s345 + $0x54] sm:$0xf]
      %v404 = vld [vmem:[%s345 + $0x58] sm:$0xf]
      %v405 = vld [vmem:[%s345 + $0x5c] sm:$0xf]
      %v406 = vld [vmem:[%s345 + $0x60] sm:$0xf]
      %v407 = vld [vmem:[%s345 + $0x64] sm:$0xf]
      %v408 = vld [vmem:[%s345 + $0x68] sm:$0xf]
      %v409 = vld [vmem:[%s345 + $0x6c] sm:$0xf]
      %v410 = vld [vmem:[%s345 + $0x70] sm:$0xf]
      %v411 = vld [vmem:[%s345 + $0x74] sm:$0xf]
      %v412 = vld [vmem:[%s345 + $0x78] sm:$0xf]
      %v413 = vld [vmem:[%s345 + $0x7c] sm:$0xf]
      %v414 = vld [vmem:[%s345 + $0x80] sm:$0xf]
      %v415 = vld [vmem:[%s345 + $0x84] sm:$0xf]
      %v416 = vld [vmem:[%s345 + $0x88] sm:$0xf]
      %v417 = vld [vmem:[%s345 + $0x8c] sm:$0xf]
      %v418 = vld [vmem:[%s3] sm:$0xf]
      %v419 = vld [vmem:[%s3 + $0x4] sm:$0xf]
      %v420 = vld [vmem:[%s345 + $0x90] sm:$0x1]
      %v421 = vld [vmem:[%s3 + $0x8] sm:$0xf]
      %v422 = vld [vmem:[%s3 + $0xc] sm:$0xf]
      %v460 = vunpack.c.l.b16 %v382
      %v461 = vunpack.c.l.b16 %v383
      %v462 = vunpack.c.l.b16 %v384
      %v463 = vunpack.c.l.b16 %v385
      %v464 = vunpack.c.l.b16 %v386
      %v465 = vunpack.c.l.b16 %v387
      %v466 = vunpack.c.l.b16 %v388
      %v467 = vunpack.c.l.b16 %v389
      %v468 = vunpack.c.l.b16 %v390
      %v469 = vunpack.c.l.b16 %v391
      %v470 = vunpack.c.l.b16 %v392
      %v471 = vunpack.c.l.b16 %v393
      %v472 = vunpack.c.l.b16 %v394
      %v473 = vunpack.c.l.b16 %v395
      %v474 = vunpack.c.l.b16 %v396
      %v475 = vunpack.c.l.b16 %v397
      %v476 = vunpack.c.l.b16 %v398
      %v477 = vunpack.c.l.b16 %v399
      %v478 = vunpack.c.l.b16 %v400
      %v479 = vunpack.c.l.b16 %v401
      %v480 = vunpack.c.l.b16 %v402
      %v481 = vunpack.c.l.b16 %v403
      %v482 = vunpack.c.l.b16 %v404
      %v483 = vunpack.c.l.b16 %v405
      %v484 = vunpack.c.l.b16 %v406
      %v485 = vunpack.c.l.b16 %v407
      %v486 = vunpack.c.l.b16 %v408
      %v487 = vunpack.c.l.b16 %v409
      %v488 = vunpack.c.l.b16 %v410
      %v489 = vunpack.c.l.b16 %v411
      %v490 = vunpack.c.l.b16 %v412
      %v491 = vunpack.c.l.b16 %v413
      %v492 = vunpack.c.l.b16 %v414
      %v493 = vunpack.c.l.b16 %v415
      %v494 = vunpack.c.l.b16 %v416
      %v495 = vunpack.c.l.b16 %v417
      %v496 = vunpack.c.l.b16 %v420
      %v497 = vpack.c.b16 %v461, %v460
      %v498 = vpack.c.b16 %v463, %v462
      %v499 = vpack.c.b16 %v465, %v464
      %v500 = vpack.c.b16 %v467, %v466
      %v501 = vpack.c.b16 %v469, %v468
      %v502 = vpack.c.b16 %v471, %v470
      %v503 = vpack.c.b16 %v473, %v472
      %v504 = vpack.c.b16 %v475, %v474
      %v505 = vpack.c.b16 %v477, %v476
      %v506 = vpack.c.b16 %v479, %v478
      %v507 = vpack.c.b16 %v481, %v480
      %v508 = vpack.c.b16 %v483, %v482
      %v509 = vpack.c.b16 %v485, %v484
      %v510 = vpack.c.b16 %v487, %v486
      %v511 = vpack.c.b16 %v489, %v488
      %v512 = vpack.c.b16 %v491, %v490
      %v513 = vpack.c.b16 %v493, %v492
      %v514 = vpack.c.b16 %v495, %v494
      %v515 = vpack.c.b16 %v496, %v496
      %vm516 = vsmask.f32 7424
      %v518 = vshrl.u32 %v497, 16
      %v520 = vshll.u32 %v497, 16
      %v522 = vrot.slane %v520, 1
      %v523 = vor.u32 %v518, %v522
      %v525 = vshll.u32 %v498, 16
      %v527 = vrot.slane %v525, 1
      %v528 = vsel %vm516, %v523, %v527
      %v529 = vshrl.u32 %v498, 16
      %v531 = vor.u32 %v529, %v527
      %v533 = vshll.u32 %v499, 16
      %v535 = vrot.slane %v533, 1
      %v536 = vsel %vm516, %v531, %v535
      %v537 = vshrl.u32 %v499, 16
      %v539 = vor.u32 %v537, %v535
      %v541 = vshll.u32 %v500, 16
      %v543 = vrot.slane %v541, 1
      %v544 = vsel %vm516, %v539, %v543
      %v545 = vshrl.u32 %v500, 16
      %v547 = vor.u32 %v545, %v543
      %v549 = vshll.u32 %v501, 16
      %v551 = vrot.slane %v549, 1
      %v552 = vsel %vm516, %v547, %v551
      %v553 = vshrl.u32 %v501, 16
      %v555 = vor.u32 %v553, %v551
      %v557 = vshll.u32 %v502, 16
      %v559 = vrot.slane %v557, 1
      %v560 = vsel %vm516, %v555, %v559
      %v561 = vshrl.u32 %v502, 16
      %v563 = vor.u32 %v561, %v559
      %v565 = vshll.u32 %v503, 16
      %v567 = vrot.slane %v565, 1
      %v568 = vsel %vm516, %v563, %v567
      %v569 = vshrl.u32 %v503, 16
      %v571 = vor.u32 %v569, %v567
      %v573 = vshll.u32 %v504, 16
      %v575 = vrot.slane %v573, 1
      %v576 = vsel %vm516, %v571, %v575
      %v577 = vshrl.u32 %v504, 16
      %v579 = vor.u32 %v577, %v575
      %v581 = vshll.u32 %v505, 16
      %v583 = vrot.slane %v581, 1
      %v584 = vsel %vm516, %v579, %v583
      %v585 = vshrl.u32 %v505, 16
      %v587 = vor.u32 %v585, %v583
      %v589 = vshll.u32 %v506, 16
      %v591 = vrot.slane %v589, 1
      %v592 = vsel %vm516, %v587, %v591
      %v593 = vshrl.u32 %v506, 16
      %v595 = vor.u32 %v593, %v591
      %v597 = vshll.u32 %v507, 16
      %v599 = vrot.slane %v597, 1
      %v600 = vsel %vm516, %v595, %v599
      %v601 = vshrl.u32 %v507, 16
      %v603 = vor.u32 %v601, %v599
      %v605 = vshll.u32 %v508, 16
      %v607 = vrot.slane %v605, 1
      %v608 = vsel %vm516, %v603, %v607
      %v609 = vshrl.u32 %v508, 16
      %v611 = vor.u32 %v609, %v607
      %v613 = vshll.u32 %v509, 16
      %v615 = vrot.slane %v613, 1
      %v616 = vsel %vm516, %v611, %v615
      %v617 = vshrl.u32 %v509, 16
      %v619 = vor.u32 %v617, %v615
      %v621 = vshll.u32 %v510, 16
      %v623 = vrot.slane %v621, 1
      %v624 = vsel %vm516, %v619, %v623
      %v625 = vshrl.u32 %v510, 16
      %v627 = vor.u32 %v625, %v623
      %v629 = vshll.u32 %v511, 16
      %v631 = vrot.slane %v629, 1
      %v632 = vsel %vm516, %v627, %v631
      %v633 = vshrl.u32 %v511, 16
      %v635 = vor.u32 %v633, %v631
      %v637 = vshll.u32 %v512, 16
      %v639 = vrot.slane %v637, 1
      %v640 = vsel %vm516, %v635, %v639
      %v641 = vshrl.u32 %v512, 16
      %v643 = vor.u32 %v641, %v639
      %v645 = vshll.u32 %v513, 16
      %v647 = vrot.slane %v645, 1
      %v648 = vsel %vm516, %v643, %v647
      %v649 = vshrl.u32 %v513, 16
      %v651 = vor.u32 %v649, %v647
      %v653 = vshll.u32 %v514, 16
      %v655 = vrot.slane %v653, 1
      %v656 = vsel %vm516, %v651, %v655
      %v657 = vshrl.u32 %v514, 16
      %v659 = vor.u32 %v657, %v655
      %v661 = vshll.u32 %v515, 16
      %v663 = vrot.slane %v661, 1
      %v664 = vsel %vm516, %v659, %v663
      %v667 = vunpack.c.l.b16 %v421
      %v668 = vunpack.c.l.b16 %v422
      %v669 = vpack.c.b16 %v668, %v667
      %vm671 = vcmask 130048
      %v673 = vsel %vm671, %v528, 0
      %v676 = vsel %vm671, %v536, 0
      %v679 = vsel %vm671, %v544, 0
      %v682 = vsel %vm671, %v552, 0
      %v685 = vsel %vm671, %v560, 0
      %v688 = vsel %vm671, %v568, 0
      %v691 = vsel %vm671, %v576, 0
      %v694 = vsel %vm671, %v584, 0
      %v697 = vsel %vm671, %v592, 0
      %v700 = vsel %vm671, %v600, 0
      %v703 = vsel %vm671, %v608, 0
      %v706 = vsel %vm671, %v616, 0
      %v709 = vsel %vm671, %v624, 0
      %v712 = vsel %vm671, %v632, 0
      %v715 = vsel %vm671, %v640, 0
      %v718 = vsel %vm671, %v648, 0
      %v721 = vsel %vm671, %v656, 0
      %v724 = vsel %vm671, %v664, 0
      %726 = vmatprep.subr.bf16.mxu0 0
      %727 = vmatpush1.bf16.msra.mxu0 %v669
      %728 = vmatprep.subr.bf16.mxu0 0
      %729 = vmatpush1.bf16.msra.mxu0 0
      %730 = vmatprep.subr.bf16.mxu0 0
      %731 = vmatpush1.bf16.msra.mxu0 0
      %732 = vmatprep.subr.bf16.mxu0 0
      %733 = vmatpush1.bf16.msra.mxu0 0
      %734 = vmatprep.subr.bf16.mxu0 0
      %735 = vmatpush1.bf16.msra.mxu0 0
      %736 = vmatprep.subr.bf16.mxu0 0
      %737 = vmatpush1.bf16.msra.mxu0 0
      %738 = vmatprep.subr.bf16.mxu0 0
      %739 = vmatpush1.bf16.msra.mxu0 0
      %740 = vmatprep.subr.bf16.mxu0 0
      %741 = vmatpush1.bf16.msra.mxu0 0
      %742 = vmatprep.subr.bf16.mxu0 0
      %743 = vmatpush1.bf16.msra.mxu0 0
      %744 = vmatprep.subr.bf16.mxu0 0
      %745 = vmatpush1.bf16.msra.mxu0 0
      %746 = vmatprep.subr.bf16.mxu0 0
      %747 = vmatpush1.bf16.msra.mxu0 0
      %748 = vmatprep.subr.bf16.mxu0 0
      %749 = vmatpush1.bf16.msra.mxu0 0
      %750 = vmatprep.subr.bf16.mxu0 0
      %751 = vmatpush1.bf16.msra.mxu0 0
      %752 = vmatprep.subr.bf16.mxu0 0
      %753 = vmatpush1.bf16.msra.mxu0 0
      %754 = vmatprep.subr.bf16.mxu0 0
      %755 = vmatpush1.bf16.msra.mxu0 0
      %756 = vmatprep.subr.bf16.mxu0 0
      %757 = vmatpush1.bf16.msra.mxu0 0
      %758 = vmatprep.mubr.bf16.mxu0 0
      %759 = vmatmul.mubr.bf16.gmra.mrb[0].mxu0 %v673
      %v760 = vpop.f32.mrb[0].mxu0
      %v761 = vadd.f32 0.0, %v760
      %v762 = vpop.f32.mrb[0].mxu0
      %v763 = vpop.f32.mrb[0].mxu0
      %v764 = vadd.f32 0.0, %v763
      %v765 = vpop.f32.mrb[0].mxu0
      %766 = vmatprep.mubr.bf16.mxu0 0
      %767 = vmatmul.mubr.bf16.gmra.mrb[0].mxu0 %v676
      %v768 = vpop.f32.mrb[0].mxu0
      %v769 = vadd.f32 0.0, %v768
      %v770 = vpop.f32.mrb[0].mxu0
      %v771 = vpop.f32.mrb[0].mxu0
      %v772 = vadd.f32 0.0, %v771
      %v773 = vpop.f32.mrb[0].mxu0
      %774 = vmatprep.mubr.bf16.mxu0 0
      %775 = vmatmul.mubr.bf16.gmra.mrb[0].mxu0 %v679
      %v776 = vpop.f32.mrb[0].mxu0
      %v777 = vadd.f32 0.0, %v776
      %v778 = vpop.f32.mrb[0].mxu0
      %v779 = vpop.f32.mrb[0].mxu0
      %v780 = vadd.f32 0.0, %v779
      %v781 = vpop.f32.mrb[0].mxu0
      %782 = vmatprep.mubr.bf16.mxu0 0
      %783 = vmatmul.mubr.bf16.gmra.mrb[0].mxu0 %v682
      %v784 = vpop.f32.mrb[0].mxu0
      %v785 = vadd.f32 0.0, %v784
      %v786 = vpop.f32.mrb[0].mxu0
      %v787 = vpop.f32.mrb[0].mxu0
      %v788 = vadd.f32 0.0, %v787
      %v789 = vpop.f32.mrb[0].mxu0
      %790 = vmatprep.mubr.bf16.mxu0 0
      %791 = vmatmul.mubr.bf16.gmra.mrb[0].mxu0 %v685
      %v792 = vpop.f32.mrb[0].mxu0
      %v793 = vadd.f32 0.0, %v792
      %v794 = vpop.f32.mrb[0].mxu0
      %v795 = vpop.f32.mrb[0].mxu0
      %v796 = vadd.f32 0.0, %v795
      %v797 = vpop.f32.mrb[0].mxu0
      %798 = vmatprep.mubr.bf16.mxu0 0
      %799 = vmatmul.mubr.bf16.gmra.mrb[0].mxu0 %v688
      %v800 = vpop.f32.mrb[0].mxu0
      %v801 = vadd.f32 0.0, %v800
      %v802 = vpop.f32.mrb[0].mxu0
      %v803 = vpop.f32.mrb[0].mxu0
      %v804 = vadd.f32 0.0, %v803
      %v805 = vpop.f32.mrb[0].mxu0
      %806 = vmatprep.mubr.bf16.mxu0 0
      %807 = vmatmul.mubr.bf16.gmra.mrb[0].mxu0 %v691
      %v808 = vpop.f32.mrb[0].mxu0
      %v809 = vadd.f32 0.0, %v808
      %v810 = vpop.f32.mrb[0].mxu0
      %v811 = vpop.f32.mrb[0].mxu0
      %v812 = vadd.f32 0.0, %v811
      %v813 = vpop.f32.mrb[0].mxu0
      %814 = vmatprep.mubr.bf16.mxu0 0
      %815 = vmatmul.mubr.bf16.gmra.mrb[0].mxu0 %v694
      %v816 = vpop.f32.mrb[0].mxu0
      %v817 = vadd.f32 0.0, %v816
      %v818 = vpop.f32.mrb[0].mxu0
      %v819 = vpop.f32.mrb[0].mxu0
      %v820 = vadd.f32 0.0, %v819
      %v821 = vpop.f32.mrb[0].mxu0
      %822 = vmatprep.mubr.bf16.mxu0 0
      %823 = vmatmul.mubr.bf16.gmra.mrb[0].mxu0 %v697
      %v824 = vpop.f32.mrb[0].mxu0
      %v825 = vadd.f32 0.0, %v824
      %v826 = vpop.f32.mrb[0].mxu0
      %v827 = vpop.f32.mrb[0].mxu0
      %v828 = vadd.f32 0.0, %v827
      %v829 = vpop.f32.mrb[0].mxu0
      %830 = vmatprep.mubr.bf16.mxu0 0
      %831 = vmatmul.mubr.bf16.gmra.mrb[0].mxu0 %v700
      %v832 = vpop.f32.mrb[0].mxu0
      %v833 = vadd.f32 0.0, %v832
      %v834 = vpop.f32.mrb[0].mxu0
      %v835 = vpop.f32.mrb[0].mxu0
      %v836 = vadd.f32 0.0, %v835
      %v837 = vpop.f32.mrb[0].mxu0
      %838 = vmatprep.mubr.bf16.mxu0 0
      %839 = vmatmul.mubr.bf16.gmra.mrb[0].mxu0 %v703
      %v840 = vpop.f32.mrb[0].mxu0
      %v841 = vadd.f32 0.0, %v840
      %v842 = vpop.f32.mrb[0].mxu0
      %v843 = vpop.f32.mrb[0].mxu0
      %v844 = vadd.f32 0.0, %v843
      %v845 = vpop.f32.mrb[0].mxu0
      %846 = vmatprep.mubr.bf16.mxu0 0
      %847 = vmatmul.mubr.bf16.gmra.mrb[0].mxu0 %v706
      %v848 = vpop.f32.mrb[0].mxu0
      %v849 = vadd.f32 0.0, %v848
      %v850 = vpop.f32.mrb[0].mxu0
      %v851 = vpop.f32.mrb[0].mxu0
      %v852 = vadd.f32 0.0, %v851
      %v853 = vpop.f32.mrb[0].mxu0
      %854 = vmatprep.mubr.bf16.mxu0 0
      %855 = vmatmul.mubr.bf16.gmra.mrb[0].mxu0 %v709
      %v856 = vpop.f32.mrb[0].mxu0
      %v857 = vadd.f32 0.0, %v856
      %v858 = vpop.f32.mrb[0].mxu0
      %v859 = vpop.f32.mrb[0].mxu0
      %v860 = vadd.f32 0.0, %v859
      %v861 = vpop.f32.mrb[0].mxu0
      %862 = vmatprep.mubr.bf16.mxu0 0
      %863 = vmatmul.mubr.bf16.gmra.mrb[0].mxu0 %v712
      %v864 = vpop.f32.mrb[0].mxu0
      %v865 = vadd.f32 0.0, %v864
      %v866 = vpop.f32.mrb[0].mxu0
      %v867 = vpop.f32.mrb[0].mxu0
      %v868 = vadd.f32 0.0, %v867
      %v869 = vpop.f32.mrb[0].mxu0
      %870 = vmatprep.mubr.bf16.mxu0 0
      %871 = vmatmul.mubr.bf16.gmra.mrb[0].mxu0 %v715
      %v872 = vpop.f32.mrb[0].mxu0
      %v873 = vadd.f32 0.0, %v872
      %v874 = vpop.f32.mrb[0].mxu0
      %v875 = vpop.f32.mrb[0].mxu0
      %v876 = vadd.f32 0.0, %v875
      %v877 = vpop.f32.mrb[0].mxu0
      %878 = vmatprep.mubr.bf16.mxu0 0
      %879 = vmatmul.mubr.bf16.gmra.mrb[0].mxu0 %v718
      %v880 = vpop.f32.mrb[0].mxu0
      %v881 = vadd.f32 0.0, %v880
      %v882 = vpop.f32.mrb[0].mxu0
      %v883 = vpop.f32.mrb[0].mxu0
      %v884 = vadd.f32 0.0, %v883
      %v885 = vpop.f32.mrb[0].mxu0
      %886 = vmatprep.mubr.bf16.mxu0 0
      %887 = vmatmul.mubr.bf16.gmra.mrb[0].mxu0 %v721
      %v888 = vpop.f32.mrb[0].mxu0
      %v889 = vadd.f32 0.0, %v888
      %v890 = vpop.f32.mrb[0].mxu0
      %v891 = vpop.f32.mrb[0].mxu0
      %v892 = vadd.f32 0.0, %v891
      %v893 = vpop.f32.mrb[0].mxu0
      %894 = vmatprep.mubr.bf16.mxu0 0
      %895 = vmatmul.mubr.bf16.gmra.mrb[0].mxu0 %v724
      %v896 = vpop.f32.mrb[0].mxu0
      %v897 = vadd.f32 0.0, %v896
      %v898 = vpop.f32.mrb[0].mxu0
      %v899 = vpop.f32.mrb[0].mxu0
      %v900 = vadd.f32 0.0, %v899
      %v901 = vpop.f32.mrb[0].mxu0
      %902 = vdwg.mxu0
      %v905 = vunpack.c.l.b16 %v418
      %v906 = vunpack.c.l.b16 %v419
      %v907 = vpack.c.b16 %v906, %v905
      %v909 = vsel %vm671, %v497, 0
      %v911 = vsel %vm671, %v498, 0
      %v913 = vsel %vm671, %v499, 0
      %v915 = vsel %vm671, %v500, 0
      %v917 = vsel %vm671, %v501, 0
      %v919 = vsel %vm671, %v502, 0
      %v921 = vsel %vm671, %v503, 0
      %v923 = vsel %vm671, %v504, 0
      %v925 = vsel %vm671, %v505, 0
      %v927 = vsel %vm671, %v506, 0
      %v929 = vsel %vm671, %v507, 0
      %v931 = vsel %vm671, %v508, 0
      %v933 = vsel %vm671, %v509, 0
      %v935 = vsel %vm671, %v510, 0
      %v937 = vsel %vm671, %v511, 0
      %v939 = vsel %vm671, %v512, 0
      %v941 = vsel %vm671, %v513, 0
      %v943 = vsel %vm671, %v514, 0
      %945 = vmatprep.subr.bf16.mxu0 0
      %946 = vmatpush1.bf16.msra.mxu0 %v907
      %947 = vmatprep.subr.bf16.mxu0 0
      %948 = vmatpush1.bf16.msra.mxu0 0
      %949 = vmatprep.subr.bf16.mxu0 0
      %950 = vmatpush1.bf16.msra.mxu0 0
      %951 = vmatprep.subr.bf16.mxu0 0
      %952 = vmatpush1.bf16.msra.mxu0 0
      %953 = vmatprep.subr.bf16.mxu0 0
      %954 = vmatpush1.bf16.msra.mxu0 0
      %955 = vmatprep.subr.bf16.mxu0 0
      %956 = vmatpush1.bf16.msra.mxu0 0
      %957 = vmatprep.subr.bf16.mxu0 0
      %958 = vmatpush1.bf16.msra.mxu0 0
      %959 = vmatprep.subr.bf16.mxu0 0
      %960 = vmatpush1.bf16.msra.mxu0 0
      %961 = vmatprep.subr.bf16.mxu0 0
      %962 = vmatpush1.bf16.msra.mxu0 0
      %963 = vmatprep.subr.bf16.mxu0 0
      %964 = vmatpush1.bf16.msra.mxu0 0
      %965 = vmatprep.subr.bf16.mxu0 0
      %966 = vmatpush1.bf16.msra.mxu0 0
      %967 = vmatprep.subr.bf16.mxu0 0
      %968 = vmatpush1.bf16.msra.mxu0 0
      %969 = vmatprep.subr.bf16.mxu0 0
      %970 = vmatpush1.bf16.msra.mxu0 0
      %971 = vmatprep.subr.bf16.mxu0 0
      %972 = vmatpush1.bf16.msra.mxu0 0
      %973 = vmatprep.subr.bf16.mxu0 0
      %974 = vmatpush1.bf16.msra.mxu0 0
      %975 = vmatprep.subr.bf16.mxu0 0
      %976 = vmatpush1.bf16.msra.mxu0 0
      %977 = vmatprep.mubr.bf16.mxu0 0
      %978 = vmatmul.mubr.bf16.gmra.mrb[0].mxu0 %v909
      %v979 = vpop.f32.mrb[0].mxu0
      %v980 = vadd.f32 %v761, %v979
      %v981 = vpop.f32.mrb[0].mxu0
      %v982 = vpop.f32.mrb[0].mxu0
      %v983 = vadd.f32 %v764, %v982
      %v984 = vpop.f32.mrb[0].mxu0
      %985 = vmatprep.mubr.bf16.mxu0 0
      %986 = vmatmul.mubr.bf16.gmra.mrb[0].mxu0 %v911
      %v987 = vpop.f32.mrb[0].mxu0
      %v988 = vadd.f32 %v769, %v987
      %v989 = vpop.f32.mrb[0].mxu0
      %v990 = vpop.f32.mrb[0].mxu0
      %v991 = vadd.f32 %v772, %v990
      %v992 = vpop.f32.mrb[0].mxu0
      %993 = vmatprep.mubr.bf16.mxu0 0
      %994 = vmatmul.mubr.bf16.gmra.mrb[0].mxu0 %v913
      %v995 = vpop.f32.mrb[0].mxu0
      %v996 = vadd.f32 %v777, %v995
      %v997 = vpop.f32.mrb[0].mxu0
      %v998 = vpop.f32.mrb[0].mxu0
      %v999 = vadd.f32 %v780, %v998
      %v1000 = vpop.f32.mrb[0].mxu0
      %1001 = vmatprep.mubr.bf16.mxu0 0
      %1002 = vmatmul.mubr.bf16.gmra.mrb[0].mxu0 %v915
      %v1003 = vpop.f32.mrb[0].mxu0
      %v1004 = vadd.f32 %v785, %v1003
      %v1005 = vpop.f32.mrb[0].mxu0
      %v1006 = vpop.f32.mrb[0].mxu0
      %v1007 = vadd.f32 %v788, %v1006
      %v1008 = vpop.f32.mrb[0].mxu0
      %1009 = vmatprep.mubr.bf16.mxu0 0
      %1010 = vmatmul.mubr.bf16.gmra.mrb[0].mxu0 %v917
      %v1011 = vpop.f32.mrb[0].mxu0
      %v1012 = vadd.f32 %v793, %v1011
      %v1013 = vpop.f32.mrb[0].mxu0
      %v1014 = vpop.f32.mrb[0].mxu0
      %v1015 = vadd.f32 %v796, %v1014
      %v1016 = vpop.f32.mrb[0].mxu0
      %1017 = vmatprep.mubr.bf16.mxu0 0
      %1018 = vmatmul.mubr.bf16.gmra.mrb[0].mxu0 %v919
      %v1019 = vpop.f32.mrb[0].mxu0
      %v1020 = vadd.f32 %v801, %v1019
      %v1021 = vpop.f32.mrb[0].mxu0
      %v1022 = vpop.f32.mrb[0].mxu0
      %v1023 = vadd.f32 %v804, %v1022
      %v1024 = vpop.f32.mrb[0].mxu0
      %1025 = vmatprep.mubr.bf16.mxu0 0
      %1026 = vmatmul.mubr.bf16.gmra.mrb[0].mxu0 %v921
      %v1027 = vpop.f32.mrb[0].mxu0
      %v1028 = vadd.f32 %v809, %v1027
      %v1029 = vpop.f32.mrb[0].mxu0
      %v1030 = vpop.f32.mrb[0].mxu0
      %v1031 = vadd.f32 %v812, %v1030
      %v1032 = vpop.f32.mrb[0].mxu0
      %1033 = vmatprep.mubr.bf16.mxu0 0
      %1034 = vmatmul.mubr.bf16.gmra.mrb[0].mxu0 %v923
      %v1035 = vpop.f32.mrb[0].mxu0
      %v1036 = vadd.f32 %v817, %v1035
      %v1037 = vpop.f32.mrb[0].mxu0
      %v1038 = vpop.f32.mrb[0].mxu0
      %v1039 = vadd.f32 %v820, %v1038
      %v1040 = vpop.f32.mrb[0].mxu0
      %1041 = vmatprep.mubr.bf16.mxu0 0
      %1042 = vmatmul.mubr.bf16.gmra.mrb[0].mxu0 %v925
      %v1043 = vpop.f32.mrb[0].mxu0
      %v1044 = vadd.f32 %v825, %v1043
      %v1045 = vpop.f32.mrb[0].mxu0
      %v1046 = vpop.f32.mrb[0].mxu0
      %v1047 = vadd.f32 %v828, %v1046
      %v1048 = vpop.f32.mrb[0].mxu0
      %1049 = vmatprep.mubr.bf16.mxu0 0
      %1050 = vmatmul.mubr.bf16.gmra.mrb[0].mxu0 %v927
      %v1051 = vpop.f32.mrb[0].mxu0
      %v1052 = vadd.f32 %v833, %v1051
      %v1053 = vpop.f32.mrb[0].mxu0
      %v1054 = vpop.f32.mrb[0].mxu0
      %v1055 = vadd.f32 %v836, %v1054
      %v1056 = vpop.f32.mrb[0].mxu0
      %1057 = vmatprep.mubr.bf16.mxu0 0
      %1058 = vmatmul.mubr.bf16.gmra.mrb[0].mxu0 %v929
      %v1059 = vpop.f32.mrb[0].mxu0
      %v1060 = vadd.f32 %v841, %v1059
      %v1061 = vpop.f32.mrb[0].mxu0
      %v1062 = vpop.f32.mrb[0].mxu0
      %v1063 = vadd.f32 %v844, %v1062
      %v1064 = vpop.f32.mrb[0].mxu0
      %1065 = vmatprep.mubr.bf16.mxu0 0
      %1066 = vmatmul.mubr.bf16.gmra.mrb[0].mxu0 %v931
      %v1067 = vpop.f32.mrb[0].mxu0
      %v1068 = vadd.f32 %v849, %v1067
      %v1069 = vpop.f32.mrb[0].mxu0
      %v1070 = vpop.f32.mrb[0].mxu0
      %v1071 = vadd.f32 %v852, %v1070
      %v1072 = vpop.f32.mrb[0].mxu0
      %1073 = vmatprep.mubr.bf16.mxu0 0
      %1074 = vmatmul.mubr.bf16.gmra.mrb[0].mxu0 %v933
      %v1075 = vpop.f32.mrb[0].mxu0
      %v1076 = vadd.f32 %v857, %v1075
      %v1077 = vpop.f32.mrb[0].mxu0
      %v1078 = vpop.f32.mrb[0].mxu0
      %v1079 = vadd.f32 %v860, %v1078
      %v1080 = vpop.f32.mrb[0].mxu0
      %1081 = vmatprep.mubr.bf16.mxu0 0
      %1082 = vmatmul.mubr.bf16.gmra.mrb[0].mxu0 %v935
      %v1083 = vpop.f32.mrb[0].mxu0
      %v1084 = vadd.f32 %v865, %v1083
      %v1085 = vpop.f32.mrb[0].mxu0
      %v1086 = vpop.f32.mrb[0].mxu0
      %v1087 = vadd.f32 %v868, %v1086
      %v1088 = vpop.f32.mrb[0].mxu0
      %1089 = vmatprep.mubr.bf16.mxu0 0
      %1090 = vmatmul.mubr.bf16.gmra.mrb[0].mxu0 %v937
      %v1091 = vpop.f32.mrb[0].mxu0
      %v1092 = vadd.f32 %v873, %v1091
      %v1093 = vpop.f32.mrb[0].mxu0
      %v1094 = vpop.f32.mrb[0].mxu0
      %v1095 = vadd.f32 %v876, %v1094
      %v1096 = vpop.f32.mrb[0].mxu0
      %1097 = vmatprep.mubr.bf16.mxu0 0
      %1098 = vmatmul.mubr.bf16.gmra.mrb[0].mxu0 %v939
      %v1099 = vpop.f32.mrb[0].mxu0
      %v1100 = vadd.f32 %v881, %v1099
      %v1101 = vpop.f32.mrb[0].mxu0
      %v1102 = vpop.f32.mrb[0].mxu0
      %v1103 = vadd.f32 %v884, %v1102
      %v1104 = vpop.f32.mrb[0].mxu0
      %1105 = vmatprep.mubr.bf16.mxu0 0
      %1106 = vmatmul.mubr.bf16.gmra.mrb[0].mxu0 %v941
      %v1107 = vpop.f32.mrb[0].mxu0
      %v1108 = vadd.f32 %v889, %v1107
      %v1109 = vpop.f32.mrb[0].mxu0
      %v1110 = vpop.f32.mrb[0].mxu0
      %v1111 = vadd.f32 %v892, %v1110
      %v1112 = vpop.f32.mrb[0].mxu0
      %1113 = vmatprep.mubr.bf16.mxu0 0
      %1114 = vmatmul.mubr.bf16.gmra.mrb[0].mxu0 %v943
      %v1115 = vpop.f32.mrb[0].mxu0
      %v1116 = vadd.f32 %v897, %v1115
      %v1117 = vpop.f32.mrb[0].mxu0
      %v1118 = vpop.f32.mrb[0].mxu0
      %v1119 = vadd.f32 %v900, %v1118
      %v1120 = vpop.f32.mrb[0].mxu0
      %1121 = vdwg.mxu0
      %v1122 = vld [vmem:[%s345] sm:$0xe]
      %v1123 = vld [vmem:[%s3 + $0x10] sm:$0xf]
      %v1124 = vld [vmem:[%s3 + $0x14] sm:$0xf]
      %v1126 = vunpack.c.l.b16 %v1122
      %v1127 = vpack.c.b16 %v461, %v1126
      %vm1128 = vcmask 1046528
      %v1129 = vrot.slane %v1127, 1
      %v1130 = vrot.slane %v498, 1
      %v1131 = vsel %vm1128, %v1129, %v1130
      %v1132 = vrot.slane %v499, 1
      %v1133 = vsel %vm1128, %v1130, %v1132
      %v1134 = vrot.slane %v500, 1
      %v1135 = vsel %vm1128, %v1132, %v1134
      %v1136 = vrot.slane %v501, 1
      %v1137 = vsel %vm1128, %v1134, %v1136
      %v1138 = vrot.slane %v502, 1
      %v1139 = vsel %vm1128, %v1136, %v1138
      %v1140 = vrot.slane %v503, 1
      %v1141 = vsel %vm1128, %v1138, %v1140
      %v1142 = vrot.slane %v504, 1
      %v1143 = vsel %vm1128, %v1140, %v1142
      %v1144 = vrot.slane %v505, 1
      %v1145 = vsel %vm1128, %v1142, %v1144
      %v1146 = vrot.slane %v506, 1
      %v1147 = vsel %vm1128, %v1144, %v1146
      %v1148 = vrot.slane %v507, 1
      %v1149 = vsel %vm1128, %v1146, %v1148
      %v1150 = vrot.slane %v508, 1
      %v1151 = vsel %vm1128, %v1148, %v1150
      %v1152 = vrot.slane %v509, 1
      %v1153 = vsel %vm1128, %v1150, %v1152
      %v1154 = vrot.slane %v510, 1
      %v1155 = vsel %vm1128, %v1152, %v1154
      %v1156 = vrot.slane %v511, 1
      %v1157 = vsel %vm1128, %v1154, %v1156
      %v1158 = vrot.slane %v512, 1
      %v1159 = vsel %vm1128, %v1156, %v1158
      %v1160 = vrot.slane %v513, 1
      %v1161 = vsel %vm1128, %v1158, %v1160
      %v1162 = vrot.slane %v514, 1
      %v1163 = vsel %vm1128, %v1160, %v1162
      %v1164 = vrot.slane %v515, 1
      %v1165 = vsel %vm1128, %v1162, %v1164
      %v1168 = vunpack.c.l.b16 %v1123
      %v1169 = vunpack.c.l.b16 %v1124
      %v1170 = vpack.c.b16 %v1169, %v1168
      %v1173 = vsel %vm671, %v1131, 0
      %v1176 = vsel %vm671, %v1133, 0
      %v1179 = vsel %vm671, %v1135, 0
      %v1182 = vsel %vm671, %v1137, 0
      %v1185 = vsel %vm671, %v1139, 0
      %v1188 = vsel %vm671, %v1141, 0
      %v1191 = vsel %vm671, %v1143, 0
      %v1194 = vsel %vm671, %v1145, 0
      %v1197 = vsel %vm671, %v1147, 0
      %v1200 = vsel %vm671, %v1149, 0
      %v1203 = vsel %vm671, %v1151, 0
      %v1206 = vsel %vm671, %v1153, 0
      %v1209 = vsel %vm671, %v1155, 0
      %v1212 = vsel %vm671, %v1157, 0
      %v1215 = vsel %vm671, %v1159, 0
      %v1218 = vsel %vm671, %v1161, 0
      %v1221 = vsel %vm671, %v1163, 0
      %v1224 = vsel %vm671, %v1165, 0
      %1226 = vmatprep.subr.bf16.mxu0 0
      %1227 = vmatpush1.bf16.msra.mxu0 %v1170
      %1228 = vmatprep.subr.bf16.mxu0 0
      %1229 = vmatpush1.bf16.msra.mxu0 0
      %1230 = vmatprep.subr.bf16.mxu0 0
      %1231 = vmatpush1.bf16.msra.mxu0 0
      %1232 = vmatprep.subr.bf16.mxu0 0
      %1233 = vmatpush1.bf16.msra.mxu0 0
      %1234 = vmatprep.subr.bf16.mxu0 0
      %1235 = vmatpush1.bf16.msra.mxu0 0
      %1236 = vmatprep.subr.bf16.mxu0 0
      %1237 = vmatpush1.bf16.msra.mxu0 0
      %1238 = vmatprep.subr.bf16.mxu0 0
      %1239 = vmatpush1.bf16.msra.mxu0 0
      %1240 = vmatprep.subr.bf16.mxu0 0
      %1241 = vmatpush1.bf16.msra.mxu0 0
      %1242 = vmatprep.subr.bf16.mxu0 0
      %1243 = vmatpush1.bf16.msra.mxu0 0
      %1244 = vmatprep.subr.bf16.mxu0 0
      %1245 = vmatpush1.bf16.msra.mxu0 0
      %1246 = vmatprep.subr.bf16.mxu0 0
      %1247 = vmatpush1.bf16.msra.mxu0 0
      %1248 = vmatprep.subr.bf16.mxu0 0
      %1249 = vmatpush1.bf16.msra.mxu0 0
      %1250 = vmatprep.subr.bf16.mxu0 0
      %1251 = vmatpush1.bf16.msra.mxu0 0
      %1252 = vmatprep.subr.bf16.mxu0 0
      %1253 = vmatpush1.bf16.msra.mxu0 0
      %1254 = vmatprep.subr.bf16.mxu0 0
      %1255 = vmatpush1.bf16.msra.mxu0 0
      %1256 = vmatprep.subr.bf16.mxu0 0
      %1257 = vmatpush1.bf16.msra.mxu0 0
      %1258 = vmatprep.mubr.bf16.mxu0 0
      %1259 = vmatmul.mubr.bf16.gmra.mrb[0].mxu0 %v1173
      %v1260 = vpop.f32.mrb[0].mxu0
      %v1261 = vadd.f32 0.0, %v1260
      %v1262 = vpop.f32.mrb[0].mxu0
      %v1263 = vpop.f32.mrb[0].mxu0
      %v1264 = vadd.f32 0.0, %v1263
      %v1265 = vpop.f32.mrb[0].mxu0
      %1266 = vmatprep.mubr.bf16.mxu0 0
      %1267 = vmatmul.mubr.bf16.gmra.mrb[0].mxu0 %v1176
      %v1268 = vpop.f32.mrb[0].mxu0
      %v1269 = vadd.f32 0.0, %v1268
      %v1270 = vpop.f32.mrb[0].mxu0
      %v1271 = vpop.f32.mrb[0].mxu0
      %v1272 = vadd.f32 0.0, %v1271
      %v1273 = vpop.f32.mrb[0].mxu0
      %1274 = vmatprep.mubr.bf16.mxu0 0
      %1275 = vmatmul.mubr.bf16.gmra.mrb[0].mxu0 %v1179
      %v1276 = vpop.f32.mrb[0].mxu0
      %v1277 = vadd.f32 0.0, %v1276
      %v1278 = vpop.f32.mrb[0].mxu0
      %v1279 = vpop.f32.mrb[0].mxu0
      %v1280 = vadd.f32 0.0, %v1279
      %v1281 = vpop.f32.mrb[0].mxu0
      %1282 = vmatprep.mubr.bf16.mxu0 0
      %1283 = vmatmul.mubr.bf16.gmra.mrb[0].mxu0 %v1182
      %v1284 = vpop.f32.mrb[0].mxu0
      %v1285 = vadd.f32 0.0, %v1284
      %v1286 = vpop.f32.mrb[0].mxu0
      %v1287 = vpop.f32.mrb[0].mxu0
      %v1288 = vadd.f32 0.0, %v1287
      %v1289 = vpop.f32.mrb[0].mxu0
      %1290 = vmatprep.mubr.bf16.mxu0 0
      %1291 = vmatmul.mubr.bf16.gmra.mrb[0].mxu0 %v1185
      %v1292 = vpop.f32.mrb[0].mxu0
      %v1293 = vadd.f32 0.0, %v1292
      %v1294 = vpop.f32.mrb[0].mxu0
      %v1295 = vpop.f32.mrb[0].mxu0
      %v1296 = vadd.f32 0.0, %v1295
      %v1297 = vpop.f32.mrb[0].mxu0
      %1298 = vmatprep.mubr.bf16.mxu0 0
      %1299 = vmatmul.mubr.bf16.gmra.mrb[0].mxu0 %v1188
      %v1300 = vpop.f32.mrb[0].mxu0
      %v1301 = vadd.f32 0.0, %v1300
      %v1302 = vpop.f32.mrb[0].mxu0
      %v1303 = vpop.f32.mrb[0].mxu0
      %v1304 = vadd.f32 0.0, %v1303
      %v1305 = vpop.f32.mrb[0].mxu0
      %1306 = vmatprep.mubr.bf16.mxu0 0
      %1307 = vmatmul.mubr.bf16.gmra.mrb[0].mxu0 %v1191
      %v1308 = vpop.f32.mrb[0].mxu0
      %v1309 = vadd.f32 0.0, %v1308
      %v1310 = vpop.f32.mrb[0].mxu0
      %v1311 = vpop.f32.mrb[0].mxu0
      %v1312 = vadd.f32 0.0, %v1311
      %v1313 = vpop.f32.mrb[0].mxu0
      %1314 = vmatprep.mubr.bf16.mxu0 0
      %1315 = vmatmul.mubr.bf16.gmra.mrb[0].mxu0 %v1194
      %v1316 = vpop.f32.mrb[0].mxu0
      %v1317 = vadd.f32 0.0, %v1316
      %v1318 = vpop.f32.mrb[0].mxu0
      %v1319 = vpop.f32.mrb[0].mxu0
      %v1320 = vadd.f32 0.0, %v1319
      %v1321 = vpop.f32.mrb[0].mxu0
      %1322 = vmatprep.mubr.bf16.mxu0 0
      %1323 = vmatmul.mubr.bf16.gmra.mrb[0].mxu0 %v1197
      %v1324 = vpop.f32.mrb[0].mxu0
      %v1325 = vadd.f32 0.0, %v1324
      %v1326 = vpop.f32.mrb[0].mxu0
      %v1327 = vpop.f32.mrb[0].mxu0
      %v1328 = vadd.f32 0.0, %v1327
      %v1329 = vpop.f32.mrb[0].mxu0
      %1330 = vmatprep.mubr.bf16.mxu0 0
      %1331 = vmatmul.mubr.bf16.gmra.mrb[0].mxu0 %v1200
      %v1332 = vpop.f32.mrb[0].mxu0
      %v1333 = vadd.f32 0.0, %v1332
      %v1334 = vpop.f32.mrb[0].mxu0
      %v1335 = vpop.f32.mrb[0].mxu0
      %v1336 = vadd.f32 0.0, %v1335
      %v1337 = vpop.f32.mrb[0].mxu0
      %1338 = vmatprep.mubr.bf16.mxu0 0
      %1339 = vmatmul.mubr.bf16.gmra.mrb[0].mxu0 %v1203
      %v1340 = vpop.f32.mrb[0].mxu0
      %v1341 = vadd.f32 0.0, %v1340
      %v1342 = vpop.f32.mrb[0].mxu0
      %v1343 = vpop.f32.mrb[0].mxu0
      %v1344 = vadd.f32 0.0, %v1343
      %v1345 = vpop.f32.mrb[0].mxu0
      %1346 = vmatprep.mubr.bf16.mxu0 0
      %1347 = vmatmul.mubr.bf16.gmra.mrb[0].mxu0 %v1206
      %v1348 = vpop.f32.mrb[0].mxu0
      %v1349 = vadd.f32 0.0, %v1348
      %v1350 = vpop.f32.mrb[0].mxu0
      %v1351 = vpop.f32.mrb[0].mxu0
      %v1352 = vadd.f32 0.0, %v1351
      %v1353 = vpop.f32.mrb[0].mxu0
      %1354 = vmatprep.mubr.bf16.mxu0 0
      %1355 = vmatmul.mubr.bf16.gmra.mrb[0].mxu0 %v1209
      %v1356 = vpop.f32.mrb[0].mxu0
      %v1357 = vadd.f32 0.0, %v1356
      %v1358 = vpop.f32.mrb[0].mxu0
      %v1359 = vpop.f32.mrb[0].mxu0
      %v1360 = vadd.f32 0.0, %v1359
      %v1361 = vpop.f32.mrb[0].mxu0
      %1362 = vmatprep.mubr.bf16.mxu0 0
      %1363 = vmatmul.mubr.bf16.gmra.mrb[0].mxu0 %v1212
      %v1364 = vpop.f32.mrb[0].mxu0
      %v1365 = vadd.f32 0.0, %v1364
      %v1366 = vpop.f32.mrb[0].mxu0
      %v1367 = vpop.f32.mrb[0].mxu0
      %v1368 = vadd.f32 0.0, %v1367
      %v1369 = vpop.f32.mrb[0].mxu0
      %1370 = vmatprep.mubr.bf16.mxu0 0
      %1371 = vmatmul.mubr.bf16.gmra.mrb[0].mxu0 %v1215
      %v1372 = vpop.f32.mrb[0].mxu0
      %v1373 = vadd.f32 0.0, %v1372
      %v1374 = vpop.f32.mrb[0].mxu0
      %v1375 = vpop.f32.mrb[0].mxu0
      %v1376 = vadd.f32 0.0, %v1375
      %v1377 = vpop.f32.mrb[0].mxu0
      %1378 = vmatprep.mubr.bf16.mxu0 0
      %1379 = vmatmul.mubr.bf16.gmra.mrb[0].mxu0 %v1218
      %v1380 = vpop.f32.mrb[0].mxu0
      %v1381 = vadd.f32 0.0, %v1380
      %v1382 = vpop.f32.mrb[0].mxu0
      %v1383 = vpop.f32.mrb[0].mxu0
      %v1384 = vadd.f32 0.0, %v1383
      %v1385 = vpop.f32.mrb[0].mxu0
      %1386 = vmatprep.mubr.bf16.mxu0 0
      %1387 = vmatmul.mubr.bf16.gmra.mrb[0].mxu0 %v1221
      %v1388 = vpop.f32.mrb[0].mxu0
      %v1389 = vadd.f32 0.0, %v1388
      %v1390 = vpop.f32.mrb[0].mxu0
      %v1391 = vpop.f32.mrb[0].mxu0
      %v1392 = vadd.f32 0.0, %v1391
      %v1393 = vpop.f32.mrb[0].mxu0
      %1394 = vmatprep.mubr.bf16.mxu0 0
      %1395 = vmatmul.mubr.bf16.gmra.mrb[0].mxu0 %v1224
      %v1396 = vpop.f32.mrb[0].mxu0
      %v1397 = vadd.f32 0.0, %v1396
      %v1398 = vpop.f32.mrb[0].mxu0
      %v1399 = vpop.f32.mrb[0].mxu0
      %v1400 = vadd.f32 0.0, %v1399
      %v1401 = vpop.f32.mrb[0].mxu0
      %1402 = vdwg.mxu0
      %v1403 = vadd.f32 %v980, %v1261
      %v1404 = vadd.f32 %v983, %v1264
      %v1405 = vadd.f32 %v988, %v1269
      %v1406 = vadd.f32 %v991, %v1272
      %v1407 = vadd.f32 %v996, %v1277
      %v1408 = vadd.f32 %v999, %v1280
      %v1409 = vadd.f32 %v1004, %v1285
      %v1410 = vadd.f32 %v1007, %v1288
      %v1411 = vadd.f32 %v1012, %v1293
      %v1412 = vadd.f32 %v1015, %v1296
      %v1413 = vadd.f32 %v1020, %v1301
      %v1414 = vadd.f32 %v1023, %v1304
      %v1415 = vadd.f32 %v1028, %v1309
      %v1416 = vadd.f32 %v1031, %v1312
      %v1417 = vadd.f32 %v1036, %v1317
      %v1418 = vadd.f32 %v1039, %v1320
      %v1419 = vadd.f32 %v1044, %v1325
      %v1420 = vadd.f32 %v1047, %v1328
      %v1421 = vadd.f32 %v1052, %v1333
      %v1422 = vadd.f32 %v1055, %v1336
      %v1423 = vadd.f32 %v1060, %v1341
      %v1424 = vadd.f32 %v1063, %v1344
      %v1425 = vadd.f32 %v1068, %v1349
      %v1426 = vadd.f32 %v1071, %v1352
      %v1427 = vadd.f32 %v1076, %v1357
      %v1428 = vadd.f32 %v1079, %v1360
      %v1429 = vadd.f32 %v1084, %v1365
      %v1430 = vadd.f32 %v1087, %v1368
      %v1431 = vadd.f32 %v1092, %v1373
      %v1432 = vadd.f32 %v1095, %v1376
      %v1433 = vadd.f32 %v1100, %v1381
      %v1434 = vadd.f32 %v1103, %v1384
      %v1435 = vadd.f32 %v1108, %v1389
      %v1436 = vadd.f32 %v1111, %v1392
      %v1437 = vadd.f32 %v1116, %v1397
      %v1438 = vadd.f32 %v1119, %v1400
      %v1439 = vld [vmem:[%s345 + $0x8] sm:$0xe]
      %v1440 = vld [vmem:[%s345 + $0xc] sm:$0xf]
      %v1441 = vld [vmem:[%s345 + $0x10] sm:$0xf]
      %v1442 = vld [vmem:[%s345 + $0x14] sm:$0xf]
      %v1443 = vld [vmem:[%s345 + $0x18] sm:$0xf]
      %v1444 = vld [vmem:[%s345 + $0x1c] sm:$0xf]
      %v1445 = vld [vmem:[%s345 + $0x20] sm:$0xf]
      %v1446 = vld [vmem:[%s345 + $0x24] sm:$0xf]
      %v1447 = vld [vmem:[%s345 + $0x28] sm:$0xf]
      %v1448 = vld [vmem:[%s345 + $0x2c] sm:$0xf]
      %v1449 = vld [vmem:[%s345 + $0x30] sm:$0xf]
      %v1450 = vld [vmem:[%s345 + $0x34] sm:$0xf]
      %v1451 = vld [vmem:[%s345 + $0x38] sm:$0xf]
      %v1452 = vld [vmem:[%s345 + $0x3c] sm:$0xf]
      %v1453 = vld [vmem:[%s345 + $0x40] sm:$0xf]
      %v1454 = vld [vmem:[%s345 + $0x44] sm:$0xf]
      %v1455 = vld [vmem:[%s345 + $0x48] sm:$0xf]
      %v1456 = vld [vmem:[%s345 + $0x4c] sm:$0xf]
      %v1457 = vld [vmem:[%s345 + $0x50] sm:$0xf]
      %v1458 = vld [vmem:[%s345 + $0x54] sm:$0xf]
      %v1459 = vld [vmem:[%s345 + $0x58] sm:$0xf]
      %v1460 = vld [vmem:[%s345 + $0x5c] sm:$0xf]
      %v1461 = vld [vmem:[%s345 + $0x60] sm:$0xf]
      %v1462 = vld [vmem:[%s345 + $0x64] sm:$0xf]
      %v1463 = vld [vmem:[%s345 + $0x68] sm:$0xf]
      %v1464 = vld [vmem:[%s345 + $0x6c] sm:$0xf]
      %v1465 = vld [vmem:[%s345 + $0x70] sm:$0xf]
      %v1466 = vld [vmem:[%s345 + $0x74] sm:$0xf]
      %v1467 = vld [vmem:[%s345 + $0x78] sm:$0xf]
      %v1468 = vld [vmem:[%s345 + $0x7c] sm:$0xf]
      %v1469 = vld [vmem:[%s345 + $0x80] sm:$0xf]
      %v1470 = vld [vmem:[%s345 + $0x84] sm:$0xf]
      %v1471 = vld [vmem:[%s345 + $0x88] sm:$0xf]
      %v1472 = vld [vmem:[%s345 + $0x8c] sm:$0xf]
      %v1473 = vld [vmem:[%s345 + $0x90] sm:$0xf]
      %v1474 = vld [vmem:[%s345 + $0x94] sm:$0xf]
      %v1475 = vld [vmem:[%s345 + $0x98] sm:$0x1]
      %v1476 = vld [vmem:[%s3 + $0x18] sm:$0xf]
      %v1477 = vld [vmem:[%s3 + $0x1c] sm:$0xf]
      %v1515 = vunpack.c.l.b16 %v1439
      %v1516 = vunpack.c.l.b16 %v1440
      %v1517 = vunpack.c.l.b16 %v1441
      %v1518 = vunpack.c.l.b16 %v1442
      %v1519 = vunpack.c.l.b16 %v1443
      %v1520 = vunpack.c.l.b16 %v1444
      %v1521 = vunpack.c.l.b16 %v1445
      %v1522 = vunpack.c.l.b16 %v1446
      %v1523 = vunpack.c.l.b16 %v1447
      %v1524 = vunpack.c.l.b16 %v1448
      %v1525 = vunpack.c.l.b16 %v1449
      %v1526 = vunpack.c.l.b16 %v1450
      %v1527 = vunpack.c.l.b16 %v1451
      %v1528 = vunpack.c.l.b16 %v1452
      %v1529 = vunpack.c.l.b16 %v1453
      %v1530 = vunpack.c.l.b16 %v1454
      %v1531 = vunpack.c.l.b16 %v1455
      %v1532 = vunpack.c.l.b16 %v1456
      %v1533 = vunpack.c.l.b16 %v1457
      %v1534 = vunpack.c.l.b16 %v1458
      %v1535 = vunpack.c.l.b16 %v1459
      %v1536 = vunpack.c.l.b16 %v1460
      %v1537 = vunpack.c.l.b16 %v1461
      %v1538 = vunpack.c.l.b16 %v1462
      %v1539 = vunpack.c.l.b16 %v1463
      %v1540 = vunpack.c.l.b16 %v1464
      %v1541 = vunpack.c.l.b16 %v1465
      %v1542 = vunpack.c.l.b16 %v1466
      %v1543 = vunpack.c.l.b16 %v1467
      %v1544 = vunpack.c.l.b16 %v1468
      %v1545 = vunpack.c.l.b16 %v1469
      %v1546 = vunpack.c.l.b16 %v1470
      %v1547 = vunpack.c.l.b16 %v1471
      %v1548 = vunpack.c.l.b16 %v1472
      %v1549 = vunpack.c.l.b16 %v1473
      %v1550 = vunpack.c.l.b16 %v1474
      %v1551 = vunpack.c.l.b16 %v1475
      %v1552 = vpack.c.b16 %v1516, %v1515
      %v1553 = vpack.c.b16 %v1518, %v1517
      %v1554 = vpack.c.b16 %v1520, %v1519
      %v1555 = vpack.c.b16 %v1522, %v1521
      %v1556 = vpack.c.b16 %v1524, %v1523
      %v1557 = vpack.c.b16 %v1526, %v1525
      %v1558 = vpack.c.b16 %v1528, %v1527
      %v1559 = vpack.c.b16 %v1530, %v1529
      %v1560 = vpack.c.b16 %v1532, %v1531
      %v1561 = vpack.c.b16 %v1534, %v1533
      %v1562 = vpack.c.b16 %v1536, %v1535
      %v1563 = vpack.c.b16 %v1538, %v1537
      %v1564 = vpack.c.b16 %v1540, %v1539
      %v1565 = vpack.c.b16 %v1542, %v1541
      %v1566 = vpack.c.b16 %v1544, %v1543
      %v1567 = vpack.c.b16 %v1546, %v1545
      %v1568 = vpack.c.b16 %v1548, %v1547
      %v1569 = vpack.c.b16 %v1550, %v1549
      %v1570 = vpack.c.b16 %v1551, %v1551
      %v1571 = vrot.slane %v1552, 1
      %v1572 = vrot.slane %v1553, 1
      %v1573 = vsel %vm1128, %v1571, %v1572
      %v1574 = vrot.slane %v1554, 1
      %v1575 = vsel %vm1128, %v1572, %v1574
      %v1576 = vrot.slane %v1555, 1
      %v1577 = vsel %vm1128, %v1574, %v1576
      %v1578 = vrot.slane %v1556, 1
      %v1579 = vsel %vm1128, %v1576, %v1578
      %v1580 = vrot.slane %v1557, 1
      %v1581 = vsel %vm1128, %v1578, %v1580
      %v1582 = vrot.slane %v1558, 1
      %v1583 = vsel %vm1128, %v1580, %v1582
      %v1584 = vrot.slane %v1559, 1
      %v1585 = vsel %vm1128, %v1582, %v1584
      %v1586 = vrot.slane %v1560, 1
      %v1587 = vsel %vm1128, %v1584, %v1586
      %v1588 = vrot.slane %v1561, 1
      %v1589 = vsel %vm1128, %v1586, %v1588
      %v1590 = vrot.slane %v1562, 1
      %v1591 = vsel %vm1128, %v1588, %v1590
      %v1592 = vrot.slane %v1563, 1
      %v1593 = vsel %vm1128, %v1590, %v1592
      %v1594 = vrot.slane %v1564, 1
      %v1595 = vsel %vm1128, %v1592, %v1594
      %v1596 = vrot.slane %v1565, 1
      %v1597 = vsel %vm1128, %v1594, %v1596
      %v1598 = vrot.slane %v1566, 1
      %v1599 = vsel %vm1128, %v1596, %v1598
      %v1600 = vrot.slane %v1567, 1
      %v1601 = vsel %vm1128, %v1598, %v1600
      %v1602 = vrot.slane %v1568, 1
      %v1603 = vsel %vm1128, %v1600, %v1602
      %v1604 = vrot.slane %v1569, 1
      %v1605 = vsel %vm1128, %v1602, %v1604
      %v1606 = vrot.slane %v1570, 1
      %v1607 = vsel %vm1128, %v1604, %v1606
      %v1610 = vunpack.c.l.b16 %v1476
      %v1611 = vunpack.c.l.b16 %v1477
      %v1612 = vpack.c.b16 %v1611, %v1610
      %v1615 = vsel %vm671, %v1573, 0
      %v1618 = vsel %vm671, %v1575, 0
      %v1621 = vsel %vm671, %v1577, 0
      %v1624 = vsel %vm671, %v1579, 0
      %v1627 = vsel %vm671, %v1581, 0
      %v1630 = vsel %vm671, %v1583, 0
      %v1633 = vsel %vm671, %v1585, 0
      %v1636 = vsel %vm671, %v1587, 0
      %v1639 = vsel %vm671, %v1589, 0
      %v1642 = vsel %vm671, %v1591, 0
      %v1645 = vsel %vm671, %v1593, 0
      %v1648 = vsel %vm671, %v1595, 0
      %v1651 = vsel %vm671, %v1597, 0
      %v1654 = vsel %vm671, %v1599, 0
      %v1657 = vsel %vm671, %v1601, 0
      %v1660 = vsel %vm671, %v1603, 0
      %v1663 = vsel %vm671, %v1605, 0
      %v1666 = vsel %vm671, %v1607, 0
      %1668 = vmatprep.subr.bf16.mxu0 0
      %1669 = vmatpush1.bf16.msra.mxu0 %v1612
      %1670 = vmatprep.subr.bf16.mxu0 0
      %1671 = vmatpush1.bf16.msra.mxu0 0
      %1672 = vmatprep.subr.bf16.mxu0 0
      %1673 = vmatpush1.bf16.msra.mxu0 0
      %1674 = vmatprep.subr.bf16.mxu0 0
      %1675 = vmatpush1.bf16.msra.mxu0 0
      %1676 = vmatprep.subr.bf16.mxu0 0
      %1677 = vmatpush1.bf16.msra.mxu0 0
      %1678 = vmatprep.subr.bf16.mxu0 0
      %1679 = vmatpush1.bf16.msra.mxu0 0
      %1680 = vmatprep.subr.bf16.mxu0 0
      %1681 = vmatpush1.bf16.msra.mxu0 0
      %1682 = vmatprep.subr.bf16.mxu0 0
      %1683 = vmatpush1.bf16.msra.mxu0 0
      %1684 = vmatprep.subr.bf16.mxu0 0
      %1685 = vmatpush1.bf16.msra.mxu0 0
      %1686 = vmatprep.subr.bf16.mxu0 0
      %1687 = vmatpush1.bf16.msra.mxu0 0
      %1688 = vmatprep.subr.bf16.mxu0 0
      %1689 = vmatpush1.bf16.msra.mxu0 0
      %1690 = vmatprep.subr.bf16.mxu0 0
      %1691 = vmatpush1.bf16.msra.mxu0 0
      %1692 = vmatprep.subr.bf16.mxu0 0
      %1693 = vmatpush1.bf16.msra.mxu0 0
      %1694 = vmatprep.subr.bf16.mxu0 0
      %1695 = vmatpush1.bf16.msra.mxu0 0
      %1696 = vmatprep.subr.bf16.mxu0 0
      %1697 = vmatpush1.bf16.msra.mxu0 0
      %1698 = vmatprep.subr.bf16.mxu0 0
      %1699 = vmatpush1.bf16.msra.mxu0 0
      %1700 = vmatprep.mubr.bf16.mxu0 0
      %1701 = vmatmul.mubr.bf16.gmra.mrb[0].mxu0 %v1615
      %v1702 = vpop.f32.mrb[0].mxu0
      %v1703 = vadd.f32 0.0, %v1702
      %v1704 = vpop.f32.mrb[0].mxu0
      %v1705 = vpop.f32.mrb[0].mxu0
      %v1706 = vadd.f32 0.0, %v1705
      %v1707 = vpop.f32.mrb[0].mxu0
      %1708 = vmatprep.mubr.bf16.mxu0 0
      %1709 = vmatmul.mubr.bf16.gmra.mrb[0].mxu0 %v1618
      %v1710 = vpop.f32.mrb[0].mxu0
      %v1711 = vadd.f32 0.0, %v1710
      %v1712 = vpop.f32.mrb[0].mxu0
      %v1713 = vpop.f32.mrb[0].mxu0
      %v1714 = vadd.f32 0.0, %v1713
      %v1715 = vpop.f32.mrb[0].mxu0
      %1716 = vmatprep.mubr.bf16.mxu0 0
      %1717 = vmatmul.mubr.bf16.gmra.mrb[0].mxu0 %v1621
      %v1718 = vpop.f32.mrb[0].mxu0
      %v1719 = vadd.f32 0.0, %v1718
      %v1720 = vpop.f32.mrb[0].mxu0
      %v1721 = vpop.f32.mrb[0].mxu0
      %v1722 = vadd.f32 0.0, %v1721
      %v1723 = vpop.f32.mrb[0].mxu0
      %1724 = vmatprep.mubr.bf16.mxu0 0
      %1725 = vmatmul.mubr.bf16.gmra.mrb[0].mxu0 %v1624
      %v1726 = vpop.f32.mrb[0].mxu0
      %v1727 = vadd.f32 0.0, %v1726
      %v1728 = vpop.f32.mrb[0].mxu0
      %v1729 = vpop.f32.mrb[0].mxu0
      %v1730 = vadd.f32 0.0, %v1729
      %v1731 = vpop.f32.mrb[0].mxu0
      %1732 = vmatprep.mubr.bf16.mxu0 0
      %1733 = vmatmul.mubr.bf16.gmra.mrb[0].mxu0 %v1627
      %v1734 = vpop.f32.mrb[0].mxu0
      %v1735 = vadd.f32 0.0, %v1734
      %v1736 = vpop.f32.mrb[0].mxu0
      %v1737 = vpop.f32.mrb[0].mxu0
      %v1738 = vadd.f32 0.0, %v1737
      %v1739 = vpop.f32.mrb[0].mxu0
      %1740 = vmatprep.mubr.bf16.mxu0 0
      %1741 = vmatmul.mubr.bf16.gmra.mrb[0].mxu0 %v1630
      %v1742 = vpop.f32.mrb[0].mxu0
      %v1743 = vadd.f32 0.0, %v1742
      %v1744 = vpop.f32.mrb[0].mxu0
      %v1745 = vpop.f32.mrb[0].mxu0
      %v1746 = vadd.f32 0.0, %v1745
      %v1747 = vpop.f32.mrb[0].mxu0
      %1748 = vmatprep.mubr.bf16.mxu0 0
      %1749 = vmatmul.mubr.bf16.gmra.mrb[0].mxu0 %v1633
      %v1750 = vpop.f32.mrb[0].mxu0
      %v1751 = vadd.f32 0.0, %v1750
      %v1752 = vpop.f32.mrb[0].mxu0
      %v1753 = vpop.f32.mrb[0].mxu0
      %v1754 = vadd.f32 0.0, %v1753
      %v1755 = vpop.f32.mrb[0].mxu0
      %1756 = vmatprep.mubr.bf16.mxu0 0
      %1757 = vmatmul.mubr.bf16.gmra.mrb[0].mxu0 %v1636
      %v1758 = vpop.f32.mrb[0].mxu0
      %v1759 = vadd.f32 0.0, %v1758
      %v1760 = vpop.f32.mrb[0].mxu0
      %v1761 = vpop.f32.mrb[0].mxu0
      %v1762 = vadd.f32 0.0, %v1761
      %v1763 = vpop.f32.mrb[0].mxu0
      %1764 = vmatprep.mubr.bf16.mxu0 0
      %1765 = vmatmul.mubr.bf16.gmra.mrb[0].mxu0 %v1639
      %v1766 = vpop.f32.mrb[0].mxu0
      %v1767 = vadd.f32 0.0, %v1766
      %v1768 = vpop.f32.mrb[0].mxu0
      %v1769 = vpop.f32.mrb[0].mxu0
      %v1770 = vadd.f32 0.0, %v1769
      %v1771 = vpop.f32.mrb[0].mxu0
      %1772 = vmatprep.mubr.bf16.mxu0 0
      %1773 = vmatmul.mubr.bf16.gmra.mrb[0].mxu0 %v1642
      %v1774 = vpop.f32.mrb[0].mxu0
      %v1775 = vadd.f32 0.0, %v1774
      %v1776 = vpop.f32.mrb[0].mxu0
      %v1777 = vpop.f32.mrb[0].mxu0
      %v1778 = vadd.f32 0.0, %v1777
      %v1779 = vpop.f32.mrb[0].mxu0
      %1780 = vmatprep.mubr.bf16.mxu0 0
      %1781 = vmatmul.mubr.bf16.gmra.mrb[0].mxu0 %v1645
      %v1782 = vpop.f32.mrb[0].mxu0
      %v1783 = vadd.f32 0.0, %v1782
      %v1784 = vpop.f32.mrb[0].mxu0
      %v1785 = vpop.f32.mrb[0].mxu0
      %v1786 = vadd.f32 0.0, %v1785
      %v1787 = vpop.f32.mrb[0].mxu0
      %1788 = vmatprep.mubr.bf16.mxu0 0
      %1789 = vmatmul.mubr.bf16.gmra.mrb[0].mxu0 %v1648
      %v1790 = vpop.f32.mrb[0].mxu0
      %v1791 = vadd.f32 0.0, %v1790
      %v1792 = vpop.f32.mrb[0].mxu0
      %v1793 = vpop.f32.mrb[0].mxu0
      %v1794 = vadd.f32 0.0, %v1793
      %v1795 = vpop.f32.mrb[0].mxu0
      %1796 = vmatprep.mubr.bf16.mxu0 0
      %1797 = vmatmul.mubr.bf16.gmra.mrb[0].mxu0 %v1651
      %v1798 = vpop.f32.mrb[0].mxu0
      %v1799 = vadd.f32 0.0, %v1798
      %v1800 = vpop.f32.mrb[0].mxu0
      %v1801 = vpop.f32.mrb[0].mxu0
      %v1802 = vadd.f32 0.0, %v1801
      %v1803 = vpop.f32.mrb[0].mxu0
      %1804 = vmatprep.mubr.bf16.mxu0 0
      %1805 = vmatmul.mubr.bf16.gmra.mrb[0].mxu0 %v1654
      %v1806 = vpop.f32.mrb[0].mxu0
      %v1807 = vadd.f32 0.0, %v1806
      %v1808 = vpop.f32.mrb[0].mxu0
      %v1809 = vpop.f32.mrb[0].mxu0
      %v1810 = vadd.f32 0.0, %v1809
      %v1811 = vpop.f32.mrb[0].mxu0
      %1812 = vmatprep.mubr.bf16.mxu0 0
      %1813 = vmatmul.mubr.bf16.gmra.mrb[0].mxu0 %v1657
      %v1814 = vpop.f32.mrb[0].mxu0
      %v1815 = vadd.f32 0.0, %v1814
      %v1816 = vpop.f32.mrb[0].mxu0
      %v1817 = vpop.f32.mrb[0].mxu0
      %v1818 = vadd.f32 0.0, %v1817
      %v1819 = vpop.f32.mrb[0].mxu0
      %1820 = vmatprep.mubr.bf16.mxu0 0
      %1821 = vmatmul.mubr.bf16.gmra.mrb[0].mxu0 %v1660
      %v1822 = vpop.f32.mrb[0].mxu0
      %v1823 = vadd.f32 0.0, %v1822
      %v1824 = vpop.f32.mrb[0].mxu0
      %v1825 = vpop.f32.mrb[0].mxu0
      %v1826 = vadd.f32 0.0, %v1825
      %v1827 = vpop.f32.mrb[0].mxu0
      %1828 = vmatprep.mubr.bf16.mxu0 0
      %1829 = vmatmul.mubr.bf16.gmra.mrb[0].mxu0 %v1663
      %v1830 = vpop.f32.mrb[0].mxu0
      %v1831 = vadd.f32 0.0, %v1830
      %v1832 = vpop.f32.mrb[0].mxu0
      %v1833 = vpop.f32.mrb[0].mxu0
      %v1834 = vadd.f32 0.0, %v1833
      %v1835 = vpop.f32.mrb[0].mxu0
      %1836 = vmatprep.mubr.bf16.mxu0 0
      %1837 = vmatmul.mubr.bf16.gmra.mrb[0].mxu0 %v1666
      %v1838 = vpop.f32.mrb[0].mxu0
      %v1839 = vadd.f32 0.0, %v1838
      %v1840 = vpop.f32.mrb[0].mxu0
      %v1841 = vpop.f32.mrb[0].mxu0
      %v1842 = vadd.f32 0.0, %v1841
      %v1843 = vpop.f32.mrb[0].mxu0
      %1844 = vdwg.mxu0
      %v1845 = vadd.f32 %v1403, %v1703
      %v1846 = vadd.f32 %v1404, %v1706
      %v1847 = vadd.f32 %v1405, %v1711
      %v1848 = vadd.f32 %v1406, %v1714
      %v1849 = vadd.f32 %v1407, %v1719
      %v1850 = vadd.f32 %v1408, %v1722
      %v1851 = vadd.f32 %v1409, %v1727
      %v1852 = vadd.f32 %v1410, %v1730
      %v1853 = vadd.f32 %v1411, %v1735
      %v1854 = vadd.f32 %v1412, %v1738
      %v1855 = vadd.f32 %v1413, %v1743
      %v1856 = vadd.f32 %v1414, %v1746
      %v1857 = vadd.f32 %v1415, %v1751
      %v1858 = vadd.f32 %v1416, %v1754
      %v1859 = vadd.f32 %v1417, %v1759
      %v1860 = vadd.f32 %v1418, %v1762
      %v1861 = vadd.f32 %v1419, %v1767
      %v1862 = vadd.f32 %v1420, %v1770
      %v1863 = vadd.f32 %v1421, %v1775
      %v1864 = vadd.f32 %v1422, %v1778
      %v1865 = vadd.f32 %v1423, %v1783
      %v1866 = vadd.f32 %v1424, %v1786
      %v1867 = vadd.f32 %v1425, %v1791
      %v1868 = vadd.f32 %v1426, %v1794
      %v1869 = vadd.f32 %v1427, %v1799
      %v1870 = vadd.f32 %v1428, %v1802
      %v1871 = vadd.f32 %v1429, %v1807
      %v1872 = vadd.f32 %v1430, %v1810
      %v1873 = vadd.f32 %v1431, %v1815
      %v1874 = vadd.f32 %v1432, %v1818
      %v1875 = vadd.f32 %v1433, %v1823
      %v1876 = vadd.f32 %v1434, %v1826
      %v1877 = vadd.f32 %v1435, %v1831
      %v1878 = vadd.f32 %v1436, %v1834
      %v1879 = vadd.f32 %v1437, %v1839
      %v1880 = vadd.f32 %v1438, %v1842
      %v1881 = vld [vmem:[%s345 + $0x98] sm:$0x3]
      %v1882 = vld [vmem:[%s3 + $0x20] sm:$0xf]
      %v1883 = vld [vmem:[%s3 + $0x24] sm:$0xf]
      %v1885 = vunpack.c.l.b16 %v1881
      %v1886 = vpack.c.b16 %v1885, %v1885
      %vm1887 = vsmask.f32 6400
      %v1889 = vshrl.u32 %v1552, 16
      %v1891 = vrot.slane %v1889, 1
      %v1892 = vshll.u32 %v1552, 16
      %v1894 = vrot.slane %v1892, 2
      %v1895 = vor.u32 %v1891, %v1894
      %v1897 = vshrl.u32 %v1553, 16
      %v1899 = vrot.slane %v1897, 1
      %v1900 = vshll.u32 %v1553, 16
      %v1902 = vrot.slane %v1900, 2
      %v1903 = vor.u32 %v1899, %v1902
      %v1904 = vsel %vm1887, %v1895, %v1903
      %v1906 = vshrl.u32 %v1554, 16
      %v1908 = vrot.slane %v1906, 1
      %v1909 = vshll.u32 %v1554, 16
      %v1911 = vrot.slane %v1909, 2
      %v1912 = vor.u32 %v1908, %v1911
      %v1913 = vsel %vm1887, %v1903, %v1912
      %v1915 = vshrl.u32 %v1555, 16
      %v1917 = vrot.slane %v1915, 1
      %v1918 = vshll.u32 %v1555, 16
      %v1920 = vrot.slane %v1918, 2
      %v1921 = vor.u32 %v1917, %v1920
      %v1922 = vsel %vm1887, %v1912, %v1921
      %v1924 = vshrl.u32 %v1556, 16
      %v1926 = vrot.slane %v1924, 1
      %v1927 = vshll.u32 %v1556, 16
      %v1929 = vrot.slane %v1927, 2
      %v1930 = vor.u32 %v1926, %v1929
      %v1931 = vsel %vm1887, %v1921, %v1930
      %v1933 = vshrl.u32 %v1557, 16
      %v1935 = vrot.slane %v1933, 1
      %v1936 = vshll.u32 %v1557, 16
      %v1938 = vrot.slane %v1936, 2
      %v1939 = vor.u32 %v1935, %v1938
      %v1940 = vsel %vm1887, %v1930, %v1939
      %v1942 = vshrl.u32 %v1558, 16
      %v1944 = vrot.slane %v1942, 1
      %v1945 = vshll.u32 %v1558, 16
      %v1947 = vrot.slane %v1945, 2
      %v1948 = vor.u32 %v1944, %v1947
      %v1949 = vsel %vm1887, %v1939, %v1948
      %v1951 = vshrl.u32 %v1559, 16
      %v1953 = vrot.slane %v1951, 1
      %v1954 = vshll.u32 %v1559, 16
      %v1956 = vrot.slane %v1954, 2
      %v1957 = vor.u32 %v1953, %v1956
      %v1958 = vsel %vm1887, %v1948, %v1957
      %v1960 = vshrl.u32 %v1560, 16
      %v1962 = vrot.slane %v1960, 1
      %v1963 = vshll.u32 %v1560, 16
      %v1965 = vrot.slane %v1963, 2
      %v1966 = vor.u32 %v1962, %v1965
      %v1967 = vsel %vm1887, %v1957, %v1966
      %v1969 = vshrl.u32 %v1561, 16
      %v1971 = vrot.slane %v1969, 1
      %v1972 = vshll.u32 %v1561, 16
      %v1974 = vrot.slane %v1972, 2
      %v1975 = vor.u32 %v1971, %v1974
      %v1976 = vsel %vm1887, %v1966, %v1975
      %v1978 = vshrl.u32 %v1562, 16
      %v1980 = vrot.slane %v1978, 1
      %v1981 = vshll.u32 %v1562, 16
      %v1983 = vrot.slane %v1981, 2
      %v1984 = vor.u32 %v1980, %v1983
      %v1985 = vsel %vm1887, %v1975, %v1984
      %v1987 = vshrl.u32 %v1563, 16
      %v1989 = vrot.slane %v1987, 1
      %v1990 = vshll.u32 %v1563, 16
      %v1992 = vrot.slane %v1990, 2
      %v1993 = vor.u32 %v1989, %v1992
      %v1994 = vsel %vm1887, %v1984, %v1993
      %v1996 = vshrl.u32 %v1564, 16
      %v1998 = vrot.slane %v1996, 1
      %v1999 = vshll.u32 %v1564, 16
      %v2001 = vrot.slane %v1999, 2
      %v2002 = vor.u32 %v1998, %v2001
      %v2003 = vsel %vm1887, %v1993, %v2002
      %v2005 = vshrl.u32 %v1565, 16
      %v2007 = vrot.slane %v2005, 1
      %v2008 = vshll.u32 %v1565, 16
      %v2010 = vrot.slane %v2008, 2
      %v2011 = vor.u32 %v2007, %v2010
      %v2012 = vsel %vm1887, %v2002, %v2011
      %v2014 = vshrl.u32 %v1566, 16
      %v2016 = vrot.slane %v2014, 1
      %v2017 = vshll.u32 %v1566, 16
      %v2019 = vrot.slane %v2017, 2
      %v2020 = vor.u32 %v2016, %v2019
      %v2021 = vsel %vm1887, %v2011, %v2020
      %v2023 = vshrl.u32 %v1567, 16
      %v2025 = vrot.slane %v2023, 1
      %v2026 = vshll.u32 %v1567, 16
      %v2028 = vrot.slane %v2026, 2
      %v2029 = vor.u32 %v2025, %v2028
      %v2030 = vsel %vm1887, %v2020, %v2029
      %v2032 = vshrl.u32 %v1568, 16
      %v2034 = vrot.slane %v2032, 1
      %v2035 = vshll.u32 %v1568, 16
      %v2037 = vrot.slane %v2035, 2
      %v2038 = vor.u32 %v2034, %v2037
      %v2039 = vsel %vm1887, %v2029, %v2038
      %v2041 = vshrl.u32 %v1569, 16
      %v2043 = vrot.slane %v2041, 1
      %v2044 = vshll.u32 %v1569, 16
      %v2046 = vrot.slane %v2044, 2
      %v2047 = vor.u32 %v2043, %v2046
      %v2048 = vsel %vm1887, %v2038, %v2047
      %v2050 = vshrl.u32 %v1886, 16
      %v2052 = vrot.slane %v2050, 1
      %v2053 = vshll.u32 %v1886, 16
      %v2055 = vrot.slane %v2053, 2
      %v2056 = vor.u32 %v2052, %v2055
      %v2057 = vsel %vm1887, %v2047, %v2056
      %v2060 = vunpack.c.l.b16 %v1882
      %v2061 = vunpack.c.l.b16 %v1883
      %v2062 = vpack.c.b16 %v2061, %v2060
      %v2065 = vsel %vm671, %v1904, 0
      %v2068 = vsel %vm671, %v1913, 0
      %v2071 = vsel %vm671, %v1922, 0
      %v2074 = vsel %vm671, %v1931, 0
      %v2077 = vsel %vm671, %v1940, 0
      %v2080 = vsel %vm671, %v1949, 0
      %v2083 = vsel %vm671, %v1958, 0
      %v2086 = vsel %vm671, %v1967, 0
      %v2089 = vsel %vm671, %v1976, 0
      %v2092 = vsel %vm671, %v1985, 0
      %v2095 = vsel %vm671, %v1994, 0
      %v2098 = vsel %vm671, %v2003, 0
      %v2101 = vsel %vm671, %v2012, 0
      %v2104 = vsel %vm671, %v2021, 0
      %v2107 = vsel %vm671, %v2030, 0
      %v2110 = vsel %vm671, %v2039, 0
      %v2113 = vsel %vm671, %v2048, 0
      %v2116 = vsel %vm671, %v2057, 0
      %2118 = vmatprep.subr.bf16.mxu0 0
      %2119 = vmatpush1.bf16.msra.mxu0 %v2062
      %2120 = vmatprep.subr.bf16.mxu0 0
      %2121 = vmatpush1.bf16.msra.mxu0 0
      %2122 = vmatprep.subr.bf16.mxu0 0
      %2123 = vmatpush1.bf16.msra.mxu0 0
      %2124 = vmatprep.subr.bf16.mxu0 0
      %2125 = vmatpush1.bf16.msra.mxu0 0
      %2126 = vmatprep.subr.bf16.mxu0 0
      %2127 = vmatpush1.bf16.msra.mxu0 0
      %2128 = vmatprep.subr.bf16.mxu0 0
      %2129 = vmatpush1.bf16.msra.mxu0 0
      %2130 = vmatprep.subr.bf16.mxu0 0
      %2131 = vmatpush1.bf16.msra.mxu0 0
      %2132 = vmatprep.subr.bf16.mxu0 0
      %2133 = vmatpush1.bf16.msra.mxu0 0
      %2134 = vmatprep.subr.bf16.mxu0 0
      %2135 = vmatpush1.bf16.msra.mxu0 0
      %2136 = vmatprep.subr.bf16.mxu0 0
      %2137 = vmatpush1.bf16.msra.mxu0 0
      %2138 = vmatprep.subr.bf16.mxu0 0
      %2139 = vmatpush1.bf16.msra.mxu0 0
      %2140 = vmatprep.subr.bf16.mxu0 0
      %2141 = vmatpush1.bf16.msra.mxu0 0
      %2142 = vmatprep.subr.bf16.mxu0 0
      %2143 = vmatpush1.bf16.msra.mxu0 0
      %2144 = vmatprep.subr.bf16.mxu0 0
      %2145 = vmatpush1.bf16.msra.mxu0 0
      %2146 = vmatprep.subr.bf16.mxu0 0
      %2147 = vmatpush1.bf16.msra.mxu0 0
      %2148 = vmatprep.subr.bf16.mxu0 0
      %2149 = vmatpush1.bf16.msra.mxu0 0
      %2150 = vmatprep.mubr.bf16.mxu0 0
      %2151 = vmatmul.mubr.bf16.gmra.mrb[0].mxu0 %v2065
      %v2152 = vpop.f32.mrb[0].mxu0
      %v2153 = vadd.f32 0.0, %v2152
      %v2154 = vpop.f32.mrb[0].mxu0
      %v2155 = vpop.f32.mrb[0].mxu0
      %v2156 = vadd.f32 0.0, %v2155
      %v2157 = vpop.f32.mrb[0].mxu0
      %2158 = vmatprep.mubr.bf16.mxu0 0
      %2159 = vmatmul.mubr.bf16.gmra.mrb[0].mxu0 %v2068
      %v2160 = vpop.f32.mrb[0].mxu0
      %v2161 = vadd.f32 0.0, %v2160
      %v2162 = vpop.f32.mrb[0].mxu0
      %v2163 = vpop.f32.mrb[0].mxu0
      %v2164 = vadd.f32 0.0, %v2163
      %v2165 = vpop.f32.mrb[0].mxu0
      %2166 = vmatprep.mubr.bf16.mxu0 0
      %2167 = vmatmul.mubr.bf16.gmra.mrb[0].mxu0 %v2071
      %v2168 = vpop.f32.mrb[0].mxu0
      %v2169 = vadd.f32 0.0, %v2168
      %v2170 = vpop.f32.mrb[0].mxu0
      %v2171 = vpop.f32.mrb[0].mxu0
      %v2172 = vadd.f32 0.0, %v2171
      %v2173 = vpop.f32.mrb[0].mxu0
      %2174 = vmatprep.mubr.bf16.mxu0 0
      %2175 = vmatmul.mubr.bf16.gmra.mrb[0].mxu0 %v2074
      %v2176 = vpop.f32.mrb[0].mxu0
      %v2177 = vadd.f32 0.0, %v2176
      %v2178 = vpop.f32.mrb[0].mxu0
      %v2179 = vpop.f32.mrb[0].mxu0
      %v2180 = vadd.f32 0.0, %v2179
      %v2181 = vpop.f32.mrb[0].mxu0
      %2182 = vmatprep.mubr.bf16.mxu0 0
      %2183 = vmatmul.mubr.bf16.gmra.mrb[0].mxu0 %v2077
      %v2184 = vpop.f32.mrb[0].mxu0
      %v2185 = vadd.f32 0.0, %v2184
      %v2186 = vpop.f32.mrb[0].mxu0
      %v2187 = vpop.f32.mrb[0].mxu0
      %v2188 = vadd.f32 0.0, %v2187
      %v2189 = vpop.f32.mrb[0].mxu0
      %2190 = vmatprep.mubr.bf16.mxu0 0
      %2191 = vmatmul.mubr.bf16.gmra.mrb[0].mxu0 %v2080
      %v2192 = vpop.f32.mrb[0].mxu0
      %v2193 = vadd.f32 0.0, %v2192
      %v2194 = vpop.f32.mrb[0].mxu0
      %v2195 = vpop.f32.mrb[0].mxu0
      %v2196 = vadd.f32 0.0, %v2195
      %v2197 = vpop.f32.mrb[0].mxu0
      %2198 = vmatprep.mubr.bf16.mxu0 0
      %2199 = vmatmul.mubr.bf16.gmra.mrb[0].mxu0 %v2083
      %v2200 = vpop.f32.mrb[0].mxu0
      %v2201 = vadd.f32 0.0, %v2200
      %v2202 = vpop.f32.mrb[0].mxu0
      %v2203 = vpop.f32.mrb[0].mxu0
      %v2204 = vadd.f32 0.0, %v2203
      %v2205 = vpop.f32.mrb[0].mxu0
      %2206 = vmatprep.mubr.bf16.mxu0 0
      %2207 = vmatmul.mubr.bf16.gmra.mrb[0].mxu0 %v2086
      %v2208 = vpop.f32.mrb[0].mxu0
      %v2209 = vadd.f32 0.0, %v2208
      %v2210 = vpop.f32.mrb[0].mxu0
      %v2211 = vpop.f32.mrb[0].mxu0
      %v2212 = vadd.f32 0.0, %v2211
      %v2213 = vpop.f32.mrb[0].mxu0
      %2214 = vmatprep.mubr.bf16.mxu0 0
      %2215 = vmatmul.mubr.bf16.gmra.mrb[0].mxu0 %v2089
      %v2216 = vpop.f32.mrb[0].mxu0
      %v2217 = vadd.f32 0.0, %v2216
      %v2218 = vpop.f32.mrb[0].mxu0
      %v2219 = vpop.f32.mrb[0].mxu0
      %v2220 = vadd.f32 0.0, %v2219
      %v2221 = vpop.f32.mrb[0].mxu0
      %2222 = vmatprep.mubr.bf16.mxu0 0
      %2223 = vmatmul.mubr.bf16.gmra.mrb[0].mxu0 %v2092
      %v2224 = vpop.f32.mrb[0].mxu0
      %v2225 = vadd.f32 0.0, %v2224
      %v2226 = vpop.f32.mrb[0].mxu0
      %v2227 = vpop.f32.mrb[0].mxu0
      %v2228 = vadd.f32 0.0, %v2227
      %v2229 = vpop.f32.mrb[0].mxu0
      %2230 = vmatprep.mubr.bf16.mxu0 0
      %2231 = vmatmul.mubr.bf16.gmra.mrb[0].mxu0 %v2095
      %v2232 = vpop.f32.mrb[0].mxu0
      %v2233 = vadd.f32 0.0, %v2232
      %v2234 = vpop.f32.mrb[0].mxu0
      %v2235 = vpop.f32.mrb[0].mxu0
      %v2236 = vadd.f32 0.0, %v2235
      %v2237 = vpop.f32.mrb[0].mxu0
      %2238 = vmatprep.mubr.bf16.mxu0 0
      %2239 = vmatmul.mubr.bf16.gmra.mrb[0].mxu0 %v2098
      %v2240 = vpop.f32.mrb[0].mxu0
      %v2241 = vadd.f32 0.0, %v2240
      %v2242 = vpop.f32.mrb[0].mxu0
      %v2243 = vpop.f32.mrb[0].mxu0
      %v2244 = vadd.f32 0.0, %v2243
      %v2245 = vpop.f32.mrb[0].mxu0
      %2246 = vmatprep.mubr.bf16.mxu0 0
      %2247 = vmatmul.mubr.bf16.gmra.mrb[0].mxu0 %v2101
      %v2248 = vpop.f32.mrb[0].mxu0
      %v2249 = vadd.f32 0.0, %v2248
      %v2250 = vpop.f32.mrb[0].mxu0
      %v2251 = vpop.f32.mrb[0].mxu0
      %v2252 = vadd.f32 0.0, %v2251
      %v2253 = vpop.f32.mrb[0].mxu0
      %2254 = vmatprep.mubr.bf16.mxu0 0
      %2255 = vmatmul.mubr.bf16.gmra.mrb[0].mxu0 %v2104
      %v2256 = vpop.f32.mrb[0].mxu0
      %v2257 = vadd.f32 0.0, %v2256
      %v2258 = vpop.f32.mrb[0].mxu0
      %v2259 = vpop.f32.mrb[0].mxu0
      %v2260 = vadd.f32 0.0, %v2259
      %v2261 = vpop.f32.mrb[0].mxu0
      %2262 = vmatprep.mubr.bf16.mxu0 0
      %2263 = vmatmul.mubr.bf16.gmra.mrb[0].mxu0 %v2107
      %v2264 = vpop.f32.mrb[0].mxu0
      %v2265 = vadd.f32 0.0, %v2264
      %v2266 = vpop.f32.mrb[0].mxu0
      %v2267 = vpop.f32.mrb[0].mxu0
      %v2268 = vadd.f32 0.0, %v2267
      %v2269 = vpop.f32.mrb[0].mxu0
      %2270 = vmatprep.mubr.bf16.mxu0 0
      %2271 = vmatmul.mubr.bf16.gmra.mrb[0].mxu0 %v2110
      %v2272 = vpop.f32.mrb[0].mxu0
      %v2273 = vadd.f32 0.0, %v2272
      %v2274 = vpop.f32.mrb[0].mxu0
      %v2275 = vpop.f32.mrb[0].mxu0
      %v2276 = vadd.f32 0.0, %v2275
      %v2277 = vpop.f32.mrb[0].mxu0
      %2278 = vmatprep.mubr.bf16.mxu0 0
      %2279 = vmatmul.mubr.bf16.gmra.mrb[0].mxu0 %v2113
      %v2280 = vpop.f32.mrb[0].mxu0
      %v2281 = vadd.f32 0.0, %v2280
      %v2282 = vpop.f32.mrb[0].mxu0
      %v2283 = vpop.f32.mrb[0].mxu0
      %v2284 = vadd.f32 0.0, %v2283
      %v2285 = vpop.f32.mrb[0].mxu0
      %2286 = vmatprep.mubr.bf16.mxu0 0
      %2287 = vmatmul.mubr.bf16.gmra.mrb[0].mxu0 %v2116
      %v2288 = vpop.f32.mrb[0].mxu0
      %v2289 = vadd.f32 0.0, %v2288
      %v2290 = vpop.f32.mrb[0].mxu0
      %v2291 = vpop.f32.mrb[0].mxu0
      %v2292 = vadd.f32 0.0, %v2291
      %v2293 = vpop.f32.mrb[0].mxu0
      %2294 = vdwg.mxu0
      %v2295 = vadd.f32 %v1845, %v2153
      %v2296 = vadd.f32 %v1846, %v2156
      %v2297 = vadd.f32 %v1847, %v2161
      %v2298 = vadd.f32 %v1848, %v2164
      %v2299 = vadd.f32 %v1849, %v2169
      %v2300 = vadd.f32 %v1850, %v2172
      %v2301 = vadd.f32 %v1851, %v2177
      %v2302 = vadd.f32 %v1852, %v2180
      %v2303 = vadd.f32 %v1853, %v2185
      %v2304 = vadd.f32 %v1854, %v2188
      %v2305 = vadd.f32 %v1855, %v2193
      %v2306 = vadd.f32 %v1856, %v2196
      %v2307 = vadd.f32 %v1857, %v2201
      %v2308 = vadd.f32 %v1858, %v2204
      %v2309 = vadd.f32 %v1859, %v2209
      %v2310 = vadd.f32 %v1860, %v2212
      %v2311 = vadd.f32 %v1861, %v2217
      %v2312 = vadd.f32 %v1862, %v2220
      %v2313 = vadd.f32 %v1863, %v2225
      %v2314 = vadd.f32 %v1864, %v2228
      %v2315 = vadd.f32 %v1865, %v2233
      %v2316 = vadd.f32 %v1866, %v2236
      %v2317 = vadd.f32 %v1867, %v2241
      %v2318 = vadd.f32 %v1868, %v2244
      %v2319 = vadd.f32 %v1869, %v2249
      %v2320 = vadd.f32 %v1870, %v2252
      %v2321 = vadd.f32 %v1871, %v2257
      %v2322 = vadd.f32 %v1872, %v2260
      %v2323 = vadd.f32 %v1873, %v2265
      %v2324 = vadd.f32 %v1874, %v2268
      %v2325 = vadd.f32 %v1875, %v2273
      %v2326 = vadd.f32 %v1876, %v2276
      %v2327 = vadd.f32 %v1877, %v2281
      %v2328 = vadd.f32 %v1878, %v2284
      %v2329 = vadd.f32 %v1879, %v2289
      %v2330 = vadd.f32 %v1880, %v2292
      %v2331 = vld [vmem:[%s345 + $0x8] sm:$0xc]
      %v2332 = vld [vmem:[%s3 + $0x28] sm:$0xf]
      %v2333 = vld [vmem:[%s3 + $0x2c] sm:$0xf]
      %v2335 = vunpack.c.l.b16 %v2331
      %v2336 = vpack.c.b16 %v1516, %v2335
      %vm2337 = vcmask 1045504
      %v2338 = vrot.slane %v2336, 2
      %v2339 = vrot.slane %v1553, 2
      %v2340 = vsel %vm2337, %v2338, %v2339
      %v2341 = vrot.slane %v1554, 2
      %v2342 = vsel %vm2337, %v2339, %v2341
      %v2343 = vrot.slane %v1555, 2
      %v2344 = vsel %vm2337, %v2341, %v2343
      %v2345 = vrot.slane %v1556, 2
      %v2346 = vsel %vm2337, %v2343, %v2345
      %v2347 = vrot.slane %v1557, 2
      %v2348 = vsel %vm2337, %v2345, %v2347
      %v2349 = vrot.slane %v1558, 2
      %v2350 = vsel %vm2337, %v2347, %v2349
      %v2351 = vrot.slane %v1559, 2
      %v2352 = vsel %vm2337, %v2349, %v2351
      %v2353 = vrot.slane %v1560, 2
      %v2354 = vsel %vm2337, %v2351, %v2353
      %v2355 = vrot.slane %v1561, 2
      %v2356 = vsel %vm2337, %v2353, %v2355
      %v2357 = vrot.slane %v1562, 2
      %v2358 = vsel %vm2337, %v2355, %v2357
      %v2359 = vrot.slane %v1563, 2
      %v2360 = vsel %vm2337, %v2357, %v2359
      %v2361 = vrot.slane %v1564, 2
      %v2362 = vsel %vm2337, %v2359, %v2361
      %v2363 = vrot.slane %v1565, 2
      %v2364 = vsel %vm2337, %v2361, %v2363
      %v2365 = vrot.slane %v1566, 2
      %v2366 = vsel %vm2337, %v2363, %v2365
      %v2367 = vrot.slane %v1567, 2
      %v2368 = vsel %vm2337, %v2365, %v2367
      %v2369 = vrot.slane %v1568, 2
      %v2370 = vsel %vm2337, %v2367, %v2369
      %v2371 = vrot.slane %v1569, 2
      %v2372 = vsel %vm2337, %v2369, %v2371
      %v2373 = vrot.slane %v1886, 2
      %v2374 = vsel %vm2337, %v2371, %v2373
      %v2377 = vunpack.c.l.b16 %v2332
      %v2378 = vunpack.c.l.b16 %v2333
      %v2379 = vpack.c.b16 %v2378, %v2377
      %v2382 = vsel %vm671, %v2340, 0
      %v2385 = vsel %vm671, %v2342, 0
      %v2388 = vsel %vm671, %v2344, 0
      %v2391 = vsel %vm671, %v2346, 0
      %v2394 = vsel %vm671, %v2348, 0
      %v2397 = vsel %vm671, %v2350, 0
      %v2400 = vsel %vm671, %v2352, 0
      %v2403 = vsel %vm671, %v2354, 0
      %v2406 = vsel %vm671, %v2356, 0
      %v2409 = vsel %vm671, %v2358, 0
      %v2412 = vsel %vm671, %v2360, 0
      %v2415 = vsel %vm671, %v2362, 0
      %v2418 = vsel %vm671, %v2364, 0
      %v2421 = vsel %vm671, %v2366, 0
      %v2424 = vsel %vm671, %v2368, 0
      %v2427 = vsel %vm671, %v2370, 0
      %v2430 = vsel %vm671, %v2372, 0
      %v2433 = vsel %vm671, %v2374, 0
      %2435 = vmatprep.subr.bf16.mxu0 0
      %2436 = vmatpush1.bf16.msra.mxu0 %v2379
      %2437 = vmatprep.subr.bf16.mxu0 0
      %2438 = vmatpush1.bf16.msra.mxu0 0
      %2439 = vmatprep.subr.bf16.mxu0 0
      %2440 = vmatpush1.bf16.msra.mxu0 0
      %2441 = vmatprep.subr.bf16.mxu0 0
      %2442 = vmatpush1.bf16.msra.mxu0 0
      %2443 = vmatprep.subr.bf16.mxu0 0
      %2444 = vmatpush1.bf16.msra.mxu0 0
      %2445 = vmatprep.subr.bf16.mxu0 0
      %2446 = vmatpush1.bf16.msra.mxu0 0
      %2447 = vmatprep.subr.bf16.mxu0 0
      %2448 = vmatpush1.bf16.msra.mxu0 0
      %2449 = vmatprep.subr.bf16.mxu0 0
      %2450 = vmatpush1.bf16.msra.mxu0 0
      %2451 = vmatprep.subr.bf16.mxu0 0
      %2452 = vmatpush1.bf16.msra.mxu0 0
      %2453 = vmatprep.subr.bf16.mxu0 0
      %2454 = vmatpush1.bf16.msra.mxu0 0
      %2455 = vmatprep.subr.bf16.mxu0 0
      %2456 = vmatpush1.bf16.msra.mxu0 0
      %2457 = vmatprep.subr.bf16.mxu0 0
      %2458 = vmatpush1.bf16.msra.mxu0 0
      %2459 = vmatprep.subr.bf16.mxu0 0
      %2460 = vmatpush1.bf16.msra.mxu0 0
      %2461 = vmatprep.subr.bf16.mxu0 0
      %2462 = vmatpush1.bf16.msra.mxu0 0
      %2463 = vmatprep.subr.bf16.mxu0 0
      %2464 = vmatpush1.bf16.msra.mxu0 0
      %2465 = vmatprep.subr.bf16.mxu0 0
      %2466 = vmatpush1.bf16.msra.mxu0 0
      %2467 = vmatprep.mubr.bf16.mxu0 0
      %2468 = vmatmul.mubr.bf16.gmra.mrb[0].mxu0 %v2382
      %v2469 = vpop.f32.mrb[0].mxu0
      %v2470 = vadd.f32 0.0, %v2469
      %v2471 = vpop.f32.mrb[0].mxu0
      %v2472 = vpop.f32.mrb[0].mxu0
      %v2473 = vadd.f32 0.0, %v2472
      %v2474 = vpop.f32.mrb[0].mxu0
      %2475 = vmatprep.mubr.bf16.mxu0 0
      %2476 = vmatmul.mubr.bf16.gmra.mrb[0].mxu0 %v2385
      %v2477 = vpop.f32.mrb[0].mxu0
      %v2478 = vadd.f32 0.0, %v2477
      %v2479 = vpop.f32.mrb[0].mxu0
      %v2480 = vpop.f32.mrb[0].mxu0
      %v2481 = vadd.f32 0.0, %v2480
      %v2482 = vpop.f32.mrb[0].mxu0
      %2483 = vmatprep.mubr.bf16.mxu0 0
      %2484 = vmatmul.mubr.bf16.gmra.mrb[0].mxu0 %v2388
      %v2485 = vpop.f32.mrb[0].mxu0
      %v2486 = vadd.f32 0.0, %v2485
      %v2487 = vpop.f32.mrb[0].mxu0
      %v2488 = vpop.f32.mrb[0].mxu0
      %v2489 = vadd.f32 0.0, %v2488
      %v2490 = vpop.f32.mrb[0].mxu0
      %2491 = vmatprep.mubr.bf16.mxu0 0
      %2492 = vmatmul.mubr.bf16.gmra.mrb[0].mxu0 %v2391
      %v2493 = vpop.f32.mrb[0].mxu0
      %v2494 = vadd.f32 0.0, %v2493
      %v2495 = vpop.f32.mrb[0].mxu0
      %v2496 = vpop.f32.mrb[0].mxu0
      %v2497 = vadd.f32 0.0, %v2496
      %v2498 = vpop.f32.mrb[0].mxu0
      %2499 = vmatprep.mubr.bf16.mxu0 0
      %2500 = vmatmul.mubr.bf16.gmra.mrb[0].mxu0 %v2394
      %v2501 = vpop.f32.mrb[0].mxu0
      %v2502 = vadd.f32 0.0, %v2501
      %v2503 = vpop.f32.mrb[0].mxu0
      %v2504 = vpop.f32.mrb[0].mxu0
      %v2505 = vadd.f32 0.0, %v2504
      %v2506 = vpop.f32.mrb[0].mxu0
      %2507 = vmatprep.mubr.bf16.mxu0 0
      %2508 = vmatmul.mubr.bf16.gmra.mrb[0].mxu0 %v2397
      %v2509 = vpop.f32.mrb[0].mxu0
      %v2510 = vadd.f32 0.0, %v2509
      %v2511 = vpop.f32.mrb[0].mxu0
      %v2512 = vpop.f32.mrb[0].mxu0
      %v2513 = vadd.f32 0.0, %v2512
      %v2514 = vpop.f32.mrb[0].mxu0
      %2515 = vmatprep.mubr.bf16.mxu0 0
      %2516 = vmatmul.mubr.bf16.gmra.mrb[0].mxu0 %v2400
      %v2517 = vpop.f32.mrb[0].mxu0
      %v2518 = vadd.f32 0.0, %v2517
      %v2519 = vpop.f32.mrb[0].mxu0
      %v2520 = vpop.f32.mrb[0].mxu0
      %v2521 = vadd.f32 0.0, %v2520
      %v2522 = vpop.f32.mrb[0].mxu0
      %2523 = vmatprep.mubr.bf16.mxu0 0
      %2524 = vmatmul.mubr.bf16.gmra.mrb[0].mxu0 %v2403
      %v2525 = vpop.f32.mrb[0].mxu0
      %v2526 = vadd.f32 0.0, %v2525
      %v2527 = vpop.f32.mrb[0].mxu0
      %v2528 = vpop.f32.mrb[0].mxu0
      %v2529 = vadd.f32 0.0, %v2528
      %v2530 = vpop.f32.mrb[0].mxu0
      %2531 = vmatprep.mubr.bf16.mxu0 0
      %2532 = vmatmul.mubr.bf16.gmra.mrb[0].mxu0 %v2406
      %v2533 = vpop.f32.mrb[0].mxu0
      %v2534 = vadd.f32 0.0, %v2533
      %v2535 = vpop.f32.mrb[0].mxu0
      %v2536 = vpop.f32.mrb[0].mxu0
      %v2537 = vadd.f32 0.0, %v2536
      %v2538 = vpop.f32.mrb[0].mxu0
      %2539 = vmatprep.mubr.bf16.mxu0 0
      %2540 = vmatmul.mubr.bf16.gmra.mrb[0].mxu0 %v2409
      %v2541 = vpop.f32.mrb[0].mxu0
      %v2542 = vadd.f32 0.0, %v2541
      %v2543 = vpop.f32.mrb[0].mxu0
      %v2544 = vpop.f32.mrb[0].mxu0
      %v2545 = vadd.f32 0.0, %v2544
      %v2546 = vpop.f32.mrb[0].mxu0
      %2547 = vmatprep.mubr.bf16.mxu0 0
      %2548 = vmatmul.mubr.bf16.gmra.mrb[0].mxu0 %v2412
      %v2549 = vpop.f32.mrb[0].mxu0
      %v2550 = vadd.f32 0.0, %v2549
      %v2551 = vpop.f32.mrb[0].mxu0
      %v2552 = vpop.f32.mrb[0].mxu0
      %v2553 = vadd.f32 0.0, %v2552
      %v2554 = vpop.f32.mrb[0].mxu0
      %2555 = vmatprep.mubr.bf16.mxu0 0
      %2556 = vmatmul.mubr.bf16.gmra.mrb[0].mxu0 %v2415
      %v2557 = vpop.f32.mrb[0].mxu0
      %v2558 = vadd.f32 0.0, %v2557
      %v2559 = vpop.f32.mrb[0].mxu0
      %v2560 = vpop.f32.mrb[0].mxu0
      %v2561 = vadd.f32 0.0, %v2560
      %v2562 = vpop.f32.mrb[0].mxu0
      %2563 = vmatprep.mubr.bf16.mxu0 0
      %2564 = vmatmul.mubr.bf16.gmra.mrb[0].mxu0 %v2418
      %v2565 = vpop.f32.mrb[0].mxu0
      %v2566 = vadd.f32 0.0, %v2565
      %v2567 = vpop.f32.mrb[0].mxu0
      %v2568 = vpop.f32.mrb[0].mxu0
      %v2569 = vadd.f32 0.0, %v2568
      %v2570 = vpop.f32.mrb[0].mxu0
      %2571 = vmatprep.mubr.bf16.mxu0 0
      %2572 = vmatmul.mubr.bf16.gmra.mrb[0].mxu0 %v2421
      %v2573 = vpop.f32.mrb[0].mxu0
      %v2574 = vadd.f32 0.0, %v2573
      %v2575 = vpop.f32.mrb[0].mxu0
      %v2576 = vpop.f32.mrb[0].mxu0
      %v2577 = vadd.f32 0.0, %v2576
      %v2578 = vpop.f32.mrb[0].mxu0
      %2579 = vmatprep.mubr.bf16.mxu0 0
      %2580 = vmatmul.mubr.bf16.gmra.mrb[0].mxu0 %v2424
      %v2581 = vpop.f32.mrb[0].mxu0
      %v2582 = vadd.f32 0.0, %v2581
      %v2583 = vpop.f32.mrb[0].mxu0
      %v2584 = vpop.f32.mrb[0].mxu0
      %v2585 = vadd.f32 0.0, %v2584
      %v2586 = vpop.f32.mrb[0].mxu0
      %2587 = vmatprep.mubr.bf16.mxu0 0
      %2588 = vmatmul.mubr.bf16.gmra.mrb[0].mxu0 %v2427
      %v2589 = vpop.f32.mrb[0].mxu0
      %v2590 = vadd.f32 0.0, %v2589
      %v2591 = vpop.f32.mrb[0].mxu0
      %v2592 = vpop.f32.mrb[0].mxu0
      %v2593 = vadd.f32 0.0, %v2592
      %v2594 = vpop.f32.mrb[0].mxu0
      %2595 = vmatprep.mubr.bf16.mxu0 0
      %2596 = vmatmul.mubr.bf16.gmra.mrb[0].mxu0 %v2430
      %v2597 = vpop.f32.mrb[0].mxu0
      %v2598 = vadd.f32 0.0, %v2597
      %v2599 = vpop.f32.mrb[0].mxu0
      %v2600 = vpop.f32.mrb[0].mxu0
      %v2601 = vadd.f32 0.0, %v2600
      %v2602 = vpop.f32.mrb[0].mxu0
      %2603 = vmatprep.mubr.bf16.mxu0 0
      %2604 = vmatmul.mubr.bf16.gmra.mrb[0].mxu0 %v2433
      %v2605 = vpop.f32.mrb[0].mxu0
      %v2606 = vadd.f32 0.0, %v2605
      %v2607 = vpop.f32.mrb[0].mxu0
      %v2608 = vpop.f32.mrb[0].mxu0
      %v2609 = vadd.f32 0.0, %v2608
      %v2610 = vpop.f32.mrb[0].mxu0
      %2611 = vdwg.mxu0
      %v2612 = vadd.f32 %v2295, %v2470
      %v2613 = vadd.f32 %v2296, %v2473
      %v2614 = vadd.f32 %v2297, %v2478
      %v2615 = vadd.f32 %v2298, %v2481
      %v2616 = vadd.f32 %v2299, %v2486
      %v2617 = vadd.f32 %v2300, %v2489
      %v2618 = vadd.f32 %v2301, %v2494
      %v2619 = vadd.f32 %v2302, %v2497
      %v2620 = vadd.f32 %v2303, %v2502
      %v2621 = vadd.f32 %v2304, %v2505
      %v2622 = vadd.f32 %v2305, %v2510
      %v2623 = vadd.f32 %v2306, %v2513
      %v2624 = vadd.f32 %v2307, %v2518
      %v2625 = vadd.f32 %v2308, %v2521
      %v2626 = vadd.f32 %v2309, %v2526
      %v2627 = vadd.f32 %v2310, %v2529
      %v2628 = vadd.f32 %v2311, %v2534
      %v2629 = vadd.f32 %v2312, %v2537
      %v2630 = vadd.f32 %v2313, %v2542
      %v2631 = vadd.f32 %v2314, %v2545
      %v2632 = vadd.f32 %v2315, %v2550
      %v2633 = vadd.f32 %v2316, %v2553
      %v2634 = vadd.f32 %v2317, %v2558
      %v2635 = vadd.f32 %v2318, %v2561
      %v2636 = vadd.f32 %v2319, %v2566
      %v2637 = vadd.f32 %v2320, %v2569
      %v2638 = vadd.f32 %v2321, %v2574
      %v2639 = vadd.f32 %v2322, %v2577
      %v2640 = vadd.f32 %v2323, %v2582
      %v2641 = vadd.f32 %v2324, %v2585
      %v2642 = vadd.f32 %v2325, %v2590
      %v2643 = vadd.f32 %v2326, %v2593
      %v2644 = vadd.f32 %v2327, %v2598
      %v2645 = vadd.f32 %v2328, %v2601
      %v2646 = vadd.f32 %v2329, %v2606
      %v2647 = vadd.f32 %v2330, %v2609
      %v2648 = vld [vmem:[%s345 + $0x10] sm:$0xc]
      %v2649 = vld [vmem:[%s345 + $0x14] sm:$0xf]
      %v2650 = vld [vmem:[%s345 + $0x18] sm:$0xf]
      %v2651 = vld [vmem:[%s345 + $0x1c] sm:$0xf]
      %v2652 = vld [vmem:[%s345 + $0x20] sm:$0xf]
      %v2653 = vld [vmem:[%s345 + $0x24] sm:$0xf]
      %v2654 = vld [vmem:[%s345 + $0x28] sm:$0xf]
      %v2655 = vld [vmem:[%s345 + $0x2c] sm:$0xf]
      %v2656 = vld [vmem:[%s345 + $0x30] sm:$0xf]
      %v2657 = vld [vmem:[%s345 + $0x34] sm:$0xf]
      %v2658 = vld [vmem:[%s345 + $0x38] sm:$0xf]
      %v2659 = vld [vmem:[%s345 + $0x3c] sm:$0xf]
      %v2660 = vld [vmem:[%s345 + $0x40] sm:$0xf]
      %v2661 = vld [vmem:[%s345 + $0x44] sm:$0xf]
      %v2662 = vld [vmem:[%s345 + $0x48] sm:$0xf]
      %v2663 = vld [vmem:[%s345 + $0x4c] sm:$0xf]
      %v2664 = vld [vmem:[%s345 + $0x50] sm:$0xf]
      %v2665 = vld [vmem:[%s345 + $0x54] sm:$0xf]
      %v2666 = vld [vmem:[%s345 + $0x58] sm:$0xf]
      %v2667 = vld [vmem:[%s345 + $0x5c] sm:$0xf]
      %v2668 = vld [vmem:[%s345 + $0x60] sm:$0xf]
      %v2669 = vld [vmem:[%s345 + $0x64] sm:$0xf]
      %v2670 = vld [vmem:[%s345 + $0x68] sm:$0xf]
      %v2671 = vld [vmem:[%s345 + $0x6c] sm:$0xf]
      %v2672 = vld [vmem:[%s345 + $0x70] sm:$0xf]
      %v2673 = vld [vmem:[%s345 + $0x74] sm:$0xf]
      %v2674 = vld [vmem:[%s345 + $0x78] sm:$0xf]
      %v2675 = vld [vmem:[%s345 + $0x7c] sm:$0xf]
      %v2676 = vld [vmem:[%s345 + $0x80] sm:$0xf]
      %v2677 = vld [vmem:[%s345 + $0x84] sm:$0xf]
      %v2678 = vld [vmem:[%s345 + $0x88] sm:$0xf]
      %v2679 = vld [vmem:[%s345 + $0x8c] sm:$0xf]
      %v2680 = vld [vmem:[%s345 + $0x90] sm:$0xf]
      %v2681 = vld [vmem:[%s345 + $0x94] sm:$0xf]
      %v2682 = vld [vmem:[%s345 + $0x98] sm:$0xf]
      %v2683 = vld [vmem:[%s345 + $0x9c] sm:$0xf]
      %v2684 = vld [vmem:[%s345 + $0xa0] sm:$0x3]
      %v2685 = vld [vmem:[%s3 + $0x30] sm:$0xf]
      %v2686 = vld [vmem:[%s3 + $0x34] sm:$0xf]
      %v2724 = vunpack.c.l.b16 %v2648
      %v2725 = vunpack.c.l.b16 %v2649
      %v2726 = vunpack.c.l.b16 %v2650
      %v2727 = vunpack.c.l.b16 %v2651
      %v2728 = vunpack.c.l.b16 %v2652
      %v2729 = vunpack.c.l.b16 %v2653
      %v2730 = vunpack.c.l.b16 %v2654
      %v2731 = vunpack.c.l.b16 %v2655
      %v2732 = vunpack.c.l.b16 %v2656
      %v2733 = vunpack.c.l.b16 %v2657
      %v2734 = vunpack.c.l.b16 %v2658
      %v2735 = vunpack.c.l.b16 %v2659
      %v2736 = vunpack.c.l.b16 %v2660
      %v2737 = vunpack.c.l.b16 %v2661
      %v2738 = vunpack.c.l.b16 %v2662
      %v2739 = vunpack.c.l.b16 %v2663
      %v2740 = vunpack.c.l.b16 %v2664
      %v2741 = vunpack.c.l.b16 %v2665
      %v2742 = vunpack.c.l.b16 %v2666
      %v2743 = vunpack.c.l.b16 %v2667
      %v2744 = vunpack.c.l.b16 %v2668
      %v2745 = vunpack.c.l.b16 %v2669
      %v2746 = vunpack.c.l.b16 %v2670
      %v2747 = vunpack.c.l.b16 %v2671
      %v2748 = vunpack.c.l.b16 %v2672
      %v2749 = vunpack.c.l.b16 %v2673
      %v2750 = vunpack.c.l.b16 %v2674
      %v2751 = vunpack.c.l.b16 %v2675
      %v2752 = vunpack.c.l.b16 %v2676
      %v2753 = vunpack.c.l.b16 %v2677
      %v2754 = vunpack.c.l.b16 %v2678
      %v2755 = vunpack.c.l.b16 %v2679
      %v2756 = vunpack.c.l.b16 %v2680
      %v2757 = vunpack.c.l.b16 %v2681
      %v2758 = vunpack.c.l.b16 %v2682
      %v2759 = vunpack.c.l.b16 %v2683
      %v2760 = vunpack.c.l.b16 %v2684
      %v2761 = vpack.c.b16 %v2725, %v2724
      %v2762 = vpack.c.b16 %v2727, %v2726
      %v2763 = vpack.c.b16 %v2729, %v2728
      %v2764 = vpack.c.b16 %v2731, %v2730
      %v2765 = vpack.c.b16 %v2733, %v2732
      %v2766 = vpack.c.b16 %v2735, %v2734
      %v2767 = vpack.c.b16 %v2737, %v2736
      %v2768 = vpack.c.b16 %v2739, %v2738
      %v2769 = vpack.c.b16 %v2741, %v2740
      %v2770 = vpack.c.b16 %v2743, %v2742
      %v2771 = vpack.c.b16 %v2745, %v2744
      %v2772 = vpack.c.b16 %v2747, %v2746
      %v2773 = vpack.c.b16 %v2749, %v2748
      %v2774 = vpack.c.b16 %v2751, %v2750
      %v2775 = vpack.c.b16 %v2753, %v2752
      %v2776 = vpack.c.b16 %v2755, %v2754
      %v2777 = vpack.c.b16 %v2757, %v2756
      %v2778 = vpack.c.b16 %v2759, %v2758
      %v2779 = vpack.c.b16 %v2760, %v2760
      %v2780 = vrot.slane %v2761, 2
      %v2781 = vrot.slane %v2762, 2
      %v2782 = vsel %vm2337, %v2780, %v2781
      %v2783 = vrot.slane %v2763, 2
      %v2784 = vsel %vm2337, %v2781, %v2783
      %v2785 = vrot.slane %v2764, 2
      %v2786 = vsel %vm2337, %v2783, %v2785
      %v2787 = vrot.slane %v2765, 2
      %v2788 = vsel %vm2337, %v2785, %v2787
      %v2789 = vrot.slane %v2766, 2
      %v2790 = vsel %vm2337, %v2787, %v2789
      %v2791 = vrot.slane %v2767, 2
      %v2792 = vsel %vm2337, %v2789, %v2791
      %v2793 = vrot.slane %v2768, 2
      %v2794 = vsel %vm2337, %v2791, %v2793
      %v2795 = vrot.slane %v2769, 2
      %v2796 = vsel %vm2337, %v2793, %v2795
      %v2797 = vrot.slane %v2770, 2
      %v2798 = vsel %vm2337, %v2795, %v2797
      %v2799 = vrot.slane %v2771, 2
      %v2800 = vsel %vm2337, %v2797, %v2799
      %v2801 = vrot.slane %v2772, 2
      %v2802 = vsel %vm2337, %v2799, %v2801
      %v2803 = vrot.slane %v2773, 2
      %v2804 = vsel %vm2337, %v2801, %v2803
      %v2805 = vrot.slane %v2774, 2
      %v2806 = vsel %vm2337, %v2803, %v2805
      %v2807 = vrot.slane %v2775, 2
      %v2808 = vsel %vm2337, %v2805, %v2807
      %v2809 = vrot.slane %v2776, 2
      %v2810 = vsel %vm2337, %v2807, %v2809
      %v2811 = vrot.slane %v2777, 2
      %v2812 = vsel %vm2337, %v2809, %v2811
      %v2813 = vrot.slane %v2778, 2
      %v2814 = vsel %vm2337, %v2811, %v2813
      %v2815 = vrot.slane %v2779, 2
      %v2816 = vsel %vm2337, %v2813, %v2815
      %v2819 = vunpack.c.l.b16 %v2685
      %v2820 = vunpack.c.l.b16 %v2686
      %v2821 = vpack.c.b16 %v2820, %v2819
      %v2824 = vsel %vm671, %v2782, 0
      %v2827 = vsel %vm671, %v2784, 0
      %v2830 = vsel %vm671, %v2786, 0
      %v2833 = vsel %vm671, %v2788, 0
      %v2836 = vsel %vm671, %v2790, 0
      %v2839 = vsel %vm671, %v2792, 0
      %v2842 = vsel %vm671, %v2794, 0
      %v2845 = vsel %vm671, %v2796, 0
      %v2848 = vsel %vm671, %v2798, 0
      %v2851 = vsel %vm671, %v2800, 0
      %v2854 = vsel %vm671, %v2802, 0
      %v2857 = vsel %vm671, %v2804, 0
      %v2860 = vsel %vm671, %v2806, 0
      %v2863 = vsel %vm671, %v2808, 0
      %v2866 = vsel %vm671, %v2810, 0
      %v2869 = vsel %vm671, %v2812, 0
      %v2872 = vsel %vm671, %v2814, 0
      %v2875 = vsel %vm671, %v2816, 0
      %2877 = vmatprep.subr.bf16.mxu0 0
      %2878 = vmatpush1.bf16.msra.mxu0 %v2821
      %2879 = vmatprep.subr.bf16.mxu0 0
      %2880 = vmatpush1.bf16.msra.mxu0 0
      %2881 = vmatprep.subr.bf16.mxu0 0
      %2882 = vmatpush1.bf16.msra.mxu0 0
      %2883 = vmatprep.subr.bf16.mxu0 0
      %2884 = vmatpush1.bf16.msra.mxu0 0
      %2885 = vmatprep.subr.bf16.mxu0 0
      %2886 = vmatpush1.bf16.msra.mxu0 0
      %2887 = vmatprep.subr.bf16.mxu0 0
      %2888 = vmatpush1.bf16.msra.mxu0 0
      %2889 = vmatprep.subr.bf16.mxu0 0
      %2890 = vmatpush1.bf16.msra.mxu0 0
      %2891 = vmatprep.subr.bf16.mxu0 0
      %2892 = vmatpush1.bf16.msra.mxu0 0
      %2893 = vmatprep.subr.bf16.mxu0 0
      %2894 = vmatpush1.bf16.msra.mxu0 0
      %2895 = vmatprep.subr.bf16.mxu0 0
      %2896 = vmatpush1.bf16.msra.mxu0 0
      %2897 = vmatprep.subr.bf16.mxu0 0
      %2898 = vmatpush1.bf16.msra.mxu0 0
      %2899 = vmatprep.subr.bf16.mxu0 0
      %2900 = vmatpush1.bf16.msra.mxu0 0
      %2901 = vmatprep.subr.bf16.mxu0 0
      %2902 = vmatpush1.bf16.msra.mxu0 0
      %2903 = vmatprep.subr.bf16.mxu0 0
      %2904 = vmatpush1.bf16.msra.mxu0 0
      %2905 = vmatprep.subr.bf16.mxu0 0
      %2906 = vmatpush1.bf16.msra.mxu0 0
      %2907 = vmatprep.subr.bf16.mxu0 0
      %2908 = vmatpush1.bf16.msra.mxu0 0
      %2909 = vmatprep.mubr.bf16.mxu0 0
      %2910 = vmatmul.mubr.bf16.gmra.mrb[0].mxu0 %v2824
      %v2911 = vpop.f32.mrb[0].mxu0
      %v2912 = vadd.f32 0.0, %v2911
      %v2913 = vpop.f32.mrb[0].mxu0
      %v2914 = vpop.f32.mrb[0].mxu0
      %v2915 = vadd.f32 0.0, %v2914
      %v2916 = vpop.f32.mrb[0].mxu0
      %2917 = vmatprep.mubr.bf16.mxu0 0
      %2918 = vmatmul.mubr.bf16.gmra.mrb[0].mxu0 %v2827
      %v2919 = vpop.f32.mrb[0].mxu0
      %v2920 = vadd.f32 0.0, %v2919
      %v2921 = vpop.f32.mrb[0].mxu0
      %v2922 = vpop.f32.mrb[0].mxu0
      %v2923 = vadd.f32 0.0, %v2922
      %v2924 = vpop.f32.mrb[0].mxu0
      %2925 = vmatprep.mubr.bf16.mxu0 0
      %2926 = vmatmul.mubr.bf16.gmra.mrb[0].mxu0 %v2830
      %v2927 = vpop.f32.mrb[0].mxu0
      %v2928 = vadd.f32 0.0, %v2927
      %v2929 = vpop.f32.mrb[0].mxu0
      %v2930 = vpop.f32.mrb[0].mxu0
      %v2931 = vadd.f32 0.0, %v2930
      %v2932 = vpop.f32.mrb[0].mxu0
      %2933 = vmatprep.mubr.bf16.mxu0 0
      %2934 = vmatmul.mubr.bf16.gmra.mrb[0].mxu0 %v2833
      %v2935 = vpop.f32.mrb[0].mxu0
      %v2936 = vadd.f32 0.0, %v2935
      %v2937 = vpop.f32.mrb[0].mxu0
      %v2938 = vpop.f32.mrb[0].mxu0
      %v2939 = vadd.f32 0.0, %v2938
      %v2940 = vpop.f32.mrb[0].mxu0
      %2941 = vmatprep.mubr.bf16.mxu0 0
      %2942 = vmatmul.mubr.bf16.gmra.mrb[0].mxu0 %v2836
      %v2943 = vpop.f32.mrb[0].mxu0
      %v2944 = vadd.f32 0.0, %v2943
      %v2945 = vpop.f32.mrb[0].mxu0
      %v2946 = vpop.f32.mrb[0].mxu0
      %v2947 = vadd.f32 0.0, %v2946
      %v2948 = vpop.f32.mrb[0].mxu0
      %2949 = vmatprep.mubr.bf16.mxu0 0
      %2950 = vmatmul.mubr.bf16.gmra.mrb[0].mxu0 %v2839
      %v2951 = vpop.f32.mrb[0].mxu0
      %v2952 = vadd.f32 0.0, %v2951
      %v2953 = vpop.f32.mrb[0].mxu0
      %v2954 = vpop.f32.mrb[0].mxu0
      %v2955 = vadd.f32 0.0, %v2954
      %v2956 = vpop.f32.mrb[0].mxu0
      %2957 = vmatprep.mubr.bf16.mxu0 0
      %2958 = vmatmul.mubr.bf16.gmra.mrb[0].mxu0 %v2842
      %v2959 = vpop.f32.mrb[0].mxu0
      %v2960 = vadd.f32 0.0, %v2959
      %v2961 = vpop.f32.mrb[0].mxu0
      %v2962 = vpop.f32.mrb[0].mxu0
      %v2963 = vadd.f32 0.0, %v2962
      %v2964 = vpop.f32.mrb[0].mxu0
      %2965 = vmatprep.mubr.bf16.mxu0 0
      %2966 = vmatmul.mubr.bf16.gmra.mrb[0].mxu0 %v2845
      %v2967 = vpop.f32.mrb[0].mxu0
      %v2968 = vadd.f32 0.0, %v2967
      %v2969 = vpop.f32.mrb[0].mxu0
      %v2970 = vpop.f32.mrb[0].mxu0
      %v2971 = vadd.f32 0.0, %v2970
      %v2972 = vpop.f32.mrb[0].mxu0
      %2973 = vmatprep.mubr.bf16.mxu0 0
      %2974 = vmatmul.mubr.bf16.gmra.mrb[0].mxu0 %v2848
      %v2975 = vpop.f32.mrb[0].mxu0
      %v2976 = vadd.f32 0.0, %v2975
      %v2977 = vpop.f32.mrb[0].mxu0
      %v2978 = vpop.f32.mrb[0].mxu0
      %v2979 = vadd.f32 0.0, %v2978
      %v2980 = vpop.f32.mrb[0].mxu0
      %2981 = vmatprep.mubr.bf16.mxu0 0
      %2982 = vmatmul.mubr.bf16.gmra.mrb[0].mxu0 %v2851
      %v2983 = vpop.f32.mrb[0].mxu0
      %v2984 = vadd.f32 0.0, %v2983
      %v2985 = vpop.f32.mrb[0].mxu0
      %v2986 = vpop.f32.mrb[0].mxu0
      %v2987 = vadd.f32 0.0, %v2986
      %v2988 = vpop.f32.mrb[0].mxu0
      %2989 = vmatprep.mubr.bf16.mxu0 0
      %2990 = vmatmul.mubr.bf16.gmra.mrb[0].mxu0 %v2854
      %v2991 = vpop.f32.mrb[0].mxu0
      %v2992 = vadd.f32 0.0, %v2991
      %v2993 = vpop.f32.mrb[0].mxu0
      %v2994 = vpop.f32.mrb[0].mxu0
      %v2995 = vadd.f32 0.0, %v2994
      %v2996 = vpop.f32.mrb[0].mxu0
      %2997 = vmatprep.mubr.bf16.mxu0 0
      %2998 = vmatmul.mubr.bf16.gmra.mrb[0].mxu0 %v2857
      %v2999 = vpop.f32.mrb[0].mxu0
      %v3000 = vadd.f32 0.0, %v2999
      %v3001 = vpop.f32.mrb[0].mxu0
      %v3002 = vpop.f32.mrb[0].mxu0
      %v3003 = vadd.f32 0.0, %v3002
      %v3004 = vpop.f32.mrb[0].mxu0
      %3005 = vmatprep.mubr.bf16.mxu0 0
      %3006 = vmatmul.mubr.bf16.gmra.mrb[0].mxu0 %v2860
      %v3007 = vpop.f32.mrb[0].mxu0
      %v3008 = vadd.f32 0.0, %v3007
      %v3009 = vpop.f32.mrb[0].mxu0
      %v3010 = vpop.f32.mrb[0].mxu0
      %v3011 = vadd.f32 0.0, %v3010
      %v3012 = vpop.f32.mrb[0].mxu0
      %3013 = vmatprep.mubr.bf16.mxu0 0
      %3014 = vmatmul.mubr.bf16.gmra.mrb[0].mxu0 %v2863
      %v3015 = vpop.f32.mrb[0].mxu0
      %v3016 = vadd.f32 0.0, %v3015
      %v3017 = vpop.f32.mrb[0].mxu0
      %v3018 = vpop.f32.mrb[0].mxu0
      %v3019 = vadd.f32 0.0, %v3018
      %v3020 = vpop.f32.mrb[0].mxu0
      %3021 = vmatprep.mubr.bf16.mxu0 0
      %3022 = vmatmul.mubr.bf16.gmra.mrb[0].mxu0 %v2866
      %v3023 = vpop.f32.mrb[0].mxu0
      %v3024 = vadd.f32 0.0, %v3023
      %v3025 = vpop.f32.mrb[0].mxu0
      %v3026 = vpop.f32.mrb[0].mxu0
      %v3027 = vadd.f32 0.0, %v3026
      %v3028 = vpop.f32.mrb[0].mxu0
      %3029 = vmatprep.mubr.bf16.mxu0 0
      %3030 = vmatmul.mubr.bf16.gmra.mrb[0].mxu0 %v2869
      %v3031 = vpop.f32.mrb[0].mxu0
      %v3032 = vadd.f32 0.0, %v3031
      %v3033 = vpop.f32.mrb[0].mxu0
      %v3034 = vpop.f32.mrb[0].mxu0
      %v3035 = vadd.f32 0.0, %v3034
      %v3036 = vpop.f32.mrb[0].mxu0
      %3037 = vmatprep.mubr.bf16.mxu0 0
      %3038 = vmatmul.mubr.bf16.gmra.mrb[0].mxu0 %v2872
      %v3039 = vpop.f32.mrb[0].mxu0
      %v3040 = vadd.f32 0.0, %v3039
      %v3041 = vpop.f32.mrb[0].mxu0
      %v3042 = vpop.f32.mrb[0].mxu0
      %v3043 = vadd.f32 0.0, %v3042
      %v3044 = vpop.f32.mrb[0].mxu0
      %3045 = vmatprep.mubr.bf16.mxu0 0
      %3046 = vmatmul.mubr.bf16.gmra.mrb[0].mxu0 %v2875
      %v3047 = vpop.f32.mrb[0].mxu0
      %v3048 = vadd.f32 0.0, %v3047
      %v3049 = vpop.f32.mrb[0].mxu0
      %v3050 = vpop.f32.mrb[0].mxu0
      %v3051 = vadd.f32 0.0, %v3050
      %v3052 = vpop.f32.mrb[0].mxu0
      %3053 = vdwg.mxu0
      %v3054 = vadd.f32 %v2612, %v2912
      %v3055 = vadd.f32 %v2613, %v2915
      %v3056 = vadd.f32 %v2614, %v2920
      %v3057 = vadd.f32 %v2615, %v2923
      %v3058 = vadd.f32 %v2616, %v2928
      %v3059 = vadd.f32 %v2617, %v2931
      %v3060 = vadd.f32 %v2618, %v2936
      %v3061 = vadd.f32 %v2619, %v2939
      %v3062 = vadd.f32 %v2620, %v2944
      %v3063 = vadd.f32 %v2621, %v2947
      %v3064 = vadd.f32 %v2622, %v2952
      %v3065 = vadd.f32 %v2623, %v2955
      %v3066 = vadd.f32 %v2624, %v2960
      %v3067 = vadd.f32 %v2625, %v2963
      %v3068 = vadd.f32 %v2626, %v2968
      %v3069 = vadd.f32 %v2627, %v2971
      %v3070 = vadd.f32 %v2628, %v2976
      %v3071 = vadd.f32 %v2629, %v2979
      %v3072 = vadd.f32 %v2630, %v2984
      %v3073 = vadd.f32 %v2631, %v2987
      %v3074 = vadd.f32 %v2632, %v2992
      %v3075 = vadd.f32 %v2633, %v2995
      %v3076 = vadd.f32 %v2634, %v3000
      %v3077 = vadd.f32 %v2635, %v3003
      %v3078 = vadd.f32 %v2636, %v3008
      %v3079 = vadd.f32 %v2637, %v3011
      %v3080 = vadd.f32 %v2638, %v3016
      %v3081 = vadd.f32 %v2639, %v3019
      %v3082 = vadd.f32 %v2640, %v3024
      %v3083 = vadd.f32 %v2641, %v3027
      %v3084 = vadd.f32 %v2642, %v3032
      %v3085 = vadd.f32 %v2643, %v3035
      %v3086 = vadd.f32 %v2644, %v3040
      %v3087 = vadd.f32 %v2645, %v3043
      %v3088 = vadd.f32 %v2646, %v3048
      %v3089 = vadd.f32 %v2647, %v3051
      %v3090 = vld [vmem:[%s345 + $0xa0] sm:$0x7]
      %v3091 = vld [vmem:[%s3 + $0x38] sm:$0xf]
      %v3092 = vld [vmem:[%s3 + $0x3c] sm:$0xf]
      %v3094 = vunpack.c.l.b16 %v3090
      %v3095 = vpack.c.b16 %v3094, %v3094
      %vm3096 = vsmask.f32 5376
      %v3098 = vshrl.u32 %v2761, 16
      %v3100 = vrot.slane %v3098, 2
      %v3101 = vshll.u32 %v2761, 16
      %v3103 = vrot.slane %v3101, 3
      %v3104 = vor.u32 %v3100, %v3103
      %v3106 = vshrl.u32 %v2762, 16
      %v3108 = vrot.slane %v3106, 2
      %v3109 = vshll.u32 %v2762, 16
      %v3111 = vrot.slane %v3109, 3
      %v3112 = vor.u32 %v3108, %v3111
      %v3113 = vsel %vm3096, %v3104, %v3112
      %v3115 = vshrl.u32 %v2763, 16
      %v3117 = vrot.slane %v3115, 2
      %v3118 = vshll.u32 %v2763, 16
      %v3120 = vrot.slane %v3118, 3
      %v3121 = vor.u32 %v3117, %v3120
      %v3122 = vsel %vm3096, %v3112, %v3121
      %v3124 = vshrl.u32 %v2764, 16
      %v3126 = vrot.slane %v3124, 2
      %v3127 = vshll.u32 %v2764, 16
      %v3129 = vrot.slane %v3127, 3
      %v3130 = vor.u32 %v3126, %v3129
      %v3131 = vsel %vm3096, %v3121, %v3130
      %v3133 = vshrl.u32 %v2765, 16
      %v3135 = vrot.slane %v3133, 2
      %v3136 = vshll.u32 %v2765, 16
      %v3138 = vrot.slane %v3136, 3
      %v3139 = vor.u32 %v3135, %v3138
      %v3140 = vsel %vm3096, %v3130, %v3139
      %v3142 = vshrl.u32 %v2766, 16
      %v3144 = vrot.slane %v3142, 2
      %v3145 = vshll.u32 %v2766, 16
      %v3147 = vrot.slane %v3145, 3
      %v3148 = vor.u32 %v3144, %v3147
      %v3149 = vsel %vm3096, %v3139, %v3148
      %v3151 = vshrl.u32 %v2767, 16
      %v3153 = vrot.slane %v3151, 2
      %v3154 = vshll.u32 %v2767, 16
      %v3156 = vrot.slane %v3154, 3
      %v3157 = vor.u32 %v3153, %v3156
      %v3158 = vsel %vm3096, %v3148, %v3157
      %v3160 = vshrl.u32 %v2768, 16
      %v3162 = vrot.slane %v3160, 2
      %v3163 = vshll.u32 %v2768, 16
      %v3165 = vrot.slane %v3163, 3
      %v3166 = vor.u32 %v3162, %v3165
      %v3167 = vsel %vm3096, %v3157, %v3166
      %v3169 = vshrl.u32 %v2769, 16
      %v3171 = vrot.slane %v3169, 2
      %v3172 = vshll.u32 %v2769, 16
      %v3174 = vrot.slane %v3172, 3
      %v3175 = vor.u32 %v3171, %v3174
      %v3176 = vsel %vm3096, %v3166, %v3175
      %v3178 = vshrl.u32 %v2770, 16
      %v3180 = vrot.slane %v3178, 2
      %v3181 = vshll.u32 %v2770, 16
      %v3183 = vrot.slane %v3181, 3
      %v3184 = vor.u32 %v3180, %v3183
      %v3185 = vsel %vm3096, %v3175, %v3184
      %v3187 = vshrl.u32 %v2771, 16
      %v3189 = vrot.slane %v3187, 2
      %v3190 = vshll.u32 %v2771, 16
      %v3192 = vrot.slane %v3190, 3
      %v3193 = vor.u32 %v3189, %v3192
      %v3194 = vsel %vm3096, %v3184, %v3193
      %v3196 = vshrl.u32 %v2772, 16
      %v3198 = vrot.slane %v3196, 2
      %v3199 = vshll.u32 %v2772, 16
      %v3201 = vrot.slane %v3199, 3
      %v3202 = vor.u32 %v3198, %v3201
      %v3203 = vsel %vm3096, %v3193, %v3202
      %v3205 = vshrl.u32 %v2773, 16
      %v3207 = vrot.slane %v3205, 2
      %v3208 = vshll.u32 %v2773, 16
      %v3210 = vrot.slane %v3208, 3
      %v3211 = vor.u32 %v3207, %v3210
      %v3212 = vsel %vm3096, %v3202, %v3211
      %v3214 = vshrl.u32 %v2774, 16
      %v3216 = vrot.slane %v3214, 2
      %v3217 = vshll.u32 %v2774, 16
      %v3219 = vrot.slane %v3217, 3
      %v3220 = vor.u32 %v3216, %v3219
      %v3221 = vsel %vm3096, %v3211, %v3220
      %v3223 = vshrl.u32 %v2775, 16
      %v3225 = vrot.slane %v3223, 2
      %v3226 = vshll.u32 %v2775, 16
      %v3228 = vrot.slane %v3226, 3
      %v3229 = vor.u32 %v3225, %v3228
      %v3230 = vsel %vm3096, %v3220, %v3229
      %v3232 = vshrl.u32 %v2776, 16
      %v3234 = vrot.slane %v3232, 2
      %v3235 = vshll.u32 %v2776, 16
      %v3237 = vrot.slane %v3235, 3
      %v3238 = vor.u32 %v3234, %v3237
      %v3239 = vsel %vm3096, %v3229, %v3238
      %v3241 = vshrl.u32 %v2777, 16
      %v3243 = vrot.slane %v3241, 2
      %v3244 = vshll.u32 %v2777, 16
      %v3246 = vrot.slane %v3244, 3
      %v3247 = vor.u32 %v3243, %v3246
      %v3248 = vsel %vm3096, %v3238, %v3247
      %v3250 = vshrl.u32 %v2778, 16
      %v3252 = vrot.slane %v3250, 2
      %v3253 = vshll.u32 %v2778, 16
      %v3255 = vrot.slane %v3253, 3
      %v3256 = vor.u32 %v3252, %v3255
      %v3257 = vsel %vm3096, %v3247, %v3256
      %v3259 = vshrl.u32 %v3095, 16
      %v3261 = vrot.slane %v3259, 2
      %v3262 = vshll.u32 %v3095, 16
      %v3264 = vrot.slane %v3262, 3
      %v3265 = vor.u32 %v3261, %v3264
      %v3266 = vsel %vm3096, %v3256, %v3265
      %v3269 = vunpack.c.l.b16 %v3091
      %v3270 = vunpack.c.l.b16 %v3092
      %v3271 = vpack.c.b16 %v3270, %v3269
      %v3274 = vsel %vm671, %v3113, 0
      %v3277 = vsel %vm671, %v3122, 0
      %v3280 = vsel %vm671, %v3131, 0
      %v3283 = vsel %vm671, %v3140, 0
      %v3286 = vsel %vm671, %v3149, 0
      %v3289 = vsel %vm671, %v3158, 0
      %v3292 = vsel %vm671, %v3167, 0
      %v3295 = vsel %vm671, %v3176, 0
      %v3298 = vsel %vm671, %v3185, 0
      %v3301 = vsel %vm671, %v3194, 0
      %v3304 = vsel %vm671, %v3203, 0
      %v3307 = vsel %vm671, %v3212, 0
      %v3310 = vsel %vm671, %v3221, 0
      %v3313 = vsel %vm671, %v3230, 0
      %v3316 = vsel %vm671, %v3239, 0
      %v3319 = vsel %vm671, %v3248, 0
      %v3322 = vsel %vm671, %v3257, 0
      %v3325 = vsel %vm671, %v3266, 0
      %3327 = vmatprep.subr.bf16.mxu0 0
      %3328 = vmatpush1.bf16.msra.mxu0 %v3271
      %3329 = vmatprep.subr.bf16.mxu0 0
      %3330 = vmatpush1.bf16.msra.mxu0 0
      %3331 = vmatprep.subr.bf16.mxu0 0
      %3332 = vmatpush1.bf16.msra.mxu0 0
      %3333 = vmatprep.subr.bf16.mxu0 0
      %3334 = vmatpush1.bf16.msra.mxu0 0
      %3335 = vmatprep.subr.bf16.mxu0 0
      %3336 = vmatpush1.bf16.msra.mxu0 0
      %3337 = vmatprep.subr.bf16.mxu0 0
      %3338 = vmatpush1.bf16.msra.mxu0 0
      %3339 = vmatprep.subr.bf16.mxu0 0
      %3340 = vmatpush1.bf16.msra.mxu0 0
      %3341 = vmatprep.subr.bf16.mxu0 0
      %3342 = vmatpush1.bf16.msra.mxu0 0
      %3343 = vmatprep.subr.bf16.mxu0 0
      %3344 = vmatpush1.bf16.msra.mxu0 0
      %3345 = vmatprep.subr.bf16.mxu0 0
      %3346 = vmatpush1.bf16.msra.mxu0 0
      %3347 = vmatprep.subr.bf16.mxu0 0
      %3348 = vmatpush1.bf16.msra.mxu0 0
      %3349 = vmatprep.subr.bf16.mxu0 0
      %3350 = vmatpush1.bf16.msra.mxu0 0
      %3351 = vmatprep.subr.bf16.mxu0 0
      %3352 = vmatpush1.bf16.msra.mxu0 0
      %3353 = vmatprep.subr.bf16.mxu0 0
      %3354 = vmatpush1.bf16.msra.mxu0 0
      %3355 = vmatprep.subr.bf16.mxu0 0
      %3356 = vmatpush1.bf16.msra.mxu0 0
      %3357 = vmatprep.subr.bf16.mxu0 0
      %3358 = vmatpush1.bf16.msra.mxu0 0
      %3359 = vmatprep.mubr.bf16.mxu0 0
      %3360 = vmatmul.mubr.bf16.gmra.mrb[0].mxu0 %v3274
      %v3361 = vpop.f32.mrb[0].mxu0
      %v3362 = vadd.f32 0.0, %v3361
      %v3363 = vpop.f32.mrb[0].mxu0
      %v3364 = vpop.f32.mrb[0].mxu0
      %v3365 = vadd.f32 0.0, %v3364
      %v3366 = vpop.f32.mrb[0].mxu0
      %3367 = vmatprep.mubr.bf16.mxu0 0
      %3368 = vmatmul.mubr.bf16.gmra.mrb[0].mxu0 %v3277
      %v3369 = vpop.f32.mrb[0].mxu0
      %v3370 = vadd.f32 0.0, %v3369
      %v3371 = vpop.f32.mrb[0].mxu0
      %v3372 = vpop.f32.mrb[0].mxu0
      %v3373 = vadd.f32 0.0, %v3372
      %v3374 = vpop.f32.mrb[0].mxu0
      %3375 = vmatprep.mubr.bf16.mxu0 0
      %3376 = vmatmul.mubr.bf16.gmra.mrb[0].mxu0 %v3280
      %v3377 = vpop.f32.mrb[0].mxu0
      %v3378 = vadd.f32 0.0, %v3377
      %v3379 = vpop.f32.mrb[0].mxu0
      %v3380 = vpop.f32.mrb[0].mxu0
      %v3381 = vadd.f32 0.0, %v3380
      %v3382 = vpop.f32.mrb[0].mxu0
      %3383 = vmatprep.mubr.bf16.mxu0 0
      %3384 = vmatmul.mubr.bf16.gmra.mrb[0].mxu0 %v3283
      %v3385 = vpop.f32.mrb[0].mxu0
      %v3386 = vadd.f32 0.0, %v3385
      %v3387 = vpop.f32.mrb[0].mxu0
      %v3388 = vpop.f32.mrb[0].mxu0
      %v3389 = vadd.f32 0.0, %v3388
      %v3390 = vpop.f32.mrb[0].mxu0
      %3391 = vmatprep.mubr.bf16.mxu0 0
      %3392 = vmatmul.mubr.bf16.gmra.mrb[0].mxu0 %v3286
      %v3393 = vpop.f32.mrb[0].mxu0
      %v3394 = vadd.f32 0.0, %v3393
      %v3395 = vpop.f32.mrb[0].mxu0
      %v3396 = vpop.f32.mrb[0].mxu0
      %v3397 = vadd.f32 0.0, %v3396
      %v3398 = vpop.f32.mrb[0].mxu0
      %3399 = vmatprep.mubr.bf16.mxu0 0
      %3400 = vmatmul.mubr.bf16.gmra.mrb[0].mxu0 %v3289
      %v3401 = vpop.f32.mrb[0].mxu0
      %v3402 = vadd.f32 0.0, %v3401
      %v3403 = vpop.f32.mrb[0].mxu0
      %v3404 = vpop.f32.mrb[0].mxu0
      %v3405 = vadd.f32 0.0, %v3404
      %v3406 = vpop.f32.mrb[0].mxu0
      %3407 = vmatprep.mubr.bf16.mxu0 0
      %3408 = vmatmul.mubr.bf16.gmra.mrb[0].mxu0 %v3292
      %v3409 = vpop.f32.mrb[0].mxu0
      %v3410 = vadd.f32 0.0, %v3409
      %v3411 = vpop.f32.mrb[0].mxu0
      %v3412 = vpop.f32.mrb[0].mxu0
      %v3413 = vadd.f32 0.0, %v3412
      %v3414 = vpop.f32.mrb[0].mxu0
      %3415 = vmatprep.mubr.bf16.mxu0 0
      %3416 = vmatmul.mubr.bf16.gmra.mrb[0].mxu0 %v3295
      %v3417 = vpop.f32.mrb[0].mxu0
      %v3418 = vadd.f32 0.0, %v3417
      %v3419 = vpop.f32.mrb[0].mxu0
      %v3420 = vpop.f32.mrb[0].mxu0
      %v3421 = vadd.f32 0.0, %v3420
      %v3422 = vpop.f32.mrb[0].mxu0
      %3423 = vmatprep.mubr.bf16.mxu0 0
      %3424 = vmatmul.mubr.bf16.gmra.mrb[0].mxu0 %v3298
      %v3425 = vpop.f32.mrb[0].mxu0
      %v3426 = vadd.f32 0.0, %v3425
      %v3427 = vpop.f32.mrb[0].mxu0
      %v3428 = vpop.f32.mrb[0].mxu0
      %v3429 = vadd.f32 0.0, %v3428
      %v3430 = vpop.f32.mrb[0].mxu0
      %3431 = vmatprep.mubr.bf16.mxu0 0
      %3432 = vmatmul.mubr.bf16.gmra.mrb[0].mxu0 %v3301
      %v3433 = vpop.f32.mrb[0].mxu0
      %v3434 = vadd.f32 0.0, %v3433
      %v3435 = vpop.f32.mrb[0].mxu0
      %v3436 = vpop.f32.mrb[0].mxu0
      %v3437 = vadd.f32 0.0, %v3436
      %v3438 = vpop.f32.mrb[0].mxu0
      %3439 = vmatprep.mubr.bf16.mxu0 0
      %3440 = vmatmul.mubr.bf16.gmra.mrb[0].mxu0 %v3304
      %v3441 = vpop.f32.mrb[0].mxu0
      %v3442 = vadd.f32 0.0, %v3441
      %v3443 = vpop.f32.mrb[0].mxu0
      %v3444 = vpop.f32.mrb[0].mxu0
      %v3445 = vadd.f32 0.0, %v3444
      %v3446 = vpop.f32.mrb[0].mxu0
      %3447 = vmatprep.mubr.bf16.mxu0 0
      %3448 = vmatmul.mubr.bf16.gmra.mrb[0].mxu0 %v3307
      %v3449 = vpop.f32.mrb[0].mxu0
      %v3450 = vadd.f32 0.0, %v3449
      %v3451 = vpop.f32.mrb[0].mxu0
      %v3452 = vpop.f32.mrb[0].mxu0
      %v3453 = vadd.f32 0.0, %v3452
      %v3454 = vpop.f32.mrb[0].mxu0
      %3455 = vmatprep.mubr.bf16.mxu0 0
      %3456 = vmatmul.mubr.bf16.gmra.mrb[0].mxu0 %v3310
      %v3457 = vpop.f32.mrb[0].mxu0
      %v3458 = vadd.f32 0.0, %v3457
      %v3459 = vpop.f32.mrb[0].mxu0
      %v3460 = vpop.f32.mrb[0].mxu0
      %v3461 = vadd.f32 0.0, %v3460
      %v3462 = vpop.f32.mrb[0].mxu0
      %3463 = vmatprep.mubr.bf16.mxu0 0
      %3464 = vmatmul.mubr.bf16.gmra.mrb[0].mxu0 %v3313
      %v3465 = vpop.f32.mrb[0].mxu0
      %v3466 = vadd.f32 0.0, %v3465
      %v3467 = vpop.f32.mrb[0].mxu0
      %v3468 = vpop.f32.mrb[0].mxu0
      %v3469 = vadd.f32 0.0, %v3468
      %v3470 = vpop.f32.mrb[0].mxu0
      %3471 = vmatprep.mubr.bf16.mxu0 0
      %3472 = vmatmul.mubr.bf16.gmra.mrb[0].mxu0 %v3316
      %v3473 = vpop.f32.mrb[0].mxu0
      %v3474 = vadd.f32 0.0, %v3473
      %v3475 = vpop.f32.mrb[0].mxu0
      %v3476 = vpop.f32.mrb[0].mxu0
      %v3477 = vadd.f32 0.0, %v3476
      %v3478 = vpop.f32.mrb[0].mxu0
      %3479 = vmatprep.mubr.bf16.mxu0 0
      %3480 = vmatmul.mubr.bf16.gmra.mrb[0].mxu0 %v3319
      %v3481 = vpop.f32.mrb[0].mxu0
      %v3482 = vadd.f32 0.0, %v3481
      %v3483 = vpop.f32.mrb[0].mxu0
      %v3484 = vpop.f32.mrb[0].mxu0
      %v3485 = vadd.f32 0.0, %v3484
      %v3486 = vpop.f32.mrb[0].mxu0
      %3487 = vmatprep.mubr.bf16.mxu0 0
      %3488 = vmatmul.mubr.bf16.gmra.mrb[0].mxu0 %v3322
      %v3489 = vpop.f32.mrb[0].mxu0
      %v3490 = vadd.f32 0.0, %v3489
      %v3491 = vpop.f32.mrb[0].mxu0
      %v3492 = vpop.f32.mrb[0].mxu0
      %v3493 = vadd.f32 0.0, %v3492
      %v3494 = vpop.f32.mrb[0].mxu0
      %3495 = vmatprep.mubr.bf16.mxu0 0
      %3496 = vmatmul.mubr.bf16.gmra.mrb[0].mxu0 %v3325
      %v3497 = vpop.f32.mrb[0].mxu0
      %v3498 = vadd.f32 0.0, %v3497
      %v3499 = vpop.f32.mrb[0].mxu0
      %v3500 = vpop.f32.mrb[0].mxu0
      %v3501 = vadd.f32 0.0, %v3500
      %v3502 = vpop.f32.mrb[0].mxu0
      %3503 = vdwg.mxu0
      %v3504 = vadd.f32 %v3054, %v3362
      %v3505 = vadd.f32 %v3055, %v3365
      %v3506 = vadd.f32 %v3056, %v3370
      %v3507 = vadd.f32 %v3057, %v3373
      %v3508 = vadd.f32 %v3058, %v3378
      %v3509 = vadd.f32 %v3059, %v3381
      %v3510 = vadd.f32 %v3060, %v3386
      %v3511 = vadd.f32 %v3061, %v3389
      %v3512 = vadd.f32 %v3062, %v3394
      %v3513 = vadd.f32 %v3063, %v3397
      %v3514 = vadd.f32 %v3064, %v3402
      %v3515 = vadd.f32 %v3065, %v3405
      %v3516 = vadd.f32 %v3066, %v3410
      %v3517 = vadd.f32 %v3067, %v3413
      %v3518 = vadd.f32 %v3068, %v3418
      %v3519 = vadd.f32 %v3069, %v3421
      %v3520 = vadd.f32 %v3070, %v3426
      %v3521 = vadd.f32 %v3071, %v3429
      %v3522 = vadd.f32 %v3072, %v3434
      %v3523 = vadd.f32 %v3073, %v3437
      %v3524 = vadd.f32 %v3074, %v3442
      %v3525 = vadd.f32 %v3075, %v3445
      %v3526 = vadd.f32 %v3076, %v3450
      %v3527 = vadd.f32 %v3077, %v3453
      %v3528 = vadd.f32 %v3078, %v3458
      %v3529 = vadd.f32 %v3079, %v3461
      %v3530 = vadd.f32 %v3080, %v3466
      %v3531 = vadd.f32 %v3081, %v3469
      %v3532 = vadd.f32 %v3082, %v3474
      %v3533 = vadd.f32 %v3083, %v3477
      %v3534 = vadd.f32 %v3084, %v3482
      %v3535 = vadd.f32 %v3085, %v3485
      %v3536 = vadd.f32 %v3086, %v3490
      %v3537 = vadd.f32 %v3087, %v3493
      %v3538 = vadd.f32 %v3088, %v3498
      %v3539 = vadd.f32 %v3089, %v3501
      %v3540 = vld [vmem:[%s345 + $0x10] sm:$0x8]
      %v3541 = vld [vmem:[%s3 + $0x40] sm:$0xf]
      %v3542 = vld [vmem:[%s3 + $0x44] sm:$0xf]
      %v3544 = vunpack.c.l.b16 %v3540
      %v3545 = vpack.c.b16 %v2725, %v3544
      %vm3546 = vcmask 1044480
      %v3547 = vrot.slane %v3545, 3
      %v3548 = vrot.slane %v2762, 3
      %v3549 = vsel %vm3546, %v3547, %v3548
      %v3550 = vrot.slane %v2763, 3
      %v3551 = vsel %vm3546, %v3548, %v3550
      %v3552 = vrot.slane %v2764, 3
      %v3553 = vsel %vm3546, %v3550, %v3552
      %v3554 = vrot.slane %v2765, 3
      %v3555 = vsel %vm3546, %v3552, %v3554
      %v3556 = vrot.slane %v2766, 3
      %v3557 = vsel %vm3546, %v3554, %v3556
      %v3558 = vrot.slane %v2767, 3
      %v3559 = vsel %vm3546, %v3556, %v3558
      %v3560 = vrot.slane %v2768, 3
      %v3561 = vsel %vm3546, %v3558, %v3560
      %v3562 = vrot.slane %v2769, 3
      %v3563 = vsel %vm3546, %v3560, %v3562
      %v3564 = vrot.slane %v2770, 3
      %v3565 = vsel %vm3546, %v3562, %v3564
      %v3566 = vrot.slane %v2771, 3
      %v3567 = vsel %vm3546, %v3564, %v3566
      %v3568 = vrot.slane %v2772, 3
      %v3569 = vsel %vm3546, %v3566, %v3568
      %v3570 = vrot.slane %v2773, 3
      %v3571 = vsel %vm3546, %v3568, %v3570
      %v3572 = vrot.slane %v2774, 3
      %v3573 = vsel %vm3546, %v3570, %v3572
      %v3574 = vrot.slane %v2775, 3
      %v3575 = vsel %vm3546, %v3572, %v3574
      %v3576 = vrot.slane %v2776, 3
      %v3577 = vsel %vm3546, %v3574, %v3576
      %v3578 = vrot.slane %v2777, 3
      %v3579 = vsel %vm3546, %v3576, %v3578
      %v3580 = vrot.slane %v2778, 3
      %v3581 = vsel %vm3546, %v3578, %v3580
      %v3582 = vrot.slane %v3095, 3
      %v3583 = vsel %vm3546, %v3580, %v3582
      %v3586 = vunpack.c.l.b16 %v3541
      %v3587 = vunpack.c.l.b16 %v3542
      %v3588 = vpack.c.b16 %v3587, %v3586
      %v3591 = vsel %vm671, %v3549, 0
      %v3594 = vsel %vm671, %v3551, 0
      %v3597 = vsel %vm671, %v3553, 0
      %v3600 = vsel %vm671, %v3555, 0
      %v3603 = vsel %vm671, %v3557, 0
      %v3606 = vsel %vm671, %v3559, 0
      %v3609 = vsel %vm671, %v3561, 0
      %v3612 = vsel %vm671, %v3563, 0
      %v3615 = vsel %vm671, %v3565, 0
      %v3618 = vsel %vm671, %v3567, 0
      %v3621 = vsel %vm671, %v3569, 0
      %v3624 = vsel %vm671, %v3571, 0
      %v3627 = vsel %vm671, %v3573, 0
      %v3630 = vsel %vm671, %v3575, 0
      %v3633 = vsel %vm671, %v3577, 0
      %v3636 = vsel %vm671, %v3579, 0
      %v3639 = vsel %vm671, %v3581, 0
      %v3642 = vsel %vm671, %v3583, 0
      %3644 = vmatprep.subr.bf16.mxu0 0
      %3645 = vmatpush1.bf16.msra.mxu0 %v3588
      %3646 = vmatprep.subr.bf16.mxu0 0
      %3647 = vmatpush1.bf16.msra.mxu0 0
      %3648 = vmatprep.subr.bf16.mxu0 0
      %3649 = vmatpush1.bf16.msra.mxu0 0
      %3650 = vmatprep.subr.bf16.mxu0 0
      %3651 = vmatpush1.bf16.msra.mxu0 0
      %3652 = vmatprep.subr.bf16.mxu0 0
      %3653 = vmatpush1.bf16.msra.mxu0 0
      %3654 = vmatprep.subr.bf16.mxu0 0
      %3655 = vmatpush1.bf16.msra.mxu0 0
      %3656 = vmatprep.subr.bf16.mxu0 0
      %3657 = vmatpush1.bf16.msra.mxu0 0
      %3658 = vmatprep.subr.bf16.mxu0 0
      %3659 = vmatpush1.bf16.msra.mxu0 0
      %3660 = vmatprep.subr.bf16.mxu0 0
      %3661 = vmatpush1.bf16.msra.mxu0 0
      %3662 = vmatprep.subr.bf16.mxu0 0
      %3663 = vmatpush1.bf16.msra.mxu0 0
      %3664 = vmatprep.subr.bf16.mxu0 0
      %3665 = vmatpush1.bf16.msra.mxu0 0
      %3666 = vmatprep.subr.bf16.mxu0 0
      %3667 = vmatpush1.bf16.msra.mxu0 0
      %3668 = vmatprep.subr.bf16.mxu0 0
      %3669 = vmatpush1.bf16.msra.mxu0 0
      %3670 = vmatprep.subr.bf16.mxu0 0
      %3671 = vmatpush1.bf16.msra.mxu0 0
      %3672 = vmatprep.subr.bf16.mxu0 0
      %3673 = vmatpush1.bf16.msra.mxu0 0
      %3674 = vmatprep.subr.bf16.mxu0 0
      %3675 = vmatpush1.bf16.msra.mxu0 0
      %3676 = vmatprep.mubr.bf16.mxu0 0
      %3677 = vmatmul.mubr.bf16.gmra.mrb[0].mxu0 %v3591
      %v3678 = vpop.f32.mrb[0].mxu0
      %v3679 = vadd.f32 0.0, %v3678
      %v3680 = vpop.f32.mrb[0].mxu0
      %v3681 = vpop.f32.mrb[0].mxu0
      %v3682 = vadd.f32 0.0, %v3681
      %v3683 = vpop.f32.mrb[0].mxu0
      %3684 = vmatprep.mubr.bf16.mxu0 0
      %3685 = vmatmul.mubr.bf16.gmra.mrb[0].mxu0 %v3594
      %v3686 = vpop.f32.mrb[0].mxu0
      %v3687 = vadd.f32 0.0, %v3686
      %v3688 = vpop.f32.mrb[0].mxu0
      %v3689 = vpop.f32.mrb[0].mxu0
      %v3690 = vadd.f32 0.0, %v3689
      %v3691 = vpop.f32.mrb[0].mxu0
      %3692 = vmatprep.mubr.bf16.mxu0 0
      %3693 = vmatmul.mubr.bf16.gmra.mrb[0].mxu0 %v3597
      %v3694 = vpop.f32.mrb[0].mxu0
      %v3695 = vadd.f32 0.0, %v3694
      %v3696 = vpop.f32.mrb[0].mxu0
      %v3697 = vpop.f32.mrb[0].mxu0
      %v3698 = vadd.f32 0.0, %v3697
      %v3699 = vpop.f32.mrb[0].mxu0
      %3700 = vmatprep.mubr.bf16.mxu0 0
      %3701 = vmatmul.mubr.bf16.gmra.mrb[0].mxu0 %v3600
      %v3702 = vpop.f32.mrb[0].mxu0
      %v3703 = vadd.f32 0.0, %v3702
      %v3704 = vpop.f32.mrb[0].mxu0
      %v3705 = vpop.f32.mrb[0].mxu0
      %v3706 = vadd.f32 0.0, %v3705
      %v3707 = vpop.f32.mrb[0].mxu0
      %3708 = vmatprep.mubr.bf16.mxu0 0
      %3709 = vmatmul.mubr.bf16.gmra.mrb[0].mxu0 %v3603
      %v3710 = vpop.f32.mrb[0].mxu0
      %v3711 = vadd.f32 0.0, %v3710
      %v3712 = vpop.f32.mrb[0].mxu0
      %v3713 = vpop.f32.mrb[0].mxu0
      %v3714 = vadd.f32 0.0, %v3713
      %v3715 = vpop.f32.mrb[0].mxu0
      %3716 = vmatprep.mubr.bf16.mxu0 0
      %3717 = vmatmul.mubr.bf16.gmra.mrb[0].mxu0 %v3606
      %v3718 = vpop.f32.mrb[0].mxu0
      %v3719 = vadd.f32 0.0, %v3718
      %v3720 = vpop.f32.mrb[0].mxu0
      %v3721 = vpop.f32.mrb[0].mxu0
      %v3722 = vadd.f32 0.0, %v3721
      %v3723 = vpop.f32.mrb[0].mxu0
      %3724 = vmatprep.mubr.bf16.mxu0 0
      %3725 = vmatmul.mubr.bf16.gmra.mrb[0].mxu0 %v3609
      %v3726 = vpop.f32.mrb[0].mxu0
      %v3727 = vadd.f32 0.0, %v3726
      %v3728 = vpop.f32.mrb[0].mxu0
      %v3729 = vpop.f32.mrb[0].mxu0
      %v3730 = vadd.f32 0.0, %v3729
      %v3731 = vpop.f32.mrb[0].mxu0
      %3732 = vmatprep.mubr.bf16.mxu0 0
      %3733 = vmatmul.mubr.bf16.gmra.mrb[0].mxu0 %v3612
      %v3734 = vpop.f32.mrb[0].mxu0
      %v3735 = vadd.f32 0.0, %v3734
      %v3736 = vpop.f32.mrb[0].mxu0
      %v3737 = vpop.f32.mrb[0].mxu0
      %v3738 = vadd.f32 0.0, %v3737
      %v3739 = vpop.f32.mrb[0].mxu0
      %3740 = vmatprep.mubr.bf16.mxu0 0
      %3741 = vmatmul.mubr.bf16.gmra.mrb[0].mxu0 %v3615
      %v3742 = vpop.f32.mrb[0].mxu0
      %v3743 = vadd.f32 0.0, %v3742
      %v3744 = vpop.f32.mrb[0].mxu0
      %v3745 = vpop.f32.mrb[0].mxu0
      %v3746 = vadd.f32 0.0, %v3745
      %v3747 = vpop.f32.mrb[0].mxu0
      %3748 = vmatprep.mubr.bf16.mxu0 0
      %3749 = vmatmul.mubr.bf16.gmra.mrb[0].mxu0 %v3618
      %v3750 = vpop.f32.mrb[0].mxu0
      %v3751 = vadd.f32 0.0, %v3750
      %v3752 = vpop.f32.mrb[0].mxu0
      %v3753 = vpop.f32.mrb[0].mxu0
      %v3754 = vadd.f32 0.0, %v3753
      %v3755 = vpop.f32.mrb[0].mxu0
      %3756 = vmatprep.mubr.bf16.mxu0 0
      %3757 = vmatmul.mubr.bf16.gmra.mrb[0].mxu0 %v3621
      %v3758 = vpop.f32.mrb[0].mxu0
      %v3759 = vadd.f32 0.0, %v3758
      %v3760 = vpop.f32.mrb[0].mxu0
      %v3761 = vpop.f32.mrb[0].mxu0
      %v3762 = vadd.f32 0.0, %v3761
      %v3763 = vpop.f32.mrb[0].mxu0
      %3764 = vmatprep.mubr.bf16.mxu0 0
      %3765 = vmatmul.mubr.bf16.gmra.mrb[0].mxu0 %v3624
      %v3766 = vpop.f32.mrb[0].mxu0
      %v3767 = vadd.f32 0.0, %v3766
      %v3768 = vpop.f32.mrb[0].mxu0
      %v3769 = vpop.f32.mrb[0].mxu0
      %v3770 = vadd.f32 0.0, %v3769
      %v3771 = vpop.f32.mrb[0].mxu0
      %3772 = vmatprep.mubr.bf16.mxu0 0
      %3773 = vmatmul.mubr.bf16.gmra.mrb[0].mxu0 %v3627
      %v3774 = vpop.f32.mrb[0].mxu0
      %v3775 = vadd.f32 0.0, %v3774
      %v3776 = vpop.f32.mrb[0].mxu0
      %v3777 = vpop.f32.mrb[0].mxu0
      %v3778 = vadd.f32 0.0, %v3777
      %v3779 = vpop.f32.mrb[0].mxu0
      %3780 = vmatprep.mubr.bf16.mxu0 0
      %3781 = vmatmul.mubr.bf16.gmra.mrb[0].mxu0 %v3630
      %v3782 = vpop.f32.mrb[0].mxu0
      %v3783 = vadd.f32 0.0, %v3782
      %v3784 = vpop.f32.mrb[0].mxu0
      %v3785 = vpop.f32.mrb[0].mxu0
      %v3786 = vadd.f32 0.0, %v3785
      %v3787 = vpop.f32.mrb[0].mxu0
      %3788 = vmatprep.mubr.bf16.mxu0 0
      %3789 = vmatmul.mubr.bf16.gmra.mrb[0].mxu0 %v3633
      %v3790 = vpop.f32.mrb[0].mxu0
      %v3791 = vadd.f32 0.0, %v3790
      %v3792 = vpop.f32.mrb[0].mxu0
      %v3793 = vpop.f32.mrb[0].mxu0
      %v3794 = vadd.f32 0.0, %v3793
      %v3795 = vpop.f32.mrb[0].mxu0
      %3796 = vmatprep.mubr.bf16.mxu0 0
      %3797 = vmatmul.mubr.bf16.gmra.mrb[0].mxu0 %v3636
      %v3798 = vpop.f32.mrb[0].mxu0
      %v3799 = vadd.f32 0.0, %v3798
      %v3800 = vpop.f32.mrb[0].mxu0
      %v3801 = vpop.f32.mrb[0].mxu0
      %v3802 = vadd.f32 0.0, %v3801
      %v3803 = vpop.f32.mrb[0].mxu0
      %3804 = vmatprep.mubr.bf16.mxu0 0
      %3805 = vmatmul.mubr.bf16.gmra.mrb[0].mxu0 %v3639
      %v3806 = vpop.f32.mrb[0].mxu0
      %v3807 = vadd.f32 0.0, %v3806
      %v3808 = vpop.f32.mrb[0].mxu0
      %v3809 = vpop.f32.mrb[0].mxu0
      %v3810 = vadd.f32 0.0, %v3809
      %v3811 = vpop.f32.mrb[0].mxu0
      %3812 = vmatprep.mubr.bf16.mxu0 0
      %3813 = vmatmul.mubr.bf16.gmra.mrb[0].mxu0 %v3642
      %v3814 = vpop.f32.mrb[0].mxu0
      %v3815 = vadd.f32 0.0, %v3814
      %v3816 = vpop.f32.mrb[0].mxu0
      %v3817 = vpop.f32.mrb[0].mxu0
      %v3818 = vadd.f32 0.0, %v3817
      %v3819 = vpop.f32.mrb[0].mxu0
      %3820 = vdwg.mxu0
      %v3821 = vadd.f32 %v3504, %v3679
      %v3822 = vadd.f32 %v3505, %v3682
      %v3823 = vadd.f32 %v3506, %v3687
      %v3824 = vadd.f32 %v3507, %v3690
      %v3825 = vadd.f32 %v3508, %v3695
      %v3826 = vadd.f32 %v3509, %v3698
      %v3827 = vadd.f32 %v3510, %v3703
      %v3828 = vadd.f32 %v3511, %v3706
      %v3829 = vadd.f32 %v3512, %v3711
      %v3830 = vadd.f32 %v3513, %v3714
      %v3831 = vadd.f32 %v3514, %v3719
      %v3832 = vadd.f32 %v3515, %v3722
      %v3833 = vadd.f32 %v3516, %v3727
      %v3834 = vadd.f32 %v3517, %v3730
      %v3835 = vadd.f32 %v3518, %v3735
      %v3836 = vadd.f32 %v3519, %v3738
      %v3837 = vadd.f32 %v3520, %v3743
      %v3838 = vadd.f32 %v3521, %v3746
      %v3839 = vadd.f32 %v3522, %v3751
      %v3840 = vadd.f32 %v3523, %v3754
      %v3841 = vadd.f32 %v3524, %v3759
      %v3842 = vadd.f32 %v3525, %v3762
      %v3843 = vadd.f32 %v3526, %v3767
      %v3844 = vadd.f32 %v3527, %v3770
      %v3845 = vadd.f32 %v3528, %v3775
      %v3846 = vadd.f32 %v3529, %v3778
      %v3847 = vadd.f32 %v3530, %v3783
      %v3848 = vadd.f32 %v3531, %v3786
      %v3849 = vadd.f32 %v3532, %v3791
      %v3850 = vadd.f32 %v3533, %v3794
      %v3851 = vadd.f32 %v3534, %v3799
      %v3852 = vadd.f32 %v3535, %v3802
      %v3853 = vadd.f32 %v3536, %v3807
      %v3854 = vadd.f32 %v3537, %v3810
      %v3855 = vadd.f32 %v3538, %v3815
      %v3856 = vadd.f32 %v3539, %v3818
      %v3857 = vld [vmem:[%s355] sm:$0xf]
      %v3858 = vld [vmem:[%s355 + $0x4] sm:$0xf]
      %v3859 = vld [vmem:[%s355 + $0x8] sm:$0xf]
      %v3860 = vld [vmem:[%s355 + $0xc] sm:$0xf]
      %v3861 = vld [vmem:[%s355 + $0x10] sm:$0xf]
      %v3862 = vld [vmem:[%s355 + $0x14] sm:$0xf]
      %v3863 = vld [vmem:[%s355 + $0x18] sm:$0xf]
      %v3864 = vld [vmem:[%s355 + $0x1c] sm:$0xf]
      %v3865 = vld [vmem:[%s355 + $0x20] sm:$0xf]
      %v3866 = vld [vmem:[%s355 + $0x24] sm:$0xf]
      %v3867 = vld [vmem:[%s355 + $0x28] sm:$0xf]
      %v3868 = vld [vmem:[%s355 + $0x2c] sm:$0xf]
      %v3869 = vld [vmem:[%s355 + $0x30] sm:$0xf]
      %v3870 = vld [vmem:[%s355 + $0x34] sm:$0xf]
      %v3871 = vld [vmem:[%s355 + $0x38] sm:$0xf]
      %v3872 = vld [vmem:[%s355 + $0x3c] sm:$0xf]
      %v3873 = vld [vmem:[%s355 + $0x40] sm:$0xf]
      %v3874 = vld [vmem:[%s355 + $0x44] sm:$0xf]
      %v3875 = vld [vmem:[%s355 + $0x48] sm:$0xf]
      %v3876 = vld [vmem:[%s355 + $0x4c] sm:$0xf]
      %v3877 = vld [vmem:[%s355 + $0x50] sm:$0xf]
      %v3878 = vld [vmem:[%s355 + $0x54] sm:$0xf]
      %v3879 = vld [vmem:[%s355 + $0x58] sm:$0xf]
      %v3880 = vld [vmem:[%s355 + $0x5c] sm:$0xf]
      %v3881 = vld [vmem:[%s355 + $0x60] sm:$0xf]
      %v3882 = vld [vmem:[%s355 + $0x64] sm:$0xf]
      %v3883 = vld [vmem:[%s355 + $0x68] sm:$0xf]
      %v3884 = vld [vmem:[%s355 + $0x6c] sm:$0xf]
      %v3885 = vld [vmem:[%s355 + $0x70] sm:$0xf]
      %v3886 = vld [vmem:[%s355 + $0x74] sm:$0xf]
      %v3887 = vld [vmem:[%s355 + $0x78] sm:$0xf]
      %v3888 = vld [vmem:[%s355 + $0x7c] sm:$0xf]
      %v3889 = vld [vmem:[%s355 + $0x80] sm:$0xf]
      %v3890 = vld [vmem:[%s355 + $0x84] sm:$0xf]
      %v3891 = vld [vmem:[%s355 + $0x88] sm:$0xf]
      %v3892 = vld [vmem:[%s355 + $0x8c] sm:$0xf]
      %v3893 = vld [vmem:[%s3 + $0x48] sm:$0xf]
      %v3894 = vld [vmem:[%s3 + $0x4c] sm:$0xf]
      %v3931 = vunpack.c.l.b16 %v3857
      %v3932 = vunpack.c.l.b16 %v3858
      %v3933 = vunpack.c.l.b16 %v3859
      %v3934 = vunpack.c.l.b16 %v3860
      %v3935 = vunpack.c.l.b16 %v3861
      %v3936 = vunpack.c.l.b16 %v3862
      %v3937 = vunpack.c.l.b16 %v3863
      %v3938 = vunpack.c.l.b16 %v3864
      %v3939 = vunpack.c.l.b16 %v3865
      %v3940 = vunpack.c.l.b16 %v3866
      %v3941 = vunpack.c.l.b16 %v3867
      %v3942 = vunpack.c.l.b16 %v3868
      %v3943 = vunpack.c.l.b16 %v3869
      %v3944 = vunpack.c.l.b16 %v3870
      %v3945 = vunpack.c.l.b16 %v3871
      %v3946 = vunpack.c.l.b16 %v3872
      %v3947 = vunpack.c.l.b16 %v3873
      %v3948 = vunpack.c.l.b16 %v3874
      %v3949 = vunpack.c.l.b16 %v3875
      %v3950 = vunpack.c.l.b16 %v3876
      %v3951 = vunpack.c.l.b16 %v3877
      %v3952 = vunpack.c.l.b16 %v3878
      %v3953 = vunpack.c.l.b16 %v3879
      %v3954 = vunpack.c.l.b16 %v3880
      %v3955 = vunpack.c.l.b16 %v3881
      %v3956 = vunpack.c.l.b16 %v3882
      %v3957 = vunpack.c.l.b16 %v3883
      %v3958 = vunpack.c.l.b16 %v3884
      %v3959 = vunpack.c.l.b16 %v3885
      %v3960 = vunpack.c.l.b16 %v3886
      %v3961 = vunpack.c.l.b16 %v3887
      %v3962 = vunpack.c.l.b16 %v3888
      %v3963 = vunpack.c.l.b16 %v3889
      %v3964 = vunpack.c.l.b16 %v3890
      %v3965 = vunpack.c.l.b16 %v3891
      %v3966 = vunpack.c.l.b16 %v3892
      %v3967 = vpack.c.b16 %v3932, %v3931
      %v3968 = vpack.c.b16 %v3934, %v3933
      %v3969 = vpack.c.b16 %v3936, %v3935
      %v3970 = vpack.c.b16 %v3938, %v3937
      %v3971 = vpack.c.b16 %v3940, %v3939
      %v3972 = vpack.c.b16 %v3942, %v3941
      %v3973 = vpack.c.b16 %v3944, %v3943
      %v3974 = vpack.c.b16 %v3946, %v3945
      %v3975 = vpack.c.b16 %v3948, %v3947
      %v3976 = vpack.c.b16 %v3950, %v3949
      %v3977 = vpack.c.b16 %v3952, %v3951
      %v3978 = vpack.c.b16 %v3954, %v3953
      %v3979 = vpack.c.b16 %v3956, %v3955
      %v3980 = vpack.c.b16 %v3958, %v3957
      %v3981 = vpack.c.b16 %v3960, %v3959
      %v3982 = vpack.c.b16 %v3962, %v3961
      %v3983 = vpack.c.b16 %v3964, %v3963
      %v3984 = vpack.c.b16 %v3966, %v3965
      %v3987 = vunpack.c.l.b16 %v3893
      %v3988 = vunpack.c.l.b16 %v3894
      %v3989 = vpack.c.b16 %v3988, %v3987
      %v3992 = vsel %vm671, %v3967, 0
      %v3995 = vsel %vm671, %v3968, 0
      %v3998 = vsel %vm671, %v3969, 0
      %v4001 = vsel %vm671, %v3970, 0
      %v4004 = vsel %vm671, %v3971, 0
      %v4007 = vsel %vm671, %v3972, 0
      %v4010 = vsel %vm671, %v3973, 0
      %v4013 = vsel %vm671, %v3974, 0
      %v4016 = vsel %vm671, %v3975, 0
      %v4019 = vsel %vm671, %v3976, 0
      %v4022 = vsel %vm671, %v3977, 0
      %v4025 = vsel %vm671, %v3978, 0
      %v4028 = vsel %vm671, %v3979, 0
      %v4031 = vsel %vm671, %v3980, 0
      %v4034 = vsel %vm671, %v3981, 0
      %v4037 = vsel %vm671, %v3982, 0
      %v4040 = vsel %vm671, %v3983, 0
      %v4043 = vsel %vm671, %v3984, 0
      %4045 = vmatprep.subr.bf16.mxu0 0
      %4046 = vmatpush1.bf16.msra.mxu0 %v3989
      %4047 = vmatprep.subr.bf16.mxu0 0
      %4048 = vmatpush1.bf16.msra.mxu0 0
      %4049 = vmatprep.subr.bf16.mxu0 0
      %4050 = vmatpush1.bf16.msra.mxu0 0
      %4051 = vmatprep.subr.bf16.mxu0 0
      %4052 = vmatpush1.bf16.msra.mxu0 0
      %4053 = vmatprep.subr.bf16.mxu0 0
      %4054 = vmatpush1.bf16.msra.mxu0 0
      %4055 = vmatprep.subr.bf16.mxu0 0
      %4056 = vmatpush1.bf16.msra.mxu0 0
      %4057 = vmatprep.subr.bf16.mxu0 0
      %4058 = vmatpush1.bf16.msra.mxu0 0
      %4059 = vmatprep.subr.bf16.mxu0 0
      %4060 = vmatpush1.bf16.msra.mxu0 0
      %4061 = vmatprep.subr.bf16.mxu0 0
      %4062 = vmatpush1.bf16.msra.mxu0 0
      %4063 = vmatprep.subr.bf16.mxu0 0
      %4064 = vmatpush1.bf16.msra.mxu0 0
      %4065 = vmatprep.subr.bf16.mxu0 0
      %4066 = vmatpush1.bf16.msra.mxu0 0
      %4067 = vmatprep.subr.bf16.mxu0 0
      %4068 = vmatpush1.bf16.msra.mxu0 0
      %4069 = vmatprep.subr.bf16.mxu0 0
      %4070 = vmatpush1.bf16.msra.mxu0 0
      %4071 = vmatprep.subr.bf16.mxu0 0
      %4072 = vmatpush1.bf16.msra.mxu0 0
      %4073 = vmatprep.subr.bf16.mxu0 0
      %4074 = vmatpush1.bf16.msra.mxu0 0
      %4075 = vmatprep.subr.bf16.mxu0 0
      %4076 = vmatpush1.bf16.msra.mxu0 0
      %4077 = vmatprep.mubr.bf16.mxu0 0
      %4078 = vmatmul.mubr.bf16.gmra.mrb[0].mxu0 %v3992
      %v4079 = vpop.f32.mrb[0].mxu0
      %v4080 = vadd.f32 0.0, %v4079
      %v4081 = vpop.f32.mrb[0].mxu0
      %v4082 = vpop.f32.mrb[0].mxu0
      %v4083 = vadd.f32 0.0, %v4082
      %v4084 = vpop.f32.mrb[0].mxu0
      %4085 = vmatprep.mubr.bf16.mxu0 0
      %4086 = vmatmul.mubr.bf16.gmra.mrb[0].mxu0 %v3995
      %v4087 = vpop.f32.mrb[0].mxu0
      %v4088 = vadd.f32 0.0, %v4087
      %v4089 = vpop.f32.mrb[0].mxu0
      %v4090 = vpop.f32.mrb[0].mxu0
      %v4091 = vadd.f32 0.0, %v4090
      %v4092 = vpop.f32.mrb[0].mxu0
      %4093 = vmatprep.mubr.bf16.mxu0 0
      %4094 = vmatmul.mubr.bf16.gmra.mrb[0].mxu0 %v3998
      %v4095 = vpop.f32.mrb[0].mxu0
      %v4096 = vadd.f32 0.0, %v4095
      %v4097 = vpop.f32.mrb[0].mxu0
      %v4098 = vpop.f32.mrb[0].mxu0
      %v4099 = vadd.f32 0.0, %v4098
      %v4100 = vpop.f32.mrb[0].mxu0
      %4101 = vmatprep.mubr.bf16.mxu0 0
      %4102 = vmatmul.mubr.bf16.gmra.mrb[0].mxu0 %v4001
      %v4103 = vpop.f32.mrb[0].mxu0
      %v4104 = vadd.f32 0.0, %v4103
      %v4105 = vpop.f32.mrb[0].mxu0
      %v4106 = vpop.f32.mrb[0].mxu0
      %v4107 = vadd.f32 0.0, %v4106
      %v4108 = vpop.f32.mrb[0].mxu0
      %4109 = vmatprep.mubr.bf16.mxu0 0
      %4110 = vmatmul.mubr.bf16.gmra.mrb[0].mxu0 %v4004
      %v4111 = vpop.f32.mrb[0].mxu0
      %v4112 = vadd.f32 0.0, %v4111
      %v4113 = vpop.f32.mrb[0].mxu0
      %v4114 = vpop.f32.mrb[0].mxu0
      %v4115 = vadd.f32 0.0, %v4114
      %v4116 = vpop.f32.mrb[0].mxu0
      %4117 = vmatprep.mubr.bf16.mxu0 0
      %4118 = vmatmul.mubr.bf16.gmra.mrb[0].mxu0 %v4007
      %v4119 = vpop.f32.mrb[0].mxu0
      %v4120 = vadd.f32 0.0, %v4119
      %v4121 = vpop.f32.mrb[0].mxu0
      %v4122 = vpop.f32.mrb[0].mxu0
      %v4123 = vadd.f32 0.0, %v4122
      %v4124 = vpop.f32.mrb[0].mxu0
      %4125 = vmatprep.mubr.bf16.mxu0 0
      %4126 = vmatmul.mubr.bf16.gmra.mrb[0].mxu0 %v4010
      %v4127 = vpop.f32.mrb[0].mxu0
      %v4128 = vadd.f32 0.0, %v4127
      %v4129 = vpop.f32.mrb[0].mxu0
      %v4130 = vpop.f32.mrb[0].mxu0
      %v4131 = vadd.f32 0.0, %v4130
      %v4132 = vpop.f32.mrb[0].mxu0
      %4133 = vmatprep.mubr.bf16.mxu0 0
      %4134 = vmatmul.mubr.bf16.gmra.mrb[0].mxu0 %v4013
      %v4135 = vpop.f32.mrb[0].mxu0
      %v4136 = vadd.f32 0.0, %v4135
      %v4137 = vpop.f32.mrb[0].mxu0
      %v4138 = vpop.f32.mrb[0].mxu0
      %v4139 = vadd.f32 0.0, %v4138
      %v4140 = vpop.f32.mrb[0].mxu0
      %4141 = vmatprep.mubr.bf16.mxu0 0
      %4142 = vmatmul.mubr.bf16.gmra.mrb[0].mxu0 %v4016
      %v4143 = vpop.f32.mrb[0].mxu0
      %v4144 = vadd.f32 0.0, %v4143
      %v4145 = vpop.f32.mrb[0].mxu0
      %v4146 = vpop.f32.mrb[0].mxu0
      %v4147 = vadd.f32 0.0, %v4146
      %v4148 = vpop.f32.mrb[0].mxu0
      %4149 = vmatprep.mubr.bf16.mxu0 0
      %4150 = vmatmul.mubr.bf16.gmra.mrb[0].mxu0 %v4019
      %v4151 = vpop.f32.mrb[0].mxu0
      %v4152 = vadd.f32 0.0, %v4151
      %v4153 = vpop.f32.mrb[0].mxu0
      %v4154 = vpop.f32.mrb[0].mxu0
      %v4155 = vadd.f32 0.0, %v4154
      %v4156 = vpop.f32.mrb[0].mxu0
      %4157 = vmatprep.mubr.bf16.mxu0 0
      %4158 = vmatmul.mubr.bf16.gmra.mrb[0].mxu0 %v4022
      %v4159 = vpop.f32.mrb[0].mxu0
      %v4160 = vadd.f32 0.0, %v4159
      %v4161 = vpop.f32.mrb[0].mxu0
      %v4162 = vpop.f32.mrb[0].mxu0
      %v4163 = vadd.f32 0.0, %v4162
      %v4164 = vpop.f32.mrb[0].mxu0
      %4165 = vmatprep.mubr.bf16.mxu0 0
      %4166 = vmatmul.mubr.bf16.gmra.mrb[0].mxu0 %v4025
      %v4167 = vpop.f32.mrb[0].mxu0
      %v4168 = vadd.f32 0.0, %v4167
      %v4169 = vpop.f32.mrb[0].mxu0
      %v4170 = vpop.f32.mrb[0].mxu0
      %v4171 = vadd.f32 0.0, %v4170
      %v4172 = vpop.f32.mrb[0].mxu0
      %4173 = vmatprep.mubr.bf16.mxu0 0
      %4174 = vmatmul.mubr.bf16.gmra.mrb[0].mxu0 %v4028
      %v4175 = vpop.f32.mrb[0].mxu0
      %v4176 = vadd.f32 0.0, %v4175
      %v4177 = vpop.f32.mrb[0].mxu0
      %v4178 = vpop.f32.mrb[0].mxu0
      %v4179 = vadd.f32 0.0, %v4178
      %v4180 = vpop.f32.mrb[0].mxu0
      %4181 = vmatprep.mubr.bf16.mxu0 0
      %4182 = vmatmul.mubr.bf16.gmra.mrb[0].mxu0 %v4031
      %v4183 = vpop.f32.mrb[0].mxu0
      %v4184 = vadd.f32 0.0, %v4183
      %v4185 = vpop.f32.mrb[0].mxu0
      %v4186 = vpop.f32.mrb[0].mxu0
      %v4187 = vadd.f32 0.0, %v4186
      %v4188 = vpop.f32.mrb[0].mxu0
      %4189 = vmatprep.mubr.bf16.mxu0 0
      %4190 = vmatmul.mubr.bf16.gmra.mrb[0].mxu0 %v4034
      %v4191 = vpop.f32.mrb[0].mxu0
      %v4192 = vadd.f32 0.0, %v4191
      %v4193 = vpop.f32.mrb[0].mxu0
      %v4194 = vpop.f32.mrb[0].mxu0
      %v4195 = vadd.f32 0.0, %v4194
      %v4196 = vpop.f32.mrb[0].mxu0
      %4197 = vmatprep.mubr.bf16.mxu0 0
      %4198 = vmatmul.mubr.bf16.gmra.mrb[0].mxu0 %v4037
      %v4199 = vpop.f32.mrb[0].mxu0
      %v4200 = vadd.f32 0.0, %v4199
      %v4201 = vpop.f32.mrb[0].mxu0
      %v4202 = vpop.f32.mrb[0].mxu0
      %v4203 = vadd.f32 0.0, %v4202
      %v4204 = vpop.f32.mrb[0].mxu0
      %4205 = vmatprep.mubr.bf16.mxu0 0
      %4206 = vmatmul.mubr.bf16.gmra.mrb[0].mxu0 %v4040
      %v4207 = vpop.f32.mrb[0].mxu0
      %v4208 = vadd.f32 0.0, %v4207
      %v4209 = vpop.f32.mrb[0].mxu0
      %v4210 = vpop.f32.mrb[0].mxu0
      %v4211 = vadd.f32 0.0, %v4210
      %v4212 = vpop.f32.mrb[0].mxu0
      %4213 = vmatprep.mubr.bf16.mxu0 0
      %4214 = vmatmul.mubr.bf16.gmra.mrb[0].mxu0 %v4043
      %v4215 = vpop.f32.mrb[0].mxu0
      %v4216 = vadd.f32 0.0, %v4215
      %v4217 = vpop.f32.mrb[0].mxu0
      %v4218 = vpop.f32.mrb[0].mxu0
      %v4219 = vadd.f32 0.0, %v4218
      %v4220 = vpop.f32.mrb[0].mxu0
      %4221 = vdwg.mxu0
      %v4222 = vadd.f32 %v3821, %v4080
      %v4223 = vadd.f32 %v3822, %v4083
      %v4224 = vadd.f32 %v3823, %v4088
      %v4225 = vadd.f32 %v3824, %v4091
      %v4226 = vadd.f32 %v3825, %v4096
      %v4227 = vadd.f32 %v3826, %v4099
      %v4228 = vadd.f32 %v3827, %v4104
      %v4229 = vadd.f32 %v3828, %v4107
      %v4230 = vadd.f32 %v3829, %v4112
      %v4231 = vadd.f32 %v3830, %v4115
      %v4232 = vadd.f32 %v3831, %v4120
      %v4233 = vadd.f32 %v3832, %v4123
      %v4234 = vadd.f32 %v3833, %v4128
      %v4235 = vadd.f32 %v3834, %v4131
      %v4236 = vadd.f32 %v3835, %v4136
      %v4237 = vadd.f32 %v3836, %v4139
      %v4238 = vadd.f32 %v3837, %v4144
      %v4239 = vadd.f32 %v3838, %v4147
      %v4240 = vadd.f32 %v3839, %v4152
      %v4241 = vadd.f32 %v3840, %v4155
      %v4242 = vadd.f32 %v3841, %v4160
      %v4243 = vadd.f32 %v3842, %v4163
      %v4244 = vadd.f32 %v3843, %v4168
      %v4245 = vadd.f32 %v3844, %v4171
      %v4246 = vadd.f32 %v3845, %v4176
      %v4247 = vadd.f32 %v3846, %v4179
      %v4248 = vadd.f32 %v3847, %v4184
      %v4249 = vadd.f32 %v3848, %v4187
      %v4250 = vadd.f32 %v3849, %v4192
      %v4251 = vadd.f32 %v3850, %v4195
      %v4252 = vadd.f32 %v3851, %v4200
      %v4253 = vadd.f32 %v3852, %v4203
      %v4254 = vadd.f32 %v3853, %v4208
      %v4255 = vadd.f32 %v3854, %v4211
      %v4256 = vadd.f32 %v3855, %v4216
      %v4257 = vadd.f32 %v3856, %v4219
      %v4258 = vld [vmem:[%s355] sm:$0xf]
      %v4259 = vld [vmem:[%s355 + $0x4] sm:$0xf]
      %v4260 = vld [vmem:[%s355 + $0x8] sm:$0xf]
      %v4261 = vld [vmem:[%s355 + $0xc] sm:$0xf]
      %v4262 = vld [vmem:[%s355 + $0x10] sm:$0xf]
      %v4263 = vld [vmem:[%s355 + $0x14] sm:$0xf]
      %v4264 = vld [vmem:[%s355 + $0x18] sm:$0xf]
      %v4265 = vld [vmem:[%s355 + $0x1c] sm:$0xf]
      %v4266 = vld [vmem:[%s355 + $0x20] sm:$0xf]
      %v4267 = vld [vmem:[%s355 + $0x24] sm:$0xf]
      %v4268 = vld [vmem:[%s355 + $0x28] sm:$0xf]
      %v4269 = vld [vmem:[%s355 + $0x2c] sm:$0xf]
      %v4270 = vld [vmem:[%s355 + $0x30] sm:$0xf]
      %v4271 = vld [vmem:[%s355 + $0x34] sm:$0xf]
      %v4272 = vld [vmem:[%s355 + $0x38] sm:$0xf]
      %v4273 = vld [vmem:[%s355 + $0x3c] sm:$0xf]
      %v4274 = vld [vmem:[%s355 + $0x40] sm:$0xf]
      %v4275 = vld [vmem:[%s355 + $0x44] sm:$0xf]
      %v4276 = vld [vmem:[%s355 + $0x48] sm:$0xf]
      %v4277 = vld [vmem:[%s355 + $0x4c] sm:$0xf]
      %v4278 = vld [vmem:[%s355 + $0x50] sm:$0xf]
      %v4279 = vld [vmem:[%s355 + $0x54] sm:$0xf]
      %v4280 = vld [vmem:[%s355 + $0x58] sm:$0xf]
      %v4281 = vld [vmem:[%s355 + $0x5c] sm:$0xf]
      %v4282 = vld [vmem:[%s355 + $0x60] sm:$0xf]
      %v4283 = vld [vmem:[%s355 + $0x64] sm:$0xf]
      %v4284 = vld [vmem:[%s355 + $0x68] sm:$0xf]
      %v4285 = vld [vmem:[%s355 + $0x6c] sm:$0xf]
      %v4286 = vld [vmem:[%s355 + $0x70] sm:$0xf]
      %v4287 = vld [vmem:[%s355 + $0x74] sm:$0xf]
      %v4288 = vld [vmem:[%s355 + $0x78] sm:$0xf]
      %v4289 = vld [vmem:[%s355 + $0x7c] sm:$0xf]
      %v4290 = vld [vmem:[%s355 + $0x80] sm:$0xf]
      %v4291 = vld [vmem:[%s355 + $0x84] sm:$0xf]
      %v4292 = vld [vmem:[%s355 + $0x88] sm:$0xf]
      %v4293 = vld [vmem:[%s355 + $0x8c] sm:$0xf]
      %v4294 = vld [vmem:[%s355 + $0x90] sm:$0x1]
      %v4295 = vld [vmem:[%s3 + $0x50] sm:$0xf]
      %v4296 = vld [vmem:[%s3 + $0x54] sm:$0xf]
      %v4334 = vunpack.c.l.b16 %v4258
      %v4335 = vunpack.c.l.b16 %v4259
      %v4336 = vunpack.c.l.b16 %v4260
      %v4337 = vunpack.c.l.b16 %v4261
      %v4338 = vunpack.c.l.b16 %v4262
      %v4339 = vunpack.c.l.b16 %v4263
      %v4340 = vunpack.c.l.b16 %v4264
      %v4341 = vunpack.c.l.b16 %v4265
      %v4342 = vunpack.c.l.b16 %v4266
      %v4343 = vunpack.c.l.b16 %v4267
      %v4344 = vunpack.c.l.b16 %v4268
      %v4345 = vunpack.c.l.b16 %v4269
      %v4346 = vunpack.c.l.b16 %v4270
      %v4347 = vunpack.c.l.b16 %v4271
      %v4348 = vunpack.c.l.b16 %v4272
      %v4349 = vunpack.c.l.b16 %v4273
      %v4350 = vunpack.c.l.b16 %v4274
      %v4351 = vunpack.c.l.b16 %v4275
      %v4352 = vunpack.c.l.b16 %v4276
      %v4353 = vunpack.c.l.b16 %v4277
      %v4354 = vunpack.c.l.b16 %v4278
      %v4355 = vunpack.c.l.b16 %v4279
      %v4356 = vunpack.c.l.b16 %v4280
      %v4357 = vunpack.c.l.b16 %v4281
      %v4358 = vunpack.c.l.b16 %v4282
      %v4359 = vunpack.c.l.b16 %v4283
      %v4360 = vunpack.c.l.b16 %v4284
      %v4361 = vunpack.c.l.b16 %v4285
      %v4362 = vunpack.c.l.b16 %v4286
      %v4363 = vunpack.c.l.b16 %v4287
      %v4364 = vunpack.c.l.b16 %v4288
      %v4365 = vunpack.c.l.b16 %v4289
      %v4366 = vunpack.c.l.b16 %v4290
      %v4367 = vunpack.c.l.b16 %v4291
      %v4368 = vunpack.c.l.b16 %v4292
      %v4369 = vunpack.c.l.b16 %v4293
      %v4370 = vunpack.c.l.b16 %v4294
      %v4371 = vpack.c.b16 %v4335, %v4334
      %v4372 = vpack.c.b16 %v4337, %v4336
      %v4373 = vpack.c.b16 %v4339, %v4338
      %v4374 = vpack.c.b16 %v4341, %v4340
      %v4375 = vpack.c.b16 %v4343, %v4342
      %v4376 = vpack.c.b16 %v4345, %v4344
      %v4377 = vpack.c.b16 %v4347, %v4346
      %v4378 = vpack.c.b16 %v4349, %v4348
      %v4379 = vpack.c.b16 %v4351, %v4350
      %v4380 = vpack.c.b16 %v4353, %v4352
      %v4381 = vpack.c.b16 %v4355, %v4354
      %v4382 = vpack.c.b16 %v4357, %v4356
      %v4383 = vpack.c.b16 %v4359, %v4358
      %v4384 = vpack.c.b16 %v4361, %v4360
      %v4385 = vpack.c.b16 %v4363, %v4362
      %v4386 = vpack.c.b16 %v4365, %v4364
      %v4387 = vpack.c.b16 %v4367, %v4366
      %v4388 = vpack.c.b16 %v4369, %v4368
      %v4389 = vpack.c.b16 %v4370, %v4370
      %v4391 = vshrl.u32 %v4371, 16
      %v4393 = vshll.u32 %v4371, 16
      %v4395 = vrot.slane %v4393, 1
      %v4396 = vor.u32 %v4391, %v4395
      %v4398 = vshll.u32 %v4372, 16
      %v4400 = vrot.slane %v4398, 1
      %v4401 = vsel %vm516, %v4396, %v4400
      %v4402 = vshrl.u32 %v4372, 16
      %v4404 = vor.u32 %v4402, %v4400
      %v4406 = vshll.u32 %v4373, 16
      %v4408 = vrot.slane %v4406, 1
      %v4409 = vsel %vm516, %v4404, %v4408
      %v4410 = vshrl.u32 %v4373, 16
      %v4412 = vor.u32 %v4410, %v4408
      %v4414 = vshll.u32 %v4374, 16
      %v4416 = vrot.slane %v4414, 1
      %v4417 = vsel %vm516, %v4412, %v4416
      %v4418 = vshrl.u32 %v4374, 16
      %v4420 = vor.u32 %v4418, %v4416
      %v4422 = vshll.u32 %v4375, 16
      %v4424 = vrot.slane %v4422, 1
      %v4425 = vsel %vm516, %v4420, %v4424
      %v4426 = vshrl.u32 %v4375, 16
      %v4428 = vor.u32 %v4426, %v4424
      %v4430 = vshll.u32 %v4376, 16
      %v4432 = vrot.slane %v4430, 1
      %v4433 = vsel %vm516, %v4428, %v4432
      %v4434 = vshrl.u32 %v4376, 16
      %v4436 = vor.u32 %v4434, %v4432
      %v4438 = vshll.u32 %v4377, 16
      %v4440 = vrot.slane %v4438, 1
      %v4441 = vsel %vm516, %v4436, %v4440
      %v4442 = vshrl.u32 %v4377, 16
      %v4444 = vor.u32 %v4442, %v4440
      %v4446 = vshll.u32 %v4378, 16
      %v4448 = vrot.slane %v4446, 1
      %v4449 = vsel %vm516, %v4444, %v4448
      %v4450 = vshrl.u32 %v4378, 16
      %v4452 = vor.u32 %v4450, %v4448
      %v4454 = vshll.u32 %v4379, 16
      %v4456 = vrot.slane %v4454, 1
      %v4457 = vsel %vm516, %v4452, %v4456
      %v4458 = vshrl.u32 %v4379, 16
      %v4460 = vor.u32 %v4458, %v4456
      %v4462 = vshll.u32 %v4380, 16
      %v4464 = vrot.slane %v4462, 1
      %v4465 = vsel %vm516, %v4460, %v4464
      %v4466 = vshrl.u32 %v4380, 16
      %v4468 = vor.u32 %v4466, %v4464
      %v4470 = vshll.u32 %v4381, 16
      %v4472 = vrot.slane %v4470, 1
      %v4473 = vsel %vm516, %v4468, %v4472
      %v4474 = vshrl.u32 %v4381, 16
      %v4476 = vor.u32 %v4474, %v4472
      %v4478 = vshll.u32 %v4382, 16
      %v4480 = vrot.slane %v4478, 1
      %v4481 = vsel %vm516, %v4476, %v4480
      %v4482 = vshrl.u32 %v4382, 16
      %v4484 = vor.u32 %v4482, %v4480
      %v4486 = vshll.u32 %v4383, 16
      %v4488 = vrot.slane %v4486, 1
      %v4489 = vsel %vm516, %v4484, %v4488
      %v4490 = vshrl.u32 %v4383, 16
      %v4492 = vor.u32 %v4490, %v4488
      %v4494 = vshll.u32 %v4384, 16
      %v4496 = vrot.slane %v4494, 1
      %v4497 = vsel %vm516, %v4492, %v4496
      %v4498 = vshrl.u32 %v4384, 16
      %v4500 = vor.u32 %v4498, %v4496
      %v4502 = vshll.u32 %v4385, 16
      %v4504 = vrot.slane %v4502, 1
      %v4505 = vsel %vm516, %v4500, %v4504
      %v4506 = vshrl.u32 %v4385, 16
      %v4508 = vor.u32 %v4506, %v4504
      %v4510 = vshll.u32 %v4386, 16
      %v4512 = vrot.slane %v4510, 1
      %v4513 = vsel %vm516, %v4508, %v4512
      %v4514 = vshrl.u32 %v4386, 16
      %v4516 = vor.u32 %v4514, %v4512
      %v4518 = vshll.u32 %v4387, 16
      %v4520 = vrot.slane %v4518, 1
      %v4521 = vsel %vm516, %v4516, %v4520
      %v4522 = vshrl.u32 %v4387, 16
      %v4524 = vor.u32 %v4522, %v4520
      %v4526 = vshll.u32 %v4388, 16
      %v4528 = vrot.slane %v4526, 1
      %v4529 = vsel %vm516, %v4524, %v4528
      %v4530 = vshrl.u32 %v4388, 16
      %v4532 = vor.u32 %v4530, %v4528
      %v4534 = vshll.u32 %v4389, 16
      %v4536 = vrot.slane %v4534, 1
      %v4537 = vsel %vm516, %v4532, %v4536
      %v4540 = vunpack.c.l.b16 %v4295
      %v4541 = vunpack.c.l.b16 %v4296
      %v4542 = vpack.c.b16 %v4541, %v4540
      %v4545 = vsel %vm671, %v4401, 0
      %v4548 = vsel %vm671, %v4409, 0
      %v4551 = vsel %vm671, %v4417, 0
      %v4554 = vsel %vm671, %v4425, 0
      %v4557 = vsel %vm671, %v4433, 0
      %v4560 = vsel %vm671, %v4441, 0
      %v4563 = vsel %vm671, %v4449, 0
      %v4566 = vsel %vm671, %v4457, 0
      %v4569 = vsel %vm671, %v4465, 0
      %v4572 = vsel %vm671, %v4473, 0
      %v4575 = vsel %vm671, %v4481, 0
      %v4578 = vsel %vm671, %v4489, 0
      %v4581 = vsel %vm671, %v4497, 0
      %v4584 = vsel %vm671, %v4505, 0
      %v4587 = vsel %vm671, %v4513, 0
      %v4590 = vsel %vm671, %v4521, 0
      %v4593 = vsel %vm671, %v4529, 0
      %v4596 = vsel %vm671, %v4537, 0
      %4598 = vmatprep.subr.bf16.mxu0 0
      %4599 = vmatpush1.bf16.msra.mxu0 %v4542
      %4600 = vmatprep.subr.bf16.mxu0 0
      %4601 = vmatpush1.bf16.msra.mxu0 0
      %4602 = vmatprep.subr.bf16.mxu0 0
      %4603 = vmatpush1.bf16.msra.mxu0 0
      %4604 = vmatprep.subr.bf16.mxu0 0
      %4605 = vmatpush1.bf16.msra.mxu0 0
      %4606 = vmatprep.subr.bf16.mxu0 0
      %4607 = vmatpush1.bf16.msra.mxu0 0
      %4608 = vmatprep.subr.bf16.mxu0 0
      %4609 = vmatpush1.bf16.msra.mxu0 0
      %4610 = vmatprep.subr.bf16.mxu0 0
      %4611 = vmatpush1.bf16.msra.mxu0 0
      %4612 = vmatprep.subr.bf16.mxu0 0
      %4613 = vmatpush1.bf16.msra.mxu0 0
      %4614 = vmatprep.subr.bf16.mxu0 0
      %4615 = vmatpush1.bf16.msra.mxu0 0
      %4616 = vmatprep.subr.bf16.mxu0 0
      %4617 = vmatpush1.bf16.msra.mxu0 0
      %4618 = vmatprep.subr.bf16.mxu0 0
      %4619 = vmatpush1.bf16.msra.mxu0 0
      %4620 = vmatprep.subr.bf16.mxu0 0
      %4621 = vmatpush1.bf16.msra.mxu0 0
      %4622 = vmatprep.subr.bf16.mxu0 0
      %4623 = vmatpush1.bf16.msra.mxu0 0
      %4624 = vmatprep.subr.bf16.mxu0 0
      %4625 = vmatpush1.bf16.msra.mxu0 0
      %4626 = vmatprep.subr.bf16.mxu0 0
      %4627 = vmatpush1.bf16.msra.mxu0 0
      %4628 = vmatprep.subr.bf16.mxu0 0
      %4629 = vmatpush1.bf16.msra.mxu0 0
      %4630 = vmatprep.mubr.bf16.mxu0 0
      %4631 = vmatmul.mubr.bf16.gmra.mrb[0].mxu0 %v4545
      %v4632 = vpop.f32.mrb[0].mxu0
      %v4633 = vadd.f32 0.0, %v4632
      %v4634 = vpop.f32.mrb[0].mxu0
      %v4635 = vpop.f32.mrb[0].mxu0
      %v4636 = vadd.f32 0.0, %v4635
      %v4637 = vpop.f32.mrb[0].mxu0
      %4638 = vmatprep.mubr.bf16.mxu0 0
      %4639 = vmatmul.mubr.bf16.gmra.mrb[0].mxu0 %v4548
      %v4640 = vpop.f32.mrb[0].mxu0
      %v4641 = vadd.f32 0.0, %v4640
      %v4642 = vpop.f32.mrb[0].mxu0
      %v4643 = vpop.f32.mrb[0].mxu0
      %v4644 = vadd.f32 0.0, %v4643
      %v4645 = vpop.f32.mrb[0].mxu0
      %4646 = vmatprep.mubr.bf16.mxu0 0
      %4647 = vmatmul.mubr.bf16.gmra.mrb[0].mxu0 %v4551
      %v4648 = vpop.f32.mrb[0].mxu0
      %v4649 = vadd.f32 0.0, %v4648
      %v4650 = vpop.f32.mrb[0].mxu0
      %v4651 = vpop.f32.mrb[0].mxu0
      %v4652 = vadd.f32 0.0, %v4651
      %v4653 = vpop.f32.mrb[0].mxu0
      %4654 = vmatprep.mubr.bf16.mxu0 0
      %4655 = vmatmul.mubr.bf16.gmra.mrb[0].mxu0 %v4554
      %v4656 = vpop.f32.mrb[0].mxu0
      %v4657 = vadd.f32 0.0, %v4656
      %v4658 = vpop.f32.mrb[0].mxu0
      %v4659 = vpop.f32.mrb[0].mxu0
      %v4660 = vadd.f32 0.0, %v4659
      %v4661 = vpop.f32.mrb[0].mxu0
      %4662 = vmatprep.mubr.bf16.mxu0 0
      %4663 = vmatmul.mubr.bf16.gmra.mrb[0].mxu0 %v4557
      %v4664 = vpop.f32.mrb[0].mxu0
      %v4665 = vadd.f32 0.0, %v4664
      %v4666 = vpop.f32.mrb[0].mxu0
      %v4667 = vpop.f32.mrb[0].mxu0
      %v4668 = vadd.f32 0.0, %v4667
      %v4669 = vpop.f32.mrb[0].mxu0
      %4670 = vmatprep.mubr.bf16.mxu0 0
      %4671 = vmatmul.mubr.bf16.gmra.mrb[0].mxu0 %v4560
      %v4672 = vpop.f32.mrb[0].mxu0
      %v4673 = vadd.f32 0.0, %v4672
      %v4674 = vpop.f32.mrb[0].mxu0
      %v4675 = vpop.f32.mrb[0].mxu0
      %v4676 = vadd.f32 0.0, %v4675
      %v4677 = vpop.f32.mrb[0].mxu0
      %4678 = vmatprep.mubr.bf16.mxu0 0
      %4679 = vmatmul.mubr.bf16.gmra.mrb[0].mxu0 %v4563
      %v4680 = vpop.f32.mrb[0].mxu0
      %v4681 = vadd.f32 0.0, %v4680
      %v4682 = vpop.f32.mrb[0].mxu0
      %v4683 = vpop.f32.mrb[0].mxu0
      %v4684 = vadd.f32 0.0, %v4683
      %v4685 = vpop.f32.mrb[0].mxu0
      %4686 = vmatprep.mubr.bf16.mxu0 0
      %4687 = vmatmul.mubr.bf16.gmra.mrb[0].mxu0 %v4566
      %v4688 = vpop.f32.mrb[0].mxu0
      %v4689 = vadd.f32 0.0, %v4688
      %v4690 = vpop.f32.mrb[0].mxu0
      %v4691 = vpop.f32.mrb[0].mxu0
      %v4692 = vadd.f32 0.0, %v4691
      %v4693 = vpop.f32.mrb[0].mxu0
      %4694 = vmatprep.mubr.bf16.mxu0 0
      %4695 = vmatmul.mubr.bf16.gmra.mrb[0].mxu0 %v4569
      %v4696 = vpop.f32.mrb[0].mxu0
      %v4697 = vadd.f32 0.0, %v4696
      %v4698 = vpop.f32.mrb[0].mxu0
      %v4699 = vpop.f32.mrb[0].mxu0
      %v4700 = vadd.f32 0.0, %v4699
      %v4701 = vpop.f32.mrb[0].mxu0
      %4702 = vmatprep.mubr.bf16.mxu0 0
      %4703 = vmatmul.mubr.bf16.gmra.mrb[0].mxu0 %v4572
      %v4704 = vpop.f32.mrb[0].mxu0
      %v4705 = vadd.f32 0.0, %v4704
      %v4706 = vpop.f32.mrb[0].mxu0
      %v4707 = vpop.f32.mrb[0].mxu0
      %v4708 = vadd.f32 0.0, %v4707
      %v4709 = vpop.f32.mrb[0].mxu0
      %4710 = vmatprep.mubr.bf16.mxu0 0
      %4711 = vmatmul.mubr.bf16.gmra.mrb[0].mxu0 %v4575
      %v4712 = vpop.f32.mrb[0].mxu0
      %v4713 = vadd.f32 0.0, %v4712
      %v4714 = vpop.f32.mrb[0].mxu0
      %v4715 = vpop.f32.mrb[0].mxu0
      %v4716 = vadd.f32 0.0, %v4715
      %v4717 = vpop.f32.mrb[0].mxu0
      %4718 = vmatprep.mubr.bf16.mxu0 0
      %4719 = vmatmul.mubr.bf16.gmra.mrb[0].mxu0 %v4578
      %v4720 = vpop.f32.mrb[0].mxu0
      %v4721 = vadd.f32 0.0, %v4720
      %v4722 = vpop.f32.mrb[0].mxu0
      %v4723 = vpop.f32.mrb[0].mxu0
      %v4724 = vadd.f32 0.0, %v4723
      %v4725 = vpop.f32.mrb[0].mxu0
      %4726 = vmatprep.mubr.bf16.mxu0 0
      %4727 = vmatmul.mubr.bf16.gmra.mrb[0].mxu0 %v4581
      %v4728 = vpop.f32.mrb[0].mxu0
      %v4729 = vadd.f32 0.0, %v4728
      %v4730 = vpop.f32.mrb[0].mxu0
      %v4731 = vpop.f32.mrb[0].mxu0
      %v4732 = vadd.f32 0.0, %v4731
      %v4733 = vpop.f32.mrb[0].mxu0
      %4734 = vmatprep.mubr.bf16.mxu0 0
      %4735 = vmatmul.mubr.bf16.gmra.mrb[0].mxu0 %v4584
      %v4736 = vpop.f32.mrb[0].mxu0
      %v4737 = vadd.f32 0.0, %v4736
      %v4738 = vpop.f32.mrb[0].mxu0
      %v4739 = vpop.f32.mrb[0].mxu0
      %v4740 = vadd.f32 0.0, %v4739
      %v4741 = vpop.f32.mrb[0].mxu0
      %4742 = vmatprep.mubr.bf16.mxu0 0
      %4743 = vmatmul.mubr.bf16.gmra.mrb[0].mxu0 %v4587
      %v4744 = vpop.f32.mrb[0].mxu0
      %v4745 = vadd.f32 0.0, %v4744
      %v4746 = vpop.f32.mrb[0].mxu0
      %v4747 = vpop.f32.mrb[0].mxu0
      %v4748 = vadd.f32 0.0, %v4747
      %v4749 = vpop.f32.mrb[0].mxu0
      %4750 = vmatprep.mubr.bf16.mxu0 0
      %4751 = vmatmul.mubr.bf16.gmra.mrb[0].mxu0 %v4590
      %v4752 = vpop.f32.mrb[0].mxu0
      %v4753 = vadd.f32 0.0, %v4752
      %v4754 = vpop.f32.mrb[0].mxu0
      %v4755 = vpop.f32.mrb[0].mxu0
      %v4756 = vadd.f32 0.0, %v4755
      %v4757 = vpop.f32.mrb[0].mxu0
      %4758 = vmatprep.mubr.bf16.mxu0 0
      %4759 = vmatmul.mubr.bf16.gmra.mrb[0].mxu0 %v4593
      %v4760 = vpop.f32.mrb[0].mxu0
      %v4761 = vadd.f32 0.0, %v4760
      %v4762 = vpop.f32.mrb[0].mxu0
      %v4763 = vpop.f32.mrb[0].mxu0
      %v4764 = vadd.f32 0.0, %v4763
      %v4765 = vpop.f32.mrb[0].mxu0
      %4766 = vmatprep.mubr.bf16.mxu0 0
      %4767 = vmatmul.mubr.bf16.gmra.mrb[0].mxu0 %v4596
      %v4768 = vpop.f32.mrb[0].mxu0
      %v4769 = vadd.f32 0.0, %v4768
      %v4770 = vpop.f32.mrb[0].mxu0
      %v4771 = vpop.f32.mrb[0].mxu0
      %v4772 = vadd.f32 0.0, %v4771
      %v4773 = vpop.f32.mrb[0].mxu0
      %4774 = vdwg.mxu0
      %v4775 = vadd.f32 %v4222, %v4633
      %v4776 = vadd.f32 %v4223, %v4636
      %v4777 = vadd.f32 %v4224, %v4641
      %v4778 = vadd.f32 %v4225, %v4644
      %v4779 = vadd.f32 %v4226, %v4649
      %v4780 = vadd.f32 %v4227, %v4652
      %v4781 = vadd.f32 %v4228, %v4657
      %v4782 = vadd.f32 %v4229, %v4660
      %v4783 = vadd.f32 %v4230, %v4665
      %v4784 = vadd.f32 %v4231, %v4668
      %v4785 = vadd.f32 %v4232, %v4673
      %v4786 = vadd.f32 %v4233, %v4676
      %v4787 = vadd.f32 %v4234, %v4681
      %v4788 = vadd.f32 %v4235, %v4684
      %v4789 = vadd.f32 %v4236, %v4689
      %v4790 = vadd.f32 %v4237, %v4692
      %v4791 = vadd.f32 %v4238, %v4697
      %v4792 = vadd.f32 %v4239, %v4700
      %v4793 = vadd.f32 %v4240, %v4705
      %v4794 = vadd.f32 %v4241, %v4708
      %v4795 = vadd.f32 %v4242, %v4713
      %v4796 = vadd.f32 %v4243, %v4716
      %v4797 = vadd.f32 %v4244, %v4721
      %v4798 = vadd.f32 %v4245, %v4724
      %v4799 = vadd.f32 %v4246, %v4729
      %v4800 = vadd.f32 %v4247, %v4732
      %v4801 = vadd.f32 %v4248, %v4737
      %v4802 = vadd.f32 %v4249, %v4740
      %v4803 = vadd.f32 %v4250, %v4745
      %v4804 = vadd.f32 %v4251, %v4748
      %v4805 = vadd.f32 %v4252, %v4753
      %v4806 = vadd.f32 %v4253, %v4756
      %v4807 = vadd.f32 %v4254, %v4761
      %v4808 = vadd.f32 %v4255, %v4764
      %v4809 = vadd.f32 %v4256, %v4769
      %v4810 = vadd.f32 %v4257, %v4772
      %v4811 = vld [vmem:[%s355] sm:$0xe]
      %v4812 = vld [vmem:[%s3 + $0x58] sm:$0xf]
      %v4813 = vld [vmem:[%s3 + $0x5c] sm:$0xf]
      %v4815 = vunpack.c.l.b16 %v4811
      %v4816 = vpack.c.b16 %v4335, %v4815
      %v4817 = vrot.slane %v4816, 1
      %v4818 = vrot.slane %v4372, 1
      %v4819 = vsel %vm1128, %v4817, %v4818
      %v4820 = vrot.slane %v4373, 1
      %v4821 = vsel %vm1128, %v4818, %v4820
      %v4822 = vrot.slane %v4374, 1
      %v4823 = vsel %vm1128, %v4820, %v4822
      %v4824 = vrot.slane %v4375, 1
      %v4825 = vsel %vm1128, %v4822, %v4824
      %v4826 = vrot.slane %v4376, 1
      %v4827 = vsel %vm1128, %v4824, %v4826
      %v4828 = vrot.slane %v4377, 1
      %v4829 = vsel %vm1128, %v4826, %v4828
      %v4830 = vrot.slane %v4378, 1
      %v4831 = vsel %vm1128, %v4828, %v4830
      %v4832 = vrot.slane %v4379, 1
      %v4833 = vsel %vm1128, %v4830, %v4832
      %v4834 = vrot.slane %v4380, 1
      %v4835 = vsel %vm1128, %v4832, %v4834
      %v4836 = vrot.slane %v4381, 1
      %v4837 = vsel %vm1128, %v4834, %v4836
      %v4838 = vrot.slane %v4382, 1
      %v4839 = vsel %vm1128, %v4836, %v4838
      %v4840 = vrot.slane %v4383, 1
      %v4841 = vsel %vm1128, %v4838, %v4840
      %v4842 = vrot.slane %v4384, 1
      %v4843 = vsel %vm1128, %v4840, %v4842
      %v4844 = vrot.slane %v4385, 1
      %v4845 = vsel %vm1128, %v4842, %v4844
      %v4846 = vrot.slane %v4386, 1
      %v4847 = vsel %vm1128, %v4844, %v4846
      %v4848 = vrot.slane %v4387, 1
      %v4849 = vsel %vm1128, %v4846, %v4848
      %v4850 = vrot.slane %v4388, 1
      %v4851 = vsel %vm1128, %v4848, %v4850
      %v4852 = vrot.slane %v4389, 1
      %v4853 = vsel %vm1128, %v4850, %v4852
      %v4856 = vunpack.c.l.b16 %v4812
      %v4857 = vunpack.c.l.b16 %v4813
      %v4858 = vpack.c.b16 %v4857, %v4856
      %v4861 = vsel %vm671, %v4819, 0
      %v4864 = vsel %vm671, %v4821, 0
      %v4867 = vsel %vm671, %v4823, 0
      %v4870 = vsel %vm671, %v4825, 0
      %v4873 = vsel %vm671, %v4827, 0
      %v4876 = vsel %vm671, %v4829, 0
      %v4879 = vsel %vm671, %v4831, 0
      %v4882 = vsel %vm671, %v4833, 0
      %v4885 = vsel %vm671, %v4835, 0
      %v4888 = vsel %vm671, %v4837, 0
      %v4891 = vsel %vm671, %v4839, 0
      %v4894 = vsel %vm671, %v4841, 0
      %v4897 = vsel %vm671, %v4843, 0
      %v4900 = vsel %vm671, %v4845, 0
      %v4903 = vsel %vm671, %v4847, 0
      %v4906 = vsel %vm671, %v4849, 0
      %v4909 = vsel %vm671, %v4851, 0
      %v4912 = vsel %vm671, %v4853, 0
      %4914 = vmatprep.subr.bf16.mxu0 0
      %4915 = vmatpush1.bf16.msra.mxu0 %v4858
      %4916 = vmatprep.subr.bf16.mxu0 0
      %4917 = vmatpush1.bf16.msra.mxu0 0
      %4918 = vmatprep.subr.bf16.mxu0 0
      %4919 = vmatpush1.bf16.msra.mxu0 0
      %4920 = vmatprep.subr.bf16.mxu0 0
      %4921 = vmatpush1.bf16.msra.mxu0 0
      %4922 = vmatprep.subr.bf16.mxu0 0
      %4923 = vmatpush1.bf16.msra.mxu0 0
      %4924 = vmatprep.subr.bf16.mxu0 0
      %4925 = vmatpush1.bf16.msra.mxu0 0
      %4926 = vmatprep.subr.bf16.mxu0 0
      %4927 = vmatpush1.bf16.msra.mxu0 0
      %4928 = vmatprep.subr.bf16.mxu0 0
      %4929 = vmatpush1.bf16.msra.mxu0 0
      %4930 = vmatprep.subr.bf16.mxu0 0
      %4931 = vmatpush1.bf16.msra.mxu0 0
      %4932 = vmatprep.subr.bf16.mxu0 0
      %4933 = vmatpush1.bf16.msra.mxu0 0
      %4934 = vmatprep.subr.bf16.mxu0 0
      %4935 = vmatpush1.bf16.msra.mxu0 0
      %4936 = vmatprep.subr.bf16.mxu0 0
      %4937 = vmatpush1.bf16.msra.mxu0 0
      %4938 = vmatprep.subr.bf16.mxu0 0
      %4939 = vmatpush1.bf16.msra.mxu0 0
      %4940 = vmatprep.subr.bf16.mxu0 0
      %4941 = vmatpush1.bf16.msra.mxu0 0
      %4942 = vmatprep.subr.bf16.mxu0 0
      %4943 = vmatpush1.bf16.msra.mxu0 0
      %4944 = vmatprep.subr.bf16.mxu0 0
      %4945 = vmatpush1.bf16.msra.mxu0 0
      %4946 = vmatprep.mubr.bf16.mxu0 0
      %4947 = vmatmul.mubr.bf16.gmra.mrb[0].mxu0 %v4861
      %v4948 = vpop.f32.mrb[0].mxu0
      %v4949 = vadd.f32 0.0, %v4948
      %v4950 = vpop.f32.mrb[0].mxu0
      %v4951 = vpop.f32.mrb[0].mxu0
      %v4952 = vadd.f32 0.0, %v4951
      %v4953 = vpop.f32.mrb[0].mxu0
      %4954 = vmatprep.mubr.bf16.mxu0 0
      %4955 = vmatmul.mubr.bf16.gmra.mrb[0].mxu0 %v4864
      %v4956 = vpop.f32.mrb[0].mxu0
      %v4957 = vadd.f32 0.0, %v4956
      %v4958 = vpop.f32.mrb[0].mxu0
      %v4959 = vpop.f32.mrb[0].mxu0
      %v4960 = vadd.f32 0.0, %v4959
      %v4961 = vpop.f32.mrb[0].mxu0
      %4962 = vmatprep.mubr.bf16.mxu0 0
      %4963 = vmatmul.mubr.bf16.gmra.mrb[0].mxu0 %v4867
      %v4964 = vpop.f32.mrb[0].mxu0
      %v4965 = vadd.f32 0.0, %v4964
      %v4966 = vpop.f32.mrb[0].mxu0
      %v4967 = vpop.f32.mrb[0].mxu0
      %v4968 = vadd.f32 0.0, %v4967
      %v4969 = vpop.f32.mrb[0].mxu0
      %4970 = vmatprep.mubr.bf16.mxu0 0
      %4971 = vmatmul.mubr.bf16.gmra.mrb[0].mxu0 %v4870
      %v4972 = vpop.f32.mrb[0].mxu0
      %v4973 = vadd.f32 0.0, %v4972
      %v4974 = vpop.f32.mrb[0].mxu0
      %v4975 = vpop.f32.mrb[0].mxu0
      %v4976 = vadd.f32 0.0, %v4975
      %v4977 = vpop.f32.mrb[0].mxu0
      %4978 = vmatprep.mubr.bf16.mxu0 0
      %4979 = vmatmul.mubr.bf16.gmra.mrb[0].mxu0 %v4873
      %v4980 = vpop.f32.mrb[0].mxu0
      %v4981 = vadd.f32 0.0, %v4980
      %v4982 = vpop.f32.mrb[0].mxu0
      %v4983 = vpop.f32.mrb[0].mxu0
      %v4984 = vadd.f32 0.0, %v4983
      %v4985 = vpop.f32.mrb[0].mxu0
      %4986 = vmatprep.mubr.bf16.mxu0 0
      %4987 = vmatmul.mubr.bf16.gmra.mrb[0].mxu0 %v4876
      %v4988 = vpop.f32.mrb[0].mxu0
      %v4989 = vadd.f32 0.0, %v4988
      %v4990 = vpop.f32.mrb[0].mxu0
      %v4991 = vpop.f32.mrb[0].mxu0
      %v4992 = vadd.f32 0.0, %v4991
      %v4993 = vpop.f32.mrb[0].mxu0
      %4994 = vmatprep.mubr.bf16.mxu0 0
      %4995 = vmatmul.mubr.bf16.gmra.mrb[0].mxu0 %v4879
      %v4996 = vpop.f32.mrb[0].mxu0
      %v4997 = vadd.f32 0.0, %v4996
      %v4998 = vpop.f32.mrb[0].mxu0
      %v4999 = vpop.f32.mrb[0].mxu0
      %v5000 = vadd.f32 0.0, %v4999
      %v5001 = vpop.f32.mrb[0].mxu0
      %5002 = vmatprep.mubr.bf16.mxu0 0
      %5003 = vmatmul.mubr.bf16.gmra.mrb[0].mxu0 %v4882
      %v5004 = vpop.f32.mrb[0].mxu0
      %v5005 = vadd.f32 0.0, %v5004
      %v5006 = vpop.f32.mrb[0].mxu0
      %v5007 = vpop.f32.mrb[0].mxu0
      %v5008 = vadd.f32 0.0, %v5007
      %v5009 = vpop.f32.mrb[0].mxu0
      %5010 = vmatprep.mubr.bf16.mxu0 0
      %5011 = vmatmul.mubr.bf16.gmra.mrb[0].mxu0 %v4885
      %v5012 = vpop.f32.mrb[0].mxu0
      %v5013 = vadd.f32 0.0, %v5012
      %v5014 = vpop.f32.mrb[0].mxu0
      %v5015 = vpop.f32.mrb[0].mxu0
      %v5016 = vadd.f32 0.0, %v5015
      %v5017 = vpop.f32.mrb[0].mxu0
      %5018 = vmatprep.mubr.bf16.mxu0 0
      %5019 = vmatmul.mubr.bf16.gmra.mrb[0].mxu0 %v4888
      %v5020 = vpop.f32.mrb[0].mxu0
      %v5021 = vadd.f32 0.0, %v5020
      %v5022 = vpop.f32.mrb[0].mxu0
      %v5023 = vpop.f32.mrb[0].mxu0
      %v5024 = vadd.f32 0.0, %v5023
      %v5025 = vpop.f32.mrb[0].mxu0
      %5026 = vmatprep.mubr.bf16.mxu0 0
      %5027 = vmatmul.mubr.bf16.gmra.mrb[0].mxu0 %v4891
      %v5028 = vpop.f32.mrb[0].mxu0
      %v5029 = vadd.f32 0.0, %v5028
      %v5030 = vpop.f32.mrb[0].mxu0
      %v5031 = vpop.f32.mrb[0].mxu0
      %v5032 = vadd.f32 0.0, %v5031
      %v5033 = vpop.f32.mrb[0].mxu0
      %5034 = vmatprep.mubr.bf16.mxu0 0
      %5035 = vmatmul.mubr.bf16.gmra.mrb[0].mxu0 %v4894
      %v5036 = vpop.f32.mrb[0].mxu0
      %v5037 = vadd.f32 0.0, %v5036
      %v5038 = vpop.f32.mrb[0].mxu0
      %v5039 = vpop.f32.mrb[0].mxu0
      %v5040 = vadd.f32 0.0, %v5039
      %v5041 = vpop.f32.mrb[0].mxu0
      %5042 = vmatprep.mubr.bf16.mxu0 0
      %5043 = vmatmul.mubr.bf16.gmra.mrb[0].mxu0 %v4897
      %v5044 = vpop.f32.mrb[0].mxu0
      %v5045 = vadd.f32 0.0, %v5044
      %v5046 = vpop.f32.mrb[0].mxu0
      %v5047 = vpop.f32.mrb[0].mxu0
      %v5048 = vadd.f32 0.0, %v5047
      %v5049 = vpop.f32.mrb[0].mxu0
      %5050 = vmatprep.mubr.bf16.mxu0 0
      %5051 = vmatmul.mubr.bf16.gmra.mrb[0].mxu0 %v4900
      %v5052 = vpop.f32.mrb[0].mxu0
      %v5053 = vadd.f32 0.0, %v5052
      %v5054 = vpop.f32.mrb[0].mxu0
      %v5055 = vpop.f32.mrb[0].mxu0
      %v5056 = vadd.f32 0.0, %v5055
      %v5057 = vpop.f32.mrb[0].mxu0
      %5058 = vmatprep.mubr.bf16.mxu0 0
      %5059 = vmatmul.mubr.bf16.gmra.mrb[0].mxu0 %v4903
      %v5060 = vpop.f32.mrb[0].mxu0
      %v5061 = vadd.f32 0.0, %v5060
      %v5062 = vpop.f32.mrb[0].mxu0
      %v5063 = vpop.f32.mrb[0].mxu0
      %v5064 = vadd.f32 0.0, %v5063
      %v5065 = vpop.f32.mrb[0].mxu0
      %5066 = vmatprep.mubr.bf16.mxu0 0
      %5067 = vmatmul.mubr.bf16.gmra.mrb[0].mxu0 %v4906
      %v5068 = vpop.f32.mrb[0].mxu0
      %v5069 = vadd.f32 0.0, %v5068
      %v5070 = vpop.f32.mrb[0].mxu0
      %v5071 = vpop.f32.mrb[0].mxu0
      %v5072 = vadd.f32 0.0, %v5071
      %v5073 = vpop.f32.mrb[0].mxu0
      %5074 = vmatprep.mubr.bf16.mxu0 0
      %5075 = vmatmul.mubr.bf16.gmra.mrb[0].mxu0 %v4909
      %v5076 = vpop.f32.mrb[0].mxu0
      %v5077 = vadd.f32 0.0, %v5076
      %v5078 = vpop.f32.mrb[0].mxu0
      %v5079 = vpop.f32.mrb[0].mxu0
      %v5080 = vadd.f32 0.0, %v5079
      %v5081 = vpop.f32.mrb[0].mxu0
      %5082 = vmatprep.mubr.bf16.mxu0 0
      %5083 = vmatmul.mubr.bf16.gmra.mrb[0].mxu0 %v4912
      %v5084 = vpop.f32.mrb[0].mxu0
      %v5085 = vadd.f32 0.0, %v5084
      %v5086 = vpop.f32.mrb[0].mxu0
      %v5087 = vpop.f32.mrb[0].mxu0
      %v5088 = vadd.f32 0.0, %v5087
      %v5089 = vpop.f32.mrb[0].mxu0
      %5090 = vdwg.mxu0
      %v5091 = vadd.f32 %v4775, %v4949
      %v5092 = vadd.f32 %v4776, %v4952
      %v5093 = vadd.f32 %v4777, %v4957
      %v5094 = vadd.f32 %v4778, %v4960
      %v5095 = vadd.f32 %v4779, %v4965
      %v5096 = vadd.f32 %v4780, %v4968
      %v5097 = vadd.f32 %v4781, %v4973
      %v5098 = vadd.f32 %v4782, %v4976
      %v5099 = vadd.f32 %v4783, %v4981
      %v5100 = vadd.f32 %v4784, %v4984
      %v5101 = vadd.f32 %v4785, %v4989
      %v5102 = vadd.f32 %v4786, %v4992
      %v5103 = vadd.f32 %v4787, %v4997
      %v5104 = vadd.f32 %v4788, %v5000
      %v5105 = vadd.f32 %v4789, %v5005
      %v5106 = vadd.f32 %v4790, %v5008
      %v5107 = vadd.f32 %v4791, %v5013
      %v5108 = vadd.f32 %v4792, %v5016
      %v5109 = vadd.f32 %v4793, %v5021
      %v5110 = vadd.f32 %v4794, %v5024
      %v5111 = vadd.f32 %v4795, %v5029
      %v5112 = vadd.f32 %v4796, %v5032
      %v5113 = vadd.f32 %v4797, %v5037
      %v5114 = vadd.f32 %v4798, %v5040
      %v5115 = vadd.f32 %v4799, %v5045
      %v5116 = vadd.f32 %v4800, %v5048
      %v5117 = vadd.f32 %v4801, %v5053
      %v5118 = vadd.f32 %v4802, %v5056
      %v5119 = vadd.f32 %v4803, %v5061
      %v5120 = vadd.f32 %v4804, %v5064
      %v5121 = vadd.f32 %v4805, %v5069
      %v5122 = vadd.f32 %v4806, %v5072
      %v5123 = vadd.f32 %v4807, %v5077
      %v5124 = vadd.f32 %v4808, %v5080
      %v5125 = vadd.f32 %v4809, %v5085
      %v5126 = vadd.f32 %v4810, %v5088
      %v5127 = vld [vmem:[%s355 + $0x8] sm:$0xe]
      %v5128 = vld [vmem:[%s355 + $0xc] sm:$0xf]
      %v5129 = vld [vmem:[%s355 + $0x10] sm:$0xf]
      %v5130 = vld [vmem:[%s355 + $0x14] sm:$0xf]
      %v5131 = vld [vmem:[%s355 + $0x18] sm:$0xf]
      %v5132 = vld [vmem:[%s355 + $0x1c] sm:$0xf]
      %v5133 = vld [vmem:[%s355 + $0x20] sm:$0xf]
      %v5134 = vld [vmem:[%s355 + $0x24] sm:$0xf]
      %v5135 = vld [vmem:[%s355 + $0x28] sm:$0xf]
      %v5136 = vld [vmem:[%s355 + $0x2c] sm:$0xf]
      %v5137 = vld [vmem:[%s355 + $0x30] sm:$0xf]
      %v5138 = vld [vmem:[%s355 + $0x34] sm:$0xf]
      %v5139 = vld [vmem:[%s355 + $0x38] sm:$0xf]
      %v5140 = vld [vmem:[%s355 + $0x3c] sm:$0xf]
      %v5141 = vld [vmem:[%s355 + $0x40] sm:$0xf]
      %v5142 = vld [vmem:[%s355 + $0x44] sm:$0xf]
      %v5143 = vld [vmem:[%s355 + $0x48] sm:$0xf]
      %v5144 = vld [vmem:[%s355 + $0x4c] sm:$0xf]
      %v5145 = vld [vmem:[%s355 + $0x50] sm:$0xf]
      %v5146 = vld [vmem:[%s355 + $0x54] sm:$0xf]
      %v5147 = vld [vmem:[%s355 + $0x58] sm:$0xf]
      %v5148 = vld [vmem:[%s355 + $0x5c] sm:$0xf]
      %v5149 = vld [vmem:[%s355 + $0x60] sm:$0xf]
      %v5150 = vld [vmem:[%s355 + $0x64] sm:$0xf]
      %v5151 = vld [vmem:[%s355 + $0x68] sm:$0xf]
      %v5152 = vld [vmem:[%s355 + $0x6c] sm:$0xf]
      %v5153 = vld [vmem:[%s355 + $0x70] sm:$0xf]
      %v5154 = vld [vmem:[%s355 + $0x74] sm:$0xf]
      %v5155 = vld [vmem:[%s355 + $0x78] sm:$0xf]
      %v5156 = vld [vmem:[%s355 + $0x7c] sm:$0xf]
      %v5157 = vld [vmem:[%s355 + $0x80] sm:$0xf]
      %v5158 = vld [vmem:[%s355 + $0x84] sm:$0xf]
      %v5159 = vld [vmem:[%s355 + $0x88] sm:$0xf]
      %v5160 = vld [vmem:[%s355 + $0x8c] sm:$0xf]
      %v5161 = vld [vmem:[%s355 + $0x90] sm:$0xf]
      %v5162 = vld [vmem:[%s355 + $0x94] sm:$0xf]
      %v5163 = vld [vmem:[%s355 + $0x98] sm:$0x1]
      %v5164 = vld [vmem:[%s3 + $0x60] sm:$0xf]
      %v5165 = vld [vmem:[%s3 + $0x64] sm:$0xf]
      %v5203 = vunpack.c.l.b16 %v5127
      %v5204 = vunpack.c.l.b16 %v5128
      %v5205 = vunpack.c.l.b16 %v5129
      %v5206 = vunpack.c.l.b16 %v5130
      %v5207 = vunpack.c.l.b16 %v5131
      %v5208 = vunpack.c.l.b16 %v5132
      %v5209 = vunpack.c.l.b16 %v5133
      %v5210 = vunpack.c.l.b16 %v5134
      %v5211 = vunpack.c.l.b16 %v5135
      %v5212 = vunpack.c.l.b16 %v5136
      %v5213 = vunpack.c.l.b16 %v5137
      %v5214 = vunpack.c.l.b16 %v5138
      %v5215 = vunpack.c.l.b16 %v5139
      %v5216 = vunpack.c.l.b16 %v5140
      %v5217 = vunpack.c.l.b16 %v5141
      %v5218 = vunpack.c.l.b16 %v5142
      %v5219 = vunpack.c.l.b16 %v5143
      %v5220 = vunpack.c.l.b16 %v5144
      %v5221 = vunpack.c.l.b16 %v5145
      %v5222 = vunpack.c.l.b16 %v5146
      %v5223 = vunpack.c.l.b16 %v5147
      %v5224 = vunpack.c.l.b16 %v5148
      %v5225 = vunpack.c.l.b16 %v5149
      %v5226 = vunpack.c.l.b16 %v5150
      %v5227 = vunpack.c.l.b16 %v5151
      %v5228 = vunpack.c.l.b16 %v5152
      %v5229 = vunpack.c.l.b16 %v5153
      %v5230 = vunpack.c.l.b16 %v5154
      %v5231 = vunpack.c.l.b16 %v5155
      %v5232 = vunpack.c.l.b16 %v5156
      %v5233 = vunpack.c.l.b16 %v5157
      %v5234 = vunpack.c.l.b16 %v5158
      %v5235 = vunpack.c.l.b16 %v5159
      %v5236 = vunpack.c.l.b16 %v5160
      %v5237 = vunpack.c.l.b16 %v5161
      %v5238 = vunpack.c.l.b16 %v5162
      %v5239 = vunpack.c.l.b16 %v5163
      %v5240 = vpack.c.b16 %v5204, %v5203
      %v5241 = vpack.c.b16 %v5206, %v5205
      %v5242 = vpack.c.b16 %v5208, %v5207
      %v5243 = vpack.c.b16 %v5210, %v5209
      %v5244 = vpack.c.b16 %v5212, %v5211
      %v5245 = vpack.c.b16 %v5214, %v5213
      %v5246 = vpack.c.b16 %v5216, %v5215
      %v5247 = vpack.c.b16 %v5218, %v5217
      %v5248 = vpack.c.b16 %v5220, %v5219
      %v5249 = vpack.c.b16 %v5222, %v5221
      %v5250 = vpack.c.b16 %v5224, %v5223
      %v5251 = vpack.c.b16 %v5226, %v5225
      %v5252 = vpack.c.b16 %v5228, %v5227
      %v5253 = vpack.c.b16 %v5230, %v5229
      %v5254 = vpack.c.b16 %v5232, %v5231
      %v5255 = vpack.c.b16 %v5234, %v5233
      %v5256 = vpack.c.b16 %v5236, %v5235
      %v5257 = vpack.c.b16 %v5238, %v5237
      %v5258 = vpack.c.b16 %v5239, %v5239
      %v5259 = vrot.slane %v5240, 1
      %v5260 = vrot.slane %v5241, 1
      %v5261 = vsel %vm1128, %v5259, %v5260
      %v5262 = vrot.slane %v5242, 1
      %v5263 = vsel %vm1128, %v5260, %v5262
      %v5264 = vrot.slane %v5243, 1
      %v5265 = vsel %vm1128, %v5262, %v5264
      %v5266 = vrot.slane %v5244, 1
      %v5267 = vsel %vm1128, %v5264, %v5266
      %v5268 = vrot.slane %v5245, 1
      %v5269 = vsel %vm1128, %v5266, %v5268
      %v5270 = vrot.slane %v5246, 1
      %v5271 = vsel %vm1128, %v5268, %v5270
      %v5272 = vrot.slane %v5247, 1
      %v5273 = vsel %vm1128, %v5270, %v5272
      %v5274 = vrot.slane %v5248, 1
      %v5275 = vsel %vm1128, %v5272, %v5274
      %v5276 = vrot.slane %v5249, 1
      %v5277 = vsel %vm1128, %v5274, %v5276
      %v5278 = vrot.slane %v5250, 1
      %v5279 = vsel %vm1128, %v5276, %v5278
      %v5280 = vrot.slane %v5251, 1
      %v5281 = vsel %vm1128, %v5278, %v5280
      %v5282 = vrot.slane %v5252, 1
      %v5283 = vsel %vm1128, %v5280, %v5282
      %v5284 = vrot.slane %v5253, 1
      %v5285 = vsel %vm1128, %v5282, %v5284
      %v5286 = vrot.slane %v5254, 1
      %v5287 = vsel %vm1128, %v5284, %v5286
      %v5288 = vrot.slane %v5255, 1
      %v5289 = vsel %vm1128, %v5286, %v5288
      %v5290 = vrot.slane %v5256, 1
      %v5291 = vsel %vm1128, %v5288, %v5290
      %v5292 = vrot.slane %v5257, 1
      %v5293 = vsel %vm1128, %v5290, %v5292
      %v5294 = vrot.slane %v5258, 1
      %v5295 = vsel %vm1128, %v5292, %v5294
      %v5298 = vunpack.c.l.b16 %v5164
      %v5299 = vunpack.c.l.b16 %v5165
      %v5300 = vpack.c.b16 %v5299, %v5298
      %v5303 = vsel %vm671, %v5261, 0
      %v5306 = vsel %vm671, %v5263, 0
      %v5309 = vsel %vm671, %v5265, 0
      %v5312 = vsel %vm671, %v5267, 0
      %v5315 = vsel %vm671, %v5269, 0
      %v5318 = vsel %vm671, %v5271, 0
      %v5321 = vsel %vm671, %v5273, 0
      %v5324 = vsel %vm671, %v5275, 0
      %v5327 = vsel %vm671, %v5277, 0
      %v5330 = vsel %vm671, %v5279, 0
      %v5333 = vsel %vm671, %v5281, 0
      %v5336 = vsel %vm671, %v5283, 0
      %v5339 = vsel %vm671, %v5285, 0
      %v5342 = vsel %vm671, %v5287, 0
      %v5345 = vsel %vm671, %v5289, 0
      %v5348 = vsel %vm671, %v5291, 0
      %v5351 = vsel %vm671, %v5293, 0
      %v5354 = vsel %vm671, %v5295, 0
      %5356 = vmatprep.subr.bf16.mxu0 0
      %5357 = vmatpush1.bf16.msra.mxu0 %v5300
      %5358 = vmatprep.subr.bf16.mxu0 0
      %5359 = vmatpush1.bf16.msra.mxu0 0
      %5360 = vmatprep.subr.bf16.mxu0 0
      %5361 = vmatpush1.bf16.msra.mxu0 0
      %5362 = vmatprep.subr.bf16.mxu0 0
      %5363 = vmatpush1.bf16.msra.mxu0 0
      %5364 = vmatprep.subr.bf16.mxu0 0
      %5365 = vmatpush1.bf16.msra.mxu0 0
      %5366 = vmatprep.subr.bf16.mxu0 0
      %5367 = vmatpush1.bf16.msra.mxu0 0
      %5368 = vmatprep.subr.bf16.mxu0 0
      %5369 = vmatpush1.bf16.msra.mxu0 0
      %5370 = vmatprep.subr.bf16.mxu0 0
      %5371 = vmatpush1.bf16.msra.mxu0 0
      %5372 = vmatprep.subr.bf16.mxu0 0
      %5373 = vmatpush1.bf16.msra.mxu0 0
      %5374 = vmatprep.subr.bf16.mxu0 0
      %5375 = vmatpush1.bf16.msra.mxu0 0
      %5376 = vmatprep.subr.bf16.mxu0 0
      %5377 = vmatpush1.bf16.msra.mxu0 0
      %5378 = vmatprep.subr.bf16.mxu0 0
      %5379 = vmatpush1.bf16.msra.mxu0 0
      %5380 = vmatprep.subr.bf16.mxu0 0
      %5381 = vmatpush1.bf16.msra.mxu0 0
      %5382 = vmatprep.subr.bf16.mxu0 0
      %5383 = vmatpush1.bf16.msra.mxu0 0
      %5384 = vmatprep.subr.bf16.mxu0 0
      %5385 = vmatpush1.bf16.msra.mxu0 0
      %5386 = vmatprep.subr.bf16.mxu0 0
      %5387 = vmatpush1.bf16.msra.mxu0 0
      %5388 = vmatprep.mubr.bf16.mxu0 0
      %5389 = vmatmul.mubr.bf16.gmra.mrb[0].mxu0 %v5303
      %v5390 = vpop.f32.mrb[0].mxu0
      %v5391 = vadd.f32 0.0, %v5390
      %v5392 = vpop.f32.mrb[0].mxu0
      %v5393 = vpop.f32.mrb[0].mxu0
      %v5394 = vadd.f32 0.0, %v5393
      %v5395 = vpop.f32.mrb[0].mxu0
      %5396 = vmatprep.mubr.bf16.mxu0 0
      %5397 = vmatmul.mubr.bf16.gmra.mrb[0].mxu0 %v5306
      %v5398 = vpop.f32.mrb[0].mxu0
      %v5399 = vadd.f32 0.0, %v5398
      %v5400 = vpop.f32.mrb[0].mxu0
      %v5401 = vpop.f32.mrb[0].mxu0
      %v5402 = vadd.f32 0.0, %v5401
      %v5403 = vpop.f32.mrb[0].mxu0
      %5404 = vmatprep.mubr.bf16.mxu0 0
      %5405 = vmatmul.mubr.bf16.gmra.mrb[0].mxu0 %v5309
      %v5406 = vpop.f32.mrb[0].mxu0
      %v5407 = vadd.f32 0.0, %v5406
      %v5408 = vpop.f32.mrb[0].mxu0
      %v5409 = vpop.f32.mrb[0].mxu0
      %v5410 = vadd.f32 0.0, %v5409
      %v5411 = vpop.f32.mrb[0].mxu0
      %5412 = vmatprep.mubr.bf16.mxu0 0
      %5413 = vmatmul.mubr.bf16.gmra.mrb[0].mxu0 %v5312
      %v5414 = vpop.f32.mrb[0].mxu0
      %v5415 = vadd.f32 0.0, %v5414
      %v5416 = vpop.f32.mrb[0].mxu0
      %v5417 = vpop.f32.mrb[0].mxu0
      %v5418 = vadd.f32 0.0, %v5417
      %v5419 = vpop.f32.mrb[0].mxu0
      %5420 = vmatprep.mubr.bf16.mxu0 0
      %5421 = vmatmul.mubr.bf16.gmra.mrb[0].mxu0 %v5315
      %v5422 = vpop.f32.mrb[0].mxu0
      %v5423 = vadd.f32 0.0, %v5422
      %v5424 = vpop.f32.mrb[0].mxu0
      %v5425 = vpop.f32.mrb[0].mxu0
      %v5426 = vadd.f32 0.0, %v5425
      %v5427 = vpop.f32.mrb[0].mxu0
      %5428 = vmatprep.mubr.bf16.mxu0 0
      %5429 = vmatmul.mubr.bf16.gmra.mrb[0].mxu0 %v5318
      %v5430 = vpop.f32.mrb[0].mxu0
      %v5431 = vadd.f32 0.0, %v5430
      %v5432 = vpop.f32.mrb[0].mxu0
      %v5433 = vpop.f32.mrb[0].mxu0
      %v5434 = vadd.f32 0.0, %v5433
      %v5435 = vpop.f32.mrb[0].mxu0
      %5436 = vmatprep.mubr.bf16.mxu0 0
      %5437 = vmatmul.mubr.bf16.gmra.mrb[0].mxu0 %v5321
      %v5438 = vpop.f32.mrb[0].mxu0
      %v5439 = vadd.f32 0.0, %v5438
      %v5440 = vpop.f32.mrb[0].mxu0
      %v5441 = vpop.f32.mrb[0].mxu0
      %v5442 = vadd.f32 0.0, %v5441
      %v5443 = vpop.f32.mrb[0].mxu0
      %5444 = vmatprep.mubr.bf16.mxu0 0
      %5445 = vmatmul.mubr.bf16.gmra.mrb[0].mxu0 %v5324
      %v5446 = vpop.f32.mrb[0].mxu0
      %v5447 = vadd.f32 0.0, %v5446
      %v5448 = vpop.f32.mrb[0].mxu0
      %v5449 = vpop.f32.mrb[0].mxu0
      %v5450 = vadd.f32 0.0, %v5449
      %v5451 = vpop.f32.mrb[0].mxu0
      %5452 = vmatprep.mubr.bf16.mxu0 0
      %5453 = vmatmul.mubr.bf16.gmra.mrb[0].mxu0 %v5327
      %v5454 = vpop.f32.mrb[0].mxu0
      %v5455 = vadd.f32 0.0, %v5454
      %v5456 = vpop.f32.mrb[0].mxu0
      %v5457 = vpop.f32.mrb[0].mxu0
      %v5458 = vadd.f32 0.0, %v5457
      %v5459 = vpop.f32.mrb[0].mxu0
      %5460 = vmatprep.mubr.bf16.mxu0 0
      %5461 = vmatmul.mubr.bf16.gmra.mrb[0].mxu0 %v5330
      %v5462 = vpop.f32.mrb[0].mxu0
      %v5463 = vadd.f32 0.0, %v5462
      %v5464 = vpop.f32.mrb[0].mxu0
      %v5465 = vpop.f32.mrb[0].mxu0
      %v5466 = vadd.f32 0.0, %v5465
      %v5467 = vpop.f32.mrb[0].mxu0
      %5468 = vmatprep.mubr.bf16.mxu0 0
      %5469 = vmatmul.mubr.bf16.gmra.mrb[0].mxu0 %v5333
      %v5470 = vpop.f32.mrb[0].mxu0
      %v5471 = vadd.f32 0.0, %v5470
      %v5472 = vpop.f32.mrb[0].mxu0
      %v5473 = vpop.f32.mrb[0].mxu0
      %v5474 = vadd.f32 0.0, %v5473
      %v5475 = vpop.f32.mrb[0].mxu0
      %5476 = vmatprep.mubr.bf16.mxu0 0
      %5477 = vmatmul.mubr.bf16.gmra.mrb[0].mxu0 %v5336
      %v5478 = vpop.f32.mrb[0].mxu0
      %v5479 = vadd.f32 0.0, %v5478
      %v5480 = vpop.f32.mrb[0].mxu0
      %v5481 = vpop.f32.mrb[0].mxu0
      %v5482 = vadd.f32 0.0, %v5481
      %v5483 = vpop.f32.mrb[0].mxu0
      %5484 = vmatprep.mubr.bf16.mxu0 0
      %5485 = vmatmul.mubr.bf16.gmra.mrb[0].mxu0 %v5339
      %v5486 = vpop.f32.mrb[0].mxu0
      %v5487 = vadd.f32 0.0, %v5486
      %v5488 = vpop.f32.mrb[0].mxu0
      %v5489 = vpop.f32.mrb[0].mxu0
      %v5490 = vadd.f32 0.0, %v5489
      %v5491 = vpop.f32.mrb[0].mxu0
      %5492 = vmatprep.mubr.bf16.mxu0 0
      %5493 = vmatmul.mubr.bf16.gmra.mrb[0].mxu0 %v5342
      %v5494 = vpop.f32.mrb[0].mxu0
      %v5495 = vadd.f32 0.0, %v5494
      %v5496 = vpop.f32.mrb[0].mxu0
      %v5497 = vpop.f32.mrb[0].mxu0
      %v5498 = vadd.f32 0.0, %v5497
      %v5499 = vpop.f32.mrb[0].mxu0
      %5500 = vmatprep.mubr.bf16.mxu0 0
      %5501 = vmatmul.mubr.bf16.gmra.mrb[0].mxu0 %v5345
      %v5502 = vpop.f32.mrb[0].mxu0
      %v5503 = vadd.f32 0.0, %v5502
      %v5504 = vpop.f32.mrb[0].mxu0
      %v5505 = vpop.f32.mrb[0].mxu0
      %v5506 = vadd.f32 0.0, %v5505
      %v5507 = vpop.f32.mrb[0].mxu0
      %5508 = vmatprep.mubr.bf16.mxu0 0
      %5509 = vmatmul.mubr.bf16.gmra.mrb[0].mxu0 %v5348
      %v5510 = vpop.f32.mrb[0].mxu0
      %v5511 = vadd.f32 0.0, %v5510
      %v5512 = vpop.f32.mrb[0].mxu0
      %v5513 = vpop.f32.mrb[0].mxu0
      %v5514 = vadd.f32 0.0, %v5513
      %v5515 = vpop.f32.mrb[0].mxu0
      %5516 = vmatprep.mubr.bf16.mxu0 0
      %5517 = vmatmul.mubr.bf16.gmra.mrb[0].mxu0 %v5351
      %v5518 = vpop.f32.mrb[0].mxu0
      %v5519 = vadd.f32 0.0, %v5518
      %v5520 = vpop.f32.mrb[0].mxu0
      %v5521 = vpop.f32.mrb[0].mxu0
      %v5522 = vadd.f32 0.0, %v5521
      %v5523 = vpop.f32.mrb[0].mxu0
      %5524 = vmatprep.mubr.bf16.mxu0 0
      %5525 = vmatmul.mubr.bf16.gmra.mrb[0].mxu0 %v5354
      %v5526 = vpop.f32.mrb[0].mxu0
      %v5527 = vadd.f32 0.0, %v5526
      %v5528 = vpop.f32.mrb[0].mxu0
      %v5529 = vpop.f32.mrb[0].mxu0
      %v5530 = vadd.f32 0.0, %v5529
      %v5531 = vpop.f32.mrb[0].mxu0
      %5532 = vdwg.mxu0
      %v5533 = vadd.f32 %v5091, %v5391
      %v5534 = vadd.f32 %v5092, %v5394
      %v5535 = vadd.f32 %v5093, %v5399
      %v5536 = vadd.f32 %v5094, %v5402
      %v5537 = vadd.f32 %v5095, %v5407
      %v5538 = vadd.f32 %v5096, %v5410
      %v5539 = vadd.f32 %v5097, %v5415
      %v5540 = vadd.f32 %v5098, %v5418
      %v5541 = vadd.f32 %v5099, %v5423
      %v5542 = vadd.f32 %v5100, %v5426
      %v5543 = vadd.f32 %v5101, %v5431
      %v5544 = vadd.f32 %v5102, %v5434
      %v5545 = vadd.f32 %v5103, %v5439
      %v5546 = vadd.f32 %v5104, %v5442
      %v5547 = vadd.f32 %v5105, %v5447
      %v5548 = vadd.f32 %v5106, %v5450
      %v5549 = vadd.f32 %v5107, %v5455
      %v5550 = vadd.f32 %v5108, %v5458
      %v5551 = vadd.f32 %v5109, %v5463
      %v5552 = vadd.f32 %v5110, %v5466
      %v5553 = vadd.f32 %v5111, %v5471
      %v5554 = vadd.f32 %v5112, %v5474
      %v5555 = vadd.f32 %v5113, %v5479
      %v5556 = vadd.f32 %v5114, %v5482
      %v5557 = vadd.f32 %v5115, %v5487
      %v5558 = vadd.f32 %v5116, %v5490
      %v5559 = vadd.f32 %v5117, %v5495
      %v5560 = vadd.f32 %v5118, %v5498
      %v5561 = vadd.f32 %v5119, %v5503
      %v5562 = vadd.f32 %v5120, %v5506
      %v5563 = vadd.f32 %v5121, %v5511
      %v5564 = vadd.f32 %v5122, %v5514
      %v5565 = vadd.f32 %v5123, %v5519
      %v5566 = vadd.f32 %v5124, %v5522
      %v5567 = vadd.f32 %v5125, %v5527
      %v5568 = vadd.f32 %v5126, %v5530
      %v5569 = vld [vmem:[%s355 + $0x98] sm:$0x3]
      %v5570 = vld [vmem:[%s3 + $0x68] sm:$0xf]
      %v5571 = vld [vmem:[%s3 + $0x6c] sm:$0xf]
      %v5573 = vunpack.c.l.b16 %v5569
      %v5574 = vpack.c.b16 %v5573, %v5573
      %v5576 = vshrl.u32 %v5240, 16
      %v5578 = vrot.slane %v5576, 1
      %v5579 = vshll.u32 %v5240, 16
      %v5581 = vrot.slane %v5579, 2
      %v5582 = vor.u32 %v5578, %v5581
      %v5584 = vshrl.u32 %v5241, 16
      %v5586 = vrot.slane %v5584, 1
      %v5587 = vshll.u32 %v5241, 16
      %v5589 = vrot.slane %v5587, 2
      %v5590 = vor.u32 %v5586, %v5589
      %v5591 = vsel %vm1887, %v5582, %v5590
      %v5593 = vshrl.u32 %v5242, 16
      %v5595 = vrot.slane %v5593, 1
      %v5596 = vshll.u32 %v5242, 16
      %v5598 = vrot.slane %v5596, 2
      %v5599 = vor.u32 %v5595, %v5598
      %v5600 = vsel %vm1887, %v5590, %v5599
      %v5602 = vshrl.u32 %v5243, 16
      %v5604 = vrot.slane %v5602, 1
      %v5605 = vshll.u32 %v5243, 16
      %v5607 = vrot.slane %v5605, 2
      %v5608 = vor.u32 %v5604, %v5607
      %v5609 = vsel %vm1887, %v5599, %v5608
      %v5611 = vshrl.u32 %v5244, 16
      %v5613 = vrot.slane %v5611, 1
      %v5614 = vshll.u32 %v5244, 16
      %v5616 = vrot.slane %v5614, 2
      %v5617 = vor.u32 %v5613, %v5616
      %v5618 = vsel %vm1887, %v5608, %v5617
      %v5620 = vshrl.u32 %v5245, 16
      %v5622 = vrot.slane %v5620, 1
      %v5623 = vshll.u32 %v5245, 16
      %v5625 = vrot.slane %v5623, 2
      %v5626 = vor.u32 %v5622, %v5625
      %v5627 = vsel %vm1887, %v5617, %v5626
      %v5629 = vshrl.u32 %v5246, 16
      %v5631 = vrot.slane %v5629, 1
      %v5632 = vshll.u32 %v5246, 16
      %v5634 = vrot.slane %v5632, 2
      %v5635 = vor.u32 %v5631, %v5634
      %v5636 = vsel %vm1887, %v5626, %v5635
      %v5638 = vshrl.u32 %v5247, 16
      %v5640 = vrot.slane %v5638, 1
      %v5641 = vshll.u32 %v5247, 16
      %v5643 = vrot.slane %v5641, 2
      %v5644 = vor.u32 %v5640, %v5643
      %v5645 = vsel %vm1887, %v5635, %v5644
      %v5647 = vshrl.u32 %v5248, 16
      %v5649 = vrot.slane %v5647, 1
      %v5650 = vshll.u32 %v5248, 16
      %v5652 = vrot.slane %v5650, 2
      %v5653 = vor.u32 %v5649, %v5652
      %v5654 = vsel %vm1887, %v5644, %v5653
      %v5656 = vshrl.u32 %v5249, 16
      %v5658 = vrot.slane %v5656, 1
      %v5659 = vshll.u32 %v5249, 16
      %v5661 = vrot.slane %v5659, 2
      %v5662 = vor.u32 %v5658, %v5661
      %v5663 = vsel %vm1887, %v5653, %v5662
      %v5665 = vshrl.u32 %v5250, 16
      %v5667 = vrot.slane %v5665, 1
      %v5668 = vshll.u32 %v5250, 16
      %v5670 = vrot.slane %v5668, 2
      %v5671 = vor.u32 %v5667, %v5670
      %v5672 = vsel %vm1887, %v5662, %v5671
      %v5674 = vshrl.u32 %v5251, 16
      %v5676 = vrot.slane %v5674, 1
      %v5677 = vshll.u32 %v5251, 16
      %v5679 = vrot.slane %v5677, 2
      %v5680 = vor.u32 %v5676, %v5679
      %v5681 = vsel %vm1887, %v5671, %v5680
      %v5683 = vshrl.u32 %v5252, 16
      %v5685 = vrot.slane %v5683, 1
      %v5686 = vshll.u32 %v5252, 16
      %v5688 = vrot.slane %v5686, 2
      %v5689 = vor.u32 %v5685, %v5688
      %v5690 = vsel %vm1887, %v5680, %v5689
      %v5692 = vshrl.u32 %v5253, 16
      %v5694 = vrot.slane %v5692, 1
      %v5695 = vshll.u32 %v5253, 16
      %v5697 = vrot.slane %v5695, 2
      %v5698 = vor.u32 %v5694, %v5697
      %v5699 = vsel %vm1887, %v5689, %v5698
      %v5701 = vshrl.u32 %v5254, 16
      %v5703 = vrot.slane %v5701, 1
      %v5704 = vshll.u32 %v5254, 16
      %v5706 = vrot.slane %v5704, 2
      %v5707 = vor.u32 %v5703, %v5706
      %v5708 = vsel %vm1887, %v5698, %v5707
      %v5710 = vshrl.u32 %v5255, 16
      %v5712 = vrot.slane %v5710, 1
      %v5713 = vshll.u32 %v5255, 16
      %v5715 = vrot.slane %v5713, 2
      %v5716 = vor.u32 %v5712, %v5715
      %v5717 = vsel %vm1887, %v5707, %v5716
      %v5719 = vshrl.u32 %v5256, 16
      %v5721 = vrot.slane %v5719, 1
      %v5722 = vshll.u32 %v5256, 16
      %v5724 = vrot.slane %v5722, 2
      %v5725 = vor.u32 %v5721, %v5724
      %v5726 = vsel %vm1887, %v5716, %v5725
      %v5728 = vshrl.u32 %v5257, 16
      %v5730 = vrot.slane %v5728, 1
      %v5731 = vshll.u32 %v5257, 16
      %v5733 = vrot.slane %v5731, 2
      %v5734 = vor.u32 %v5730, %v5733
      %v5735 = vsel %vm1887, %v5725, %v5734
      %v5737 = vshrl.u32 %v5574, 16
      %v5739 = vrot.slane %v5737, 1
      %v5740 = vshll.u32 %v5574, 16
      %v5742 = vrot.slane %v5740, 2
      %v5743 = vor.u32 %v5739, %v5742
      %v5744 = vsel %vm1887, %v5734, %v5743
      %v5747 = vunpack.c.l.b16 %v5570
      %v5748 = vunpack.c.l.b16 %v5571
      %v5749 = vpack.c.b16 %v5748, %v5747
      %v5752 = vsel %vm671, %v5591, 0
      %v5755 = vsel %vm671, %v5600, 0
      %v5758 = vsel %vm671, %v5609, 0
      %v5761 = vsel %vm671, %v5618, 0
      %v5764 = vsel %vm671, %v5627, 0
      %v5767 = vsel %vm671, %v5636, 0
      %v5770 = vsel %vm671, %v5645, 0
      %v5773 = vsel %vm671, %v5654, 0
      %v5776 = vsel %vm671, %v5663, 0
      %v5779 = vsel %vm671, %v5672, 0
      %v5782 = vsel %vm671, %v5681, 0
      %v5785 = vsel %vm671, %v5690, 0
      %v5788 = vsel %vm671, %v5699, 0
      %v5791 = vsel %vm671, %v5708, 0
      %v5794 = vsel %vm671, %v5717, 0
      %v5797 = vsel %vm671, %v5726, 0
      %v5800 = vsel %vm671, %v5735, 0
      %v5803 = vsel %vm671, %v5744, 0
      %5805 = vmatprep.subr.bf16.mxu0 0
      %5806 = vmatpush1.bf16.msra.mxu0 %v5749
      %5807 = vmatprep.subr.bf16.mxu0 0
      %5808 = vmatpush1.bf16.msra.mxu0 0
      %5809 = vmatprep.subr.bf16.mxu0 0
      %5810 = vmatpush1.bf16.msra.mxu0 0
      %5811 = vmatprep.subr.bf16.mxu0 0
      %5812 = vmatpush1.bf16.msra.mxu0 0
      %5813 = vmatprep.subr.bf16.mxu0 0
      %5814 = vmatpush1.bf16.msra.mxu0 0
      %5815 = vmatprep.subr.bf16.mxu0 0
      %5816 = vmatpush1.bf16.msra.mxu0 0
      %5817 = vmatprep.subr.bf16.mxu0 0
      %5818 = vmatpush1.bf16.msra.mxu0 0
      %5819 = vmatprep.subr.bf16.mxu0 0
      %5820 = vmatpush1.bf16.msra.mxu0 0
      %5821 = vmatprep.subr.bf16.mxu0 0
      %5822 = vmatpush1.bf16.msra.mxu0 0
      %5823 = vmatprep.subr.bf16.mxu0 0
      %5824 = vmatpush1.bf16.msra.mxu0 0
      %5825 = vmatprep.subr.bf16.mxu0 0
      %5826 = vmatpush1.bf16.msra.mxu0 0
      %5827 = vmatprep.subr.bf16.mxu0 0
      %5828 = vmatpush1.bf16.msra.mxu0 0
      %5829 = vmatprep.subr.bf16.mxu0 0
      %5830 = vmatpush1.bf16.msra.mxu0 0
      %5831 = vmatprep.subr.bf16.mxu0 0
      %5832 = vmatpush1.bf16.msra.mxu0 0
      %5833 = vmatprep.subr.bf16.mxu0 0
      %5834 = vmatpush1.bf16.msra.mxu0 0
      %5835 = vmatprep.subr.bf16.mxu0 0
      %5836 = vmatpush1.bf16.msra.mxu0 0
      %5837 = vmatprep.mubr.bf16.mxu0 0
      %5838 = vmatmul.mubr.bf16.gmra.mrb[0].mxu0 %v5752
      %v5839 = vpop.f32.mrb[0].mxu0
      %v5840 = vadd.f32 0.0, %v5839
      %v5841 = vpop.f32.mrb[0].mxu0
      %v5842 = vpop.f32.mrb[0].mxu0
      %v5843 = vadd.f32 0.0, %v5842
      %v5844 = vpop.f32.mrb[0].mxu0
      %5845 = vmatprep.mubr.bf16.mxu0 0
      %5846 = vmatmul.mubr.bf16.gmra.mrb[0].mxu0 %v5755
      %v5847 = vpop.f32.mrb[0].mxu0
      %v5848 = vadd.f32 0.0, %v5847
      %v5849 = vpop.f32.mrb[0].mxu0
      %v5850 = vpop.f32.mrb[0].mxu0
      %v5851 = vadd.f32 0.0, %v5850
      %v5852 = vpop.f32.mrb[0].mxu0
      %5853 = vmatprep.mubr.bf16.mxu0 0
      %5854 = vmatmul.mubr.bf16.gmra.mrb[0].mxu0 %v5758
      %v5855 = vpop.f32.mrb[0].mxu0
      %v5856 = vadd.f32 0.0, %v5855
      %v5857 = vpop.f32.mrb[0].mxu0
      %v5858 = vpop.f32.mrb[0].mxu0
      %v5859 = vadd.f32 0.0, %v5858
      %v5860 = vpop.f32.mrb[0].mxu0
      %5861 = vmatprep.mubr.bf16.mxu0 0
      %5862 = vmatmul.mubr.bf16.gmra.mrb[0].mxu0 %v5761
      %v5863 = vpop.f32.mrb[0].mxu0
      %v5864 = vadd.f32 0.0, %v5863
      %v5865 = vpop.f32.mrb[0].mxu0
      %v5866 = vpop.f32.mrb[0].mxu0
      %v5867 = vadd.f32 0.0, %v5866
      %v5868 = vpop.f32.mrb[0].mxu0
      %5869 = vmatprep.mubr.bf16.mxu0 0
      %5870 = vmatmul.mubr.bf16.gmra.mrb[0].mxu0 %v5764
      %v5871 = vpop.f32.mrb[0].mxu0
      %v5872 = vadd.f32 0.0, %v5871
      %v5873 = vpop.f32.mrb[0].mxu0
      %v5874 = vpop.f32.mrb[0].mxu0
      %v5875 = vadd.f32 0.0, %v5874
      %v5876 = vpop.f32.mrb[0].mxu0
      %5877 = vmatprep.mubr.bf16.mxu0 0
      %5878 = vmatmul.mubr.bf16.gmra.mrb[0].mxu0 %v5767
      %v5879 = vpop.f32.mrb[0].mxu0
      %v5880 = vadd.f32 0.0, %v5879
      %v5881 = vpop.f32.mrb[0].mxu0
      %v5882 = vpop.f32.mrb[0].mxu0
      %v5883 = vadd.f32 0.0, %v5882
      %v5884 = vpop.f32.mrb[0].mxu0
      %5885 = vmatprep.mubr.bf16.mxu0 0
      %5886 = vmatmul.mubr.bf16.gmra.mrb[0].mxu0 %v5770
      %v5887 = vpop.f32.mrb[0].mxu0
      %v5888 = vadd.f32 0.0, %v5887
      %v5889 = vpop.f32.mrb[0].mxu0
      %v5890 = vpop.f32.mrb[0].mxu0
      %v5891 = vadd.f32 0.0, %v5890
      %v5892 = vpop.f32.mrb[0].mxu0
      %5893 = vmatprep.mubr.bf16.mxu0 0
      %5894 = vmatmul.mubr.bf16.gmra.mrb[0].mxu0 %v5773
      %v5895 = vpop.f32.mrb[0].mxu0
      %v5896 = vadd.f32 0.0, %v5895
      %v5897 = vpop.f32.mrb[0].mxu0
      %v5898 = vpop.f32.mrb[0].mxu0
      %v5899 = vadd.f32 0.0, %v5898
      %v5900 = vpop.f32.mrb[0].mxu0
      %5901 = vmatprep.mubr.bf16.mxu0 0
      %5902 = vmatmul.mubr.bf16.gmra.mrb[0].mxu0 %v5776
      %v5903 = vpop.f32.mrb[0].mxu0
      %v5904 = vadd.f32 0.0, %v5903
      %v5905 = vpop.f32.mrb[0].mxu0
      %v5906 = vpop.f32.mrb[0].mxu0
      %v5907 = vadd.f32 0.0, %v5906
      %v5908 = vpop.f32.mrb[0].mxu0
      %5909 = vmatprep.mubr.bf16.mxu0 0
      %5910 = vmatmul.mubr.bf16.gmra.mrb[0].mxu0 %v5779
      %v5911 = vpop.f32.mrb[0].mxu0
      %v5912 = vadd.f32 0.0, %v5911
      %v5913 = vpop.f32.mrb[0].mxu0
      %v5914 = vpop.f32.mrb[0].mxu0
      %v5915 = vadd.f32 0.0, %v5914
      %v5916 = vpop.f32.mrb[0].mxu0
      %5917 = vmatprep.mubr.bf16.mxu0 0
      %5918 = vmatmul.mubr.bf16.gmra.mrb[0].mxu0 %v5782
      %v5919 = vpop.f32.mrb[0].mxu0
      %v5920 = vadd.f32 0.0, %v5919
      %v5921 = vpop.f32.mrb[0].mxu0
      %v5922 = vpop.f32.mrb[0].mxu0
      %v5923 = vadd.f32 0.0, %v5922
      %v5924 = vpop.f32.mrb[0].mxu0
      %5925 = vmatprep.mubr.bf16.mxu0 0
      %5926 = vmatmul.mubr.bf16.gmra.mrb[0].mxu0 %v5785
      %v5927 = vpop.f32.mrb[0].mxu0
      %v5928 = vadd.f32 0.0, %v5927
      %v5929 = vpop.f32.mrb[0].mxu0
      %v5930 = vpop.f32.mrb[0].mxu0
      %v5931 = vadd.f32 0.0, %v5930
      %v5932 = vpop.f32.mrb[0].mxu0
      %5933 = vmatprep.mubr.bf16.mxu0 0
      %5934 = vmatmul.mubr.bf16.gmra.mrb[0].mxu0 %v5788
      %v5935 = vpop.f32.mrb[0].mxu0
      %v5936 = vadd.f32 0.0, %v5935
      %v5937 = vpop.f32.mrb[0].mxu0
      %v5938 = vpop.f32.mrb[0].mxu0
      %v5939 = vadd.f32 0.0, %v5938
      %v5940 = vpop.f32.mrb[0].mxu0
      %5941 = vmatprep.mubr.bf16.mxu0 0
      %5942 = vmatmul.mubr.bf16.gmra.mrb[0].mxu0 %v5791
      %v5943 = vpop.f32.mrb[0].mxu0
      %v5944 = vadd.f32 0.0, %v5943
      %v5945 = vpop.f32.mrb[0].mxu0
      %v5946 = vpop.f32.mrb[0].mxu0
      %v5947 = vadd.f32 0.0, %v5946
      %v5948 = vpop.f32.mrb[0].mxu0
      %5949 = vmatprep.mubr.bf16.mxu0 0
      %5950 = vmatmul.mubr.bf16.gmra.mrb[0].mxu0 %v5794
      %v5951 = vpop.f32.mrb[0].mxu0
      %v5952 = vadd.f32 0.0, %v5951
      %v5953 = vpop.f32.mrb[0].mxu0
      %v5954 = vpop.f32.mrb[0].mxu0
      %v5955 = vadd.f32 0.0, %v5954
      %v5956 = vpop.f32.mrb[0].mxu0
      %5957 = vmatprep.mubr.bf16.mxu0 0
      %5958 = vmatmul.mubr.bf16.gmra.mrb[0].mxu0 %v5797
      %v5959 = vpop.f32.mrb[0].mxu0
      %v5960 = vadd.f32 0.0, %v5959
      %v5961 = vpop.f32.mrb[0].mxu0
      %v5962 = vpop.f32.mrb[0].mxu0
      %v5963 = vadd.f32 0.0, %v5962
      %v5964 = vpop.f32.mrb[0].mxu0
      %5965 = vmatprep.mubr.bf16.mxu0 0
      %5966 = vmatmul.mubr.bf16.gmra.mrb[0].mxu0 %v5800
      %v5967 = vpop.f32.mrb[0].mxu0
      %v5968 = vadd.f32 0.0, %v5967
      %v5969 = vpop.f32.mrb[0].mxu0
      %v5970 = vpop.f32.mrb[0].mxu0
      %v5971 = vadd.f32 0.0, %v5970
      %v5972 = vpop.f32.mrb[0].mxu0
      %5973 = vmatprep.mubr.bf16.mxu0 0
      %5974 = vmatmul.mubr.bf16.gmra.mrb[0].mxu0 %v5803
      %v5975 = vpop.f32.mrb[0].mxu0
      %v5976 = vadd.f32 0.0, %v5975
      %v5977 = vpop.f32.mrb[0].mxu0
      %v5978 = vpop.f32.mrb[0].mxu0
      %v5979 = vadd.f32 0.0, %v5978
      %v5980 = vpop.f32.mrb[0].mxu0
      %5981 = vdwg.mxu0
      %v5982 = vadd.f32 %v5533, %v5840
      %v5983 = vadd.f32 %v5534, %v5843
      %v5984 = vadd.f32 %v5535, %v5848
      %v5985 = vadd.f32 %v5536, %v5851
      %v5986 = vadd.f32 %v5537, %v5856
      %v5987 = vadd.f32 %v5538, %v5859
      %v5988 = vadd.f32 %v5539, %v5864
      %v5989 = vadd.f32 %v5540, %v5867
      %v5990 = vadd.f32 %v5541, %v5872
      %v5991 = vadd.f32 %v5542, %v5875
      %v5992 = vadd.f32 %v5543, %v5880
      %v5993 = vadd.f32 %v5544, %v5883
      %v5994 = vadd.f32 %v5545, %v5888
      %v5995 = vadd.f32 %v5546, %v5891
      %v5996 = vadd.f32 %v5547, %v5896
      %v5997 = vadd.f32 %v5548, %v5899
      %v5998 = vadd.f32 %v5549, %v5904
      %v5999 = vadd.f32 %v5550, %v5907
      %v6000 = vadd.f32 %v5551, %v5912
      %v6001 = vadd.f32 %v5552, %v5915
      %v6002 = vadd.f32 %v5553, %v5920
      %v6003 = vadd.f32 %v5554, %v5923
      %v6004 = vadd.f32 %v5555, %v5928
      %v6005 = vadd.f32 %v5556, %v5931
      %v6006 = vadd.f32 %v5557, %v5936
      %v6007 = vadd.f32 %v5558, %v5939
      %v6008 = vadd.f32 %v5559, %v5944
      %v6009 = vadd.f32 %v5560, %v5947
      %v6010 = vadd.f32 %v5561, %v5952
      %v6011 = vadd.f32 %v5562, %v5955
      %v6012 = vadd.f32 %v5563, %v5960
      %v6013 = vadd.f32 %v5564, %v5963
      %v6014 = vadd.f32 %v5565, %v5968
      %v6015 = vadd.f32 %v5566, %v5971
      %v6016 = vadd.f32 %v5567, %v5976
      %v6017 = vadd.f32 %v5568, %v5979
      %v6018 = vld [vmem:[%s355 + $0x8] sm:$0xc]
      %v6019 = vld [vmem:[%s3 + $0x70] sm:$0xf]
      %v6020 = vld [vmem:[%s3 + $0x74] sm:$0xf]
      %v6022 = vunpack.c.l.b16 %v6018
      %v6023 = vpack.c.b16 %v5204, %v6022
      %v6024 = vrot.slane %v6023, 2
      %v6025 = vrot.slane %v5241, 2
      %v6026 = vsel %vm2337, %v6024, %v6025
      %v6027 = vrot.slane %v5242, 2
      %v6028 = vsel %vm2337, %v6025, %v6027
      %v6029 = vrot.slane %v5243, 2
      %v6030 = vsel %vm2337, %v6027, %v6029
      %v6031 = vrot.slane %v5244, 2
      %v6032 = vsel %vm2337, %v6029, %v6031
      %v6033 = vrot.slane %v5245, 2
      %v6034 = vsel %vm2337, %v6031, %v6033
      %v6035 = vrot.slane %v5246, 2
      %v6036 = vsel %vm2337, %v6033, %v6035
      %v6037 = vrot.slane %v5247, 2
      %v6038 = vsel %vm2337, %v6035, %v6037
      %v6039 = vrot.slane %v5248, 2
      %v6040 = vsel %vm2337, %v6037, %v6039
      %v6041 = vrot.slane %v5249, 2
      %v6042 = vsel %vm2337, %v6039, %v6041
      %v6043 = vrot.slane %v5250, 2
      %v6044 = vsel %vm2337, %v6041, %v6043
      %v6045 = vrot.slane %v5251, 2
      %v6046 = vsel %vm2337, %v6043, %v6045
      %v6047 = vrot.slane %v5252, 2
      %v6048 = vsel %vm2337, %v6045, %v6047
      %v6049 = vrot.slane %v5253, 2
      %v6050 = vsel %vm2337, %v6047, %v6049
      %v6051 = vrot.slane %v5254, 2
      %v6052 = vsel %vm2337, %v6049, %v6051
      %v6053 = vrot.slane %v5255, 2
      %v6054 = vsel %vm2337, %v6051, %v6053
      %v6055 = vrot.slane %v5256, 2
      %v6056 = vsel %vm2337, %v6053, %v6055
      %v6057 = vrot.slane %v5257, 2
      %v6058 = vsel %vm2337, %v6055, %v6057
      %v6059 = vrot.slane %v5574, 2
      %v6060 = vsel %vm2337, %v6057, %v6059
      %v6063 = vunpack.c.l.b16 %v6019
      %v6064 = vunpack.c.l.b16 %v6020
      %v6065 = vpack.c.b16 %v6064, %v6063
      %v6068 = vsel %vm671, %v6026, 0
      %v6071 = vsel %vm671, %v6028, 0
      %v6074 = vsel %vm671, %v6030, 0
      %v6077 = vsel %vm671, %v6032, 0
      %v6080 = vsel %vm671, %v6034, 0
      %v6083 = vsel %vm671, %v6036, 0
      %v6086 = vsel %vm671, %v6038, 0
      %v6089 = vsel %vm671, %v6040, 0
      %v6092 = vsel %vm671, %v6042, 0
      %v6095 = vsel %vm671, %v6044, 0
      %v6098 = vsel %vm671, %v6046, 0
      %v6101 = vsel %vm671, %v6048, 0
      %v6104 = vsel %vm671, %v6050, 0
      %v6107 = vsel %vm671, %v6052, 0
      %v6110 = vsel %vm671, %v6054, 0
      %v6113 = vsel %vm671, %v6056, 0
      %v6116 = vsel %vm671, %v6058, 0
      %v6119 = vsel %vm671, %v6060, 0
      %6121 = vmatprep.subr.bf16.mxu0 0
      %6122 = vmatpush1.bf16.msra.mxu0 %v6065
      %6123 = vmatprep.subr.bf16.mxu0 0
      %6124 = vmatpush1.bf16.msra.mxu0 0
      %6125 = vmatprep.subr.bf16.mxu0 0
      %6126 = vmatpush1.bf16.msra.mxu0 0
      %6127 = vmatprep.subr.bf16.mxu0 0
      %6128 = vmatpush1.bf16.msra.mxu0 0
      %6129 = vmatprep.subr.bf16.mxu0 0
      %6130 = vmatpush1.bf16.msra.mxu0 0
      %6131 = vmatprep.subr.bf16.mxu0 0
      %6132 = vmatpush1.bf16.msra.mxu0 0
      %6133 = vmatprep.subr.bf16.mxu0 0
      %6134 = vmatpush1.bf16.msra.mxu0 0
      %6135 = vmatprep.subr.bf16.mxu0 0
      %6136 = vmatpush1.bf16.msra.mxu0 0
      %6137 = vmatprep.subr.bf16.mxu0 0
      %6138 = vmatpush1.bf16.msra.mxu0 0
      %6139 = vmatprep.subr.bf16.mxu0 0
      %6140 = vmatpush1.bf16.msra.mxu0 0
      %6141 = vmatprep.subr.bf16.mxu0 0
      %6142 = vmatpush1.bf16.msra.mxu0 0
      %6143 = vmatprep.subr.bf16.mxu0 0
      %6144 = vmatpush1.bf16.msra.mxu0 0
      %6145 = vmatprep.subr.bf16.mxu0 0
      %6146 = vmatpush1.bf16.msra.mxu0 0
      %6147 = vmatprep.subr.bf16.mxu0 0
      %6148 = vmatpush1.bf16.msra.mxu0 0
      %6149 = vmatprep.subr.bf16.mxu0 0
      %6150 = vmatpush1.bf16.msra.mxu0 0
      %6151 = vmatprep.subr.bf16.mxu0 0
      %6152 = vmatpush1.bf16.msra.mxu0 0
      %6153 = vmatprep.mubr.bf16.mxu0 0
      %6154 = vmatmul.mubr.bf16.gmra.mrb[0].mxu0 %v6068
      %v6155 = vpop.f32.mrb[0].mxu0
      %v6156 = vadd.f32 0.0, %v6155
      %v6157 = vpop.f32.mrb[0].mxu0
      %v6158 = vpop.f32.mrb[0].mxu0
      %v6159 = vadd.f32 0.0, %v6158
      %v6160 = vpop.f32.mrb[0].mxu0
      %6161 = vmatprep.mubr.bf16.mxu0 0
      %6162 = vmatmul.mubr.bf16.gmra.mrb[0].mxu0 %v6071
      %v6163 = vpop.f32.mrb[0].mxu0
      %v6164 = vadd.f32 0.0, %v6163
      %v6165 = vpop.f32.mrb[0].mxu0
      %v6166 = vpop.f32.mrb[0].mxu0
      %v6167 = vadd.f32 0.0, %v6166
      %v6168 = vpop.f32.mrb[0].mxu0
      %6169 = vmatprep.mubr.bf16.mxu0 0
      %6170 = vmatmul.mubr.bf16.gmra.mrb[0].mxu0 %v6074
      %v6171 = vpop.f32.mrb[0].mxu0
      %v6172 = vadd.f32 0.0, %v6171
      %v6173 = vpop.f32.mrb[0].mxu0
      %v6174 = vpop.f32.mrb[0].mxu0
      %v6175 = vadd.f32 0.0, %v6174
      %v6176 = vpop.f32.mrb[0].mxu0
      %6177 = vmatprep.mubr.bf16.mxu0 0
      %6178 = vmatmul.mubr.bf16.gmra.mrb[0].mxu0 %v6077
      %v6179 = vpop.f32.mrb[0].mxu0
      %v6180 = vadd.f32 0.0, %v6179
      %v6181 = vpop.f32.mrb[0].mxu0
      %v6182 = vpop.f32.mrb[0].mxu0
      %v6183 = vadd.f32 0.0, %v6182
      %v6184 = vpop.f32.mrb[0].mxu0
      %6185 = vmatprep.mubr.bf16.mxu0 0
      %6186 = vmatmul.mubr.bf16.gmra.mrb[0].mxu0 %v6080
      %v6187 = vpop.f32.mrb[0].mxu0
      %v6188 = vadd.f32 0.0, %v6187
      %v6189 = vpop.f32.mrb[0].mxu0
      %v6190 = vpop.f32.mrb[0].mxu0
      %v6191 = vadd.f32 0.0, %v6190
      %v6192 = vpop.f32.mrb[0].mxu0
      %6193 = vmatprep.mubr.bf16.mxu0 0
      %6194 = vmatmul.mubr.bf16.gmra.mrb[0].mxu0 %v6083
      %v6195 = vpop.f32.mrb[0].mxu0
      %v6196 = vadd.f32 0.0, %v6195
      %v6197 = vpop.f32.mrb[0].mxu0
      %v6198 = vpop.f32.mrb[0].mxu0
      %v6199 = vadd.f32 0.0, %v6198
      %v6200 = vpop.f32.mrb[0].mxu0
      %6201 = vmatprep.mubr.bf16.mxu0 0
      %6202 = vmatmul.mubr.bf16.gmra.mrb[0].mxu0 %v6086
      %v6203 = vpop.f32.mrb[0].mxu0
      %v6204 = vadd.f32 0.0, %v6203
      %v6205 = vpop.f32.mrb[0].mxu0
      %v6206 = vpop.f32.mrb[0].mxu0
      %v6207 = vadd.f32 0.0, %v6206
      %v6208 = vpop.f32.mrb[0].mxu0
      %6209 = vmatprep.mubr.bf16.mxu0 0
      %6210 = vmatmul.mubr.bf16.gmra.mrb[0].mxu0 %v6089
      %v6211 = vpop.f32.mrb[0].mxu0
      %v6212 = vadd.f32 0.0, %v6211
      %v6213 = vpop.f32.mrb[0].mxu0
      %v6214 = vpop.f32.mrb[0].mxu0
      %v6215 = vadd.f32 0.0, %v6214
      %v6216 = vpop.f32.mrb[0].mxu0
      %6217 = vmatprep.mubr.bf16.mxu0 0
      %6218 = vmatmul.mubr.bf16.gmra.mrb[0].mxu0 %v6092
      %v6219 = vpop.f32.mrb[0].mxu0
      %v6220 = vadd.f32 0.0, %v6219
      %v6221 = vpop.f32.mrb[0].mxu0
      %v6222 = vpop.f32.mrb[0].mxu0
      %v6223 = vadd.f32 0.0, %v6222
      %v6224 = vpop.f32.mrb[0].mxu0
      %6225 = vmatprep.mubr.bf16.mxu0 0
      %6226 = vmatmul.mubr.bf16.gmra.mrb[0].mxu0 %v6095
      %v6227 = vpop.f32.mrb[0].mxu0
      %v6228 = vadd.f32 0.0, %v6227
      %v6229 = vpop.f32.mrb[0].mxu0
      %v6230 = vpop.f32.mrb[0].mxu0
      %v6231 = vadd.f32 0.0, %v6230
      %v6232 = vpop.f32.mrb[0].mxu0
      %6233 = vmatprep.mubr.bf16.mxu0 0
      %6234 = vmatmul.mubr.bf16.gmra.mrb[0].mxu0 %v6098
      %v6235 = vpop.f32.mrb[0].mxu0
      %v6236 = vadd.f32 0.0, %v6235
      %v6237 = vpop.f32.mrb[0].mxu0
      %v6238 = vpop.f32.mrb[0].mxu0
      %v6239 = vadd.f32 0.0, %v6238
      %v6240 = vpop.f32.mrb[0].mxu0
      %6241 = vmatprep.mubr.bf16.mxu0 0
      %6242 = vmatmul.mubr.bf16.gmra.mrb[0].mxu0 %v6101
      %v6243 = vpop.f32.mrb[0].mxu0
      %v6244 = vadd.f32 0.0, %v6243
      %v6245 = vpop.f32.mrb[0].mxu0
      %v6246 = vpop.f32.mrb[0].mxu0
      %v6247 = vadd.f32 0.0, %v6246
      %v6248 = vpop.f32.mrb[0].mxu0
      %6249 = vmatprep.mubr.bf16.mxu0 0
      %6250 = vmatmul.mubr.bf16.gmra.mrb[0].mxu0 %v6104
      %v6251 = vpop.f32.mrb[0].mxu0
      %v6252 = vadd.f32 0.0, %v6251
      %v6253 = vpop.f32.mrb[0].mxu0
      %v6254 = vpop.f32.mrb[0].mxu0
      %v6255 = vadd.f32 0.0, %v6254
      %v6256 = vpop.f32.mrb[0].mxu0
      %6257 = vmatprep.mubr.bf16.mxu0 0
      %6258 = vmatmul.mubr.bf16.gmra.mrb[0].mxu0 %v6107
      %v6259 = vpop.f32.mrb[0].mxu0
      %v6260 = vadd.f32 0.0, %v6259
      %v6261 = vpop.f32.mrb[0].mxu0
      %v6262 = vpop.f32.mrb[0].mxu0
      %v6263 = vadd.f32 0.0, %v6262
      %v6264 = vpop.f32.mrb[0].mxu0
      %6265 = vmatprep.mubr.bf16.mxu0 0
      %6266 = vmatmul.mubr.bf16.gmra.mrb[0].mxu0 %v6110
      %v6267 = vpop.f32.mrb[0].mxu0
      %v6268 = vadd.f32 0.0, %v6267
      %v6269 = vpop.f32.mrb[0].mxu0
      %v6270 = vpop.f32.mrb[0].mxu0
      %v6271 = vadd.f32 0.0, %v6270
      %v6272 = vpop.f32.mrb[0].mxu0
      %6273 = vmatprep.mubr.bf16.mxu0 0
      %6274 = vmatmul.mubr.bf16.gmra.mrb[0].mxu0 %v6113
      %v6275 = vpop.f32.mrb[0].mxu0
      %v6276 = vadd.f32 0.0, %v6275
      %v6277 = vpop.f32.mrb[0].mxu0
      %v6278 = vpop.f32.mrb[0].mxu0
      %v6279 = vadd.f32 0.0, %v6278
      %v6280 = vpop.f32.mrb[0].mxu0
      %6281 = vmatprep.mubr.bf16.mxu0 0
      %6282 = vmatmul.mubr.bf16.gmra.mrb[0].mxu0 %v6116
      %v6283 = vpop.f32.mrb[0].mxu0
      %v6284 = vadd.f32 0.0, %v6283
      %v6285 = vpop.f32.mrb[0].mxu0
      %v6286 = vpop.f32.mrb[0].mxu0
      %v6287 = vadd.f32 0.0, %v6286
      %v6288 = vpop.f32.mrb[0].mxu0
      %6289 = vmatprep.mubr.bf16.mxu0 0
      %6290 = vmatmul.mubr.bf16.gmra.mrb[0].mxu0 %v6119
      %v6291 = vpop.f32.mrb[0].mxu0
      %v6292 = vadd.f32 0.0, %v6291
      %v6293 = vpop.f32.mrb[0].mxu0
      %v6294 = vpop.f32.mrb[0].mxu0
      %v6295 = vadd.f32 0.0, %v6294
      %v6296 = vpop.f32.mrb[0].mxu0
      %6297 = vdwg.mxu0
      %v6298 = vadd.f32 %v5982, %v6156
      %v6299 = vadd.f32 %v5983, %v6159
      %v6300 = vadd.f32 %v5984, %v6164
      %v6301 = vadd.f32 %v5985, %v6167
      %v6302 = vadd.f32 %v5986, %v6172
      %v6303 = vadd.f32 %v5987, %v6175
      %v6304 = vadd.f32 %v5988, %v6180
      %v6305 = vadd.f32 %v5989, %v6183
      %v6306 = vadd.f32 %v5990, %v6188
      %v6307 = vadd.f32 %v5991, %v6191
      %v6308 = vadd.f32 %v5992, %v6196
      %v6309 = vadd.f32 %v5993, %v6199
      %v6310 = vadd.f32 %v5994, %v6204
      %v6311 = vadd.f32 %v5995, %v6207
      %v6312 = vadd.f32 %v5996, %v6212
      %v6313 = vadd.f32 %v5997, %v6215
      %v6314 = vadd.f32 %v5998, %v6220
      %v6315 = vadd.f32 %v5999, %v6223
      %v6316 = vadd.f32 %v6000, %v6228
      %v6317 = vadd.f32 %v6001, %v6231
      %v6318 = vadd.f32 %v6002, %v6236
      %v6319 = vadd.f32 %v6003, %v6239
      %v6320 = vadd.f32 %v6004, %v6244
      %v6321 = vadd.f32 %v6005, %v6247
      %v6322 = vadd.f32 %v6006, %v6252
      %v6323 = vadd.f32 %v6007, %v6255
      %v6324 = vadd.f32 %v6008, %v6260
      %v6325 = vadd.f32 %v6009, %v6263
      %v6326 = vadd.f32 %v6010, %v6268
      %v6327 = vadd.f32 %v6011, %v6271
      %v6328 = vadd.f32 %v6012, %v6276
      %v6329 = vadd.f32 %v6013, %v6279
      %v6330 = vadd.f32 %v6014, %v6284
      %v6331 = vadd.f32 %v6015, %v6287
      %v6332 = vadd.f32 %v6016, %v6292
      %v6333 = vadd.f32 %v6017, %v6295
      %v6334 = vld [vmem:[%s355 + $0x10] sm:$0xc]
      %v6335 = vld [vmem:[%s355 + $0x14] sm:$0xf]
      %v6336 = vld [vmem:[%s355 + $0x18] sm:$0xf]
      %v6337 = vld [vmem:[%s355 + $0x1c] sm:$0xf]
      %v6338 = vld [vmem:[%s355 + $0x20] sm:$0xf]
      %v6339 = vld [vmem:[%s355 + $0x24] sm:$0xf]
      %v6340 = vld [vmem:[%s355 + $0x28] sm:$0xf]
      %v6341 = vld [vmem:[%s355 + $0x2c] sm:$0xf]
      %v6342 = vld [vmem:[%s355 + $0x30] sm:$0xf]
      %v6343 = vld [vmem:[%s355 + $0x34] sm:$0xf]
      %v6344 = vld [vmem:[%s355 + $0x38] sm:$0xf]
      %v6345 = vld [vmem:[%s355 + $0x3c] sm:$0xf]
      %v6346 = vld [vmem:[%s355 + $0x40] sm:$0xf]
      %v6347 = vld [vmem:[%s355 + $0x44] sm:$0xf]
      %v6348 = vld [vmem:[%s355 + $0x48] sm:$0xf]
      %v6349 = vld [vmem:[%s355 + $0x4c] sm:$0xf]
      %v6350 = vld [vmem:[%s355 + $0x50] sm:$0xf]
      %v6351 = vld [vmem:[%s355 + $0x54] sm:$0xf]
      %v6352 = vld [vmem:[%s355 + $0x58] sm:$0xf]
      %v6353 = vld [vmem:[%s355 + $0x5c] sm:$0xf]
      %v6354 = vld [vmem:[%s355 + $0x60] sm:$0xf]
      %v6355 = vld [vmem:[%s355 + $0x64] sm:$0xf]
      %v6356 = vld [vmem:[%s355 + $0x68] sm:$0xf]
      %v6357 = vld [vmem:[%s355 + $0x6c] sm:$0xf]
      %v6358 = vld [vmem:[%s355 + $0x70] sm:$0xf]
      %v6359 = vld [vmem:[%s355 + $0x74] sm:$0xf]
      %v6360 = vld [vmem:[%s355 + $0x78] sm:$0xf]
      %v6361 = vld [vmem:[%s355 + $0x7c] sm:$0xf]
      %v6362 = vld [vmem:[%s355 + $0x80] sm:$0xf]
      %v6363 = vld [vmem:[%s355 + $0x84] sm:$0xf]
      %v6364 = vld [vmem:[%s355 + $0x88] sm:$0xf]
      %v6365 = vld [vmem:[%s355 + $0x8c] sm:$0xf]
      %v6366 = vld [vmem:[%s355 + $0x90] sm:$0xf]
      %v6367 = vld [vmem:[%s355 + $0x94] sm:$0xf]
      %v6368 = vld [vmem:[%s355 + $0x98] sm:$0xf]
      %v6369 = vld [vmem:[%s355 + $0x9c] sm:$0xf]
      %v6370 = vld [vmem:[%s355 + $0xa0] sm:$0x3]
      %v6371 = vld [vmem:[%s3 + $0x78] sm:$0xf]
      %v6372 = vld [vmem:[%s3 + $0x7c] sm:$0xf]
      %v6410 = vunpack.c.l.b16 %v6334
      %v6411 = vunpack.c.l.b16 %v6335
      %v6412 = vunpack.c.l.b16 %v6336
      %v6413 = vunpack.c.l.b16 %v6337
      %v6414 = vunpack.c.l.b16 %v6338
      %v6415 = vunpack.c.l.b16 %v6339
      %v6416 = vunpack.c.l.b16 %v6340
      %v6417 = vunpack.c.l.b16 %v6341
      %v6418 = vunpack.c.l.b16 %v6342
      %v6419 = vunpack.c.l.b16 %v6343
      %v6420 = vunpack.c.l.b16 %v6344
      %v6421 = vunpack.c.l.b16 %v6345
      %v6422 = vunpack.c.l.b16 %v6346
      %v6423 = vunpack.c.l.b16 %v6347
      %v6424 = vunpack.c.l.b16 %v6348
      %v6425 = vunpack.c.l.b16 %v6349
      %v6426 = vunpack.c.l.b16 %v6350
      %v6427 = vunpack.c.l.b16 %v6351
      %v6428 = vunpack.c.l.b16 %v6352
      %v6429 = vunpack.c.l.b16 %v6353
      %v6430 = vunpack.c.l.b16 %v6354
      %v6431 = vunpack.c.l.b16 %v6355
      %v6432 = vunpack.c.l.b16 %v6356
      %v6433 = vunpack.c.l.b16 %v6357
      %v6434 = vunpack.c.l.b16 %v6358
      %v6435 = vunpack.c.l.b16 %v6359
      %v6436 = vunpack.c.l.b16 %v6360
      %v6437 = vunpack.c.l.b16 %v6361
      %v6438 = vunpack.c.l.b16 %v6362
      %v6439 = vunpack.c.l.b16 %v6363
      %v6440 = vunpack.c.l.b16 %v6364
      %v6441 = vunpack.c.l.b16 %v6365
      %v6442 = vunpack.c.l.b16 %v6366
      %v6443 = vunpack.c.l.b16 %v6367
      %v6444 = vunpack.c.l.b16 %v6368
      %v6445 = vunpack.c.l.b16 %v6369
      %v6446 = vunpack.c.l.b16 %v6370
      %v6447 = vpack.c.b16 %v6411, %v6410
      %v6448 = vpack.c.b16 %v6413, %v6412
      %v6449 = vpack.c.b16 %v6415, %v6414
      %v6450 = vpack.c.b16 %v6417, %v6416
      %v6451 = vpack.c.b16 %v6419, %v6418
      %v6452 = vpack.c.b16 %v6421, %v6420
      %v6453 = vpack.c.b16 %v6423, %v6422
      %v6454 = vpack.c.b16 %v6425, %v6424
      %v6455 = vpack.c.b16 %v6427, %v6426
      %v6456 = vpack.c.b16 %v6429, %v6428
      %v6457 = vpack.c.b16 %v6431, %v6430
      %v6458 = vpack.c.b16 %v6433, %v6432
      %v6459 = vpack.c.b16 %v6435, %v6434
      %v6460 = vpack.c.b16 %v6437, %v6436
      %v6461 = vpack.c.b16 %v6439, %v6438
      %v6462 = vpack.c.b16 %v6441, %v6440
      %v6463 = vpack.c.b16 %v6443, %v6442
      %v6464 = vpack.c.b16 %v6445, %v6444
      %v6465 = vpack.c.b16 %v6446, %v6446
      %v6466 = vrot.slane %v6447, 2
      %v6467 = vrot.slane %v6448, 2
      %v6468 = vsel %vm2337, %v6466, %v6467
      %v6469 = vrot.slane %v6449, 2
      %v6470 = vsel %vm2337, %v6467, %v6469
      %v6471 = vrot.slane %v6450, 2
      %v6472 = vsel %vm2337, %v6469, %v6471
      %v6473 = vrot.slane %v6451, 2
      %v6474 = vsel %vm2337, %v6471, %v6473
      %v6475 = vrot.slane %v6452, 2
      %v6476 = vsel %vm2337, %v6473, %v6475
      %v6477 = vrot.slane %v6453, 2
      %v6478 = vsel %vm2337, %v6475, %v6477
      %v6479 = vrot.slane %v6454, 2
      %v6480 = vsel %vm2337, %v6477, %v6479
      %v6481 = vrot.slane %v6455, 2
      %v6482 = vsel %vm2337, %v6479, %v6481
      %v6483 = vrot.slane %v6456, 2
      %v6484 = vsel %vm2337, %v6481, %v6483
      %v6485 = vrot.slane %v6457, 2
      %v6486 = vsel %vm2337, %v6483, %v6485
      %v6487 = vrot.slane %v6458, 2
      %v6488 = vsel %vm2337, %v6485, %v6487
      %v6489 = vrot.slane %v6459, 2
      %v6490 = vsel %vm2337, %v6487, %v6489
      %v6491 = vrot.slane %v6460, 2
      %v6492 = vsel %vm2337, %v6489, %v6491
      %v6493 = vrot.slane %v6461, 2
      %v6494 = vsel %vm2337, %v6491, %v6493
      %v6495 = vrot.slane %v6462, 2
      %v6496 = vsel %vm2337, %v6493, %v6495
      %v6497 = vrot.slane %v6463, 2
      %v6498 = vsel %vm2337, %v6495, %v6497
      %v6499 = vrot.slane %v6464, 2
      %v6500 = vsel %vm2337, %v6497, %v6499
      %v6501 = vrot.slane %v6465, 2
      %v6502 = vsel %vm2337, %v6499, %v6501
      %v6505 = vunpack.c.l.b16 %v6371
      %v6506 = vunpack.c.l.b16 %v6372
      %v6507 = vpack.c.b16 %v6506, %v6505
      %v6510 = vsel %vm671, %v6468, 0
      %v6513 = vsel %vm671, %v6470, 0
      %v6516 = vsel %vm671, %v6472, 0
      %v6519 = vsel %vm671, %v6474, 0
      %v6522 = vsel %vm671, %v6476, 0
      %v6525 = vsel %vm671, %v6478, 0
      %v6528 = vsel %vm671, %v6480, 0
      %v6531 = vsel %vm671, %v6482, 0
      %v6534 = vsel %vm671, %v6484, 0
      %v6537 = vsel %vm671, %v6486, 0
      %v6540 = vsel %vm671, %v6488, 0
      %v6543 = vsel %vm671, %v6490, 0
      %v6546 = vsel %vm671, %v6492, 0
      %v6549 = vsel %vm671, %v6494, 0
      %v6552 = vsel %vm671, %v6496, 0
      %v6555 = vsel %vm671, %v6498, 0
      %v6558 = vsel %vm671, %v6500, 0
      %v6561 = vsel %vm671, %v6502, 0
      %6563 = vmatprep.subr.bf16.mxu0 0
      %6564 = vmatpush1.bf16.msra.mxu0 %v6507
      %6565 = vmatprep.subr.bf16.mxu0 0
      %6566 = vmatpush1.bf16.msra.mxu0 0
      %6567 = vmatprep.subr.bf16.mxu0 0
      %6568 = vmatpush1.bf16.msra.mxu0 0
      %6569 = vmatprep.subr.bf16.mxu0 0
      %6570 = vmatpush1.bf16.msra.mxu0 0
      %6571 = vmatprep.subr.bf16.mxu0 0
      %6572 = vmatpush1.bf16.msra.mxu0 0
      %6573 = vmatprep.subr.bf16.mxu0 0
      %6574 = vmatpush1.bf16.msra.mxu0 0
      %6575 = vmatprep.subr.bf16.mxu0 0
      %6576 = vmatpush1.bf16.msra.mxu0 0
      %6577 = vmatprep.subr.bf16.mxu0 0
      %6578 = vmatpush1.bf16.msra.mxu0 0
      %6579 = vmatprep.subr.bf16.mxu0 0
      %6580 = vmatpush1.bf16.msra.mxu0 0
      %6581 = vmatprep.subr.bf16.mxu0 0
      %6582 = vmatpush1.bf16.msra.mxu0 0
      %6583 = vmatprep.subr.bf16.mxu0 0
      %6584 = vmatpush1.bf16.msra.mxu0 0
      %6585 = vmatprep.subr.bf16.mxu0 0
      %6586 = vmatpush1.bf16.msra.mxu0 0
      %6587 = vmatprep.subr.bf16.mxu0 0
      %6588 = vmatpush1.bf16.msra.mxu0 0
      %6589 = vmatprep.subr.bf16.mxu0 0
      %6590 = vmatpush1.bf16.msra.mxu0 0
      %6591 = vmatprep.subr.bf16.mxu0 0
      %6592 = vmatpush1.bf16.msra.mxu0 0
      %6593 = vmatprep.subr.bf16.mxu0 0
      %6594 = vmatpush1.bf16.msra.mxu0 0
      %6595 = vmatprep.mubr.bf16.mxu0 0
      %6596 = vmatmul.mubr.bf16.gmra.mrb[0].mxu0 %v6510
      %v6597 = vpop.f32.mrb[0].mxu0
      %v6598 = vadd.f32 0.0, %v6597
      %v6599 = vpop.f32.mrb[0].mxu0
      %v6600 = vpop.f32.mrb[0].mxu0
      %v6601 = vadd.f32 0.0, %v6600
      %v6602 = vpop.f32.mrb[0].mxu0
      %6603 = vmatprep.mubr.bf16.mxu0 0
      %6604 = vmatmul.mubr.bf16.gmra.mrb[0].mxu0 %v6513
      %v6605 = vpop.f32.mrb[0].mxu0
      %v6606 = vadd.f32 0.0, %v6605
      %v6607 = vpop.f32.mrb[0].mxu0
      %v6608 = vpop.f32.mrb[0].mxu0
      %v6609 = vadd.f32 0.0, %v6608
      %v6610 = vpop.f32.mrb[0].mxu0
      %6611 = vmatprep.mubr.bf16.mxu0 0
      %6612 = vmatmul.mubr.bf16.gmra.mrb[0].mxu0 %v6516
      %v6613 = vpop.f32.mrb[0].mxu0
      %v6614 = vadd.f32 0.0, %v6613
      %v6615 = vpop.f32.mrb[0].mxu0
      %v6616 = vpop.f32.mrb[0].mxu0
      %v6617 = vadd.f32 0.0, %v6616
      %v6618 = vpop.f32.mrb[0].mxu0
      %6619 = vmatprep.mubr.bf16.mxu0 0
      %6620 = vmatmul.mubr.bf16.gmra.mrb[0].mxu0 %v6519
      %v6621 = vpop.f32.mrb[0].mxu0
      %v6622 = vadd.f32 0.0, %v6621
      %v6623 = vpop.f32.mrb[0].mxu0
      %v6624 = vpop.f32.mrb[0].mxu0
      %v6625 = vadd.f32 0.0, %v6624
      %v6626 = vpop.f32.mrb[0].mxu0
      %6627 = vmatprep.mubr.bf16.mxu0 0
      %6628 = vmatmul.mubr.bf16.gmra.mrb[0].mxu0 %v6522
      %v6629 = vpop.f32.mrb[0].mxu0
      %v6630 = vadd.f32 0.0, %v6629
      %v6631 = vpop.f32.mrb[0].mxu0
      %v6632 = vpop.f32.mrb[0].mxu0
      %v6633 = vadd.f32 0.0, %v6632
      %v6634 = vpop.f32.mrb[0].mxu0
      %6635 = vmatprep.mubr.bf16.mxu0 0
      %6636 = vmatmul.mubr.bf16.gmra.mrb[0].mxu0 %v6525
      %v6637 = vpop.f32.mrb[0].mxu0
      %v6638 = vadd.f32 0.0, %v6637
      %v6639 = vpop.f32.mrb[0].mxu0
      %v6640 = vpop.f32.mrb[0].mxu0
      %v6641 = vadd.f32 0.0, %v6640
      %v6642 = vpop.f32.mrb[0].mxu0
      %6643 = vmatprep.mubr.bf16.mxu0 0
      %6644 = vmatmul.mubr.bf16.gmra.mrb[0].mxu0 %v6528
      %v6645 = vpop.f32.mrb[0].mxu0
      %v6646 = vadd.f32 0.0, %v6645
      %v6647 = vpop.f32.mrb[0].mxu0
      %v6648 = vpop.f32.mrb[0].mxu0
      %v6649 = vadd.f32 0.0, %v6648
      %v6650 = vpop.f32.mrb[0].mxu0
      %6651 = vmatprep.mubr.bf16.mxu0 0
      %6652 = vmatmul.mubr.bf16.gmra.mrb[0].mxu0 %v6531
      %v6653 = vpop.f32.mrb[0].mxu0
      %v6654 = vadd.f32 0.0, %v6653
      %v6655 = vpop.f32.mrb[0].mxu0
      %v6656 = vpop.f32.mrb[0].mxu0
      %v6657 = vadd.f32 0.0, %v6656
      %v6658 = vpop.f32.mrb[0].mxu0
      %6659 = vmatprep.mubr.bf16.mxu0 0
      %6660 = vmatmul.mubr.bf16.gmra.mrb[0].mxu0 %v6534
      %v6661 = vpop.f32.mrb[0].mxu0
      %v6662 = vadd.f32 0.0, %v6661
      %v6663 = vpop.f32.mrb[0].mxu0
      %v6664 = vpop.f32.mrb[0].mxu0
      %v6665 = vadd.f32 0.0, %v6664
      %v6666 = vpop.f32.mrb[0].mxu0
      %6667 = vmatprep.mubr.bf16.mxu0 0
      %6668 = vmatmul.mubr.bf16.gmra.mrb[0].mxu0 %v6537
      %v6669 = vpop.f32.mrb[0].mxu0
      %v6670 = vadd.f32 0.0, %v6669
      %v6671 = vpop.f32.mrb[0].mxu0
      %v6672 = vpop.f32.mrb[0].mxu0
      %v6673 = vadd.f32 0.0, %v6672
      %v6674 = vpop.f32.mrb[0].mxu0
      %6675 = vmatprep.mubr.bf16.mxu0 0
      %6676 = vmatmul.mubr.bf16.gmra.mrb[0].mxu0 %v6540
      %v6677 = vpop.f32.mrb[0].mxu0
      %v6678 = vadd.f32 0.0, %v6677
      %v6679 = vpop.f32.mrb[0].mxu0
      %v6680 = vpop.f32.mrb[0].mxu0
      %v6681 = vadd.f32 0.0, %v6680
      %v6682 = vpop.f32.mrb[0].mxu0
      %6683 = vmatprep.mubr.bf16.mxu0 0
      %6684 = vmatmul.mubr.bf16.gmra.mrb[0].mxu0 %v6543
      %v6685 = vpop.f32.mrb[0].mxu0
      %v6686 = vadd.f32 0.0, %v6685
      %v6687 = vpop.f32.mrb[0].mxu0
      %v6688 = vpop.f32.mrb[0].mxu0
      %v6689 = vadd.f32 0.0, %v6688
      %v6690 = vpop.f32.mrb[0].mxu0
      %6691 = vmatprep.mubr.bf16.mxu0 0
      %6692 = vmatmul.mubr.bf16.gmra.mrb[0].mxu0 %v6546
      %v6693 = vpop.f32.mrb[0].mxu0
      %v6694 = vadd.f32 0.0, %v6693
      %v6695 = vpop.f32.mrb[0].mxu0
      %v6696 = vpop.f32.mrb[0].mxu0
      %v6697 = vadd.f32 0.0, %v6696
      %v6698 = vpop.f32.mrb[0].mxu0
      %6699 = vmatprep.mubr.bf16.mxu0 0
      %6700 = vmatmul.mubr.bf16.gmra.mrb[0].mxu0 %v6549
      %v6701 = vpop.f32.mrb[0].mxu0
      %v6702 = vadd.f32 0.0, %v6701
      %v6703 = vpop.f32.mrb[0].mxu0
      %v6704 = vpop.f32.mrb[0].mxu0
      %v6705 = vadd.f32 0.0, %v6704
      %v6706 = vpop.f32.mrb[0].mxu0
      %6707 = vmatprep.mubr.bf16.mxu0 0
      %6708 = vmatmul.mubr.bf16.gmra.mrb[0].mxu0 %v6552
      %v6709 = vpop.f32.mrb[0].mxu0
      %v6710 = vadd.f32 0.0, %v6709
      %v6711 = vpop.f32.mrb[0].mxu0
      %v6712 = vpop.f32.mrb[0].mxu0
      %v6713 = vadd.f32 0.0, %v6712
      %v6714 = vpop.f32.mrb[0].mxu0
      %6715 = vmatprep.mubr.bf16.mxu0 0
      %6716 = vmatmul.mubr.bf16.gmra.mrb[0].mxu0 %v6555
      %v6717 = vpop.f32.mrb[0].mxu0
      %v6718 = vadd.f32 0.0, %v6717
      %v6719 = vpop.f32.mrb[0].mxu0
      %v6720 = vpop.f32.mrb[0].mxu0
      %v6721 = vadd.f32 0.0, %v6720
      %v6722 = vpop.f32.mrb[0].mxu0
      %6723 = vmatprep.mubr.bf16.mxu0 0
      %6724 = vmatmul.mubr.bf16.gmra.mrb[0].mxu0 %v6558
      %v6725 = vpop.f32.mrb[0].mxu0
      %v6726 = vadd.f32 0.0, %v6725
      %v6727 = vpop.f32.mrb[0].mxu0
      %v6728 = vpop.f32.mrb[0].mxu0
      %v6729 = vadd.f32 0.0, %v6728
      %v6730 = vpop.f32.mrb[0].mxu0
      %6731 = vmatprep.mubr.bf16.mxu0 0
      %6732 = vmatmul.mubr.bf16.gmra.mrb[0].mxu0 %v6561
      %v6733 = vpop.f32.mrb[0].mxu0
      %v6734 = vadd.f32 0.0, %v6733
      %v6735 = vpop.f32.mrb[0].mxu0
      %v6736 = vpop.f32.mrb[0].mxu0
      %v6737 = vadd.f32 0.0, %v6736
      %v6738 = vpop.f32.mrb[0].mxu0
      %6739 = vdwg.mxu0
      %v6740 = vadd.f32 %v6298, %v6598
      %v6741 = vadd.f32 %v6299, %v6601
      %v6742 = vadd.f32 %v6300, %v6606
      %v6743 = vadd.f32 %v6301, %v6609
      %v6744 = vadd.f32 %v6302, %v6614
      %v6745 = vadd.f32 %v6303, %v6617
      %v6746 = vadd.f32 %v6304, %v6622
      %v6747 = vadd.f32 %v6305, %v6625
      %v6748 = vadd.f32 %v6306, %v6630
      %v6749 = vadd.f32 %v6307, %v6633
      %v6750 = vadd.f32 %v6308, %v6638
      %v6751 = vadd.f32 %v6309, %v6641
      %v6752 = vadd.f32 %v6310, %v6646
      %v6753 = vadd.f32 %v6311, %v6649
      %v6754 = vadd.f32 %v6312, %v6654
      %v6755 = vadd.f32 %v6313, %v6657
      %v6756 = vadd.f32 %v6314, %v6662
      %v6757 = vadd.f32 %v6315, %v6665
      %v6758 = vadd.f32 %v6316, %v6670
      %v6759 = vadd.f32 %v6317, %v6673
      %v6760 = vadd.f32 %v6318, %v6678
      %v6761 = vadd.f32 %v6319, %v6681
      %v6762 = vadd.f32 %v6320, %v6686
      %v6763 = vadd.f32 %v6321, %v6689
      %v6764 = vadd.f32 %v6322, %v6694
      %v6765 = vadd.f32 %v6323, %v6697
      %v6766 = vadd.f32 %v6324, %v6702
      %v6767 = vadd.f32 %v6325, %v6705
      %v6768 = vadd.f32 %v6326, %v6710
      %v6769 = vadd.f32 %v6327, %v6713
      %v6770 = vadd.f32 %v6328, %v6718
      %v6771 = vadd.f32 %v6329, %v6721
      %v6772 = vadd.f32 %v6330, %v6726
      %v6773 = vadd.f32 %v6331, %v6729
      %v6774 = vadd.f32 %v6332, %v6734
      %v6775 = vadd.f32 %v6333, %v6737
      %v6776 = vld [vmem:[%s355 + $0xa0] sm:$0x7]
      %v6777 = vld [vmem:[%s3 + $0x80] sm:$0xf]
      %v6778 = vld [vmem:[%s3 + $0x84] sm:$0xf]
      %v6780 = vunpack.c.l.b16 %v6776
      %v6781 = vpack.c.b16 %v6780, %v6780
      %v6783 = vshrl.u32 %v6447, 16
      %v6785 = vrot.slane %v6783, 2
      %v6786 = vshll.u32 %v6447, 16
      %v6788 = vrot.slane %v6786, 3
      %v6789 = vor.u32 %v6785, %v6788
      %v6791 = vshrl.u32 %v6448, 16
      %v6793 = vrot.slane %v6791, 2
      %v6794 = vshll.u32 %v6448, 16
      %v6796 = vrot.slane %v6794, 3
      %v6797 = vor.u32 %v6793, %v6796
      %v6798 = vsel %vm3096, %v6789, %v6797
      %v6800 = vshrl.u32 %v6449, 16
      %v6802 = vrot.slane %v6800, 2
      %v6803 = vshll.u32 %v6449, 16
      %v6805 = vrot.slane %v6803, 3
      %v6806 = vor.u32 %v6802, %v6805
      %v6807 = vsel %vm3096, %v6797, %v6806
      %v6809 = vshrl.u32 %v6450, 16
      %v6811 = vrot.slane %v6809, 2
      %v6812 = vshll.u32 %v6450, 16
      %v6814 = vrot.slane %v6812, 3
      %v6815 = vor.u32 %v6811, %v6814
      %v6816 = vsel %vm3096, %v6806, %v6815
      %v6818 = vshrl.u32 %v6451, 16
      %v6820 = vrot.slane %v6818, 2
      %v6821 = vshll.u32 %v6451, 16
      %v6823 = vrot.slane %v6821, 3
      %v6824 = vor.u32 %v6820, %v6823
      %v6825 = vsel %vm3096, %v6815, %v6824
      %v6827 = vshrl.u32 %v6452, 16
      %v6829 = vrot.slane %v6827, 2
      %v6830 = vshll.u32 %v6452, 16
      %v6832 = vrot.slane %v6830, 3
      %v6833 = vor.u32 %v6829, %v6832
      %v6834 = vsel %vm3096, %v6824, %v6833
      %v6836 = vshrl.u32 %v6453, 16
      %v6838 = vrot.slane %v6836, 2
      %v6839 = vshll.u32 %v6453, 16
      %v6841 = vrot.slane %v6839, 3
      %v6842 = vor.u32 %v6838, %v6841
      %v6843 = vsel %vm3096, %v6833, %v6842
      %v6845 = vshrl.u32 %v6454, 16
      %v6847 = vrot.slane %v6845, 2
      %v6848 = vshll.u32 %v6454, 16
      %v6850 = vrot.slane %v6848, 3
      %v6851 = vor.u32 %v6847, %v6850
      %v6852 = vsel %vm3096, %v6842, %v6851
      %v6854 = vshrl.u32 %v6455, 16
      %v6856 = vrot.slane %v6854, 2
      %v6857 = vshll.u32 %v6455, 16
      %v6859 = vrot.slane %v6857, 3
      %v6860 = vor.u32 %v6856, %v6859
      %v6861 = vsel %vm3096, %v6851, %v6860
      %v6863 = vshrl.u32 %v6456, 16
      %v6865 = vrot.slane %v6863, 2
      %v6866 = vshll.u32 %v6456, 16
      %v6868 = vrot.slane %v6866, 3
      %v6869 = vor.u32 %v6865, %v6868
      %v6870 = vsel %vm3096, %v6860, %v6869
      %v6872 = vshrl.u32 %v6457, 16
      %v6874 = vrot.slane %v6872, 2
      %v6875 = vshll.u32 %v6457, 16
      %v6877 = vrot.slane %v6875, 3
      %v6878 = vor.u32 %v6874, %v6877
      %v6879 = vsel %vm3096, %v6869, %v6878
      %v6881 = vshrl.u32 %v6458, 16
      %v6883 = vrot.slane %v6881, 2
      %v6884 = vshll.u32 %v6458, 16
      %v6886 = vrot.slane %v6884, 3
      %v6887 = vor.u32 %v6883, %v6886
      %v6888 = vsel %vm3096, %v6878, %v6887
      %v6890 = vshrl.u32 %v6459, 16
      %v6892 = vrot.slane %v6890, 2
      %v6893 = vshll.u32 %v6459, 16
      %v6895 = vrot.slane %v6893, 3
      %v6896 = vor.u32 %v6892, %v6895
      %v6897 = vsel %vm3096, %v6887, %v6896
      %v6899 = vshrl.u32 %v6460, 16
      %v6901 = vrot.slane %v6899, 2
      %v6902 = vshll.u32 %v6460, 16
      %v6904 = vrot.slane %v6902, 3
      %v6905 = vor.u32 %v6901, %v6904
      %v6906 = vsel %vm3096, %v6896, %v6905
      %v6908 = vshrl.u32 %v6461, 16
      %v6910 = vrot.slane %v6908, 2
      %v6911 = vshll.u32 %v6461, 16
      %v6913 = vrot.slane %v6911, 3
      %v6914 = vor.u32 %v6910, %v6913
      %v6915 = vsel %vm3096, %v6905, %v6914
      %v6917 = vshrl.u32 %v6462, 16
      %v6919 = vrot.slane %v6917, 2
      %v6920 = vshll.u32 %v6462, 16
      %v6922 = vrot.slane %v6920, 3
      %v6923 = vor.u32 %v6919, %v6922
      %v6924 = vsel %vm3096, %v6914, %v6923
      %v6926 = vshrl.u32 %v6463, 16
      %v6928 = vrot.slane %v6926, 2
      %v6929 = vshll.u32 %v6463, 16
      %v6931 = vrot.slane %v6929, 3
      %v6932 = vor.u32 %v6928, %v6931
      %v6933 = vsel %vm3096, %v6923, %v6932
      %v6935 = vshrl.u32 %v6464, 16
      %v6937 = vrot.slane %v6935, 2
      %v6938 = vshll.u32 %v6464, 16
      %v6940 = vrot.slane %v6938, 3
      %v6941 = vor.u32 %v6937, %v6940
      %v6942 = vsel %vm3096, %v6932, %v6941
      %v6944 = vshrl.u32 %v6781, 16
      %v6946 = vrot.slane %v6944, 2
      %v6947 = vshll.u32 %v6781, 16
      %v6949 = vrot.slane %v6947, 3
      %v6950 = vor.u32 %v6946, %v6949
      %v6951 = vsel %vm3096, %v6941, %v6950
      %v6954 = vunpack.c.l.b16 %v6777
      %v6955 = vunpack.c.l.b16 %v6778
      %v6956 = vpack.c.b16 %v6955, %v6954
      %v6959 = vsel %vm671, %v6798, 0
      %v6962 = vsel %vm671, %v6807, 0
      %v6965 = vsel %vm671, %v6816, 0
      %v6968 = vsel %vm671, %v6825, 0
      %v6971 = vsel %vm671, %v6834, 0
      %v6974 = vsel %vm671, %v6843, 0
      %v6977 = vsel %vm671, %v6852, 0
      %v6980 = vsel %vm671, %v6861, 0
      %v6983 = vsel %vm671, %v6870, 0
      %v6986 = vsel %vm671, %v6879, 0
      %v6989 = vsel %vm671, %v6888, 0
      %v6992 = vsel %vm671, %v6897, 0
      %v6995 = vsel %vm671, %v6906, 0
      %v6998 = vsel %vm671, %v6915, 0
      %v7001 = vsel %vm671, %v6924, 0
      %v7004 = vsel %vm671, %v6933, 0
      %v7007 = vsel %vm671, %v6942, 0
      %v7010 = vsel %vm671, %v6951, 0
      %7012 = vmatprep.subr.bf16.mxu0 0
      %7013 = vmatpush1.bf16.msra.mxu0 %v6956
      %7014 = vmatprep.subr.bf16.mxu0 0
      %7015 = vmatpush1.bf16.msra.mxu0 0
      %7016 = vmatprep.subr.bf16.mxu0 0
      %7017 = vmatpush1.bf16.msra.mxu0 0
      %7018 = vmatprep.subr.bf16.mxu0 0
      %7019 = vmatpush1.bf16.msra.mxu0 0
      %7020 = vmatprep.subr.bf16.mxu0 0
      %7021 = vmatpush1.bf16.msra.mxu0 0
      %7022 = vmatprep.subr.bf16.mxu0 0
      %7023 = vmatpush1.bf16.msra.mxu0 0
      %7024 = vmatprep.subr.bf16.mxu0 0
      %7025 = vmatpush1.bf16.msra.mxu0 0
      %7026 = vmatprep.subr.bf16.mxu0 0
      %7027 = vmatpush1.bf16.msra.mxu0 0
      %7028 = vmatprep.subr.bf16.mxu0 0
      %7029 = vmatpush1.bf16.msra.mxu0 0
      %7030 = vmatprep.subr.bf16.mxu0 0
      %7031 = vmatpush1.bf16.msra.mxu0 0
      %7032 = vmatprep.subr.bf16.mxu0 0
      %7033 = vmatpush1.bf16.msra.mxu0 0
      %7034 = vmatprep.subr.bf16.mxu0 0
      %7035 = vmatpush1.bf16.msra.mxu0 0
      %7036 = vmatprep.subr.bf16.mxu0 0
      %7037 = vmatpush1.bf16.msra.mxu0 0
      %7038 = vmatprep.subr.bf16.mxu0 0
      %7039 = vmatpush1.bf16.msra.mxu0 0
      %7040 = vmatprep.subr.bf16.mxu0 0
      %7041 = vmatpush1.bf16.msra.mxu0 0
      %7042 = vmatprep.subr.bf16.mxu0 0
      %7043 = vmatpush1.bf16.msra.mxu0 0
      %7044 = vmatprep.mubr.bf16.mxu0 0
      %7045 = vmatmul.mubr.bf16.gmra.mrb[0].mxu0 %v6959
      %v7046 = vpop.f32.mrb[0].mxu0
      %v7047 = vadd.f32 0.0, %v7046
      %v7048 = vpop.f32.mrb[0].mxu0
      %v7049 = vpop.f32.mrb[0].mxu0
      %v7050 = vadd.f32 0.0, %v7049
      %v7051 = vpop.f32.mrb[0].mxu0
      %7052 = vmatprep.mubr.bf16.mxu0 0
      %7053 = vmatmul.mubr.bf16.gmra.mrb[0].mxu0 %v6962
      %v7054 = vpop.f32.mrb[0].mxu0
      %v7055 = vadd.f32 0.0, %v7054
      %v7056 = vpop.f32.mrb[0].mxu0
      %v7057 = vpop.f32.mrb[0].mxu0
      %v7058 = vadd.f32 0.0, %v7057
      %v7059 = vpop.f32.mrb[0].mxu0
      %7060 = vmatprep.mubr.bf16.mxu0 0
      %7061 = vmatmul.mubr.bf16.gmra.mrb[0].mxu0 %v6965
      %v7062 = vpop.f32.mrb[0].mxu0
      %v7063 = vadd.f32 0.0, %v7062
      %v7064 = vpop.f32.mrb[0].mxu0
      %v7065 = vpop.f32.mrb[0].mxu0
      %v7066 = vadd.f32 0.0, %v7065
      %v7067 = vpop.f32.mrb[0].mxu0
      %7068 = vmatprep.mubr.bf16.mxu0 0
      %7069 = vmatmul.mubr.bf16.gmra.mrb[0].mxu0 %v6968
      %v7070 = vpop.f32.mrb[0].mxu0
      %v7071 = vadd.f32 0.0, %v7070
      %v7072 = vpop.f32.mrb[0].mxu0
      %v7073 = vpop.f32.mrb[0].mxu0
      %v7074 = vadd.f32 0.0, %v7073
      %v7075 = vpop.f32.mrb[0].mxu0
      %7076 = vmatprep.mubr.bf16.mxu0 0
      %7077 = vmatmul.mubr.bf16.gmra.mrb[0].mxu0 %v6971
      %v7078 = vpop.f32.mrb[0].mxu0
      %v7079 = vadd.f32 0.0, %v7078
      %v7080 = vpop.f32.mrb[0].mxu0
      %v7081 = vpop.f32.mrb[0].mxu0
      %v7082 = vadd.f32 0.0, %v7081
      %v7083 = vpop.f32.mrb[0].mxu0
      %7084 = vmatprep.mubr.bf16.mxu0 0
      %7085 = vmatmul.mubr.bf16.gmra.mrb[0].mxu0 %v6974
      %v7086 = vpop.f32.mrb[0].mxu0
      %v7087 = vadd.f32 0.0, %v7086
      %v7088 = vpop.f32.mrb[0].mxu0
      %v7089 = vpop.f32.mrb[0].mxu0
      %v7090 = vadd.f32 0.0, %v7089
      %v7091 = vpop.f32.mrb[0].mxu0
      %7092 = vmatprep.mubr.bf16.mxu0 0
      %7093 = vmatmul.mubr.bf16.gmra.mrb[0].mxu0 %v6977
      %v7094 = vpop.f32.mrb[0].mxu0
      %v7095 = vadd.f32 0.0, %v7094
      %v7096 = vpop.f32.mrb[0].mxu0
      %v7097 = vpop.f32.mrb[0].mxu0
      %v7098 = vadd.f32 0.0, %v7097
      %v7099 = vpop.f32.mrb[0].mxu0
      %7100 = vmatprep.mubr.bf16.mxu0 0
      %7101 = vmatmul.mubr.bf16.gmra.mrb[0].mxu0 %v6980
      %v7102 = vpop.f32.mrb[0].mxu0
      %v7103 = vadd.f32 0.0, %v7102
      %v7104 = vpop.f32.mrb[0].mxu0
      %v7105 = vpop.f32.mrb[0].mxu0
      %v7106 = vadd.f32 0.0, %v7105
      %v7107 = vpop.f32.mrb[0].mxu0
      %7108 = vmatprep.mubr.bf16.mxu0 0
      %7109 = vmatmul.mubr.bf16.gmra.mrb[0].mxu0 %v6983
      %v7110 = vpop.f32.mrb[0].mxu0
      %v7111 = vadd.f32 0.0, %v7110
      %v7112 = vpop.f32.mrb[0].mxu0
      %v7113 = vpop.f32.mrb[0].mxu0
      %v7114 = vadd.f32 0.0, %v7113
      %v7115 = vpop.f32.mrb[0].mxu0
      %7116 = vmatprep.mubr.bf16.mxu0 0
      %7117 = vmatmul.mubr.bf16.gmra.mrb[0].mxu0 %v6986
      %v7118 = vpop.f32.mrb[0].mxu0
      %v7119 = vadd.f32 0.0, %v7118
      %v7120 = vpop.f32.mrb[0].mxu0
      %v7121 = vpop.f32.mrb[0].mxu0
      %v7122 = vadd.f32 0.0, %v7121
      %v7123 = vpop.f32.mrb[0].mxu0
      %7124 = vmatprep.mubr.bf16.mxu0 0
      %7125 = vmatmul.mubr.bf16.gmra.mrb[0].mxu0 %v6989
      %v7126 = vpop.f32.mrb[0].mxu0
      %v7127 = vadd.f32 0.0, %v7126
      %v7128 = vpop.f32.mrb[0].mxu0
      %v7129 = vpop.f32.mrb[0].mxu0
      %v7130 = vadd.f32 0.0, %v7129
      %v7131 = vpop.f32.mrb[0].mxu0
      %7132 = vmatprep.mubr.bf16.mxu0 0
      %7133 = vmatmul.mubr.bf16.gmra.mrb[0].mxu0 %v6992
      %v7134 = vpop.f32.mrb[0].mxu0
      %v7135 = vadd.f32 0.0, %v7134
      %v7136 = vpop.f32.mrb[0].mxu0
      %v7137 = vpop.f32.mrb[0].mxu0
      %v7138 = vadd.f32 0.0, %v7137
      %v7139 = vpop.f32.mrb[0].mxu0
      %7140 = vmatprep.mubr.bf16.mxu0 0
      %7141 = vmatmul.mubr.bf16.gmra.mrb[0].mxu0 %v6995
      %v7142 = vpop.f32.mrb[0].mxu0
      %v7143 = vadd.f32 0.0, %v7142
      %v7144 = vpop.f32.mrb[0].mxu0
      %v7145 = vpop.f32.mrb[0].mxu0
      %v7146 = vadd.f32 0.0, %v7145
      %v7147 = vpop.f32.mrb[0].mxu0
      %7148 = vmatprep.mubr.bf16.mxu0 0
      %7149 = vmatmul.mubr.bf16.gmra.mrb[0].mxu0 %v6998
      %v7150 = vpop.f32.mrb[0].mxu0
      %v7151 = vadd.f32 0.0, %v7150
      %v7152 = vpop.f32.mrb[0].mxu0
      %v7153 = vpop.f32.mrb[0].mxu0
      %v7154 = vadd.f32 0.0, %v7153
      %v7155 = vpop.f32.mrb[0].mxu0
      %7156 = vmatprep.mubr.bf16.mxu0 0
      %7157 = vmatmul.mubr.bf16.gmra.mrb[0].mxu0 %v7001
      %v7158 = vpop.f32.mrb[0].mxu0
      %v7159 = vadd.f32 0.0, %v7158
      %v7160 = vpop.f32.mrb[0].mxu0
      %v7161 = vpop.f32.mrb[0].mxu0
      %v7162 = vadd.f32 0.0, %v7161
      %v7163 = vpop.f32.mrb[0].mxu0
      %7164 = vmatprep.mubr.bf16.mxu0 0
      %7165 = vmatmul.mubr.bf16.gmra.mrb[0].mxu0 %v7004
      %v7166 = vpop.f32.mrb[0].mxu0
      %v7167 = vadd.f32 0.0, %v7166
      %v7168 = vpop.f32.mrb[0].mxu0
      %v7169 = vpop.f32.mrb[0].mxu0
      %v7170 = vadd.f32 0.0, %v7169
      %v7171 = vpop.f32.mrb[0].mxu0
      %7172 = vmatprep.mubr.bf16.mxu0 0
      %7173 = vmatmul.mubr.bf16.gmra.mrb[0].mxu0 %v7007
      %v7174 = vpop.f32.mrb[0].mxu0
      %v7175 = vadd.f32 0.0, %v7174
      %v7176 = vpop.f32.mrb[0].mxu0
      %v7177 = vpop.f32.mrb[0].mxu0
      %v7178 = vadd.f32 0.0, %v7177
      %v7179 = vpop.f32.mrb[0].mxu0
      %7180 = vmatprep.mubr.bf16.mxu0 0
      %7181 = vmatmul.mubr.bf16.gmra.mrb[0].mxu0 %v7010
      %v7182 = vpop.f32.mrb[0].mxu0
      %v7183 = vadd.f32 0.0, %v7182
      %v7184 = vpop.f32.mrb[0].mxu0
      %v7185 = vpop.f32.mrb[0].mxu0
      %v7186 = vadd.f32 0.0, %v7185
      %v7187 = vpop.f32.mrb[0].mxu0
      %7188 = vdwg.mxu0
      %v7189 = vadd.f32 %v6740, %v7047
      %v7190 = vadd.f32 %v6741, %v7050
      %v7191 = vadd.f32 %v6742, %v7055
      %v7192 = vadd.f32 %v6743, %v7058
      %v7193 = vadd.f32 %v6744, %v7063
      %v7194 = vadd.f32 %v6745, %v7066
      %v7195 = vadd.f32 %v6746, %v7071
      %v7196 = vadd.f32 %v6747, %v7074
      %v7197 = vadd.f32 %v6748, %v7079
      %v7198 = vadd.f32 %v6749, %v7082
      %v7199 = vadd.f32 %v6750, %v7087
      %v7200 = vadd.f32 %v6751, %v7090
      %v7201 = vadd.f32 %v6752, %v7095
      %v7202 = vadd.f32 %v6753, %v7098
      %v7203 = vadd.f32 %v6754, %v7103
      %v7204 = vadd.f32 %v6755, %v7106
      %v7205 = vadd.f32 %v6756, %v7111
      %v7206 = vadd.f32 %v6757, %v7114
      %v7207 = vadd.f32 %v6758, %v7119
      %v7208 = vadd.f32 %v6759, %v7122
      %v7209 = vadd.f32 %v6760, %v7127
      %v7210 = vadd.f32 %v6761, %v7130
      %v7211 = vadd.f32 %v6762, %v7135
      %v7212 = vadd.f32 %v6763, %v7138
      %v7213 = vadd.f32 %v6764, %v7143
      %v7214 = vadd.f32 %v6765, %v7146
      %v7215 = vadd.f32 %v6766, %v7151
      %v7216 = vadd.f32 %v6767, %v7154
      %v7217 = vadd.f32 %v6768, %v7159
      %v7218 = vadd.f32 %v6769, %v7162
      %v7219 = vadd.f32 %v6770, %v7167
      %v7220 = vadd.f32 %v6771, %v7170
      %v7221 = vadd.f32 %v6772, %v7175
      %v7222 = vadd.f32 %v6773, %v7178
      %v7223 = vadd.f32 %v6774, %v7183
      %v7224 = vadd.f32 %v6775, %v7186
      %v7225 = vld [vmem:[%s355 + $0x10] sm:$0x8]
      %v7226 = vld [vmem:[%s3 + $0x88] sm:$0xf]
      %v7227 = vld [vmem:[%s3 + $0x8c] sm:$0xf]
      %v7229 = vunpack.c.l.b16 %v7225
      %v7230 = vpack.c.b16 %v6411, %v7229
      %v7231 = vrot.slane %v7230, 3
      %v7232 = vrot.slane %v6448, 3
      %v7233 = vsel %vm3546, %v7231, %v7232
      %v7234 = vrot.slane %v6449, 3
      %v7235 = vsel %vm3546, %v7232, %v7234
      %v7236 = vrot.slane %v6450, 3
      %v7237 = vsel %vm3546, %v7234, %v7236
      %v7238 = vrot.slane %v6451, 3
      %v7239 = vsel %vm3546, %v7236, %v7238
      %v7240 = vrot.slane %v6452, 3
      %v7241 = vsel %vm3546, %v7238, %v7240
      %v7242 = vrot.slane %v6453, 3
      %v7243 = vsel %vm3546, %v7240, %v7242
      %v7244 = vrot.slane %v6454, 3
      %v7245 = vsel %vm3546, %v7242, %v7244
      %v7246 = vrot.slane %v6455, 3
      %v7247 = vsel %vm3546, %v7244, %v7246
      %v7248 = vrot.slane %v6456, 3
      %v7249 = vsel %vm3546, %v7246, %v7248
      %v7250 = vrot.slane %v6457, 3
      %v7251 = vsel %vm3546, %v7248, %v7250
      %v7252 = vrot.slane %v6458, 3
      %v7253 = vsel %vm3546, %v7250, %v7252
      %v7254 = vrot.slane %v6459, 3
      %v7255 = vsel %vm3546, %v7252, %v7254
      %v7256 = vrot.slane %v6460, 3
      %v7257 = vsel %vm3546, %v7254, %v7256
      %v7258 = vrot.slane %v6461, 3
      %v7259 = vsel %vm3546, %v7256, %v7258
      %v7260 = vrot.slane %v6462, 3
      %v7261 = vsel %vm3546, %v7258, %v7260
      %v7262 = vrot.slane %v6463, 3
      %v7263 = vsel %vm3546, %v7260, %v7262
      %v7264 = vrot.slane %v6464, 3
      %v7265 = vsel %vm3546, %v7262, %v7264
      %v7266 = vrot.slane %v6781, 3
      %v7267 = vsel %vm3546, %v7264, %v7266
      %v7270 = vunpack.c.l.b16 %v7226
      %v7271 = vunpack.c.l.b16 %v7227
      %v7272 = vpack.c.b16 %v7271, %v7270
      %v7275 = vsel %vm671, %v7233, 0
      %v7278 = vsel %vm671, %v7235, 0
      %v7281 = vsel %vm671, %v7237, 0
      %v7284 = vsel %vm671, %v7239, 0
      %v7287 = vsel %vm671, %v7241, 0
      %v7290 = vsel %vm671, %v7243, 0
      %v7293 = vsel %vm671, %v7245, 0
      %v7296 = vsel %vm671, %v7247, 0
      %v7299 = vsel %vm671, %v7249, 0
      %v7302 = vsel %vm671, %v7251, 0
      %v7305 = vsel %vm671, %v7253, 0
      %v7308 = vsel %vm671, %v7255, 0
      %v7311 = vsel %vm671, %v7257, 0
      %v7314 = vsel %vm671, %v7259, 0
      %v7317 = vsel %vm671, %v7261, 0
      %v7320 = vsel %vm671, %v7263, 0
      %v7323 = vsel %vm671, %v7265, 0
      %v7326 = vsel %vm671, %v7267, 0
      %7328 = vmatprep.subr.bf16.mxu0 0
      %7329 = vmatpush1.bf16.msra.mxu0 %v7272
      %7330 = vmatprep.subr.bf16.mxu0 0
      %7331 = vmatpush1.bf16.msra.mxu0 0
      %7332 = vmatprep.subr.bf16.mxu0 0
      %7333 = vmatpush1.bf16.msra.mxu0 0
      %7334 = vmatprep.subr.bf16.mxu0 0
      %7335 = vmatpush1.bf16.msra.mxu0 0
      %7336 = vmatprep.subr.bf16.mxu0 0
      %7337 = vmatpush1.bf16.msra.mxu0 0
      %7338 = vmatprep.subr.bf16.mxu0 0
      %7339 = vmatpush1.bf16.msra.mxu0 0
      %7340 = vmatprep.subr.bf16.mxu0 0
      %7341 = vmatpush1.bf16.msra.mxu0 0
      %7342 = vmatprep.subr.bf16.mxu0 0
      %7343 = vmatpush1.bf16.msra.mxu0 0
      %7344 = vmatprep.subr.bf16.mxu0 0
      %7345 = vmatpush1.bf16.msra.mxu0 0
      %7346 = vmatprep.subr.bf16.mxu0 0
      %7347 = vmatpush1.bf16.msra.mxu0 0
      %7348 = vmatprep.subr.bf16.mxu0 0
      %7349 = vmatpush1.bf16.msra.mxu0 0
      %7350 = vmatprep.subr.bf16.mxu0 0
      %7351 = vmatpush1.bf16.msra.mxu0 0
      %7352 = vmatprep.subr.bf16.mxu0 0
      %7353 = vmatpush1.bf16.msra.mxu0 0
      %7354 = vmatprep.subr.bf16.mxu0 0
      %7355 = vmatpush1.bf16.msra.mxu0 0
      %7356 = vmatprep.subr.bf16.mxu0 0
      %7357 = vmatpush1.bf16.msra.mxu0 0
      %7358 = vmatprep.subr.bf16.mxu0 0
      %7359 = vmatpush1.bf16.msra.mxu0 0
      %7360 = vmatprep.mubr.bf16.mxu0 0
      %7361 = vmatmul.mubr.bf16.gmra.mrb[0].mxu0 %v7275
      %v7362 = vpop.f32.mrb[0].mxu0
      %v7363 = vadd.f32 0.0, %v7362
      %v7364 = vpop.f32.mrb[0].mxu0
      %v7365 = vpop.f32.mrb[0].mxu0
      %v7366 = vadd.f32 0.0, %v7365
      %v7367 = vpop.f32.mrb[0].mxu0
      %7368 = vmatprep.mubr.bf16.mxu0 0
      %7369 = vmatmul.mubr.bf16.gmra.mrb[0].mxu0 %v7278
      %v7370 = vpop.f32.mrb[0].mxu0
      %v7371 = vadd.f32 0.0, %v7370
      %v7372 = vpop.f32.mrb[0].mxu0
      %v7373 = vpop.f32.mrb[0].mxu0
      %v7374 = vadd.f32 0.0, %v7373
      %v7375 = vpop.f32.mrb[0].mxu0
      %7376 = vmatprep.mubr.bf16.mxu0 0
      %7377 = vmatmul.mubr.bf16.gmra.mrb[0].mxu0 %v7281
      %v7378 = vpop.f32.mrb[0].mxu0
      %v7379 = vadd.f32 0.0, %v7378
      %v7380 = vpop.f32.mrb[0].mxu0
      %v7381 = vpop.f32.mrb[0].mxu0
      %v7382 = vadd.f32 0.0, %v7381
      %v7383 = vpop.f32.mrb[0].mxu0
      %7384 = vmatprep.mubr.bf16.mxu0 0
      %7385 = vmatmul.mubr.bf16.gmra.mrb[0].mxu0 %v7284
      %v7386 = vpop.f32.mrb[0].mxu0
      %v7387 = vadd.f32 0.0, %v7386
      %v7388 = vpop.f32.mrb[0].mxu0
      %v7389 = vpop.f32.mrb[0].mxu0
      %v7390 = vadd.f32 0.0, %v7389
      %v7391 = vpop.f32.mrb[0].mxu0
      %7392 = vmatprep.mubr.bf16.mxu0 0
      %7393 = vmatmul.mubr.bf16.gmra.mrb[0].mxu0 %v7287
      %v7394 = vpop.f32.mrb[0].mxu0
      %v7395 = vadd.f32 0.0, %v7394
      %v7396 = vpop.f32.mrb[0].mxu0
      %v7397 = vpop.f32.mrb[0].mxu0
      %v7398 = vadd.f32 0.0, %v7397
      %v7399 = vpop.f32.mrb[0].mxu0
      %7400 = vmatprep.mubr.bf16.mxu0 0
      %7401 = vmatmul.mubr.bf16.gmra.mrb[0].mxu0 %v7290
      %v7402 = vpop.f32.mrb[0].mxu0
      %v7403 = vadd.f32 0.0, %v7402
      %v7404 = vpop.f32.mrb[0].mxu0
      %v7405 = vpop.f32.mrb[0].mxu0
      %v7406 = vadd.f32 0.0, %v7405
      %v7407 = vpop.f32.mrb[0].mxu0
      %7408 = vmatprep.mubr.bf16.mxu0 0
      %7409 = vmatmul.mubr.bf16.gmra.mrb[0].mxu0 %v7293
      %v7410 = vpop.f32.mrb[0].mxu0
      %v7411 = vadd.f32 0.0, %v7410
      %v7412 = vpop.f32.mrb[0].mxu0
      %v7413 = vpop.f32.mrb[0].mxu0
      %v7414 = vadd.f32 0.0, %v7413
      %v7415 = vpop.f32.mrb[0].mxu0
      %7416 = vmatprep.mubr.bf16.mxu0 0
      %7417 = vmatmul.mubr.bf16.gmra.mrb[0].mxu0 %v7296
      %v7418 = vpop.f32.mrb[0].mxu0
      %v7419 = vadd.f32 0.0, %v7418
      %v7420 = vpop.f32.mrb[0].mxu0
      %v7421 = vpop.f32.mrb[0].mxu0
      %v7422 = vadd.f32 0.0, %v7421
      %v7423 = vpop.f32.mrb[0].mxu0
      %7424 = vmatprep.mubr.bf16.mxu0 0
      %7425 = vmatmul.mubr.bf16.gmra.mrb[0].mxu0 %v7299
      %v7426 = vpop.f32.mrb[0].mxu0
      %v7427 = vadd.f32 0.0, %v7426
      %v7428 = vpop.f32.mrb[0].mxu0
      %v7429 = vpop.f32.mrb[0].mxu0
      %v7430 = vadd.f32 0.0, %v7429
      %v7431 = vpop.f32.mrb[0].mxu0
      %7432 = vmatprep.mubr.bf16.mxu0 0
      %7433 = vmatmul.mubr.bf16.gmra.mrb[0].mxu0 %v7302
      %v7434 = vpop.f32.mrb[0].mxu0
      %v7435 = vadd.f32 0.0, %v7434
      %v7436 = vpop.f32.mrb[0].mxu0
      %v7437 = vpop.f32.mrb[0].mxu0
      %v7438 = vadd.f32 0.0, %v7437
      %v7439 = vpop.f32.mrb[0].mxu0
      %7440 = vmatprep.mubr.bf16.mxu0 0
      %7441 = vmatmul.mubr.bf16.gmra.mrb[0].mxu0 %v7305
      %v7442 = vpop.f32.mrb[0].mxu0
      %v7443 = vadd.f32 0.0, %v7442
      %v7444 = vpop.f32.mrb[0].mxu0
      %v7445 = vpop.f32.mrb[0].mxu0
      %v7446 = vadd.f32 0.0, %v7445
      %v7447 = vpop.f32.mrb[0].mxu0
      %7448 = vmatprep.mubr.bf16.mxu0 0
      %7449 = vmatmul.mubr.bf16.gmra.mrb[0].mxu0 %v7308
      %v7450 = vpop.f32.mrb[0].mxu0
      %v7451 = vadd.f32 0.0, %v7450
      %v7452 = vpop.f32.mrb[0].mxu0
      %v7453 = vpop.f32.mrb[0].mxu0
      %v7454 = vadd.f32 0.0, %v7453
      %v7455 = vpop.f32.mrb[0].mxu0
      %7456 = vmatprep.mubr.bf16.mxu0 0
      %7457 = vmatmul.mubr.bf16.gmra.mrb[0].mxu0 %v7311
      %v7458 = vpop.f32.mrb[0].mxu0
      %v7459 = vadd.f32 0.0, %v7458
      %v7460 = vpop.f32.mrb[0].mxu0
      %v7461 = vpop.f32.mrb[0].mxu0
      %v7462 = vadd.f32 0.0, %v7461
      %v7463 = vpop.f32.mrb[0].mxu0
      %7464 = vmatprep.mubr.bf16.mxu0 0
      %7465 = vmatmul.mubr.bf16.gmra.mrb[0].mxu0 %v7314
      %v7466 = vpop.f32.mrb[0].mxu0
      %v7467 = vadd.f32 0.0, %v7466
      %v7468 = vpop.f32.mrb[0].mxu0
      %v7469 = vpop.f32.mrb[0].mxu0
      %v7470 = vadd.f32 0.0, %v7469
      %v7471 = vpop.f32.mrb[0].mxu0
      %7472 = vmatprep.mubr.bf16.mxu0 0
      %7473 = vmatmul.mubr.bf16.gmra.mrb[0].mxu0 %v7317
      %v7474 = vpop.f32.mrb[0].mxu0
      %v7475 = vadd.f32 0.0, %v7474
      %v7476 = vpop.f32.mrb[0].mxu0
      %v7477 = vpop.f32.mrb[0].mxu0
      %v7478 = vadd.f32 0.0, %v7477
      %v7479 = vpop.f32.mrb[0].mxu0
      %7480 = vmatprep.mubr.bf16.mxu0 0
      %7481 = vmatmul.mubr.bf16.gmra.mrb[0].mxu0 %v7320
      %v7482 = vpop.f32.mrb[0].mxu0
      %v7483 = vadd.f32 0.0, %v7482
      %v7484 = vpop.f32.mrb[0].mxu0
      %v7485 = vpop.f32.mrb[0].mxu0
      %v7486 = vadd.f32 0.0, %v7485
      %v7487 = vpop.f32.mrb[0].mxu0
      %7488 = vmatprep.mubr.bf16.mxu0 0
      %7489 = vmatmul.mubr.bf16.gmra.mrb[0].mxu0 %v7323
      %v7490 = vpop.f32.mrb[0].mxu0
      %v7491 = vadd.f32 0.0, %v7490
      %v7492 = vpop.f32.mrb[0].mxu0
      %v7493 = vpop.f32.mrb[0].mxu0
      %v7494 = vadd.f32 0.0, %v7493
      %v7495 = vpop.f32.mrb[0].mxu0
      %7496 = vmatprep.mubr.bf16.mxu0 0
      %7497 = vmatmul.mubr.bf16.gmra.mrb[0].mxu0 %v7326
      %v7498 = vpop.f32.mrb[0].mxu0
      %v7499 = vadd.f32 0.0, %v7498
      %v7500 = vpop.f32.mrb[0].mxu0
      %v7501 = vpop.f32.mrb[0].mxu0
      %v7502 = vadd.f32 0.0, %v7501
      %v7503 = vpop.f32.mrb[0].mxu0
      %7504 = vdwg.mxu0
      %v7505 = vadd.f32 %v7189, %v7363
      %v7506 = vadd.f32 %v7190, %v7366
      %v7507 = vadd.f32 %v7191, %v7371
      %v7508 = vadd.f32 %v7192, %v7374
      %v7509 = vadd.f32 %v7193, %v7379
      %v7510 = vadd.f32 %v7194, %v7382
      %v7511 = vadd.f32 %v7195, %v7387
      %v7512 = vadd.f32 %v7196, %v7390
      %v7513 = vadd.f32 %v7197, %v7395
      %v7514 = vadd.f32 %v7198, %v7398
      %v7515 = vadd.f32 %v7199, %v7403
      %v7516 = vadd.f32 %v7200, %v7406
      %v7517 = vadd.f32 %v7201, %v7411
      %v7518 = vadd.f32 %v7202, %v7414
      %v7519 = vadd.f32 %v7203, %v7419
      %v7520 = vadd.f32 %v7204, %v7422
      %v7521 = vadd.f32 %v7205, %v7427
      %v7522 = vadd.f32 %v7206, %v7430
      %v7523 = vadd.f32 %v7207, %v7435
      %v7524 = vadd.f32 %v7208, %v7438
      %v7525 = vadd.f32 %v7209, %v7443
      %v7526 = vadd.f32 %v7210, %v7446
      %v7527 = vadd.f32 %v7211, %v7451
      %v7528 = vadd.f32 %v7212, %v7454
      %v7529 = vadd.f32 %v7213, %v7459
      %v7530 = vadd.f32 %v7214, %v7462
      %v7531 = vadd.f32 %v7215, %v7467
      %v7532 = vadd.f32 %v7216, %v7470
      %v7533 = vadd.f32 %v7217, %v7475
      %v7534 = vadd.f32 %v7218, %v7478
      %v7535 = vadd.f32 %v7219, %v7483
      %v7536 = vadd.f32 %v7220, %v7486
      %v7537 = vadd.f32 %v7221, %v7491
      %v7538 = vadd.f32 %v7222, %v7494
      %v7539 = vadd.f32 %v7223, %v7499
      %v7540 = vadd.f32 %v7224, %v7502
      %v7541 = vld [vmem:[%s366] sm:$0xf]
      %v7542 = vld [vmem:[%s366 + $0x4] sm:$0xf]
      %v7543 = vld [vmem:[%s366 + $0x8] sm:$0xf]
      %v7544 = vld [vmem:[%s366 + $0xc] sm:$0xf]
      %v7545 = vld [vmem:[%s366 + $0x10] sm:$0xf]
      %v7546 = vld [vmem:[%s366 + $0x14] sm:$0xf]
      %v7547 = vld [vmem:[%s366 + $0x18] sm:$0xf]
      %v7548 = vld [vmem:[%s366 + $0x1c] sm:$0xf]
      %v7549 = vld [vmem:[%s366 + $0x20] sm:$0xf]
      %v7550 = vld [vmem:[%s366 + $0x24] sm:$0xf]
      %v7551 = vld [vmem:[%s366 + $0x28] sm:$0xf]
      %v7552 = vld [vmem:[%s366 + $0x2c] sm:$0xf]
      %v7553 = vld [vmem:[%s366 + $0x30] sm:$0xf]
      %v7554 = vld [vmem:[%s366 + $0x34] sm:$0xf]
      %v7555 = vld [vmem:[%s366 + $0x38] sm:$0xf]
      %v7556 = vld [vmem:[%s366 + $0x3c] sm:$0xf]
      %v7557 = vld [vmem:[%s366 + $0x40] sm:$0xf]
      %v7558 = vld [vmem:[%s366 + $0x44] sm:$0xf]
      %v7559 = vld [vmem:[%s366 + $0x48] sm:$0xf]
      %v7560 = vld [vmem:[%s366 + $0x4c] sm:$0xf]
      %v7561 = vld [vmem:[%s366 + $0x50] sm:$0xf]
      %v7562 = vld [vmem:[%s366 + $0x54] sm:$0xf]
      %v7563 = vld [vmem:[%s366 + $0x58] sm:$0xf]
      %v7564 = vld [vmem:[%s366 + $0x5c] sm:$0xf]
      %v7565 = vld [vmem:[%s366 + $0x60] sm:$0xf]
      %v7566 = vld [vmem:[%s366 + $0x64] sm:$0xf]
      %v7567 = vld [vmem:[%s366 + $0x68] sm:$0xf]
      %v7568 = vld [vmem:[%s366 + $0x6c] sm:$0xf]
      %v7569 = vld [vmem:[%s366 + $0x70] sm:$0xf]
      %v7570 = vld [vmem:[%s366 + $0x74] sm:$0xf]
      %v7571 = vld [vmem:[%s366 + $0x78] sm:$0xf]
      %v7572 = vld [vmem:[%s366 + $0x7c] sm:$0xf]
      %v7573 = vld [vmem:[%s366 + $0x80] sm:$0xf]
      %v7574 = vld [vmem:[%s366 + $0x84] sm:$0xf]
      %v7575 = vld [vmem:[%s366 + $0x88] sm:$0xf]
      %v7576 = vld [vmem:[%s366 + $0x8c] sm:$0xf]
      %v7577 = vld [vmem:[%s3 + $0x90] sm:$0xf]
      %v7578 = vld [vmem:[%s3 + $0x94] sm:$0xf]
      %v7615 = vunpack.c.l.b16 %v7541
      %v7616 = vunpack.c.l.b16 %v7542
      %v7617 = vunpack.c.l.b16 %v7543
      %v7618 = vunpack.c.l.b16 %v7544
      %v7619 = vunpack.c.l.b16 %v7545
      %v7620 = vunpack.c.l.b16 %v7546
      %v7621 = vunpack.c.l.b16 %v7547
      %v7622 = vunpack.c.l.b16 %v7548
      %v7623 = vunpack.c.l.b16 %v7549
      %v7624 = vunpack.c.l.b16 %v7550
      %v7625 = vunpack.c.l.b16 %v7551
      %v7626 = vunpack.c.l.b16 %v7552
      %v7627 = vunpack.c.l.b16 %v7553
      %v7628 = vunpack.c.l.b16 %v7554
      %v7629 = vunpack.c.l.b16 %v7555
      %v7630 = vunpack.c.l.b16 %v7556
      %v7631 = vunpack.c.l.b16 %v7557
      %v7632 = vunpack.c.l.b16 %v7558
      %v7633 = vunpack.c.l.b16 %v7559
      %v7634 = vunpack.c.l.b16 %v7560
      %v7635 = vunpack.c.l.b16 %v7561
      %v7636 = vunpack.c.l.b16 %v7562
      %v7637 = vunpack.c.l.b16 %v7563
      %v7638 = vunpack.c.l.b16 %v7564
      %v7639 = vunpack.c.l.b16 %v7565
      %v7640 = vunpack.c.l.b16 %v7566
      %v7641 = vunpack.c.l.b16 %v7567
      %v7642 = vunpack.c.l.b16 %v7568
      %v7643 = vunpack.c.l.b16 %v7569
      %v7644 = vunpack.c.l.b16 %v7570
      %v7645 = vunpack.c.l.b16 %v7571
      %v7646 = vunpack.c.l.b16 %v7572
      %v7647 = vunpack.c.l.b16 %v7573
      %v7648 = vunpack.c.l.b16 %v7574
      %v7649 = vunpack.c.l.b16 %v7575
      %v7650 = vunpack.c.l.b16 %v7576
      %v7651 = vpack.c.b16 %v7616, %v7615
      %v7652 = vpack.c.b16 %v7618, %v7617
      %v7653 = vpack.c.b16 %v7620, %v7619
      %v7654 = vpack.c.b16 %v7622, %v7621
      %v7655 = vpack.c.b16 %v7624, %v7623
      %v7656 = vpack.c.b16 %v7626, %v7625
      %v7657 = vpack.c.b16 %v7628, %v7627
      %v7658 = vpack.c.b16 %v7630, %v7629
      %v7659 = vpack.c.b16 %v7632, %v7631
      %v7660 = vpack.c.b16 %v7634, %v7633
      %v7661 = vpack.c.b16 %v7636, %v7635
      %v7662 = vpack.c.b16 %v7638, %v7637
      %v7663 = vpack.c.b16 %v7640, %v7639
      %v7664 = vpack.c.b16 %v7642, %v7641
      %v7665 = vpack.c.b16 %v7644, %v7643
      %v7666 = vpack.c.b16 %v7646, %v7645
      %v7667 = vpack.c.b16 %v7648, %v7647
      %v7668 = vpack.c.b16 %v7650, %v7649
      %v7671 = vunpack.c.l.b16 %v7577
      %v7672 = vunpack.c.l.b16 %v7578
      %v7673 = vpack.c.b16 %v7672, %v7671
      %v7676 = vsel %vm671, %v7651, 0
      %v7679 = vsel %vm671, %v7652, 0
      %v7682 = vsel %vm671, %v7653, 0
      %v7685 = vsel %vm671, %v7654, 0
      %v7688 = vsel %vm671, %v7655, 0
      %v7691 = vsel %vm671, %v7656, 0
      %v7694 = vsel %vm671, %v7657, 0
      %v7697 = vsel %vm671, %v7658, 0
      %v7700 = vsel %vm671, %v7659, 0
      %v7703 = vsel %vm671, %v7660, 0
      %v7706 = vsel %vm671, %v7661, 0
      %v7709 = vsel %vm671, %v7662, 0
      %v7712 = vsel %vm671, %v7663, 0
      %v7715 = vsel %vm671, %v7664, 0
      %v7718 = vsel %vm671, %v7665, 0
      %v7721 = vsel %vm671, %v7666, 0
      %v7724 = vsel %vm671, %v7667, 0
      %v7727 = vsel %vm671, %v7668, 0
      %7729 = vmatprep.subr.bf16.mxu0 0
      %7730 = vmatpush1.bf16.msra.mxu0 %v7673
      %7731 = vmatprep.subr.bf16.mxu0 0
      %7732 = vmatpush1.bf16.msra.mxu0 0
      %7733 = vmatprep.subr.bf16.mxu0 0
      %7734 = vmatpush1.bf16.msra.mxu0 0
      %7735 = vmatprep.subr.bf16.mxu0 0
      %7736 = vmatpush1.bf16.msra.mxu0 0
      %7737 = vmatprep.subr.bf16.mxu0 0
      %7738 = vmatpush1.bf16.msra.mxu0 0
      %7739 = vmatprep.subr.bf16.mxu0 0
      %7740 = vmatpush1.bf16.msra.mxu0 0
      %7741 = vmatprep.subr.bf16.mxu0 0
      %7742 = vmatpush1.bf16.msra.mxu0 0
      %7743 = vmatprep.subr.bf16.mxu0 0
      %7744 = vmatpush1.bf16.msra.mxu0 0
      %7745 = vmatprep.subr.bf16.mxu0 0
      %7746 = vmatpush1.bf16.msra.mxu0 0
      %7747 = vmatprep.subr.bf16.mxu0 0
      %7748 = vmatpush1.bf16.msra.mxu0 0
      %7749 = vmatprep.subr.bf16.mxu0 0
      %7750 = vmatpush1.bf16.msra.mxu0 0
      %7751 = vmatprep.subr.bf16.mxu0 0
      %7752 = vmatpush1.bf16.msra.mxu0 0
      %7753 = vmatprep.subr.bf16.mxu0 0
      %7754 = vmatpush1.bf16.msra.mxu0 0
      %7755 = vmatprep.subr.bf16.mxu0 0
      %7756 = vmatpush1.bf16.msra.mxu0 0
      %7757 = vmatprep.subr.bf16.mxu0 0
      %7758 = vmatpush1.bf16.msra.mxu0 0
      %7759 = vmatprep.subr.bf16.mxu0 0
      %7760 = vmatpush1.bf16.msra.mxu0 0
      %7761 = vmatprep.mubr.bf16.mxu0 0
      %7762 = vmatmul.mubr.bf16.gmra.mrb[0].mxu0 %v7676
      %v7763 = vpop.f32.mrb[0].mxu0
      %v7764 = vadd.f32 0.0, %v7763
      %v7765 = vpop.f32.mrb[0].mxu0
      %v7766 = vpop.f32.mrb[0].mxu0
      %v7767 = vadd.f32 0.0, %v7766
      %v7768 = vpop.f32.mrb[0].mxu0
      %7769 = vmatprep.mubr.bf16.mxu0 0
      %7770 = vmatmul.mubr.bf16.gmra.mrb[0].mxu0 %v7679
      %v7771 = vpop.f32.mrb[0].mxu0
      %v7772 = vadd.f32 0.0, %v7771
      %v7773 = vpop.f32.mrb[0].mxu0
      %v7774 = vpop.f32.mrb[0].mxu0
      %v7775 = vadd.f32 0.0, %v7774
      %v7776 = vpop.f32.mrb[0].mxu0
      %7777 = vmatprep.mubr.bf16.mxu0 0
      %7778 = vmatmul.mubr.bf16.gmra.mrb[0].mxu0 %v7682
      %v7779 = vpop.f32.mrb[0].mxu0
      %v7780 = vadd.f32 0.0, %v7779
      %v7781 = vpop.f32.mrb[0].mxu0
      %v7782 = vpop.f32.mrb[0].mxu0
      %v7783 = vadd.f32 0.0, %v7782
      %v7784 = vpop.f32.mrb[0].mxu0
      %7785 = vmatprep.mubr.bf16.mxu0 0
      %7786 = vmatmul.mubr.bf16.gmra.mrb[0].mxu0 %v7685
      %v7787 = vpop.f32.mrb[0].mxu0
      %v7788 = vadd.f32 0.0, %v7787
      %v7789 = vpop.f32.mrb[0].mxu0
      %v7790 = vpop.f32.mrb[0].mxu0
      %v7791 = vadd.f32 0.0, %v7790
      %v7792 = vpop.f32.mrb[0].mxu0
      %7793 = vmatprep.mubr.bf16.mxu0 0
      %7794 = vmatmul.mubr.bf16.gmra.mrb[0].mxu0 %v7688
      %v7795 = vpop.f32.mrb[0].mxu0
      %v7796 = vadd.f32 0.0, %v7795
      %v7797 = vpop.f32.mrb[0].mxu0
      %v7798 = vpop.f32.mrb[0].mxu0
      %v7799 = vadd.f32 0.0, %v7798
      %v7800 = vpop.f32.mrb[0].mxu0
      %7801 = vmatprep.mubr.bf16.mxu0 0
      %7802 = vmatmul.mubr.bf16.gmra.mrb[0].mxu0 %v7691
      %v7803 = vpop.f32.mrb[0].mxu0
      %v7804 = vadd.f32 0.0, %v7803
      %v7805 = vpop.f32.mrb[0].mxu0
      %v7806 = vpop.f32.mrb[0].mxu0
      %v7807 = vadd.f32 0.0, %v7806
      %v7808 = vpop.f32.mrb[0].mxu0
      %7809 = vmatprep.mubr.bf16.mxu0 0
      %7810 = vmatmul.mubr.bf16.gmra.mrb[0].mxu0 %v7694
      %v7811 = vpop.f32.mrb[0].mxu0
      %v7812 = vadd.f32 0.0, %v7811
      %v7813 = vpop.f32.mrb[0].mxu0
      %v7814 = vpop.f32.mrb[0].mxu0
      %v7815 = vadd.f32 0.0, %v7814
      %v7816 = vpop.f32.mrb[0].mxu0
      %7817 = vmatprep.mubr.bf16.mxu0 0
      %7818 = vmatmul.mubr.bf16.gmra.mrb[0].mxu0 %v7697
      %v7819 = vpop.f32.mrb[0].mxu0
      %v7820 = vadd.f32 0.0, %v7819
      %v7821 = vpop.f32.mrb[0].mxu0
      %v7822 = vpop.f32.mrb[0].mxu0
      %v7823 = vadd.f32 0.0, %v7822
      %v7824 = vpop.f32.mrb[0].mxu0
      %7825 = vmatprep.mubr.bf16.mxu0 0
      %7826 = vmatmul.mubr.bf16.gmra.mrb[0].mxu0 %v7700
      %v7827 = vpop.f32.mrb[0].mxu0
      %v7828 = vadd.f32 0.0, %v7827
      %v7829 = vpop.f32.mrb[0].mxu0
      %v7830 = vpop.f32.mrb[0].mxu0
      %v7831 = vadd.f32 0.0, %v7830
      %v7832 = vpop.f32.mrb[0].mxu0
      %7833 = vmatprep.mubr.bf16.mxu0 0
      %7834 = vmatmul.mubr.bf16.gmra.mrb[0].mxu0 %v7703
      %v7835 = vpop.f32.mrb[0].mxu0
      %v7836 = vadd.f32 0.0, %v7835
      %v7837 = vpop.f32.mrb[0].mxu0
      %v7838 = vpop.f32.mrb[0].mxu0
      %v7839 = vadd.f32 0.0, %v7838
      %v7840 = vpop.f32.mrb[0].mxu0
      %7841 = vmatprep.mubr.bf16.mxu0 0
      %7842 = vmatmul.mubr.bf16.gmra.mrb[0].mxu0 %v7706
      %v7843 = vpop.f32.mrb[0].mxu0
      %v7844 = vadd.f32 0.0, %v7843
      %v7845 = vpop.f32.mrb[0].mxu0
      %v7846 = vpop.f32.mrb[0].mxu0
      %v7847 = vadd.f32 0.0, %v7846
      %v7848 = vpop.f32.mrb[0].mxu0
      %7849 = vmatprep.mubr.bf16.mxu0 0
      %7850 = vmatmul.mubr.bf16.gmra.mrb[0].mxu0 %v7709
      %v7851 = vpop.f32.mrb[0].mxu0
      %v7852 = vadd.f32 0.0, %v7851
      %v7853 = vpop.f32.mrb[0].mxu0
      %v7854 = vpop.f32.mrb[0].mxu0
      %v7855 = vadd.f32 0.0, %v7854
      %v7856 = vpop.f32.mrb[0].mxu0
      %7857 = vmatprep.mubr.bf16.mxu0 0
      %7858 = vmatmul.mubr.bf16.gmra.mrb[0].mxu0 %v7712
      %v7859 = vpop.f32.mrb[0].mxu0
      %v7860 = vadd.f32 0.0, %v7859
      %v7861 = vpop.f32.mrb[0].mxu0
      %v7862 = vpop.f32.mrb[0].mxu0
      %v7863 = vadd.f32 0.0, %v7862
      %v7864 = vpop.f32.mrb[0].mxu0
      %7865 = vmatprep.mubr.bf16.mxu0 0
      %7866 = vmatmul.mubr.bf16.gmra.mrb[0].mxu0 %v7715
      %v7867 = vpop.f32.mrb[0].mxu0
      %v7868 = vadd.f32 0.0, %v7867
      %v7869 = vpop.f32.mrb[0].mxu0
      %v7870 = vpop.f32.mrb[0].mxu0
      %v7871 = vadd.f32 0.0, %v7870
      %v7872 = vpop.f32.mrb[0].mxu0
      %7873 = vmatprep.mubr.bf16.mxu0 0
      %7874 = vmatmul.mubr.bf16.gmra.mrb[0].mxu0 %v7718
      %v7875 = vpop.f32.mrb[0].mxu0
      %v7876 = vadd.f32 0.0, %v7875
      %v7877 = vpop.f32.mrb[0].mxu0
      %v7878 = vpop.f32.mrb[0].mxu0
      %v7879 = vadd.f32 0.0, %v7878
      %v7880 = vpop.f32.mrb[0].mxu0
      %7881 = vmatprep.mubr.bf16.mxu0 0
      %7882 = vmatmul.mubr.bf16.gmra.mrb[0].mxu0 %v7721
      %v7883 = vpop.f32.mrb[0].mxu0
      %v7884 = vadd.f32 0.0, %v7883
      %v7885 = vpop.f32.mrb[0].mxu0
      %v7886 = vpop.f32.mrb[0].mxu0
      %v7887 = vadd.f32 0.0, %v7886
      %v7888 = vpop.f32.mrb[0].mxu0
      %7889 = vmatprep.mubr.bf16.mxu0 0
      %7890 = vmatmul.mubr.bf16.gmra.mrb[0].mxu0 %v7724
      %v7891 = vpop.f32.mrb[0].mxu0
      %v7892 = vadd.f32 0.0, %v7891
      %v7893 = vpop.f32.mrb[0].mxu0
      %v7894 = vpop.f32.mrb[0].mxu0
      %v7895 = vadd.f32 0.0, %v7894
      %v7896 = vpop.f32.mrb[0].mxu0
      %7897 = vmatprep.mubr.bf16.mxu0 0
      %7898 = vmatmul.mubr.bf16.gmra.mrb[0].mxu0 %v7727
      %v7899 = vpop.f32.mrb[0].mxu0
      %v7900 = vadd.f32 0.0, %v7899
      %v7901 = vpop.f32.mrb[0].mxu0
      %v7902 = vpop.f32.mrb[0].mxu0
      %v7903 = vadd.f32 0.0, %v7902
      %v7904 = vpop.f32.mrb[0].mxu0
      %7905 = vdwg.mxu0
      %v7906 = vadd.f32 %v7505, %v7764
      %v7907 = vadd.f32 %v7506, %v7767
      %v7908 = vadd.f32 %v7507, %v7772
      %v7909 = vadd.f32 %v7508, %v7775
      %v7910 = vadd.f32 %v7509, %v7780
      %v7911 = vadd.f32 %v7510, %v7783
      %v7912 = vadd.f32 %v7511, %v7788
      %v7913 = vadd.f32 %v7512, %v7791
      %v7914 = vadd.f32 %v7513, %v7796
      %v7915 = vadd.f32 %v7514, %v7799
      %v7916 = vadd.f32 %v7515, %v7804
      %v7917 = vadd.f32 %v7516, %v7807
      %v7918 = vadd.f32 %v7517, %v7812
      %v7919 = vadd.f32 %v7518, %v7815
      %v7920 = vadd.f32 %v7519, %v7820
      %v7921 = vadd.f32 %v7520, %v7823
      %v7922 = vadd.f32 %v7521, %v7828
      %v7923 = vadd.f32 %v7522, %v7831
      %v7924 = vadd.f32 %v7523, %v7836
      %v7925 = vadd.f32 %v7524, %v7839
      %v7926 = vadd.f32 %v7525, %v7844
      %v7927 = vadd.f32 %v7526, %v7847
      %v7928 = vadd.f32 %v7527, %v7852
      %v7929 = vadd.f32 %v7528, %v7855
      %v7930 = vadd.f32 %v7529, %v7860
      %v7931 = vadd.f32 %v7530, %v7863
      %v7932 = vadd.f32 %v7531, %v7868
      %v7933 = vadd.f32 %v7532, %v7871
      %v7934 = vadd.f32 %v7533, %v7876
      %v7935 = vadd.f32 %v7534, %v7879
      %v7936 = vadd.f32 %v7535, %v7884
      %v7937 = vadd.f32 %v7536, %v7887
      %v7938 = vadd.f32 %v7537, %v7892
      %v7939 = vadd.f32 %v7538, %v7895
      %v7940 = vadd.f32 %v7539, %v7900
      %v7941 = vadd.f32 %v7540, %v7903
      %v7942 = vld [vmem:[%s366] sm:$0xf]
      %v7943 = vld [vmem:[%s366 + $0x4] sm:$0xf]
      %v7944 = vld [vmem:[%s366 + $0x8] sm:$0xf]
      %v7945 = vld [vmem:[%s366 + $0xc] sm:$0xf]
      %v7946 = vld [vmem:[%s366 + $0x10] sm:$0xf]
      %v7947 = vld [vmem:[%s366 + $0x14] sm:$0xf]
      %v7948 = vld [vmem:[%s366 + $0x18] sm:$0xf]
      %v7949 = vld [vmem:[%s366 + $0x1c] sm:$0xf]
      %v7950 = vld [vmem:[%s366 + $0x20] sm:$0xf]
      %v7951 = vld [vmem:[%s366 + $0x24] sm:$0xf]
      %v7952 = vld [vmem:[%s366 + $0x28] sm:$0xf]
      %v7953 = vld [vmem:[%s366 + $0x2c] sm:$0xf]
      %v7954 = vld [vmem:[%s366 + $0x30] sm:$0xf]
      %v7955 = vld [vmem:[%s366 + $0x34] sm:$0xf]
      %v7956 = vld [vmem:[%s366 + $0x38] sm:$0xf]
      %v7957 = vld [vmem:[%s366 + $0x3c] sm:$0xf]
      %v7958 = vld [vmem:[%s366 + $0x40] sm:$0xf]
      %v7959 = vld [vmem:[%s366 + $0x44] sm:$0xf]
      %v7960 = vld [vmem:[%s366 + $0x48] sm:$0xf]
      %v7961 = vld [vmem:[%s366 + $0x4c] sm:$0xf]
      %v7962 = vld [vmem:[%s366 + $0x50] sm:$0xf]
      %v7963 = vld [vmem:[%s366 + $0x54] sm:$0xf]
      %v7964 = vld [vmem:[%s366 + $0x58] sm:$0xf]
      %v7965 = vld [vmem:[%s366 + $0x5c] sm:$0xf]
      %v7966 = vld [vmem:[%s366 + $0x60] sm:$0xf]
      %v7967 = vld [vmem:[%s366 + $0x64] sm:$0xf]
      %v7968 = vld [vmem:[%s366 + $0x68] sm:$0xf]
      %v7969 = vld [vmem:[%s366 + $0x6c] sm:$0xf]
      %v7970 = vld [vmem:[%s366 + $0x70] sm:$0xf]
      %v7971 = vld [vmem:[%s366 + $0x74] sm:$0xf]
      %v7972 = vld [vmem:[%s366 + $0x78] sm:$0xf]
      %v7973 = vld [vmem:[%s366 + $0x7c] sm:$0xf]
      %v7974 = vld [vmem:[%s366 + $0x80] sm:$0xf]
      %v7975 = vld [vmem:[%s366 + $0x84] sm:$0xf]
      %v7976 = vld [vmem:[%s366 + $0x88] sm:$0xf]
      %v7977 = vld [vmem:[%s366 + $0x8c] sm:$0xf]
      %v7978 = vld [vmem:[%s366 + $0x90] sm:$0x1]
      %v7979 = vld [vmem:[%s3 + $0x98] sm:$0xf]
      %v7980 = vld [vmem:[%s3 + $0x9c] sm:$0xf]
      %v8018 = vunpack.c.l.b16 %v7942
      %v8019 = vunpack.c.l.b16 %v7943
      %v8020 = vunpack.c.l.b16 %v7944
      %v8021 = vunpack.c.l.b16 %v7945
      %v8022 = vunpack.c.l.b16 %v7946
      %v8023 = vunpack.c.l.b16 %v7947
      %v8024 = vunpack.c.l.b16 %v7948
      %v8025 = vunpack.c.l.b16 %v7949
      %v8026 = vunpack.c.l.b16 %v7950
      %v8027 = vunpack.c.l.b16 %v7951
      %v8028 = vunpack.c.l.b16 %v7952
      %v8029 = vunpack.c.l.b16 %v7953
      %v8030 = vunpack.c.l.b16 %v7954
      %v8031 = vunpack.c.l.b16 %v7955
      %v8032 = vunpack.c.l.b16 %v7956
      %v8033 = vunpack.c.l.b16 %v7957
      %v8034 = vunpack.c.l.b16 %v7958
      %v8035 = vunpack.c.l.b16 %v7959
      %v8036 = vunpack.c.l.b16 %v7960
      %v8037 = vunpack.c.l.b16 %v7961
      %v8038 = vunpack.c.l.b16 %v7962
      %v8039 = vunpack.c.l.b16 %v7963
      %v8040 = vunpack.c.l.b16 %v7964
      %v8041 = vunpack.c.l.b16 %v7965
      %v8042 = vunpack.c.l.b16 %v7966
      %v8043 = vunpack.c.l.b16 %v7967
      %v8044 = vunpack.c.l.b16 %v7968
      %v8045 = vunpack.c.l.b16 %v7969
      %v8046 = vunpack.c.l.b16 %v7970
      %v8047 = vunpack.c.l.b16 %v7971
      %v8048 = vunpack.c.l.b16 %v7972
      %v8049 = vunpack.c.l.b16 %v7973
      %v8050 = vunpack.c.l.b16 %v7974
      %v8051 = vunpack.c.l.b16 %v7975
      %v8052 = vunpack.c.l.b16 %v7976
      %v8053 = vunpack.c.l.b16 %v7977
      %v8054 = vunpack.c.l.b16 %v7978
      %v8055 = vpack.c.b16 %v8019, %v8018
      %v8056 = vpack.c.b16 %v8021, %v8020
      %v8057 = vpack.c.b16 %v8023, %v8022
      %v8058 = vpack.c.b16 %v8025, %v8024
      %v8059 = vpack.c.b16 %v8027, %v8026
      %v8060 = vpack.c.b16 %v8029, %v8028
      %v8061 = vpack.c.b16 %v8031, %v8030
      %v8062 = vpack.c.b16 %v8033, %v8032
      %v8063 = vpack.c.b16 %v8035, %v8034
      %v8064 = vpack.c.b16 %v8037, %v8036
      %v8065 = vpack.c.b16 %v8039, %v8038
      %v8066 = vpack.c.b16 %v8041, %v8040
      %v8067 = vpack.c.b16 %v8043, %v8042
      %v8068 = vpack.c.b16 %v8045, %v8044
      %v8069 = vpack.c.b16 %v8047, %v8046
      %v8070 = vpack.c.b16 %v8049, %v8048
      %v8071 = vpack.c.b16 %v8051, %v8050
      %v8072 = vpack.c.b16 %v8053, %v8052
      %v8073 = vpack.c.b16 %v8054, %v8054
      %v8075 = vshrl.u32 %v8055, 16
      %v8077 = vshll.u32 %v8055, 16
      %v8079 = vrot.slane %v8077, 1
      %v8080 = vor.u32 %v8075, %v8079
      %v8082 = vshll.u32 %v8056, 16
      %v8084 = vrot.slane %v8082, 1
      %v8085 = vsel %vm516, %v8080, %v8084
      %v8086 = vshrl.u32 %v8056, 16
      %v8088 = vor.u32 %v8086, %v8084
      %v8090 = vshll.u32 %v8057, 16
      %v8092 = vrot.slane %v8090, 1
      %v8093 = vsel %vm516, %v8088, %v8092
      %v8094 = vshrl.u32 %v8057, 16
      %v8096 = vor.u32 %v8094, %v8092
      %v8098 = vshll.u32 %v8058, 16
      %v8100 = vrot.slane %v8098, 1
      %v8101 = vsel %vm516, %v8096, %v8100
      %v8102 = vshrl.u32 %v8058, 16
      %v8104 = vor.u32 %v8102, %v8100
      %v8106 = vshll.u32 %v8059, 16
      %v8108 = vrot.slane %v8106, 1
      %v8109 = vsel %vm516, %v8104, %v8108
      %v8110 = vshrl.u32 %v8059, 16
      %v8112 = vor.u32 %v8110, %v8108
      %v8114 = vshll.u32 %v8060, 16
      %v8116 = vrot.slane %v8114, 1
      %v8117 = vsel %vm516, %v8112, %v8116
      %v8118 = vshrl.u32 %v8060, 16
      %v8120 = vor.u32 %v8118, %v8116
      %v8122 = vshll.u32 %v8061, 16
      %v8124 = vrot.slane %v8122, 1
      %v8125 = vsel %vm516, %v8120, %v8124
      %v8126 = vshrl.u32 %v8061, 16
      %v8128 = vor.u32 %v8126, %v8124
      %v8130 = vshll.u32 %v8062, 16
      %v8132 = vrot.slane %v8130, 1
      %v8133 = vsel %vm516, %v8128, %v8132
      %v8134 = vshrl.u32 %v8062, 16
      %v8136 = vor.u32 %v8134, %v8132
      %v8138 = vshll.u32 %v8063, 16
      %v8140 = vrot.slane %v8138, 1
      %v8141 = vsel %vm516, %v8136, %v8140
      %v8142 = vshrl.u32 %v8063, 16
      %v8144 = vor.u32 %v8142, %v8140
      %v8146 = vshll.u32 %v8064, 16
      %v8148 = vrot.slane %v8146, 1
      %v8149 = vsel %vm516, %v8144, %v8148
      %v8150 = vshrl.u32 %v8064, 16
      %v8152 = vor.u32 %v8150, %v8148
      %v8154 = vshll.u32 %v8065, 16
      %v8156 = vrot.slane %v8154, 1
      %v8157 = vsel %vm516, %v8152, %v8156
      %v8158 = vshrl.u32 %v8065, 16
      %v8160 = vor.u32 %v8158, %v8156
      %v8162 = vshll.u32 %v8066, 16
      %v8164 = vrot.slane %v8162, 1
      %v8165 = vsel %vm516, %v8160, %v8164
      %v8166 = vshrl.u32 %v8066, 16
      %v8168 = vor.u32 %v8166, %v8164
      %v8170 = vshll.u32 %v8067, 16
      %v8172 = vrot.slane %v8170, 1
      %v8173 = vsel %vm516, %v8168, %v8172
      %v8174 = vshrl.u32 %v8067, 16
      %v8176 = vor.u32 %v8174, %v8172
      %v8178 = vshll.u32 %v8068, 16
      %v8180 = vrot.slane %v8178, 1
      %v8181 = vsel %vm516, %v8176, %v8180
      %v8182 = vshrl.u32 %v8068, 16
      %v8184 = vor.u32 %v8182, %v8180
      %v8186 = vshll.u32 %v8069, 16
      %v8188 = vrot.slane %v8186, 1
      %v8189 = vsel %vm516, %v8184, %v8188
      %v8190 = vshrl.u32 %v8069, 16
      %v8192 = vor.u32 %v8190, %v8188
      %v8194 = vshll.u32 %v8070, 16
      %v8196 = vrot.slane %v8194, 1
      %v8197 = vsel %vm516, %v8192, %v8196
      %v8198 = vshrl.u32 %v8070, 16
      %v8200 = vor.u32 %v8198, %v8196
      %v8202 = vshll.u32 %v8071, 16
      %v8204 = vrot.slane %v8202, 1
      %v8205 = vsel %vm516, %v8200, %v8204
      %v8206 = vshrl.u32 %v8071, 16
      %v8208 = vor.u32 %v8206, %v8204
      %v8210 = vshll.u32 %v8072, 16
      %v8212 = vrot.slane %v8210, 1
      %v8213 = vsel %vm516, %v8208, %v8212
      %v8214 = vshrl.u32 %v8072, 16
      %v8216 = vor.u32 %v8214, %v8212
      %v8218 = vshll.u32 %v8073, 16
      %v8220 = vrot.slane %v8218, 1
      %v8221 = vsel %vm516, %v8216, %v8220
      %v8224 = vunpack.c.l.b16 %v7979
      %v8225 = vunpack.c.l.b16 %v7980
      %v8226 = vpack.c.b16 %v8225, %v8224
      %v8229 = vsel %vm671, %v8085, 0
      %v8232 = vsel %vm671, %v8093, 0
      %v8235 = vsel %vm671, %v8101, 0
      %v8238 = vsel %vm671, %v8109, 0
      %v8241 = vsel %vm671, %v8117, 0
      %v8244 = vsel %vm671, %v8125, 0
      %v8247 = vsel %vm671, %v8133, 0
      %v8250 = vsel %vm671, %v8141, 0
      %v8253 = vsel %vm671, %v8149, 0
      %v8256 = vsel %vm671, %v8157, 0
      %v8259 = vsel %vm671, %v8165, 0
      %v8262 = vsel %vm671, %v8173, 0
      %v8265 = vsel %vm671, %v8181, 0
      %v8268 = vsel %vm671, %v8189, 0
      %v8271 = vsel %vm671, %v8197, 0
      %v8274 = vsel %vm671, %v8205, 0
      %v8277 = vsel %vm671, %v8213, 0
      %v8280 = vsel %vm671, %v8221, 0
      %8282 = vmatprep.subr.bf16.mxu0 0
      %8283 = vmatpush1.bf16.msra.mxu0 %v8226
      %8284 = vmatprep.subr.bf16.mxu0 0
      %8285 = vmatpush1.bf16.msra.mxu0 0
      %8286 = vmatprep.subr.bf16.mxu0 0
      %8287 = vmatpush1.bf16.msra.mxu0 0
      %8288 = vmatprep.subr.bf16.mxu0 0
      %8289 = vmatpush1.bf16.msra.mxu0 0
      %8290 = vmatprep.subr.bf16.mxu0 0
      %8291 = vmatpush1.bf16.msra.mxu0 0
      %8292 = vmatprep.subr.bf16.mxu0 0
      %8293 = vmatpush1.bf16.msra.mxu0 0
      %8294 = vmatprep.subr.bf16.mxu0 0
      %8295 = vmatpush1.bf16.msra.mxu0 0
      %8296 = vmatprep.subr.bf16.mxu0 0
      %8297 = vmatpush1.bf16.msra.mxu0 0
      %8298 = vmatprep.subr.bf16.mxu0 0
      %8299 = vmatpush1.bf16.msra.mxu0 0
      %8300 = vmatprep.subr.bf16.mxu0 0
      %8301 = vmatpush1.bf16.msra.mxu0 0
      %8302 = vmatprep.subr.bf16.mxu0 0
      %8303 = vmatpush1.bf16.msra.mxu0 0
      %8304 = vmatprep.subr.bf16.mxu0 0
      %8305 = vmatpush1.bf16.msra.mxu0 0
      %8306 = vmatprep.subr.bf16.mxu0 0
      %8307 = vmatpush1.bf16.msra.mxu0 0
      %8308 = vmatprep.subr.bf16.mxu0 0
      %8309 = vmatpush1.bf16.msra.mxu0 0
      %8310 = vmatprep.subr.bf16.mxu0 0
      %8311 = vmatpush1.bf16.msra.mxu0 0
      %8312 = vmatprep.subr.bf16.mxu0 0
      %8313 = vmatpush1.bf16.msra.mxu0 0
      %8314 = vmatprep.mubr.bf16.mxu0 0
      %8315 = vmatmul.mubr.bf16.gmra.mrb[0].mxu0 %v8229
      %v8316 = vpop.f32.mrb[0].mxu0
      %v8317 = vadd.f32 0.0, %v8316
      %v8318 = vpop.f32.mrb[0].mxu0
      %v8319 = vpop.f32.mrb[0].mxu0
      %v8320 = vadd.f32 0.0, %v8319
      %v8321 = vpop.f32.mrb[0].mxu0
      %8322 = vmatprep.mubr.bf16.mxu0 0
      %8323 = vmatmul.mubr.bf16.gmra.mrb[0].mxu0 %v8232
      %v8324 = vpop.f32.mrb[0].mxu0
      %v8325 = vadd.f32 0.0, %v8324
      %v8326 = vpop.f32.mrb[0].mxu0
      %v8327 = vpop.f32.mrb[0].mxu0
      %v8328 = vadd.f32 0.0, %v8327
      %v8329 = vpop.f32.mrb[0].mxu0
      %8330 = vmatprep.mubr.bf16.mxu0 0
      %8331 = vmatmul.mubr.bf16.gmra.mrb[0].mxu0 %v8235
      %v8332 = vpop.f32.mrb[0].mxu0
      %v8333 = vadd.f32 0.0, %v8332
      %v8334 = vpop.f32.mrb[0].mxu0
      %v8335 = vpop.f32.mrb[0].mxu0
      %v8336 = vadd.f32 0.0, %v8335
      %v8337 = vpop.f32.mrb[0].mxu0
      %8338 = vmatprep.mubr.bf16.mxu0 0
      %8339 = vmatmul.mubr.bf16.gmra.mrb[0].mxu0 %v8238
      %v8340 = vpop.f32.mrb[0].mxu0
      %v8341 = vadd.f32 0.0, %v8340
      %v8342 = vpop.f32.mrb[0].mxu0
      %v8343 = vpop.f32.mrb[0].mxu0
      %v8344 = vadd.f32 0.0, %v8343
      %v8345 = vpop.f32.mrb[0].mxu0
      %8346 = vmatprep.mubr.bf16.mxu0 0
      %8347 = vmatmul.mubr.bf16.gmra.mrb[0].mxu0 %v8241
      %v8348 = vpop.f32.mrb[0].mxu0
      %v8349 = vadd.f32 0.0, %v8348
      %v8350 = vpop.f32.mrb[0].mxu0
      %v8351 = vpop.f32.mrb[0].mxu0
      %v8352 = vadd.f32 0.0, %v8351
      %v8353 = vpop.f32.mrb[0].mxu0
      %8354 = vmatprep.mubr.bf16.mxu0 0
      %8355 = vmatmul.mubr.bf16.gmra.mrb[0].mxu0 %v8244
      %v8356 = vpop.f32.mrb[0].mxu0
      %v8357 = vadd.f32 0.0, %v8356
      %v8358 = vpop.f32.mrb[0].mxu0
      %v8359 = vpop.f32.mrb[0].mxu0
      %v8360 = vadd.f32 0.0, %v8359
      %v8361 = vpop.f32.mrb[0].mxu0
      %8362 = vmatprep.mubr.bf16.mxu0 0
      %8363 = vmatmul.mubr.bf16.gmra.mrb[0].mxu0 %v8247
      %v8364 = vpop.f32.mrb[0].mxu0
      %v8365 = vadd.f32 0.0, %v8364
      %v8366 = vpop.f32.mrb[0].mxu0
      %v8367 = vpop.f32.mrb[0].mxu0
      %v8368 = vadd.f32 0.0, %v8367
      %v8369 = vpop.f32.mrb[0].mxu0
      %8370 = vmatprep.mubr.bf16.mxu0 0
      %8371 = vmatmul.mubr.bf16.gmra.mrb[0].mxu0 %v8250
      %v8372 = vpop.f32.mrb[0].mxu0
      %v8373 = vadd.f32 0.0, %v8372
      %v8374 = vpop.f32.mrb[0].mxu0
      %v8375 = vpop.f32.mrb[0].mxu0
      %v8376 = vadd.f32 0.0, %v8375
      %v8377 = vpop.f32.mrb[0].mxu0
      %8378 = vmatprep.mubr.bf16.mxu0 0
      %8379 = vmatmul.mubr.bf16.gmra.mrb[0].mxu0 %v8253
      %v8380 = vpop.f32.mrb[0].mxu0
      %v8381 = vadd.f32 0.0, %v8380
      %v8382 = vpop.f32.mrb[0].mxu0
      %v8383 = vpop.f32.mrb[0].mxu0
      %v8384 = vadd.f32 0.0, %v8383
      %v8385 = vpop.f32.mrb[0].mxu0
      %8386 = vmatprep.mubr.bf16.mxu0 0
      %8387 = vmatmul.mubr.bf16.gmra.mrb[0].mxu0 %v8256
      %v8388 = vpop.f32.mrb[0].mxu0
      %v8389 = vadd.f32 0.0, %v8388
      %v8390 = vpop.f32.mrb[0].mxu0
      %v8391 = vpop.f32.mrb[0].mxu0
      %v8392 = vadd.f32 0.0, %v8391
      %v8393 = vpop.f32.mrb[0].mxu0
      %8394 = vmatprep.mubr.bf16.mxu0 0
      %8395 = vmatmul.mubr.bf16.gmra.mrb[0].mxu0 %v8259
      %v8396 = vpop.f32.mrb[0].mxu0
      %v8397 = vadd.f32 0.0, %v8396
      %v8398 = vpop.f32.mrb[0].mxu0
      %v8399 = vpop.f32.mrb[0].mxu0
      %v8400 = vadd.f32 0.0, %v8399
      %v8401 = vpop.f32.mrb[0].mxu0
      %8402 = vmatprep.mubr.bf16.mxu0 0
      %8403 = vmatmul.mubr.bf16.gmra.mrb[0].mxu0 %v8262
      %v8404 = vpop.f32.mrb[0].mxu0
      %v8405 = vadd.f32 0.0, %v8404
      %v8406 = vpop.f32.mrb[0].mxu0
      %v8407 = vpop.f32.mrb[0].mxu0
      %v8408 = vadd.f32 0.0, %v8407
      %v8409 = vpop.f32.mrb[0].mxu0
      %8410 = vmatprep.mubr.bf16.mxu0 0
      %8411 = vmatmul.mubr.bf16.gmra.mrb[0].mxu0 %v8265
      %v8412 = vpop.f32.mrb[0].mxu0
      %v8413 = vadd.f32 0.0, %v8412
      %v8414 = vpop.f32.mrb[0].mxu0
      %v8415 = vpop.f32.mrb[0].mxu0
      %v8416 = vadd.f32 0.0, %v8415
      %v8417 = vpop.f32.mrb[0].mxu0
      %8418 = vmatprep.mubr.bf16.mxu0 0
      %8419 = vmatmul.mubr.bf16.gmra.mrb[0].mxu0 %v8268
      %v8420 = vpop.f32.mrb[0].mxu0
      %v8421 = vadd.f32 0.0, %v8420
      %v8422 = vpop.f32.mrb[0].mxu0
      %v8423 = vpop.f32.mrb[0].mxu0
      %v8424 = vadd.f32 0.0, %v8423
      %v8425 = vpop.f32.mrb[0].mxu0
      %8426 = vmatprep.mubr.bf16.mxu0 0
      %8427 = vmatmul.mubr.bf16.gmra.mrb[0].mxu0 %v8271
      %v8428 = vpop.f32.mrb[0].mxu0
      %v8429 = vadd.f32 0.0, %v8428
      %v8430 = vpop.f32.mrb[0].mxu0
      %v8431 = vpop.f32.mrb[0].mxu0
      %v8432 = vadd.f32 0.0, %v8431
      %v8433 = vpop.f32.mrb[0].mxu0
      %8434 = vmatprep.mubr.bf16.mxu0 0
      %8435 = vmatmul.mubr.bf16.gmra.mrb[0].mxu0 %v8274
      %v8436 = vpop.f32.mrb[0].mxu0
      %v8437 = vadd.f32 0.0, %v8436
      %v8438 = vpop.f32.mrb[0].mxu0
      %v8439 = vpop.f32.mrb[0].mxu0
      %v8440 = vadd.f32 0.0, %v8439
      %v8441 = vpop.f32.mrb[0].mxu0
      %8442 = vmatprep.mubr.bf16.mxu0 0
      %8443 = vmatmul.mubr.bf16.gmra.mrb[0].mxu0 %v8277
      %v8444 = vpop.f32.mrb[0].mxu0
      %v8445 = vadd.f32 0.0, %v8444
      %v8446 = vpop.f32.mrb[0].mxu0
      %v8447 = vpop.f32.mrb[0].mxu0
      %v8448 = vadd.f32 0.0, %v8447
      %v8449 = vpop.f32.mrb[0].mxu0
      %8450 = vmatprep.mubr.bf16.mxu0 0
      %8451 = vmatmul.mubr.bf16.gmra.mrb[0].mxu0 %v8280
      %v8452 = vpop.f32.mrb[0].mxu0
      %v8453 = vadd.f32 0.0, %v8452
      %v8454 = vpop.f32.mrb[0].mxu0
      %v8455 = vpop.f32.mrb[0].mxu0
      %v8456 = vadd.f32 0.0, %v8455
      %v8457 = vpop.f32.mrb[0].mxu0
      %8458 = vdwg.mxu0
      %v8459 = vadd.f32 %v7906, %v8317
      %v8460 = vadd.f32 %v7907, %v8320
      %v8461 = vadd.f32 %v7908, %v8325
      %v8462 = vadd.f32 %v7909, %v8328
      %v8463 = vadd.f32 %v7910, %v8333
      %v8464 = vadd.f32 %v7911, %v8336
      %v8465 = vadd.f32 %v7912, %v8341
      %v8466 = vadd.f32 %v7913, %v8344
      %v8467 = vadd.f32 %v7914, %v8349
      %v8468 = vadd.f32 %v7915, %v8352
      %v8469 = vadd.f32 %v7916, %v8357
      %v8470 = vadd.f32 %v7917, %v8360
      %v8471 = vadd.f32 %v7918, %v8365
      %v8472 = vadd.f32 %v7919, %v8368
      %v8473 = vadd.f32 %v7920, %v8373
      %v8474 = vadd.f32 %v7921, %v8376
      %v8475 = vadd.f32 %v7922, %v8381
      %v8476 = vadd.f32 %v7923, %v8384
      %v8477 = vadd.f32 %v7924, %v8389
      %v8478 = vadd.f32 %v7925, %v8392
      %v8479 = vadd.f32 %v7926, %v8397
      %v8480 = vadd.f32 %v7927, %v8400
      %v8481 = vadd.f32 %v7928, %v8405
      %v8482 = vadd.f32 %v7929, %v8408
      %v8483 = vadd.f32 %v7930, %v8413
      %v8484 = vadd.f32 %v7931, %v8416
      %v8485 = vadd.f32 %v7932, %v8421
      %v8486 = vadd.f32 %v7933, %v8424
      %v8487 = vadd.f32 %v7934, %v8429
      %v8488 = vadd.f32 %v7935, %v8432
      %v8489 = vadd.f32 %v7936, %v8437
      %v8490 = vadd.f32 %v7937, %v8440
      %v8491 = vadd.f32 %v7938, %v8445
      %v8492 = vadd.f32 %v7939, %v8448
      %v8493 = vadd.f32 %v7940, %v8453
      %v8494 = vadd.f32 %v7941, %v8456
      %v8495 = vld [vmem:[%s366] sm:$0xe]
      %v8496 = vld [vmem:[%s3 + $0xa0] sm:$0xf]
      %v8497 = vld [vmem:[%s3 + $0xa4] sm:$0xf]
      %v8499 = vunpack.c.l.b16 %v8495
      %v8500 = vpack.c.b16 %v8019, %v8499
      %v8501 = vrot.slane %v8500, 1
      %v8502 = vrot.slane %v8056, 1
      %v8503 = vsel %vm1128, %v8501, %v8502
      %v8504 = vrot.slane %v8057, 1
      %v8505 = vsel %vm1128, %v8502, %v8504
      %v8506 = vrot.slane %v8058, 1
      %v8507 = vsel %vm1128, %v8504, %v8506
      %v8508 = vrot.slane %v8059, 1
      %v8509 = vsel %vm1128, %v8506, %v8508
      %v8510 = vrot.slane %v8060, 1
      %v8511 = vsel %vm1128, %v8508, %v8510
      %v8512 = vrot.slane %v8061, 1
      %v8513 = vsel %vm1128, %v8510, %v8512
      %v8514 = vrot.slane %v8062, 1
      %v8515 = vsel %vm1128, %v8512, %v8514
      %v8516 = vrot.slane %v8063, 1
      %v8517 = vsel %vm1128, %v8514, %v8516
      %v8518 = vrot.slane %v8064, 1
      %v8519 = vsel %vm1128, %v8516, %v8518
      %v8520 = vrot.slane %v8065, 1
      %v8521 = vsel %vm1128, %v8518, %v8520
      %v8522 = vrot.slane %v8066, 1
      %v8523 = vsel %vm1128, %v8520, %v8522
      %v8524 = vrot.slane %v8067, 1
      %v8525 = vsel %vm1128, %v8522, %v8524
      %v8526 = vrot.slane %v8068, 1
      %v8527 = vsel %vm1128, %v8524, %v8526
      %v8528 = vrot.slane %v8069, 1
      %v8529 = vsel %vm1128, %v8526, %v8528
      %v8530 = vrot.slane %v8070, 1
      %v8531 = vsel %vm1128, %v8528, %v8530
      %v8532 = vrot.slane %v8071, 1
      %v8533 = vsel %vm1128, %v8530, %v8532
      %v8534 = vrot.slane %v8072, 1
      %v8535 = vsel %vm1128, %v8532, %v8534
      %v8536 = vrot.slane %v8073, 1
      %v8537 = vsel %vm1128, %v8534, %v8536
      %v8540 = vunpack.c.l.b16 %v8496
      %v8541 = vunpack.c.l.b16 %v8497
      %v8542 = vpack.c.b16 %v8541, %v8540
      %v8545 = vsel %vm671, %v8503, 0
      %v8548 = vsel %vm671, %v8505, 0
      %v8551 = vsel %vm671, %v8507, 0
      %v8554 = vsel %vm671, %v8509, 0
      %v8557 = vsel %vm671, %v8511, 0
      %v8560 = vsel %vm671, %v8513, 0
      %v8563 = vsel %vm671, %v8515, 0
      %v8566 = vsel %vm671, %v8517, 0
      %v8569 = vsel %vm671, %v8519, 0
      %v8572 = vsel %vm671, %v8521, 0
      %v8575 = vsel %vm671, %v8523, 0
      %v8578 = vsel %vm671, %v8525, 0
      %v8581 = vsel %vm671, %v8527, 0
      %v8584 = vsel %vm671, %v8529, 0
      %v8587 = vsel %vm671, %v8531, 0
      %v8590 = vsel %vm671, %v8533, 0
      %v8593 = vsel %vm671, %v8535, 0
      %v8596 = vsel %vm671, %v8537, 0
      %8598 = vmatprep.subr.bf16.mxu0 0
      %8599 = vmatpush1.bf16.msra.mxu0 %v8542
      %8600 = vmatprep.subr.bf16.mxu0 0
      %8601 = vmatpush1.bf16.msra.mxu0 0
      %8602 = vmatprep.subr.bf16.mxu0 0
      %8603 = vmatpush1.bf16.msra.mxu0 0
      %8604 = vmatprep.subr.bf16.mxu0 0
      %8605 = vmatpush1.bf16.msra.mxu0 0
      %8606 = vmatprep.subr.bf16.mxu0 0
      %8607 = vmatpush1.bf16.msra.mxu0 0
      %8608 = vmatprep.subr.bf16.mxu0 0
      %8609 = vmatpush1.bf16.msra.mxu0 0
      %8610 = vmatprep.subr.bf16.mxu0 0
      %8611 = vmatpush1.bf16.msra.mxu0 0
      %8612 = vmatprep.subr.bf16.mxu0 0
      %8613 = vmatpush1.bf16.msra.mxu0 0
      %8614 = vmatprep.subr.bf16.mxu0 0
      %8615 = vmatpush1.bf16.msra.mxu0 0
      %8616 = vmatprep.subr.bf16.mxu0 0
      %8617 = vmatpush1.bf16.msra.mxu0 0
      %8618 = vmatprep.subr.bf16.mxu0 0
      %8619 = vmatpush1.bf16.msra.mxu0 0
      %8620 = vmatprep.subr.bf16.mxu0 0
      %8621 = vmatpush1.bf16.msra.mxu0 0
      %8622 = vmatprep.subr.bf16.mxu0 0
      %8623 = vmatpush1.bf16.msra.mxu0 0
      %8624 = vmatprep.subr.bf16.mxu0 0
      %8625 = vmatpush1.bf16.msra.mxu0 0
      %8626 = vmatprep.subr.bf16.mxu0 0
      %8627 = vmatpush1.bf16.msra.mxu0 0
      %8628 = vmatprep.subr.bf16.mxu0 0
      %8629 = vmatpush1.bf16.msra.mxu0 0
      %8630 = vmatprep.mubr.bf16.mxu0 0
      %8631 = vmatmul.mubr.bf16.gmra.mrb[0].mxu0 %v8545
      %v8632 = vpop.f32.mrb[0].mxu0
      %v8633 = vadd.f32 0.0, %v8632
      %v8634 = vpop.f32.mrb[0].mxu0
      %v8635 = vpop.f32.mrb[0].mxu0
      %v8636 = vadd.f32 0.0, %v8635
      %v8637 = vpop.f32.mrb[0].mxu0
      %8638 = vmatprep.mubr.bf16.mxu0 0
      %8639 = vmatmul.mubr.bf16.gmra.mrb[0].mxu0 %v8548
      %v8640 = vpop.f32.mrb[0].mxu0
      %v8641 = vadd.f32 0.0, %v8640
      %v8642 = vpop.f32.mrb[0].mxu0
      %v8643 = vpop.f32.mrb[0].mxu0
      %v8644 = vadd.f32 0.0, %v8643
      %v8645 = vpop.f32.mrb[0].mxu0
      %8646 = vmatprep.mubr.bf16.mxu0 0
      %8647 = vmatmul.mubr.bf16.gmra.mrb[0].mxu0 %v8551
      %v8648 = vpop.f32.mrb[0].mxu0
      %v8649 = vadd.f32 0.0, %v8648
      %v8650 = vpop.f32.mrb[0].mxu0
      %v8651 = vpop.f32.mrb[0].mxu0
      %v8652 = vadd.f32 0.0, %v8651
      %v8653 = vpop.f32.mrb[0].mxu0
      %8654 = vmatprep.mubr.bf16.mxu0 0
      %8655 = vmatmul.mubr.bf16.gmra.mrb[0].mxu0 %v8554
      %v8656 = vpop.f32.mrb[0].mxu0
      %v8657 = vadd.f32 0.0, %v8656
      %v8658 = vpop.f32.mrb[0].mxu0
      %v8659 = vpop.f32.mrb[0].mxu0
      %v8660 = vadd.f32 0.0, %v8659
      %v8661 = vpop.f32.mrb[0].mxu0
      %8662 = vmatprep.mubr.bf16.mxu0 0
      %8663 = vmatmul.mubr.bf16.gmra.mrb[0].mxu0 %v8557
      %v8664 = vpop.f32.mrb[0].mxu0
      %v8665 = vadd.f32 0.0, %v8664
      %v8666 = vpop.f32.mrb[0].mxu0
      %v8667 = vpop.f32.mrb[0].mxu0
      %v8668 = vadd.f32 0.0, %v8667
      %v8669 = vpop.f32.mrb[0].mxu0
      %8670 = vmatprep.mubr.bf16.mxu0 0
      %8671 = vmatmul.mubr.bf16.gmra.mrb[0].mxu0 %v8560
      %v8672 = vpop.f32.mrb[0].mxu0
      %v8673 = vadd.f32 0.0, %v8672
      %v8674 = vpop.f32.mrb[0].mxu0
      %v8675 = vpop.f32.mrb[0].mxu0
      %v8676 = vadd.f32 0.0, %v8675
      %v8677 = vpop.f32.mrb[0].mxu0
      %8678 = vmatprep.mubr.bf16.mxu0 0
      %8679 = vmatmul.mubr.bf16.gmra.mrb[0].mxu0 %v8563
      %v8680 = vpop.f32.mrb[0].mxu0
      %v8681 = vadd.f32 0.0, %v8680
      %v8682 = vpop.f32.mrb[0].mxu0
      %v8683 = vpop.f32.mrb[0].mxu0
      %v8684 = vadd.f32 0.0, %v8683
      %v8685 = vpop.f32.mrb[0].mxu0
      %8686 = vmatprep.mubr.bf16.mxu0 0
      %8687 = vmatmul.mubr.bf16.gmra.mrb[0].mxu0 %v8566
      %v8688 = vpop.f32.mrb[0].mxu0
      %v8689 = vadd.f32 0.0, %v8688
      %v8690 = vpop.f32.mrb[0].mxu0
      %v8691 = vpop.f32.mrb[0].mxu0
      %v8692 = vadd.f32 0.0, %v8691
      %v8693 = vpop.f32.mrb[0].mxu0
      %8694 = vmatprep.mubr.bf16.mxu0 0
      %8695 = vmatmul.mubr.bf16.gmra.mrb[0].mxu0 %v8569
      %v8696 = vpop.f32.mrb[0].mxu0
      %v8697 = vadd.f32 0.0, %v8696
      %v8698 = vpop.f32.mrb[0].mxu0
      %v8699 = vpop.f32.mrb[0].mxu0
      %v8700 = vadd.f32 0.0, %v8699
      %v8701 = vpop.f32.mrb[0].mxu0
      %8702 = vmatprep.mubr.bf16.mxu0 0
      %8703 = vmatmul.mubr.bf16.gmra.mrb[0].mxu0 %v8572
      %v8704 = vpop.f32.mrb[0].mxu0
      %v8705 = vadd.f32 0.0, %v8704
      %v8706 = vpop.f32.mrb[0].mxu0
      %v8707 = vpop.f32.mrb[0].mxu0
      %v8708 = vadd.f32 0.0, %v8707
      %v8709 = vpop.f32.mrb[0].mxu0
      %8710 = vmatprep.mubr.bf16.mxu0 0
      %8711 = vmatmul.mubr.bf16.gmra.mrb[0].mxu0 %v8575
      %v8712 = vpop.f32.mrb[0].mxu0
      %v8713 = vadd.f32 0.0, %v8712
      %v8714 = vpop.f32.mrb[0].mxu0
      %v8715 = vpop.f32.mrb[0].mxu0
      %v8716 = vadd.f32 0.0, %v8715
      %v8717 = vpop.f32.mrb[0].mxu0
      %8718 = vmatprep.mubr.bf16.mxu0 0
      %8719 = vmatmul.mubr.bf16.gmra.mrb[0].mxu0 %v8578
      %v8720 = vpop.f32.mrb[0].mxu0
      %v8721 = vadd.f32 0.0, %v8720
      %v8722 = vpop.f32.mrb[0].mxu0
      %v8723 = vpop.f32.mrb[0].mxu0
      %v8724 = vadd.f32 0.0, %v8723
      %v8725 = vpop.f32.mrb[0].mxu0
      %8726 = vmatprep.mubr.bf16.mxu0 0
      %8727 = vmatmul.mubr.bf16.gmra.mrb[0].mxu0 %v8581
      %v8728 = vpop.f32.mrb[0].mxu0
      %v8729 = vadd.f32 0.0, %v8728
      %v8730 = vpop.f32.mrb[0].mxu0
      %v8731 = vpop.f32.mrb[0].mxu0
      %v8732 = vadd.f32 0.0, %v8731
      %v8733 = vpop.f32.mrb[0].mxu0
      %8734 = vmatprep.mubr.bf16.mxu0 0
      %8735 = vmatmul.mubr.bf16.gmra.mrb[0].mxu0 %v8584
      %v8736 = vpop.f32.mrb[0].mxu0
      %v8737 = vadd.f32 0.0, %v8736
      %v8738 = vpop.f32.mrb[0].mxu0
      %v8739 = vpop.f32.mrb[0].mxu0
      %v8740 = vadd.f32 0.0, %v8739
      %v8741 = vpop.f32.mrb[0].mxu0
      %8742 = vmatprep.mubr.bf16.mxu0 0
      %8743 = vmatmul.mubr.bf16.gmra.mrb[0].mxu0 %v8587
      %v8744 = vpop.f32.mrb[0].mxu0
      %v8745 = vadd.f32 0.0, %v8744
      %v8746 = vpop.f32.mrb[0].mxu0
      %v8747 = vpop.f32.mrb[0].mxu0
      %v8748 = vadd.f32 0.0, %v8747
      %v8749 = vpop.f32.mrb[0].mxu0
      %8750 = vmatprep.mubr.bf16.mxu0 0
      %8751 = vmatmul.mubr.bf16.gmra.mrb[0].mxu0 %v8590
      %v8752 = vpop.f32.mrb[0].mxu0
      %v8753 = vadd.f32 0.0, %v8752
      %v8754 = vpop.f32.mrb[0].mxu0
      %v8755 = vpop.f32.mrb[0].mxu0
      %v8756 = vadd.f32 0.0, %v8755
      %v8757 = vpop.f32.mrb[0].mxu0
      %8758 = vmatprep.mubr.bf16.mxu0 0
      %8759 = vmatmul.mubr.bf16.gmra.mrb[0].mxu0 %v8593
      %v8760 = vpop.f32.mrb[0].mxu0
      %v8761 = vadd.f32 0.0, %v8760
      %v8762 = vpop.f32.mrb[0].mxu0
      %v8763 = vpop.f32.mrb[0].mxu0
      %v8764 = vadd.f32 0.0, %v8763
      %v8765 = vpop.f32.mrb[0].mxu0
      %8766 = vmatprep.mubr.bf16.mxu0 0
      %8767 = vmatmul.mubr.bf16.gmra.mrb[0].mxu0 %v8596
      %v8768 = vpop.f32.mrb[0].mxu0
      %v8769 = vadd.f32 0.0, %v8768
      %v8770 = vpop.f32.mrb[0].mxu0
      %v8771 = vpop.f32.mrb[0].mxu0
      %v8772 = vadd.f32 0.0, %v8771
      %v8773 = vpop.f32.mrb[0].mxu0
      %8774 = vdwg.mxu0
      %v8775 = vadd.f32 %v8459, %v8633
      %v8776 = vadd.f32 %v8460, %v8636
      %v8777 = vadd.f32 %v8461, %v8641
      %v8778 = vadd.f32 %v8462, %v8644
      %v8779 = vadd.f32 %v8463, %v8649
      %v8780 = vadd.f32 %v8464, %v8652
      %v8781 = vadd.f32 %v8465, %v8657
      %v8782 = vadd.f32 %v8466, %v8660
      %v8783 = vadd.f32 %v8467, %v8665
      %v8784 = vadd.f32 %v8468, %v8668
      %v8785 = vadd.f32 %v8469, %v8673
      %v8786 = vadd.f32 %v8470, %v8676
      %v8787 = vadd.f32 %v8471, %v8681
      %v8788 = vadd.f32 %v8472, %v8684
      %v8789 = vadd.f32 %v8473, %v8689
      %v8790 = vadd.f32 %v8474, %v8692
      %v8791 = vadd.f32 %v8475, %v8697
      %v8792 = vadd.f32 %v8476, %v8700
      %v8793 = vadd.f32 %v8477, %v8705
      %v8794 = vadd.f32 %v8478, %v8708
      %v8795 = vadd.f32 %v8479, %v8713
      %v8796 = vadd.f32 %v8480, %v8716
      %v8797 = vadd.f32 %v8481, %v8721
      %v8798 = vadd.f32 %v8482, %v8724
      %v8799 = vadd.f32 %v8483, %v8729
      %v8800 = vadd.f32 %v8484, %v8732
      %v8801 = vadd.f32 %v8485, %v8737
      %v8802 = vadd.f32 %v8486, %v8740
      %v8803 = vadd.f32 %v8487, %v8745
      %v8804 = vadd.f32 %v8488, %v8748
      %v8805 = vadd.f32 %v8489, %v8753
      %v8806 = vadd.f32 %v8490, %v8756
      %v8807 = vadd.f32 %v8491, %v8761
      %v8808 = vadd.f32 %v8492, %v8764
      %v8809 = vadd.f32 %v8493, %v8769
      %v8810 = vadd.f32 %v8494, %v8772
      %v8811 = vld [vmem:[%s366 + $0x8] sm:$0xe]
      %v8812 = vld [vmem:[%s366 + $0xc] sm:$0xf]
      %v8813 = vld [vmem:[%s366 + $0x10] sm:$0xf]
      %v8814 = vld [vmem:[%s366 + $0x14] sm:$0xf]
      %v8815 = vld [vmem:[%s366 + $0x18] sm:$0xf]
      %v8816 = vld [vmem:[%s366 + $0x1c] sm:$0xf]
      %v8817 = vld [vmem:[%s366 + $0x20] sm:$0xf]
      %v8818 = vld [vmem:[%s366 + $0x24] sm:$0xf]
      %v8819 = vld [vmem:[%s366 + $0x28] sm:$0xf]
      %v8820 = vld [vmem:[%s366 + $0x2c] sm:$0xf]
      %v8821 = vld [vmem:[%s366 + $0x30] sm:$0xf]
      %v8822 = vld [vmem:[%s366 + $0x34] sm:$0xf]
      %v8823 = vld [vmem:[%s366 + $0x38] sm:$0xf]
      %v8824 = vld [vmem:[%s366 + $0x3c] sm:$0xf]
      %v8825 = vld [vmem:[%s366 + $0x40] sm:$0xf]
      %v8826 = vld [vmem:[%s366 + $0x44] sm:$0xf]
      %v8827 = vld [vmem:[%s366 + $0x48] sm:$0xf]
      %v8828 = vld [vmem:[%s366 + $0x4c] sm:$0xf]
      %v8829 = vld [vmem:[%s366 + $0x50] sm:$0xf]
      %v8830 = vld [vmem:[%s366 + $0x54] sm:$0xf]
      %v8831 = vld [vmem:[%s366 + $0x58] sm:$0xf]
      %v8832 = vld [vmem:[%s366 + $0x5c] sm:$0xf]
      %v8833 = vld [vmem:[%s366 + $0x60] sm:$0xf]
      %v8834 = vld [vmem:[%s366 + $0x64] sm:$0xf]
      %v8835 = vld [vmem:[%s366 + $0x68] sm:$0xf]
      %v8836 = vld [vmem:[%s366 + $0x6c] sm:$0xf]
      %v8837 = vld [vmem:[%s366 + $0x70] sm:$0xf]
      %v8838 = vld [vmem:[%s366 + $0x74] sm:$0xf]
      %v8839 = vld [vmem:[%s366 + $0x78] sm:$0xf]
      %v8840 = vld [vmem:[%s366 + $0x7c] sm:$0xf]
      %v8841 = vld [vmem:[%s366 + $0x80] sm:$0xf]
      %v8842 = vld [vmem:[%s366 + $0x84] sm:$0xf]
      %v8843 = vld [vmem:[%s366 + $0x88] sm:$0xf]
      %v8844 = vld [vmem:[%s366 + $0x8c] sm:$0xf]
      %v8845 = vld [vmem:[%s366 + $0x90] sm:$0xf]
      %v8846 = vld [vmem:[%s366 + $0x94] sm:$0xf]
      %v8847 = vld [vmem:[%s366 + $0x98] sm:$0x1]
      %v8848 = vld [vmem:[%s3 + $0xa8] sm:$0xf]
      %v8849 = vld [vmem:[%s3 + $0xac] sm:$0xf]
      %v8887 = vunpack.c.l.b16 %v8811
      %v8888 = vunpack.c.l.b16 %v8812
      %v8889 = vunpack.c.l.b16 %v8813
      %v8890 = vunpack.c.l.b16 %v8814
      %v8891 = vunpack.c.l.b16 %v8815
      %v8892 = vunpack.c.l.b16 %v8816
      %v8893 = vunpack.c.l.b16 %v8817
      %v8894 = vunpack.c.l.b16 %v8818
      %v8895 = vunpack.c.l.b16 %v8819
      %v8896 = vunpack.c.l.b16 %v8820
      %v8897 = vunpack.c.l.b16 %v8821
      %v8898 = vunpack.c.l.b16 %v8822
      %v8899 = vunpack.c.l.b16 %v8823
      %v8900 = vunpack.c.l.b16 %v8824
      %v8901 = vunpack.c.l.b16 %v8825
      %v8902 = vunpack.c.l.b16 %v8826
      %v8903 = vunpack.c.l.b16 %v8827
      %v8904 = vunpack.c.l.b16 %v8828
      %v8905 = vunpack.c.l.b16 %v8829
      %v8906 = vunpack.c.l.b16 %v8830
      %v8907 = vunpack.c.l.b16 %v8831
      %v8908 = vunpack.c.l.b16 %v8832
      %v8909 = vunpack.c.l.b16 %v8833
      %v8910 = vunpack.c.l.b16 %v8834
      %v8911 = vunpack.c.l.b16 %v8835
      %v8912 = vunpack.c.l.b16 %v8836
      %v8913 = vunpack.c.l.b16 %v8837
      %v8914 = vunpack.c.l.b16 %v8838
      %v8915 = vunpack.c.l.b16 %v8839
      %v8916 = vunpack.c.l.b16 %v8840
      %v8917 = vunpack.c.l.b16 %v8841
      %v8918 = vunpack.c.l.b16 %v8842
      %v8919 = vunpack.c.l.b16 %v8843
      %v8920 = vunpack.c.l.b16 %v8844
      %v8921 = vunpack.c.l.b16 %v8845
      %v8922 = vunpack.c.l.b16 %v8846
      %v8923 = vunpack.c.l.b16 %v8847
      %v8924 = vpack.c.b16 %v8888, %v8887
      %v8925 = vpack.c.b16 %v8890, %v8889
      %v8926 = vpack.c.b16 %v8892, %v8891
      %v8927 = vpack.c.b16 %v8894, %v8893
      %v8928 = vpack.c.b16 %v8896, %v8895
      %v8929 = vpack.c.b16 %v8898, %v8897
      %v8930 = vpack.c.b16 %v8900, %v8899
      %v8931 = vpack.c.b16 %v8902, %v8901
      %v8932 = vpack.c.b16 %v8904, %v8903
      %v8933 = vpack.c.b16 %v8906, %v8905
      %v8934 = vpack.c.b16 %v8908, %v8907
      %v8935 = vpack.c.b16 %v8910, %v8909
      %v8936 = vpack.c.b16 %v8912, %v8911
      %v8937 = vpack.c.b16 %v8914, %v8913
      %v8938 = vpack.c.b16 %v8916, %v8915
      %v8939 = vpack.c.b16 %v8918, %v8917
      %v8940 = vpack.c.b16 %v8920, %v8919
      %v8941 = vpack.c.b16 %v8922, %v8921
      %v8942 = vpack.c.b16 %v8923, %v8923
      %v8943 = vrot.slane %v8924, 1
      %v8944 = vrot.slane %v8925, 1
      %v8945 = vsel %vm1128, %v8943, %v8944
      %v8946 = vrot.slane %v8926, 1
      %v8947 = vsel %vm1128, %v8944, %v8946
      %v8948 = vrot.slane %v8927, 1
      %v8949 = vsel %vm1128, %v8946, %v8948
      %v8950 = vrot.slane %v8928, 1
      %v8951 = vsel %vm1128, %v8948, %v8950
      %v8952 = vrot.slane %v8929, 1
      %v8953 = vsel %vm1128, %v8950, %v8952
      %v8954 = vrot.slane %v8930, 1
      %v8955 = vsel %vm1128, %v8952, %v8954
      %v8956 = vrot.slane %v8931, 1
      %v8957 = vsel %vm1128, %v8954, %v8956
      %v8958 = vrot.slane %v8932, 1
      %v8959 = vsel %vm1128, %v8956, %v8958
      %v8960 = vrot.slane %v8933, 1
      %v8961 = vsel %vm1128, %v8958, %v8960
      %v8962 = vrot.slane %v8934, 1
      %v8963 = vsel %vm1128, %v8960, %v8962
      %v8964 = vrot.slane %v8935, 1
      %v8965 = vsel %vm1128, %v8962, %v8964
      %v8966 = vrot.slane %v8936, 1
      %v8967 = vsel %vm1128, %v8964, %v8966
      %v8968 = vrot.slane %v8937, 1
      %v8969 = vsel %vm1128, %v8966, %v8968
      %v8970 = vrot.slane %v8938, 1
      %v8971 = vsel %vm1128, %v8968, %v8970
      %v8972 = vrot.slane %v8939, 1
      %v8973 = vsel %vm1128, %v8970, %v8972
      %v8974 = vrot.slane %v8940, 1
      %v8975 = vsel %vm1128, %v8972, %v8974
      %v8976 = vrot.slane %v8941, 1
      %v8977 = vsel %vm1128, %v8974, %v8976
      %v8978 = vrot.slane %v8942, 1
      %v8979 = vsel %vm1128, %v8976, %v8978
      %v8982 = vunpack.c.l.b16 %v8848
      %v8983 = vunpack.c.l.b16 %v8849
      %v8984 = vpack.c.b16 %v8983, %v8982
      %v8987 = vsel %vm671, %v8945, 0
      %v8990 = vsel %vm671, %v8947, 0
      %v8993 = vsel %vm671, %v8949, 0
      %v8996 = vsel %vm671, %v8951, 0
      %v8999 = vsel %vm671, %v8953, 0
      %v9002 = vsel %vm671, %v8955, 0
      %v9005 = vsel %vm671, %v8957, 0
      %v9008 = vsel %vm671, %v8959, 0
      %v9011 = vsel %vm671, %v8961, 0
      %v9014 = vsel %vm671, %v8963, 0
      %v9017 = vsel %vm671, %v8965, 0
      %v9020 = vsel %vm671, %v8967, 0
      %v9023 = vsel %vm671, %v8969, 0
      %v9026 = vsel %vm671, %v8971, 0
      %v9029 = vsel %vm671, %v8973, 0
      %v9032 = vsel %vm671, %v8975, 0
      %v9035 = vsel %vm671, %v8977, 0
      %v9038 = vsel %vm671, %v8979, 0
      %9040 = vmatprep.subr.bf16.mxu0 0
      %9041 = vmatpush1.bf16.msra.mxu0 %v8984
      %9042 = vmatprep.subr.bf16.mxu0 0
      %9043 = vmatpush1.bf16.msra.mxu0 0
      %9044 = vmatprep.subr.bf16.mxu0 0
      %9045 = vmatpush1.bf16.msra.mxu0 0
      %9046 = vmatprep.subr.bf16.mxu0 0
      %9047 = vmatpush1.bf16.msra.mxu0 0
      %9048 = vmatprep.subr.bf16.mxu0 0
      %9049 = vmatpush1.bf16.msra.mxu0 0
      %9050 = vmatprep.subr.bf16.mxu0 0
      %9051 = vmatpush1.bf16.msra.mxu0 0
      %9052 = vmatprep.subr.bf16.mxu0 0
      %9053 = vmatpush1.bf16.msra.mxu0 0
      %9054 = vmatprep.subr.bf16.mxu0 0
      %9055 = vmatpush1.bf16.msra.mxu0 0
      %9056 = vmatprep.subr.bf16.mxu0 0
      %9057 = vmatpush1.bf16.msra.mxu0 0
      %9058 = vmatprep.subr.bf16.mxu0 0
      %9059 = vmatpush1.bf16.msra.mxu0 0
      %9060 = vmatprep.subr.bf16.mxu0 0
      %9061 = vmatpush1.bf16.msra.mxu0 0
      %9062 = vmatprep.subr.bf16.mxu0 0
      %9063 = vmatpush1.bf16.msra.mxu0 0
      %9064 = vmatprep.subr.bf16.mxu0 0
      %9065 = vmatpush1.bf16.msra.mxu0 0
      %9066 = vmatprep.subr.bf16.mxu0 0
      %9067 = vmatpush1.bf16.msra.mxu0 0
      %9068 = vmatprep.subr.bf16.mxu0 0
      %9069 = vmatpush1.bf16.msra.mxu0 0
      %9070 = vmatprep.subr.bf16.mxu0 0
      %9071 = vmatpush1.bf16.msra.mxu0 0
      %9072 = vmatprep.mubr.bf16.mxu0 0
      %9073 = vmatmul.mubr.bf16.gmra.mrb[0].mxu0 %v8987
      %v9074 = vpop.f32.mrb[0].mxu0
      %v9075 = vadd.f32 0.0, %v9074
      %v9076 = vpop.f32.mrb[0].mxu0
      %v9077 = vpop.f32.mrb[0].mxu0
      %v9078 = vadd.f32 0.0, %v9077
      %v9079 = vpop.f32.mrb[0].mxu0
      %9080 = vmatprep.mubr.bf16.mxu0 0
      %9081 = vmatmul.mubr.bf16.gmra.mrb[0].mxu0 %v8990
      %v9082 = vpop.f32.mrb[0].mxu0
      %v9083 = vadd.f32 0.0, %v9082
      %v9084 = vpop.f32.mrb[0].mxu0
      %v9085 = vpop.f32.mrb[0].mxu0
      %v9086 = vadd.f32 0.0, %v9085
      %v9087 = vpop.f32.mrb[0].mxu0
      %9088 = vmatprep.mubr.bf16.mxu0 0
      %9089 = vmatmul.mubr.bf16.gmra.mrb[0].mxu0 %v8993
      %v9090 = vpop.f32.mrb[0].mxu0
      %v9091 = vadd.f32 0.0, %v9090
      %v9092 = vpop.f32.mrb[0].mxu0
      %v9093 = vpop.f32.mrb[0].mxu0
      %v9094 = vadd.f32 0.0, %v9093
      %v9095 = vpop.f32.mrb[0].mxu0
      %9096 = vmatprep.mubr.bf16.mxu0 0
      %9097 = vmatmul.mubr.bf16.gmra.mrb[0].mxu0 %v8996
      %v9098 = vpop.f32.mrb[0].mxu0
      %v9099 = vadd.f32 0.0, %v9098
      %v9100 = vpop.f32.mrb[0].mxu0
      %v9101 = vpop.f32.mrb[0].mxu0
      %v9102 = vadd.f32 0.0, %v9101
      %v9103 = vpop.f32.mrb[0].mxu0
      %9104 = vmatprep.mubr.bf16.mxu0 0
      %9105 = vmatmul.mubr.bf16.gmra.mrb[0].mxu0 %v8999
      %v9106 = vpop.f32.mrb[0].mxu0
      %v9107 = vadd.f32 0.0, %v9106
      %v9108 = vpop.f32.mrb[0].mxu0
      %v9109 = vpop.f32.mrb[0].mxu0
      %v9110 = vadd.f32 0.0, %v9109
      %v9111 = vpop.f32.mrb[0].mxu0
      %9112 = vmatprep.mubr.bf16.mxu0 0
      %9113 = vmatmul.mubr.bf16.gmra.mrb[0].mxu0 %v9002
      %v9114 = vpop.f32.mrb[0].mxu0
      %v9115 = vadd.f32 0.0, %v9114
      %v9116 = vpop.f32.mrb[0].mxu0
      %v9117 = vpop.f32.mrb[0].mxu0
      %v9118 = vadd.f32 0.0, %v9117
      %v9119 = vpop.f32.mrb[0].mxu0
      %9120 = vmatprep.mubr.bf16.mxu0 0
      %9121 = vmatmul.mubr.bf16.gmra.mrb[0].mxu0 %v9005
      %v9122 = vpop.f32.mrb[0].mxu0
      %v9123 = vadd.f32 0.0, %v9122
      %v9124 = vpop.f32.mrb[0].mxu0
      %v9125 = vpop.f32.mrb[0].mxu0
      %v9126 = vadd.f32 0.0, %v9125
      %v9127 = vpop.f32.mrb[0].mxu0
      %9128 = vmatprep.mubr.bf16.mxu0 0
      %9129 = vmatmul.mubr.bf16.gmra.mrb[0].mxu0 %v9008
      %v9130 = vpop.f32.mrb[0].mxu0
      %v9131 = vadd.f32 0.0, %v9130
      %v9132 = vpop.f32.mrb[0].mxu0
      %v9133 = vpop.f32.mrb[0].mxu0
      %v9134 = vadd.f32 0.0, %v9133
      %v9135 = vpop.f32.mrb[0].mxu0
      %9136 = vmatprep.mubr.bf16.mxu0 0
      %9137 = vmatmul.mubr.bf16.gmra.mrb[0].mxu0 %v9011
      %v9138 = vpop.f32.mrb[0].mxu0
      %v9139 = vadd.f32 0.0, %v9138
      %v9140 = vpop.f32.mrb[0].mxu0
      %v9141 = vpop.f32.mrb[0].mxu0
      %v9142 = vadd.f32 0.0, %v9141
      %v9143 = vpop.f32.mrb[0].mxu0
      %9144 = vmatprep.mubr.bf16.mxu0 0
      %9145 = vmatmul.mubr.bf16.gmra.mrb[0].mxu0 %v9014
      %v9146 = vpop.f32.mrb[0].mxu0
      %v9147 = vadd.f32 0.0, %v9146
      %v9148 = vpop.f32.mrb[0].mxu0
      %v9149 = vpop.f32.mrb[0].mxu0
      %v9150 = vadd.f32 0.0, %v9149
      %v9151 = vpop.f32.mrb[0].mxu0
      %9152 = vmatprep.mubr.bf16.mxu0 0
      %9153 = vmatmul.mubr.bf16.gmra.mrb[0].mxu0 %v9017
      %v9154 = vpop.f32.mrb[0].mxu0
      %v9155 = vadd.f32 0.0, %v9154
      %v9156 = vpop.f32.mrb[0].mxu0
      %v9157 = vpop.f32.mrb[0].mxu0
      %v9158 = vadd.f32 0.0, %v9157
      %v9159 = vpop.f32.mrb[0].mxu0
      %9160 = vmatprep.mubr.bf16.mxu0 0
      %9161 = vmatmul.mubr.bf16.gmra.mrb[0].mxu0 %v9020
      %v9162 = vpop.f32.mrb[0].mxu0
      %v9163 = vadd.f32 0.0, %v9162
      %v9164 = vpop.f32.mrb[0].mxu0
      %v9165 = vpop.f32.mrb[0].mxu0
      %v9166 = vadd.f32 0.0, %v9165
      %v9167 = vpop.f32.mrb[0].mxu0
      %9168 = vmatprep.mubr.bf16.mxu0 0
      %9169 = vmatmul.mubr.bf16.gmra.mrb[0].mxu0 %v9023
      %v9170 = vpop.f32.mrb[0].mxu0
      %v9171 = vadd.f32 0.0, %v9170
      %v9172 = vpop.f32.mrb[0].mxu0
      %v9173 = vpop.f32.mrb[0].mxu0
      %v9174 = vadd.f32 0.0, %v9173
      %v9175 = vpop.f32.mrb[0].mxu0
      %9176 = vmatprep.mubr.bf16.mxu0 0
      %9177 = vmatmul.mubr.bf16.gmra.mrb[0].mxu0 %v9026
      %v9178 = vpop.f32.mrb[0].mxu0
      %v9179 = vadd.f32 0.0, %v9178
      %v9180 = vpop.f32.mrb[0].mxu0
      %v9181 = vpop.f32.mrb[0].mxu0
      %v9182 = vadd.f32 0.0, %v9181
      %v9183 = vpop.f32.mrb[0].mxu0
      %9184 = vmatprep.mubr.bf16.mxu0 0
      %9185 = vmatmul.mubr.bf16.gmra.mrb[0].mxu0 %v9029
      %v9186 = vpop.f32.mrb[0].mxu0
      %v9187 = vadd.f32 0.0, %v9186
      %v9188 = vpop.f32.mrb[0].mxu0
      %v9189 = vpop.f32.mrb[0].mxu0
      %v9190 = vadd.f32 0.0, %v9189
      %v9191 = vpop.f32.mrb[0].mxu0
      %9192 = vmatprep.mubr.bf16.mxu0 0
      %9193 = vmatmul.mubr.bf16.gmra.mrb[0].mxu0 %v9032
      %v9194 = vpop.f32.mrb[0].mxu0
      %v9195 = vadd.f32 0.0, %v9194
      %v9196 = vpop.f32.mrb[0].mxu0
      %v9197 = vpop.f32.mrb[0].mxu0
      %v9198 = vadd.f32 0.0, %v9197
      %v9199 = vpop.f32.mrb[0].mxu0
      %9200 = vmatprep.mubr.bf16.mxu0 0
      %9201 = vmatmul.mubr.bf16.gmra.mrb[0].mxu0 %v9035
      %v9202 = vpop.f32.mrb[0].mxu0
      %v9203 = vadd.f32 0.0, %v9202
      %v9204 = vpop.f32.mrb[0].mxu0
      %v9205 = vpop.f32.mrb[0].mxu0
      %v9206 = vadd.f32 0.0, %v9205
      %v9207 = vpop.f32.mrb[0].mxu0
      %9208 = vmatprep.mubr.bf16.mxu0 0
      %9209 = vmatmul.mubr.bf16.gmra.mrb[0].mxu0 %v9038
      %v9210 = vpop.f32.mrb[0].mxu0
      %v9211 = vadd.f32 0.0, %v9210
      %v9212 = vpop.f32.mrb[0].mxu0
      %v9213 = vpop.f32.mrb[0].mxu0
      %v9214 = vadd.f32 0.0, %v9213
      %v9215 = vpop.f32.mrb[0].mxu0
      %9216 = vdwg.mxu0
      %v9217 = vadd.f32 %v8775, %v9075
      %v9218 = vadd.f32 %v8776, %v9078
      %v9219 = vadd.f32 %v8777, %v9083
      %v9220 = vadd.f32 %v8778, %v9086
      %v9221 = vadd.f32 %v8779, %v9091
      %v9222 = vadd.f32 %v8780, %v9094
      %v9223 = vadd.f32 %v8781, %v9099
      %v9224 = vadd.f32 %v8782, %v9102
      %v9225 = vadd.f32 %v8783, %v9107
      %v9226 = vadd.f32 %v8784, %v9110
      %v9227 = vadd.f32 %v8785, %v9115
      %v9228 = vadd.f32 %v8786, %v9118
      %v9229 = vadd.f32 %v8787, %v9123
      %v9230 = vadd.f32 %v8788, %v9126
      %v9231 = vadd.f32 %v8789, %v9131
      %v9232 = vadd.f32 %v8790, %v9134
      %v9233 = vadd.f32 %v8791, %v9139
      %v9234 = vadd.f32 %v8792, %v9142
      %v9235 = vadd.f32 %v8793, %v9147
      %v9236 = vadd.f32 %v8794, %v9150
      %v9237 = vadd.f32 %v8795, %v9155
      %v9238 = vadd.f32 %v8796, %v9158
      %v9239 = vadd.f32 %v8797, %v9163
      %v9240 = vadd.f32 %v8798, %v9166
      %v9241 = vadd.f32 %v8799, %v9171
      %v9242 = vadd.f32 %v8800, %v9174
      %v9243 = vadd.f32 %v8801, %v9179
      %v9244 = vadd.f32 %v8802, %v9182
      %v9245 = vadd.f32 %v8803, %v9187
      %v9246 = vadd.f32 %v8804, %v9190
      %v9247 = vadd.f32 %v8805, %v9195
      %v9248 = vadd.f32 %v8806, %v9198
      %v9249 = vadd.f32 %v8807, %v9203
      %v9250 = vadd.f32 %v8808, %v9206
      %v9251 = vadd.f32 %v8809, %v9211
      %v9252 = vadd.f32 %v8810, %v9214
      %v9253 = vld [vmem:[%s366 + $0x98] sm:$0x3]
      %v9254 = vld [vmem:[%s3 + $0xb0] sm:$0xf]
      %v9255 = vld [vmem:[%s3 + $0xb4] sm:$0xf]
      %v9257 = vunpack.c.l.b16 %v9253
      %v9258 = vpack.c.b16 %v9257, %v9257
      %v9260 = vshrl.u32 %v8924, 16
      %v9262 = vrot.slane %v9260, 1
      %v9263 = vshll.u32 %v8924, 16
      %v9265 = vrot.slane %v9263, 2
      %v9266 = vor.u32 %v9262, %v9265
      %v9268 = vshrl.u32 %v8925, 16
      %v9270 = vrot.slane %v9268, 1
      %v9271 = vshll.u32 %v8925, 16
      %v9273 = vrot.slane %v9271, 2
      %v9274 = vor.u32 %v9270, %v9273
      %v9275 = vsel %vm1887, %v9266, %v9274
      %v9277 = vshrl.u32 %v8926, 16
      %v9279 = vrot.slane %v9277, 1
      %v9280 = vshll.u32 %v8926, 16
      %v9282 = vrot.slane %v9280, 2
      %v9283 = vor.u32 %v9279, %v9282
      %v9284 = vsel %vm1887, %v9274, %v9283
      %v9286 = vshrl.u32 %v8927, 16
      %v9288 = vrot.slane %v9286, 1
      %v9289 = vshll.u32 %v8927, 16
      %v9291 = vrot.slane %v9289, 2
      %v9292 = vor.u32 %v9288, %v9291
      %v9293 = vsel %vm1887, %v9283, %v9292
      %v9295 = vshrl.u32 %v8928, 16
      %v9297 = vrot.slane %v9295, 1
      %v9298 = vshll.u32 %v8928, 16
      %v9300 = vrot.slane %v9298, 2
      %v9301 = vor.u32 %v9297, %v9300
      %v9302 = vsel %vm1887, %v9292, %v9301
      %v9304 = vshrl.u32 %v8929, 16
      %v9306 = vrot.slane %v9304, 1
      %v9307 = vshll.u32 %v8929, 16
      %v9309 = vrot.slane %v9307, 2
      %v9310 = vor.u32 %v9306, %v9309
      %v9311 = vsel %vm1887, %v9301, %v9310
      %v9313 = vshrl.u32 %v8930, 16
      %v9315 = vrot.slane %v9313, 1
      %v9316 = vshll.u32 %v8930, 16
      %v9318 = vrot.slane %v9316, 2
      %v9319 = vor.u32 %v9315, %v9318
      %v9320 = vsel %vm1887, %v9310, %v9319
      %v9322 = vshrl.u32 %v8931, 16
      %v9324 = vrot.slane %v9322, 1
      %v9325 = vshll.u32 %v8931, 16
      %v9327 = vrot.slane %v9325, 2
      %v9328 = vor.u32 %v9324, %v9327
      %v9329 = vsel %vm1887, %v9319, %v9328
      %v9331 = vshrl.u32 %v8932, 16
      %v9333 = vrot.slane %v9331, 1
      %v9334 = vshll.u32 %v8932, 16
      %v9336 = vrot.slane %v9334, 2
      %v9337 = vor.u32 %v9333, %v9336
      %v9338 = vsel %vm1887, %v9328, %v9337
      %v9340 = vshrl.u32 %v8933, 16
      %v9342 = vrot.slane %v9340, 1
      %v9343 = vshll.u32 %v8933, 16
      %v9345 = vrot.slane %v9343, 2
      %v9346 = vor.u32 %v9342, %v9345
      %v9347 = vsel %vm1887, %v9337, %v9346
      %v9349 = vshrl.u32 %v8934, 16
      %v9351 = vrot.slane %v9349, 1
      %v9352 = vshll.u32 %v8934, 16
      %v9354 = vrot.slane %v9352, 2
      %v9355 = vor.u32 %v9351, %v9354
      %v9356 = vsel %vm1887, %v9346, %v9355
      %v9358 = vshrl.u32 %v8935, 16
      %v9360 = vrot.slane %v9358, 1
      %v9361 = vshll.u32 %v8935, 16
      %v9363 = vrot.slane %v9361, 2
      %v9364 = vor.u32 %v9360, %v9363
      %v9365 = vsel %vm1887, %v9355, %v9364
      %v9367 = vshrl.u32 %v8936, 16
      %v9369 = vrot.slane %v9367, 1
      %v9370 = vshll.u32 %v8936, 16
      %v9372 = vrot.slane %v9370, 2
      %v9373 = vor.u32 %v9369, %v9372
      %v9374 = vsel %vm1887, %v9364, %v9373
      %v9376 = vshrl.u32 %v8937, 16
      %v9378 = vrot.slane %v9376, 1
      %v9379 = vshll.u32 %v8937, 16
      %v9381 = vrot.slane %v9379, 2
      %v9382 = vor.u32 %v9378, %v9381
      %v9383 = vsel %vm1887, %v9373, %v9382
      %v9385 = vshrl.u32 %v8938, 16
      %v9387 = vrot.slane %v9385, 1
      %v9388 = vshll.u32 %v8938, 16
      %v9390 = vrot.slane %v9388, 2
      %v9391 = vor.u32 %v9387, %v9390
      %v9392 = vsel %vm1887, %v9382, %v9391
      %v9394 = vshrl.u32 %v8939, 16
      %v9396 = vrot.slane %v9394, 1
      %v9397 = vshll.u32 %v8939, 16
      %v9399 = vrot.slane %v9397, 2
      %v9400 = vor.u32 %v9396, %v9399
      %v9401 = vsel %vm1887, %v9391, %v9400
      %v9403 = vshrl.u32 %v8940, 16
      %v9405 = vrot.slane %v9403, 1
      %v9406 = vshll.u32 %v8940, 16
      %v9408 = vrot.slane %v9406, 2
      %v9409 = vor.u32 %v9405, %v9408
      %v9410 = vsel %vm1887, %v9400, %v9409
      %v9412 = vshrl.u32 %v8941, 16
      %v9414 = vrot.slane %v9412, 1
      %v9415 = vshll.u32 %v8941, 16
      %v9417 = vrot.slane %v9415, 2
      %v9418 = vor.u32 %v9414, %v9417
      %v9419 = vsel %vm1887, %v9409, %v9418
      %v9421 = vshrl.u32 %v9258, 16
      %v9423 = vrot.slane %v9421, 1
      %v9424 = vshll.u32 %v9258, 16
      %v9426 = vrot.slane %v9424, 2
      %v9427 = vor.u32 %v9423, %v9426
      %v9428 = vsel %vm1887, %v9418, %v9427
      %v9431 = vunpack.c.l.b16 %v9254
      %v9432 = vunpack.c.l.b16 %v9255
      %v9433 = vpack.c.b16 %v9432, %v9431
      %v9436 = vsel %vm671, %v9275, 0
      %v9439 = vsel %vm671, %v9284, 0
      %v9442 = vsel %vm671, %v9293, 0
      %v9445 = vsel %vm671, %v9302, 0
      %v9448 = vsel %vm671, %v9311, 0
      %v9451 = vsel %vm671, %v9320, 0
      %v9454 = vsel %vm671, %v9329, 0
      %v9457 = vsel %vm671, %v9338, 0
      %v9460 = vsel %vm671, %v9347, 0
      %v9463 = vsel %vm671, %v9356, 0
      %v9466 = vsel %vm671, %v9365, 0
      %v9469 = vsel %vm671, %v9374, 0
      %v9472 = vsel %vm671, %v9383, 0
      %v9475 = vsel %vm671, %v9392, 0
      %v9478 = vsel %vm671, %v9401, 0
      %v9481 = vsel %vm671, %v9410, 0
      %v9484 = vsel %vm671, %v9419, 0
      %v9487 = vsel %vm671, %v9428, 0
      %9489 = vmatprep.subr.bf16.mxu0 0
      %9490 = vmatpush1.bf16.msra.mxu0 %v9433
      %9491 = vmatprep.subr.bf16.mxu0 0
      %9492 = vmatpush1.bf16.msra.mxu0 0
      %9493 = vmatprep.subr.bf16.mxu0 0
      %9494 = vmatpush1.bf16.msra.mxu0 0
      %9495 = vmatprep.subr.bf16.mxu0 0
      %9496 = vmatpush1.bf16.msra.mxu0 0
      %9497 = vmatprep.subr.bf16.mxu0 0
      %9498 = vmatpush1.bf16.msra.mxu0 0
      %9499 = vmatprep.subr.bf16.mxu0 0
      %9500 = vmatpush1.bf16.msra.mxu0 0
      %9501 = vmatprep.subr.bf16.mxu0 0
      %9502 = vmatpush1.bf16.msra.mxu0 0
      %9503 = vmatprep.subr.bf16.mxu0 0
      %9504 = vmatpush1.bf16.msra.mxu0 0
      %9505 = vmatprep.subr.bf16.mxu0 0
      %9506 = vmatpush1.bf16.msra.mxu0 0
      %9507 = vmatprep.subr.bf16.mxu0 0
      %9508 = vmatpush1.bf16.msra.mxu0 0
      %9509 = vmatprep.subr.bf16.mxu0 0
      %9510 = vmatpush1.bf16.msra.mxu0 0
      %9511 = vmatprep.subr.bf16.mxu0 0
      %9512 = vmatpush1.bf16.msra.mxu0 0
      %9513 = vmatprep.subr.bf16.mxu0 0
      %9514 = vmatpush1.bf16.msra.mxu0 0
      %9515 = vmatprep.subr.bf16.mxu0 0
      %9516 = vmatpush1.bf16.msra.mxu0 0
      %9517 = vmatprep.subr.bf16.mxu0 0
      %9518 = vmatpush1.bf16.msra.mxu0 0
      %9519 = vmatprep.subr.bf16.mxu0 0
      %9520 = vmatpush1.bf16.msra.mxu0 0
      %9521 = vmatprep.mubr.bf16.mxu0 0
      %9522 = vmatmul.mubr.bf16.gmra.mrb[0].mxu0 %v9436
      %v9523 = vpop.f32.mrb[0].mxu0
      %v9524 = vadd.f32 0.0, %v9523
      %v9525 = vpop.f32.mrb[0].mxu0
      %v9526 = vpop.f32.mrb[0].mxu0
      %v9527 = vadd.f32 0.0, %v9526
      %v9528 = vpop.f32.mrb[0].mxu0
      %9529 = vmatprep.mubr.bf16.mxu0 0
      %9530 = vmatmul.mubr.bf16.gmra.mrb[0].mxu0 %v9439
      %v9531 = vpop.f32.mrb[0].mxu0
      %v9532 = vadd.f32 0.0, %v9531
      %v9533 = vpop.f32.mrb[0].mxu0
      %v9534 = vpop.f32.mrb[0].mxu0
      %v9535 = vadd.f32 0.0, %v9534
      %v9536 = vpop.f32.mrb[0].mxu0
      %9537 = vmatprep.mubr.bf16.mxu0 0
      %9538 = vmatmul.mubr.bf16.gmra.mrb[0].mxu0 %v9442
      %v9539 = vpop.f32.mrb[0].mxu0
      %v9540 = vadd.f32 0.0, %v9539
      %v9541 = vpop.f32.mrb[0].mxu0
      %v9542 = vpop.f32.mrb[0].mxu0
      %v9543 = vadd.f32 0.0, %v9542
      %v9544 = vpop.f32.mrb[0].mxu0
      %9545 = vmatprep.mubr.bf16.mxu0 0
      %9546 = vmatmul.mubr.bf16.gmra.mrb[0].mxu0 %v9445
      %v9547 = vpop.f32.mrb[0].mxu0
      %v9548 = vadd.f32 0.0, %v9547
      %v9549 = vpop.f32.mrb[0].mxu0
      %v9550 = vpop.f32.mrb[0].mxu0
      %v9551 = vadd.f32 0.0, %v9550
      %v9552 = vpop.f32.mrb[0].mxu0
      %9553 = vmatprep.mubr.bf16.mxu0 0
      %9554 = vmatmul.mubr.bf16.gmra.mrb[0].mxu0 %v9448
      %v9555 = vpop.f32.mrb[0].mxu0
      %v9556 = vadd.f32 0.0, %v9555
      %v9557 = vpop.f32.mrb[0].mxu0
      %v9558 = vpop.f32.mrb[0].mxu0
      %v9559 = vadd.f32 0.0, %v9558
      %v9560 = vpop.f32.mrb[0].mxu0
      %9561 = vmatprep.mubr.bf16.mxu0 0
      %9562 = vmatmul.mubr.bf16.gmra.mrb[0].mxu0 %v9451
      %v9563 = vpop.f32.mrb[0].mxu0
      %v9564 = vadd.f32 0.0, %v9563
      %v9565 = vpop.f32.mrb[0].mxu0
      %v9566 = vpop.f32.mrb[0].mxu0
      %v9567 = vadd.f32 0.0, %v9566
      %v9568 = vpop.f32.mrb[0].mxu0
      %9569 = vmatprep.mubr.bf16.mxu0 0
      %9570 = vmatmul.mubr.bf16.gmra.mrb[0].mxu0 %v9454
      %v9571 = vpop.f32.mrb[0].mxu0
      %v9572 = vadd.f32 0.0, %v9571
      %v9573 = vpop.f32.mrb[0].mxu0
      %v9574 = vpop.f32.mrb[0].mxu0
      %v9575 = vadd.f32 0.0, %v9574
      %v9576 = vpop.f32.mrb[0].mxu0
      %9577 = vmatprep.mubr.bf16.mxu0 0
      %9578 = vmatmul.mubr.bf16.gmra.mrb[0].mxu0 %v9457
      %v9579 = vpop.f32.mrb[0].mxu0
      %v9580 = vadd.f32 0.0, %v9579
      %v9581 = vpop.f32.mrb[0].mxu0
      %v9582 = vpop.f32.mrb[0].mxu0
      %v9583 = vadd.f32 0.0, %v9582
      %v9584 = vpop.f32.mrb[0].mxu0
      %9585 = vmatprep.mubr.bf16.mxu0 0
      %9586 = vmatmul.mubr.bf16.gmra.mrb[0].mxu0 %v9460
      %v9587 = vpop.f32.mrb[0].mxu0
      %v9588 = vadd.f32 0.0, %v9587
      %v9589 = vpop.f32.mrb[0].mxu0
      %v9590 = vpop.f32.mrb[0].mxu0
      %v9591 = vadd.f32 0.0, %v9590
      %v9592 = vpop.f32.mrb[0].mxu0
      %9593 = vmatprep.mubr.bf16.mxu0 0
      %9594 = vmatmul.mubr.bf16.gmra.mrb[0].mxu0 %v9463
      %v9595 = vpop.f32.mrb[0].mxu0
      %v9596 = vadd.f32 0.0, %v9595
      %v9597 = vpop.f32.mrb[0].mxu0
      %v9598 = vpop.f32.mrb[0].mxu0
      %v9599 = vadd.f32 0.0, %v9598
      %v9600 = vpop.f32.mrb[0].mxu0
      %9601 = vmatprep.mubr.bf16.mxu0 0
      %9602 = vmatmul.mubr.bf16.gmra.mrb[0].mxu0 %v9466
      %v9603 = vpop.f32.mrb[0].mxu0
      %v9604 = vadd.f32 0.0, %v9603
      %v9605 = vpop.f32.mrb[0].mxu0
      %v9606 = vpop.f32.mrb[0].mxu0
      %v9607 = vadd.f32 0.0, %v9606
      %v9608 = vpop.f32.mrb[0].mxu0
      %9609 = vmatprep.mubr.bf16.mxu0 0
      %9610 = vmatmul.mubr.bf16.gmra.mrb[0].mxu0 %v9469
      %v9611 = vpop.f32.mrb[0].mxu0
      %v9612 = vadd.f32 0.0, %v9611
      %v9613 = vpop.f32.mrb[0].mxu0
      %v9614 = vpop.f32.mrb[0].mxu0
      %v9615 = vadd.f32 0.0, %v9614
      %v9616 = vpop.f32.mrb[0].mxu0
      %9617 = vmatprep.mubr.bf16.mxu0 0
      %9618 = vmatmul.mubr.bf16.gmra.mrb[0].mxu0 %v9472
      %v9619 = vpop.f32.mrb[0].mxu0
      %v9620 = vadd.f32 0.0, %v9619
      %v9621 = vpop.f32.mrb[0].mxu0
      %v9622 = vpop.f32.mrb[0].mxu0
      %v9623 = vadd.f32 0.0, %v9622
      %v9624 = vpop.f32.mrb[0].mxu0
      %9625 = vmatprep.mubr.bf16.mxu0 0
      %9626 = vmatmul.mubr.bf16.gmra.mrb[0].mxu0 %v9475
      %v9627 = vpop.f32.mrb[0].mxu0
      %v9628 = vadd.f32 0.0, %v9627
      %v9629 = vpop.f32.mrb[0].mxu0
      %v9630 = vpop.f32.mrb[0].mxu0
      %v9631 = vadd.f32 0.0, %v9630
      %v9632 = vpop.f32.mrb[0].mxu0
      %9633 = vmatprep.mubr.bf16.mxu0 0
      %9634 = vmatmul.mubr.bf16.gmra.mrb[0].mxu0 %v9478
      %v9635 = vpop.f32.mrb[0].mxu0
      %v9636 = vadd.f32 0.0, %v9635
      %v9637 = vpop.f32.mrb[0].mxu0
      %v9638 = vpop.f32.mrb[0].mxu0
      %v9639 = vadd.f32 0.0, %v9638
      %v9640 = vpop.f32.mrb[0].mxu0
      %9641 = vmatprep.mubr.bf16.mxu0 0
      %9642 = vmatmul.mubr.bf16.gmra.mrb[0].mxu0 %v9481
      %v9643 = vpop.f32.mrb[0].mxu0
      %v9644 = vadd.f32 0.0, %v9643
      %v9645 = vpop.f32.mrb[0].mxu0
      %v9646 = vpop.f32.mrb[0].mxu0
      %v9647 = vadd.f32 0.0, %v9646
      %v9648 = vpop.f32.mrb[0].mxu0
      %9649 = vmatprep.mubr.bf16.mxu0 0
      %9650 = vmatmul.mubr.bf16.gmra.mrb[0].mxu0 %v9484
      %v9651 = vpop.f32.mrb[0].mxu0
      %v9652 = vadd.f32 0.0, %v9651
      %v9653 = vpop.f32.mrb[0].mxu0
      %v9654 = vpop.f32.mrb[0].mxu0
      %v9655 = vadd.f32 0.0, %v9654
      %v9656 = vpop.f32.mrb[0].mxu0
      %9657 = vmatprep.mubr.bf16.mxu0 0
      %9658 = vmatmul.mubr.bf16.gmra.mrb[0].mxu0 %v9487
      %v9659 = vpop.f32.mrb[0].mxu0
      %v9660 = vadd.f32 0.0, %v9659
      %v9661 = vpop.f32.mrb[0].mxu0
      %v9662 = vpop.f32.mrb[0].mxu0
      %v9663 = vadd.f32 0.0, %v9662
      %v9664 = vpop.f32.mrb[0].mxu0
      %9665 = vdwg.mxu0
      %v9666 = vadd.f32 %v9217, %v9524
      %v9667 = vadd.f32 %v9218, %v9527
      %v9668 = vadd.f32 %v9219, %v9532
      %v9669 = vadd.f32 %v9220, %v9535
      %v9670 = vadd.f32 %v9221, %v9540
      %v9671 = vadd.f32 %v9222, %v9543
      %v9672 = vadd.f32 %v9223, %v9548
      %v9673 = vadd.f32 %v9224, %v9551
      %v9674 = vadd.f32 %v9225, %v9556
      %v9675 = vadd.f32 %v9226, %v9559
      %v9676 = vadd.f32 %v9227, %v9564
      %v9677 = vadd.f32 %v9228, %v9567
      %v9678 = vadd.f32 %v9229, %v9572
      %v9679 = vadd.f32 %v9230, %v9575
      %v9680 = vadd.f32 %v9231, %v9580
      %v9681 = vadd.f32 %v9232, %v9583
      %v9682 = vadd.f32 %v9233, %v9588
      %v9683 = vadd.f32 %v9234, %v9591
      %v9684 = vadd.f32 %v9235, %v9596
      %v9685 = vadd.f32 %v9236, %v9599
      %v9686 = vadd.f32 %v9237, %v9604
      %v9687 = vadd.f32 %v9238, %v9607
      %v9688 = vadd.f32 %v9239, %v9612
      %v9689 = vadd.f32 %v9240, %v9615
      %v9690 = vadd.f32 %v9241, %v9620
      %v9691 = vadd.f32 %v9242, %v9623
      %v9692 = vadd.f32 %v9243, %v9628
      %v9693 = vadd.f32 %v9244, %v9631
      %v9694 = vadd.f32 %v9245, %v9636
      %v9695 = vadd.f32 %v9246, %v9639
      %v9696 = vadd.f32 %v9247, %v9644
      %v9697 = vadd.f32 %v9248, %v9647
      %v9698 = vadd.f32 %v9249, %v9652
      %v9699 = vadd.f32 %v9250, %v9655
      %v9700 = vadd.f32 %v9251, %v9660
      %v9701 = vadd.f32 %v9252, %v9663
      %v9702 = vld [vmem:[%s366 + $0x8] sm:$0xc]
      %v9703 = vld [vmem:[%s3 + $0xb8] sm:$0xf]
      %v9704 = vld [vmem:[%s3 + $0xbc] sm:$0xf]
      %v9706 = vunpack.c.l.b16 %v9702
      %v9707 = vpack.c.b16 %v8888, %v9706
      %v9708 = vrot.slane %v9707, 2
      %v9709 = vrot.slane %v8925, 2
      %v9710 = vsel %vm2337, %v9708, %v9709
      %v9711 = vrot.slane %v8926, 2
      %v9712 = vsel %vm2337, %v9709, %v9711
      %v9713 = vrot.slane %v8927, 2
      %v9714 = vsel %vm2337, %v9711, %v9713
      %v9715 = vrot.slane %v8928, 2
      %v9716 = vsel %vm2337, %v9713, %v9715
      %v9717 = vrot.slane %v8929, 2
      %v9718 = vsel %vm2337, %v9715, %v9717
      %v9719 = vrot.slane %v8930, 2
      %v9720 = vsel %vm2337, %v9717, %v9719
      %v9721 = vrot.slane %v8931, 2
      %v9722 = vsel %vm2337, %v9719, %v9721
      %v9723 = vrot.slane %v8932, 2
      %v9724 = vsel %vm2337, %v9721, %v9723
      %v9725 = vrot.slane %v8933, 2
      %v9726 = vsel %vm2337, %v9723, %v9725
      %v9727 = vrot.slane %v8934, 2
      %v9728 = vsel %vm2337, %v9725, %v9727
      %v9729 = vrot.slane %v8935, 2
      %v9730 = vsel %vm2337, %v9727, %v9729
      %v9731 = vrot.slane %v8936, 2
      %v9732 = vsel %vm2337, %v9729, %v9731
      %v9733 = vrot.slane %v8937, 2
      %v9734 = vsel %vm2337, %v9731, %v9733
      %v9735 = vrot.slane %v8938, 2
      %v9736 = vsel %vm2337, %v9733, %v9735
      %v9737 = vrot.slane %v8939, 2
      %v9738 = vsel %vm2337, %v9735, %v9737
      %v9739 = vrot.slane %v8940, 2
      %v9740 = vsel %vm2337, %v9737, %v9739
      %v9741 = vrot.slane %v8941, 2
      %v9742 = vsel %vm2337, %v9739, %v9741
      %v9743 = vrot.slane %v9258, 2
      %v9744 = vsel %vm2337, %v9741, %v9743
      %v9747 = vunpack.c.l.b16 %v9703
      %v9748 = vunpack.c.l.b16 %v9704
      %v9749 = vpack.c.b16 %v9748, %v9747
      %v9752 = vsel %vm671, %v9710, 0
      %v9755 = vsel %vm671, %v9712, 0
      %v9758 = vsel %vm671, %v9714, 0
      %v9761 = vsel %vm671, %v9716, 0
      %v9764 = vsel %vm671, %v9718, 0
      %v9767 = vsel %vm671, %v9720, 0
      %v9770 = vsel %vm671, %v9722, 0
      %v9773 = vsel %vm671, %v9724, 0
      %v9776 = vsel %vm671, %v9726, 0
      %v9779 = vsel %vm671, %v9728, 0
      %v9782 = vsel %vm671, %v9730, 0
      %v9785 = vsel %vm671, %v9732, 0
      %v9788 = vsel %vm671, %v9734, 0
      %v9791 = vsel %vm671, %v9736, 0
      %v9794 = vsel %vm671, %v9738, 0
      %v9797 = vsel %vm671, %v9740, 0
      %v9800 = vsel %vm671, %v9742, 0
      %v9803 = vsel %vm671, %v9744, 0
      %9805 = vmatprep.subr.bf16.mxu0 0
      %9806 = vmatpush1.bf16.msra.mxu0 %v9749
      %9807 = vmatprep.subr.bf16.mxu0 0
      %9808 = vmatpush1.bf16.msra.mxu0 0
      %9809 = vmatprep.subr.bf16.mxu0 0
      %9810 = vmatpush1.bf16.msra.mxu0 0
      %9811 = vmatprep.subr.bf16.mxu0 0
      %9812 = vmatpush1.bf16.msra.mxu0 0
      %9813 = vmatprep.subr.bf16.mxu0 0
      %9814 = vmatpush1.bf16.msra.mxu0 0
      %9815 = vmatprep.subr.bf16.mxu0 0
      %9816 = vmatpush1.bf16.msra.mxu0 0
      %9817 = vmatprep.subr.bf16.mxu0 0
      %9818 = vmatpush1.bf16.msra.mxu0 0
      %9819 = vmatprep.subr.bf16.mxu0 0
      %9820 = vmatpush1.bf16.msra.mxu0 0
      %9821 = vmatprep.subr.bf16.mxu0 0
      %9822 = vmatpush1.bf16.msra.mxu0 0
      %9823 = vmatprep.subr.bf16.mxu0 0
      %9824 = vmatpush1.bf16.msra.mxu0 0
      %9825 = vmatprep.subr.bf16.mxu0 0
      %9826 = vmatpush1.bf16.msra.mxu0 0
      %9827 = vmatprep.subr.bf16.mxu0 0
      %9828 = vmatpush1.bf16.msra.mxu0 0
      %9829 = vmatprep.subr.bf16.mxu0 0
      %9830 = vmatpush1.bf16.msra.mxu0 0
      %9831 = vmatprep.subr.bf16.mxu0 0
      %9832 = vmatpush1.bf16.msra.mxu0 0
      %9833 = vmatprep.subr.bf16.mxu0 0
      %9834 = vmatpush1.bf16.msra.mxu0 0
      %9835 = vmatprep.subr.bf16.mxu0 0
      %9836 = vmatpush1.bf16.msra.mxu0 0
      %9837 = vmatprep.mubr.bf16.mxu0 0
      %9838 = vmatmul.mubr.bf16.gmra.mrb[0].mxu0 %v9752
      %v9839 = vpop.f32.mrb[0].mxu0
      %v9840 = vadd.f32 0.0, %v9839
      %v9841 = vpop.f32.mrb[0].mxu0
      %v9842 = vpop.f32.mrb[0].mxu0
      %v9843 = vadd.f32 0.0, %v9842
      %v9844 = vpop.f32.mrb[0].mxu0
      %9845 = vmatprep.mubr.bf16.mxu0 0
      %9846 = vmatmul.mubr.bf16.gmra.mrb[0].mxu0 %v9755
      %v9847 = vpop.f32.mrb[0].mxu0
      %v9848 = vadd.f32 0.0, %v9847
      %v9849 = vpop.f32.mrb[0].mxu0
      %v9850 = vpop.f32.mrb[0].mxu0
      %v9851 = vadd.f32 0.0, %v9850
      %v9852 = vpop.f32.mrb[0].mxu0
      %9853 = vmatprep.mubr.bf16.mxu0 0
      %9854 = vmatmul.mubr.bf16.gmra.mrb[0].mxu0 %v9758
      %v9855 = vpop.f32.mrb[0].mxu0
      %v9856 = vadd.f32 0.0, %v9855
      %v9857 = vpop.f32.mrb[0].mxu0
      %v9858 = vpop.f32.mrb[0].mxu0
      %v9859 = vadd.f32 0.0, %v9858
      %v9860 = vpop.f32.mrb[0].mxu0
      %9861 = vmatprep.mubr.bf16.mxu0 0
      %9862 = vmatmul.mubr.bf16.gmra.mrb[0].mxu0 %v9761
      %v9863 = vpop.f32.mrb[0].mxu0
      %v9864 = vadd.f32 0.0, %v9863
      %v9865 = vpop.f32.mrb[0].mxu0
      %v9866 = vpop.f32.mrb[0].mxu0
      %v9867 = vadd.f32 0.0, %v9866
      %v9868 = vpop.f32.mrb[0].mxu0
      %9869 = vmatprep.mubr.bf16.mxu0 0
      %9870 = vmatmul.mubr.bf16.gmra.mrb[0].mxu0 %v9764
      %v9871 = vpop.f32.mrb[0].mxu0
      %v9872 = vadd.f32 0.0, %v9871
      %v9873 = vpop.f32.mrb[0].mxu0
      %v9874 = vpop.f32.mrb[0].mxu0
      %v9875 = vadd.f32 0.0, %v9874
      %v9876 = vpop.f32.mrb[0].mxu0
      %9877 = vmatprep.mubr.bf16.mxu0 0
      %9878 = vmatmul.mubr.bf16.gmra.mrb[0].mxu0 %v9767
      %v9879 = vpop.f32.mrb[0].mxu0
      %v9880 = vadd.f32 0.0, %v9879
      %v9881 = vpop.f32.mrb[0].mxu0
      %v9882 = vpop.f32.mrb[0].mxu0
      %v9883 = vadd.f32 0.0, %v9882
      %v9884 = vpop.f32.mrb[0].mxu0
      %9885 = vmatprep.mubr.bf16.mxu0 0
      %9886 = vmatmul.mubr.bf16.gmra.mrb[0].mxu0 %v9770
      %v9887 = vpop.f32.mrb[0].mxu0
      %v9888 = vadd.f32 0.0, %v9887
      %v9889 = vpop.f32.mrb[0].mxu0
      %v9890 = vpop.f32.mrb[0].mxu0
      %v9891 = vadd.f32 0.0, %v9890
      %v9892 = vpop.f32.mrb[0].mxu0
      %9893 = vmatprep.mubr.bf16.mxu0 0
      %9894 = vmatmul.mubr.bf16.gmra.mrb[0].mxu0 %v9773
      %v9895 = vpop.f32.mrb[0].mxu0
      %v9896 = vadd.f32 0.0, %v9895
      %v9897 = vpop.f32.mrb[0].mxu0
      %v9898 = vpop.f32.mrb[0].mxu0
      %v9899 = vadd.f32 0.0, %v9898
      %v9900 = vpop.f32.mrb[0].mxu0
      %9901 = vmatprep.mubr.bf16.mxu0 0
      %9902 = vmatmul.mubr.bf16.gmra.mrb[0].mxu0 %v9776
      %v9903 = vpop.f32.mrb[0].mxu0
      %v9904 = vadd.f32 0.0, %v9903
      %v9905 = vpop.f32.mrb[0].mxu0
      %v9906 = vpop.f32.mrb[0].mxu0
      %v9907 = vadd.f32 0.0, %v9906
      %v9908 = vpop.f32.mrb[0].mxu0
      %9909 = vmatprep.mubr.bf16.mxu0 0
      %9910 = vmatmul.mubr.bf16.gmra.mrb[0].mxu0 %v9779
      %v9911 = vpop.f32.mrb[0].mxu0
      %v9912 = vadd.f32 0.0, %v9911
      %v9913 = vpop.f32.mrb[0].mxu0
      %v9914 = vpop.f32.mrb[0].mxu0
      %v9915 = vadd.f32 0.0, %v9914
      %v9916 = vpop.f32.mrb[0].mxu0
      %9917 = vmatprep.mubr.bf16.mxu0 0
      %9918 = vmatmul.mubr.bf16.gmra.mrb[0].mxu0 %v9782
      %v9919 = vpop.f32.mrb[0].mxu0
      %v9920 = vadd.f32 0.0, %v9919
      %v9921 = vpop.f32.mrb[0].mxu0
      %v9922 = vpop.f32.mrb[0].mxu0
      %v9923 = vadd.f32 0.0, %v9922
      %v9924 = vpop.f32.mrb[0].mxu0
      %9925 = vmatprep.mubr.bf16.mxu0 0
      %9926 = vmatmul.mubr.bf16.gmra.mrb[0].mxu0 %v9785
      %v9927 = vpop.f32.mrb[0].mxu0
      %v9928 = vadd.f32 0.0, %v9927
      %v9929 = vpop.f32.mrb[0].mxu0
      %v9930 = vpop.f32.mrb[0].mxu0
      %v9931 = vadd.f32 0.0, %v9930
      %v9932 = vpop.f32.mrb[0].mxu0
      %9933 = vmatprep.mubr.bf16.mxu0 0
      %9934 = vmatmul.mubr.bf16.gmra.mrb[0].mxu0 %v9788
      %v9935 = vpop.f32.mrb[0].mxu0
      %v9936 = vadd.f32 0.0, %v9935
      %v9937 = vpop.f32.mrb[0].mxu0
      %v9938 = vpop.f32.mrb[0].mxu0
      %v9939 = vadd.f32 0.0, %v9938
      %v9940 = vpop.f32.mrb[0].mxu0
      %9941 = vmatprep.mubr.bf16.mxu0 0
      %9942 = vmatmul.mubr.bf16.gmra.mrb[0].mxu0 %v9791
      %v9943 = vpop.f32.mrb[0].mxu0
      %v9944 = vadd.f32 0.0, %v9943
      %v9945 = vpop.f32.mrb[0].mxu0
      %v9946 = vpop.f32.mrb[0].mxu0
      %v9947 = vadd.f32 0.0, %v9946
      %v9948 = vpop.f32.mrb[0].mxu0
      %9949 = vmatprep.mubr.bf16.mxu0 0
      %9950 = vmatmul.mubr.bf16.gmra.mrb[0].mxu0 %v9794
      %v9951 = vpop.f32.mrb[0].mxu0
      %v9952 = vadd.f32 0.0, %v9951
      %v9953 = vpop.f32.mrb[0].mxu0
      %v9954 = vpop.f32.mrb[0].mxu0
      %v9955 = vadd.f32 0.0, %v9954
      %v9956 = vpop.f32.mrb[0].mxu0
      %9957 = vmatprep.mubr.bf16.mxu0 0
      %9958 = vmatmul.mubr.bf16.gmra.mrb[0].mxu0 %v9797
      %v9959 = vpop.f32.mrb[0].mxu0
      %v9960 = vadd.f32 0.0, %v9959
      %v9961 = vpop.f32.mrb[0].mxu0
      %v9962 = vpop.f32.mrb[0].mxu0
      %v9963 = vadd.f32 0.0, %v9962
      %v9964 = vpop.f32.mrb[0].mxu0
      %9965 = vmatprep.mubr.bf16.mxu0 0
      %9966 = vmatmul.mubr.bf16.gmra.mrb[0].mxu0 %v9800
      %v9967 = vpop.f32.mrb[0].mxu0
      %v9968 = vadd.f32 0.0, %v9967
      %v9969 = vpop.f32.mrb[0].mxu0
      %v9970 = vpop.f32.mrb[0].mxu0
      %v9971 = vadd.f32 0.0, %v9970
      %v9972 = vpop.f32.mrb[0].mxu0
      %9973 = vmatprep.mubr.bf16.mxu0 0
      %9974 = vmatmul.mubr.bf16.gmra.mrb[0].mxu0 %v9803
      %v9975 = vpop.f32.mrb[0].mxu0
      %v9976 = vadd.f32 0.0, %v9975
      %v9977 = vpop.f32.mrb[0].mxu0
      %v9978 = vpop.f32.mrb[0].mxu0
      %v9979 = vadd.f32 0.0, %v9978
      %v9980 = vpop.f32.mrb[0].mxu0
      %9981 = vdwg.mxu0
      %v9982 = vadd.f32 %v9666, %v9840
      %v9983 = vadd.f32 %v9667, %v9843
      %v9984 = vadd.f32 %v9668, %v9848
      %v9985 = vadd.f32 %v9669, %v9851
      %v9986 = vadd.f32 %v9670, %v9856
      %v9987 = vadd.f32 %v9671, %v9859
      %v9988 = vadd.f32 %v9672, %v9864
      %v9989 = vadd.f32 %v9673, %v9867
      %v9990 = vadd.f32 %v9674, %v9872
      %v9991 = vadd.f32 %v9675, %v9875
      %v9992 = vadd.f32 %v9676, %v9880
      %v9993 = vadd.f32 %v9677, %v9883
      %v9994 = vadd.f32 %v9678, %v9888
      %v9995 = vadd.f32 %v9679, %v9891
      %v9996 = vadd.f32 %v9680, %v9896
      %v9997 = vadd.f32 %v9681, %v9899
      %v9998 = vadd.f32 %v9682, %v9904
      %v9999 = vadd.f32 %v9683, %v9907
      %v10000 = vadd.f32 %v9684, %v9912
      %v10001 = vadd.f32 %v9685, %v9915
      %v10002 = vadd.f32 %v9686, %v9920
      %v10003 = vadd.f32 %v9687, %v9923
      %v10004 = vadd.f32 %v9688, %v9928
      %v10005 = vadd.f32 %v9689, %v9931
      %v10006 = vadd.f32 %v9690, %v9936
      %v10007 = vadd.f32 %v9691, %v9939
      %v10008 = vadd.f32 %v9692, %v9944
      %v10009 = vadd.f32 %v9693, %v9947
      %v10010 = vadd.f32 %v9694, %v9952
      %v10011 = vadd.f32 %v9695, %v9955
      %v10012 = vadd.f32 %v9696, %v9960
      %v10013 = vadd.f32 %v9697, %v9963
      %v10014 = vadd.f32 %v9698, %v9968
      %v10015 = vadd.f32 %v9699, %v9971
      %v10016 = vadd.f32 %v9700, %v9976
      %v10017 = vadd.f32 %v9701, %v9979
      %v10018 = vld [vmem:[%s366 + $0x10] sm:$0xc]
      %v10019 = vld [vmem:[%s366 + $0x14] sm:$0xf]
      %v10020 = vld [vmem:[%s366 + $0x18] sm:$0xf]
      %v10021 = vld [vmem:[%s366 + $0x1c] sm:$0xf]
      %v10022 = vld [vmem:[%s366 + $0x20] sm:$0xf]
      %v10023 = vld [vmem:[%s366 + $0x24] sm:$0xf]
      %v10024 = vld [vmem:[%s366 + $0x28] sm:$0xf]
      %v10025 = vld [vmem:[%s366 + $0x2c] sm:$0xf]
      %v10026 = vld [vmem:[%s366 + $0x30] sm:$0xf]
      %v10027 = vld [vmem:[%s366 + $0x34] sm:$0xf]
      %v10028 = vld [vmem:[%s366 + $0x38] sm:$0xf]
      %v10029 = vld [vmem:[%s366 + $0x3c] sm:$0xf]
      %v10030 = vld [vmem:[%s366 + $0x40] sm:$0xf]
      %v10031 = vld [vmem:[%s366 + $0x44] sm:$0xf]
      %v10032 = vld [vmem:[%s366 + $0x48] sm:$0xf]
      %v10033 = vld [vmem:[%s366 + $0x4c] sm:$0xf]
      %v10034 = vld [vmem:[%s366 + $0x50] sm:$0xf]
      %v10035 = vld [vmem:[%s366 + $0x54] sm:$0xf]
      %v10036 = vld [vmem:[%s366 + $0x58] sm:$0xf]
      %v10037 = vld [vmem:[%s366 + $0x5c] sm:$0xf]
      %v10038 = vld [vmem:[%s366 + $0x60] sm:$0xf]
      %v10039 = vld [vmem:[%s366 + $0x64] sm:$0xf]
      %v10040 = vld [vmem:[%s366 + $0x68] sm:$0xf]
      %v10041 = vld [vmem:[%s366 + $0x6c] sm:$0xf]
      %v10042 = vld [vmem:[%s366 + $0x70] sm:$0xf]
      %v10043 = vld [vmem:[%s366 + $0x74] sm:$0xf]
      %v10044 = vld [vmem:[%s366 + $0x78] sm:$0xf]
      %v10045 = vld [vmem:[%s366 + $0x7c] sm:$0xf]
      %v10046 = vld [vmem:[%s366 + $0x80] sm:$0xf]
      %v10047 = vld [vmem:[%s366 + $0x84] sm:$0xf]
      %v10048 = vld [vmem:[%s366 + $0x88] sm:$0xf]
      %v10049 = vld [vmem:[%s366 + $0x8c] sm:$0xf]
      %v10050 = vld [vmem:[%s366 + $0x90] sm:$0xf]
      %v10051 = vld [vmem:[%s366 + $0x94] sm:$0xf]
      %v10052 = vld [vmem:[%s366 + $0x98] sm:$0xf]
      %v10053 = vld [vmem:[%s366 + $0x9c] sm:$0xf]
      %v10054 = vld [vmem:[%s366 + $0xa0] sm:$0x3]
      %v10055 = vld [vmem:[%s3 + $0xc0] sm:$0xf]
      %v10056 = vld [vmem:[%s3 + $0xc4] sm:$0xf]
      %v10094 = vunpack.c.l.b16 %v10018
      %v10095 = vunpack.c.l.b16 %v10019
      %v10096 = vunpack.c.l.b16 %v10020
      %v10097 = vunpack.c.l.b16 %v10021
      %v10098 = vunpack.c.l.b16 %v10022
      %v10099 = vunpack.c.l.b16 %v10023
      %v10100 = vunpack.c.l.b16 %v10024
      %v10101 = vunpack.c.l.b16 %v10025
      %v10102 = vunpack.c.l.b16 %v10026
      %v10103 = vunpack.c.l.b16 %v10027
      %v10104 = vunpack.c.l.b16 %v10028
      %v10105 = vunpack.c.l.b16 %v10029
      %v10106 = vunpack.c.l.b16 %v10030
      %v10107 = vunpack.c.l.b16 %v10031
      %v10108 = vunpack.c.l.b16 %v10032
      %v10109 = vunpack.c.l.b16 %v10033
      %v10110 = vunpack.c.l.b16 %v10034
      %v10111 = vunpack.c.l.b16 %v10035
      %v10112 = vunpack.c.l.b16 %v10036
      %v10113 = vunpack.c.l.b16 %v10037
      %v10114 = vunpack.c.l.b16 %v10038
      %v10115 = vunpack.c.l.b16 %v10039
      %v10116 = vunpack.c.l.b16 %v10040
      %v10117 = vunpack.c.l.b16 %v10041
      %v10118 = vunpack.c.l.b16 %v10042
      %v10119 = vunpack.c.l.b16 %v10043
      %v10120 = vunpack.c.l.b16 %v10044
      %v10121 = vunpack.c.l.b16 %v10045
      %v10122 = vunpack.c.l.b16 %v10046
      %v10123 = vunpack.c.l.b16 %v10047
      %v10124 = vunpack.c.l.b16 %v10048
      %v10125 = vunpack.c.l.b16 %v10049
      %v10126 = vunpack.c.l.b16 %v10050
      %v10127 = vunpack.c.l.b16 %v10051
      %v10128 = vunpack.c.l.b16 %v10052
      %v10129 = vunpack.c.l.b16 %v10053
      %v10130 = vunpack.c.l.b16 %v10054
      %v10131 = vpack.c.b16 %v10095, %v10094
      %v10132 = vpack.c.b16 %v10097, %v10096
      %v10133 = vpack.c.b16 %v10099, %v10098
      %v10134 = vpack.c.b16 %v10101, %v10100
      %v10135 = vpack.c.b16 %v10103, %v10102
      %v10136 = vpack.c.b16 %v10105, %v10104
      %v10137 = vpack.c.b16 %v10107, %v10106
      %v10138 = vpack.c.b16 %v10109, %v10108
      %v10139 = vpack.c.b16 %v10111, %v10110
      %v10140 = vpack.c.b16 %v10113, %v10112
      %v10141 = vpack.c.b16 %v10115, %v10114
      %v10142 = vpack.c.b16 %v10117, %v10116
      %v10143 = vpack.c.b16 %v10119, %v10118
      %v10144 = vpack.c.b16 %v10121, %v10120
      %v10145 = vpack.c.b16 %v10123, %v10122
      %v10146 = vpack.c.b16 %v10125, %v10124
      %v10147 = vpack.c.b16 %v10127, %v10126
      %v10148 = vpack.c.b16 %v10129, %v10128
      %v10149 = vpack.c.b16 %v10130, %v10130
      %v10150 = vrot.slane %v10131, 2
      %v10151 = vrot.slane %v10132, 2
      %v10152 = vsel %vm2337, %v10150, %v10151
      %v10153 = vrot.slane %v10133, 2
      %v10154 = vsel %vm2337, %v10151, %v10153
      %v10155 = vrot.slane %v10134, 2
      %v10156 = vsel %vm2337, %v10153, %v10155
      %v10157 = vrot.slane %v10135, 2
      %v10158 = vsel %vm2337, %v10155, %v10157
      %v10159 = vrot.slane %v10136, 2
      %v10160 = vsel %vm2337, %v10157, %v10159
      %v10161 = vrot.slane %v10137, 2
      %v10162 = vsel %vm2337, %v10159, %v10161
      %v10163 = vrot.slane %v10138, 2
      %v10164 = vsel %vm2337, %v10161, %v10163
      %v10165 = vrot.slane %v10139, 2
      %v10166 = vsel %vm2337, %v10163, %v10165
      %v10167 = vrot.slane %v10140, 2
      %v10168 = vsel %vm2337, %v10165, %v10167
      %v10169 = vrot.slane %v10141, 2
      %v10170 = vsel %vm2337, %v10167, %v10169
      %v10171 = vrot.slane %v10142, 2
      %v10172 = vsel %vm2337, %v10169, %v10171
      %v10173 = vrot.slane %v10143, 2
      %v10174 = vsel %vm2337, %v10171, %v10173
      %v10175 = vrot.slane %v10144, 2
      %v10176 = vsel %vm2337, %v10173, %v10175
      %v10177 = vrot.slane %v10145, 2
      %v10178 = vsel %vm2337, %v10175, %v10177
      %v10179 = vrot.slane %v10146, 2
      %v10180 = vsel %vm2337, %v10177, %v10179
      %v10181 = vrot.slane %v10147, 2
      %v10182 = vsel %vm2337, %v10179, %v10181
      %v10183 = vrot.slane %v10148, 2
      %v10184 = vsel %vm2337, %v10181, %v10183
      %v10185 = vrot.slane %v10149, 2
      %v10186 = vsel %vm2337, %v10183, %v10185
      %v10189 = vunpack.c.l.b16 %v10055
      %v10190 = vunpack.c.l.b16 %v10056
      %v10191 = vpack.c.b16 %v10190, %v10189
      %v10194 = vsel %vm671, %v10152, 0
      %v10197 = vsel %vm671, %v10154, 0
      %v10200 = vsel %vm671, %v10156, 0
      %v10203 = vsel %vm671, %v10158, 0
      %v10206 = vsel %vm671, %v10160, 0
      %v10209 = vsel %vm671, %v10162, 0
      %v10212 = vsel %vm671, %v10164, 0
      %v10215 = vsel %vm671, %v10166, 0
      %v10218 = vsel %vm671, %v10168, 0
      %v10221 = vsel %vm671, %v10170, 0
      %v10224 = vsel %vm671, %v10172, 0
      %v10227 = vsel %vm671, %v10174, 0
      %v10230 = vsel %vm671, %v10176, 0
      %v10233 = vsel %vm671, %v10178, 0
      %v10236 = vsel %vm671, %v10180, 0
      %v10239 = vsel %vm671, %v10182, 0
      %v10242 = vsel %vm671, %v10184, 0
      %v10245 = vsel %vm671, %v10186, 0
      %10247 = vmatprep.subr.bf16.mxu0 0
      %10248 = vmatpush1.bf16.msra.mxu0 %v10191
      %10249 = vmatprep.subr.bf16.mxu0 0
      %10250 = vmatpush1.bf16.msra.mxu0 0
      %10251 = vmatprep.subr.bf16.mxu0 0
      %10252 = vmatpush1.bf16.msra.mxu0 0
      %10253 = vmatprep.subr.bf16.mxu0 0
      %10254 = vmatpush1.bf16.msra.mxu0 0
      %10255 = vmatprep.subr.bf16.mxu0 0
      %10256 = vmatpush1.bf16.msra.mxu0 0
      %10257 = vmatprep.subr.bf16.mxu0 0
      %10258 = vmatpush1.bf16.msra.mxu0 0
      %10259 = vmatprep.subr.bf16.mxu0 0
      %10260 = vmatpush1.bf16.msra.mxu0 0
      %10261 = vmatprep.subr.bf16.mxu0 0
      %10262 = vmatpush1.bf16.msra.mxu0 0
      %10263 = vmatprep.subr.bf16.mxu0 0
      %10264 = vmatpush1.bf16.msra.mxu0 0
      %10265 = vmatprep.subr.bf16.mxu0 0
      %10266 = vmatpush1.bf16.msra.mxu0 0
      %10267 = vmatprep.subr.bf16.mxu0 0
      %10268 = vmatpush1.bf16.msra.mxu0 0
      %10269 = vmatprep.subr.bf16.mxu0 0
      %10270 = vmatpush1.bf16.msra.mxu0 0
      %10271 = vmatprep.subr.bf16.mxu0 0
      %10272 = vmatpush1.bf16.msra.mxu0 0
      %10273 = vmatprep.subr.bf16.mxu0 0
      %10274 = vmatpush1.bf16.msra.mxu0 0
      %10275 = vmatprep.subr.bf16.mxu0 0
      %10276 = vmatpush1.bf16.msra.mxu0 0
      %10277 = vmatprep.subr.bf16.mxu0 0
      %10278 = vmatpush1.bf16.msra.mxu0 0
      %10279 = vmatprep.mubr.bf16.mxu0 0
      %10280 = vmatmul.mubr.bf16.gmra.mrb[0].mxu0 %v10194
      %v10281 = vpop.f32.mrb[0].mxu0
      %v10282 = vadd.f32 0.0, %v10281
      %v10283 = vpop.f32.mrb[0].mxu0
      %v10284 = vpop.f32.mrb[0].mxu0
      %v10285 = vadd.f32 0.0, %v10284
      %v10286 = vpop.f32.mrb[0].mxu0
      %10287 = vmatprep.mubr.bf16.mxu0 0
      %10288 = vmatmul.mubr.bf16.gmra.mrb[0].mxu0 %v10197
      %v10289 = vpop.f32.mrb[0].mxu0
      %v10290 = vadd.f32 0.0, %v10289
      %v10291 = vpop.f32.mrb[0].mxu0
      %v10292 = vpop.f32.mrb[0].mxu0
      %v10293 = vadd.f32 0.0, %v10292
      %v10294 = vpop.f32.mrb[0].mxu0
      %10295 = vmatprep.mubr.bf16.mxu0 0
      %10296 = vmatmul.mubr.bf16.gmra.mrb[0].mxu0 %v10200
      %v10297 = vpop.f32.mrb[0].mxu0
      %v10298 = vadd.f32 0.0, %v10297
      %v10299 = vpop.f32.mrb[0].mxu0
      %v10300 = vpop.f32.mrb[0].mxu0
      %v10301 = vadd.f32 0.0, %v10300
      %v10302 = vpop.f32.mrb[0].mxu0
      %10303 = vmatprep.mubr.bf16.mxu0 0
      %10304 = vmatmul.mubr.bf16.gmra.mrb[0].mxu0 %v10203
      %v10305 = vpop.f32.mrb[0].mxu0
      %v10306 = vadd.f32 0.0, %v10305
      %v10307 = vpop.f32.mrb[0].mxu0
      %v10308 = vpop.f32.mrb[0].mxu0
      %v10309 = vadd.f32 0.0, %v10308
      %v10310 = vpop.f32.mrb[0].mxu0
      %10311 = vmatprep.mubr.bf16.mxu0 0
      %10312 = vmatmul.mubr.bf16.gmra.mrb[0].mxu0 %v10206
      %v10313 = vpop.f32.mrb[0].mxu0
      %v10314 = vadd.f32 0.0, %v10313
      %v10315 = vpop.f32.mrb[0].mxu0
      %v10316 = vpop.f32.mrb[0].mxu0
      %v10317 = vadd.f32 0.0, %v10316
      %v10318 = vpop.f32.mrb[0].mxu0
      %10319 = vmatprep.mubr.bf16.mxu0 0
      %10320 = vmatmul.mubr.bf16.gmra.mrb[0].mxu0 %v10209
      %v10321 = vpop.f32.mrb[0].mxu0
      %v10322 = vadd.f32 0.0, %v10321
      %v10323 = vpop.f32.mrb[0].mxu0
      %v10324 = vpop.f32.mrb[0].mxu0
      %v10325 = vadd.f32 0.0, %v10324
      %v10326 = vpop.f32.mrb[0].mxu0
      %10327 = vmatprep.mubr.bf16.mxu0 0
      %10328 = vmatmul.mubr.bf16.gmra.mrb[0].mxu0 %v10212
      %v10329 = vpop.f32.mrb[0].mxu0
      %v10330 = vadd.f32 0.0, %v10329
      %v10331 = vpop.f32.mrb[0].mxu0
      %v10332 = vpop.f32.mrb[0].mxu0
      %v10333 = vadd.f32 0.0, %v10332
      %v10334 = vpop.f32.mrb[0].mxu0
      %10335 = vmatprep.mubr.bf16.mxu0 0
      %10336 = vmatmul.mubr.bf16.gmra.mrb[0].mxu0 %v10215
      %v10337 = vpop.f32.mrb[0].mxu0
      %v10338 = vadd.f32 0.0, %v10337
      %v10339 = vpop.f32.mrb[0].mxu0
      %v10340 = vpop.f32.mrb[0].mxu0
      %v10341 = vadd.f32 0.0, %v10340
      %v10342 = vpop.f32.mrb[0].mxu0
      %10343 = vmatprep.mubr.bf16.mxu0 0
      %10344 = vmatmul.mubr.bf16.gmra.mrb[0].mxu0 %v10218
      %v10345 = vpop.f32.mrb[0].mxu0
      %v10346 = vadd.f32 0.0, %v10345
      %v10347 = vpop.f32.mrb[0].mxu0
      %v10348 = vpop.f32.mrb[0].mxu0
      %v10349 = vadd.f32 0.0, %v10348
      %v10350 = vpop.f32.mrb[0].mxu0
      %10351 = vmatprep.mubr.bf16.mxu0 0
      %10352 = vmatmul.mubr.bf16.gmra.mrb[0].mxu0 %v10221
      %v10353 = vpop.f32.mrb[0].mxu0
      %v10354 = vadd.f32 0.0, %v10353
      %v10355 = vpop.f32.mrb[0].mxu0
      %v10356 = vpop.f32.mrb[0].mxu0
      %v10357 = vadd.f32 0.0, %v10356
      %v10358 = vpop.f32.mrb[0].mxu0
      %10359 = vmatprep.mubr.bf16.mxu0 0
      %10360 = vmatmul.mubr.bf16.gmra.mrb[0].mxu0 %v10224
      %v10361 = vpop.f32.mrb[0].mxu0
      %v10362 = vadd.f32 0.0, %v10361
      %v10363 = vpop.f32.mrb[0].mxu0
      %v10364 = vpop.f32.mrb[0].mxu0
      %v10365 = vadd.f32 0.0, %v10364
      %v10366 = vpop.f32.mrb[0].mxu0
      %10367 = vmatprep.mubr.bf16.mxu0 0
      %10368 = vmatmul.mubr.bf16.gmra.mrb[0].mxu0 %v10227
      %v10369 = vpop.f32.mrb[0].mxu0
      %v10370 = vadd.f32 0.0, %v10369
      %v10371 = vpop.f32.mrb[0].mxu0
      %v10372 = vpop.f32.mrb[0].mxu0
      %v10373 = vadd.f32 0.0, %v10372
      %v10374 = vpop.f32.mrb[0].mxu0
      %10375 = vmatprep.mubr.bf16.mxu0 0
      %10376 = vmatmul.mubr.bf16.gmra.mrb[0].mxu0 %v10230
      %v10377 = vpop.f32.mrb[0].mxu0
      %v10378 = vadd.f32 0.0, %v10377
      %v10379 = vpop.f32.mrb[0].mxu0
      %v10380 = vpop.f32.mrb[0].mxu0
      %v10381 = vadd.f32 0.0, %v10380
      %v10382 = vpop.f32.mrb[0].mxu0
      %10383 = vmatprep.mubr.bf16.mxu0 0
      %10384 = vmatmul.mubr.bf16.gmra.mrb[0].mxu0 %v10233
      %v10385 = vpop.f32.mrb[0].mxu0
      %v10386 = vadd.f32 0.0, %v10385
      %v10387 = vpop.f32.mrb[0].mxu0
      %v10388 = vpop.f32.mrb[0].mxu0
      %v10389 = vadd.f32 0.0, %v10388
      %v10390 = vpop.f32.mrb[0].mxu0
      %10391 = vmatprep.mubr.bf16.mxu0 0
      %10392 = vmatmul.mubr.bf16.gmra.mrb[0].mxu0 %v10236
      %v10393 = vpop.f32.mrb[0].mxu0
      %v10394 = vadd.f32 0.0, %v10393
      %v10395 = vpop.f32.mrb[0].mxu0
      %v10396 = vpop.f32.mrb[0].mxu0
      %v10397 = vadd.f32 0.0, %v10396
      %v10398 = vpop.f32.mrb[0].mxu0
      %10399 = vmatprep.mubr.bf16.mxu0 0
      %10400 = vmatmul.mubr.bf16.gmra.mrb[0].mxu0 %v10239
      %v10401 = vpop.f32.mrb[0].mxu0
      %v10402 = vadd.f32 0.0, %v10401
      %v10403 = vpop.f32.mrb[0].mxu0
      %v10404 = vpop.f32.mrb[0].mxu0
      %v10405 = vadd.f32 0.0, %v10404
      %v10406 = vpop.f32.mrb[0].mxu0
      %10407 = vmatprep.mubr.bf16.mxu0 0
      %10408 = vmatmul.mubr.bf16.gmra.mrb[0].mxu0 %v10242
      %v10409 = vpop.f32.mrb[0].mxu0
      %v10410 = vadd.f32 0.0, %v10409
      %v10411 = vpop.f32.mrb[0].mxu0
      %v10412 = vpop.f32.mrb[0].mxu0
      %v10413 = vadd.f32 0.0, %v10412
      %v10414 = vpop.f32.mrb[0].mxu0
      %10415 = vmatprep.mubr.bf16.mxu0 0
      %10416 = vmatmul.mubr.bf16.gmra.mrb[0].mxu0 %v10245
      %v10417 = vpop.f32.mrb[0].mxu0
      %v10418 = vadd.f32 0.0, %v10417
      %v10419 = vpop.f32.mrb[0].mxu0
      %v10420 = vpop.f32.mrb[0].mxu0
      %v10421 = vadd.f32 0.0, %v10420
      %v10422 = vpop.f32.mrb[0].mxu0
      %10423 = vdwg.mxu0
      %v10424 = vadd.f32 %v9982, %v10282
      %v10425 = vadd.f32 %v9983, %v10285
      %v10426 = vadd.f32 %v9984, %v10290
      %v10427 = vadd.f32 %v9985, %v10293
      %v10428 = vadd.f32 %v9986, %v10298
      %v10429 = vadd.f32 %v9987, %v10301
      %v10430 = vadd.f32 %v9988, %v10306
      %v10431 = vadd.f32 %v9989, %v10309
      %v10432 = vadd.f32 %v9990, %v10314
      %v10433 = vadd.f32 %v9991, %v10317
      %v10434 = vadd.f32 %v9992, %v10322
      %v10435 = vadd.f32 %v9993, %v10325
      %v10436 = vadd.f32 %v9994, %v10330
      %v10437 = vadd.f32 %v9995, %v10333
      %v10438 = vadd.f32 %v9996, %v10338
      %v10439 = vadd.f32 %v9997, %v10341
      %v10440 = vadd.f32 %v9998, %v10346
      %v10441 = vadd.f32 %v9999, %v10349
      %v10442 = vadd.f32 %v10000, %v10354
      %v10443 = vadd.f32 %v10001, %v10357
      %v10444 = vadd.f32 %v10002, %v10362
      %v10445 = vadd.f32 %v10003, %v10365
      %v10446 = vadd.f32 %v10004, %v10370
      %v10447 = vadd.f32 %v10005, %v10373
      %v10448 = vadd.f32 %v10006, %v10378
      %v10449 = vadd.f32 %v10007, %v10381
      %v10450 = vadd.f32 %v10008, %v10386
      %v10451 = vadd.f32 %v10009, %v10389
      %v10452 = vadd.f32 %v10010, %v10394
      %v10453 = vadd.f32 %v10011, %v10397
      %v10454 = vadd.f32 %v10012, %v10402
      %v10455 = vadd.f32 %v10013, %v10405
      %v10456 = vadd.f32 %v10014, %v10410
      %v10457 = vadd.f32 %v10015, %v10413
      %v10458 = vadd.f32 %v10016, %v10418
      %v10459 = vadd.f32 %v10017, %v10421
      %v10460 = vld [vmem:[%s366 + $0xa0] sm:$0x7]
      %v10461 = vld [vmem:[%s3 + $0xc8] sm:$0xf]
      %v10462 = vld [vmem:[%s3 + $0xcc] sm:$0xf]
      %v10464 = vunpack.c.l.b16 %v10460
      %v10465 = vpack.c.b16 %v10464, %v10464
      %v10467 = vshrl.u32 %v10131, 16
      %v10469 = vrot.slane %v10467, 2
      %v10470 = vshll.u32 %v10131, 16
      %v10472 = vrot.slane %v10470, 3
      %v10473 = vor.u32 %v10469, %v10472
      %v10475 = vshrl.u32 %v10132, 16
      %v10477 = vrot.slane %v10475, 2
      %v10478 = vshll.u32 %v10132, 16
      %v10480 = vrot.slane %v10478, 3
      %v10481 = vor.u32 %v10477, %v10480
      %v10482 = vsel %vm3096, %v10473, %v10481
      %v10484 = vshrl.u32 %v10133, 16
      %v10486 = vrot.slane %v10484, 2
      %v10487 = vshll.u32 %v10133, 16
      %v10489 = vrot.slane %v10487, 3
      %v10490 = vor.u32 %v10486, %v10489
      %v10491 = vsel %vm3096, %v10481, %v10490
      %v10493 = vshrl.u32 %v10134, 16
      %v10495 = vrot.slane %v10493, 2
      %v10496 = vshll.u32 %v10134, 16
      %v10498 = vrot.slane %v10496, 3
      %v10499 = vor.u32 %v10495, %v10498
      %v10500 = vsel %vm3096, %v10490, %v10499
      %v10502 = vshrl.u32 %v10135, 16
      %v10504 = vrot.slane %v10502, 2
      %v10505 = vshll.u32 %v10135, 16
      %v10507 = vrot.slane %v10505, 3
      %v10508 = vor.u32 %v10504, %v10507
      %v10509 = vsel %vm3096, %v10499, %v10508
      %v10511 = vshrl.u32 %v10136, 16
      %v10513 = vrot.slane %v10511, 2
      %v10514 = vshll.u32 %v10136, 16
      %v10516 = vrot.slane %v10514, 3
      %v10517 = vor.u32 %v10513, %v10516
      %v10518 = vsel %vm3096, %v10508, %v10517
      %v10520 = vshrl.u32 %v10137, 16
      %v10522 = vrot.slane %v10520, 2
      %v10523 = vshll.u32 %v10137, 16
      %v10525 = vrot.slane %v10523, 3
      %v10526 = vor.u32 %v10522, %v10525
      %v10527 = vsel %vm3096, %v10517, %v10526
      %v10529 = vshrl.u32 %v10138, 16
      %v10531 = vrot.slane %v10529, 2
      %v10532 = vshll.u32 %v10138, 16
      %v10534 = vrot.slane %v10532, 3
      %v10535 = vor.u32 %v10531, %v10534
      %v10536 = vsel %vm3096, %v10526, %v10535
      %v10538 = vshrl.u32 %v10139, 16
      %v10540 = vrot.slane %v10538, 2
      %v10541 = vshll.u32 %v10139, 16
      %v10543 = vrot.slane %v10541, 3
      %v10544 = vor.u32 %v10540, %v10543
      %v10545 = vsel %vm3096, %v10535, %v10544
      %v10547 = vshrl.u32 %v10140, 16
      %v10549 = vrot.slane %v10547, 2
      %v10550 = vshll.u32 %v10140, 16
      %v10552 = vrot.slane %v10550, 3
      %v10553 = vor.u32 %v10549, %v10552
      %v10554 = vsel %vm3096, %v10544, %v10553
      %v10556 = vshrl.u32 %v10141, 16
      %v10558 = vrot.slane %v10556, 2
      %v10559 = vshll.u32 %v10141, 16
      %v10561 = vrot.slane %v10559, 3
      %v10562 = vor.u32 %v10558, %v10561
      %v10563 = vsel %vm3096, %v10553, %v10562
      %v10565 = vshrl.u32 %v10142, 16
      %v10567 = vrot.slane %v10565, 2
      %v10568 = vshll.u32 %v10142, 16
      %v10570 = vrot.slane %v10568, 3
      %v10571 = vor.u32 %v10567, %v10570
      %v10572 = vsel %vm3096, %v10562, %v10571
      %v10574 = vshrl.u32 %v10143, 16
      %v10576 = vrot.slane %v10574, 2
      %v10577 = vshll.u32 %v10143, 16
      %v10579 = vrot.slane %v10577, 3
      %v10580 = vor.u32 %v10576, %v10579
      %v10581 = vsel %vm3096, %v10571, %v10580
      %v10583 = vshrl.u32 %v10144, 16
      %v10585 = vrot.slane %v10583, 2
      %v10586 = vshll.u32 %v10144, 16
      %v10588 = vrot.slane %v10586, 3
      %v10589 = vor.u32 %v10585, %v10588
      %v10590 = vsel %vm3096, %v10580, %v10589
      %v10592 = vshrl.u32 %v10145, 16
      %v10594 = vrot.slane %v10592, 2
      %v10595 = vshll.u32 %v10145, 16
      %v10597 = vrot.slane %v10595, 3
      %v10598 = vor.u32 %v10594, %v10597
      %v10599 = vsel %vm3096, %v10589, %v10598
      %v10601 = vshrl.u32 %v10146, 16
      %v10603 = vrot.slane %v10601, 2
      %v10604 = vshll.u32 %v10146, 16
      %v10606 = vrot.slane %v10604, 3
      %v10607 = vor.u32 %v10603, %v10606
      %v10608 = vsel %vm3096, %v10598, %v10607
      %v10610 = vshrl.u32 %v10147, 16
      %v10612 = vrot.slane %v10610, 2
      %v10613 = vshll.u32 %v10147, 16
      %v10615 = vrot.slane %v10613, 3
      %v10616 = vor.u32 %v10612, %v10615
      %v10617 = vsel %vm3096, %v10607, %v10616
      %v10619 = vshrl.u32 %v10148, 16
      %v10621 = vrot.slane %v10619, 2
      %v10622 = vshll.u32 %v10148, 16
      %v10624 = vrot.slane %v10622, 3
      %v10625 = vor.u32 %v10621, %v10624
      %v10626 = vsel %vm3096, %v10616, %v10625
      %v10628 = vshrl.u32 %v10465, 16
      %v10630 = vrot.slane %v10628, 2
      %v10631 = vshll.u32 %v10465, 16
      %v10633 = vrot.slane %v10631, 3
      %v10634 = vor.u32 %v10630, %v10633
      %v10635 = vsel %vm3096, %v10625, %v10634
      %v10638 = vunpack.c.l.b16 %v10461
      %v10639 = vunpack.c.l.b16 %v10462
      %v10640 = vpack.c.b16 %v10639, %v10638
      %v10643 = vsel %vm671, %v10482, 0
      %v10646 = vsel %vm671, %v10491, 0
      %v10649 = vsel %vm671, %v10500, 0
      %v10652 = vsel %vm671, %v10509, 0
      %v10655 = vsel %vm671, %v10518, 0
      %v10658 = vsel %vm671, %v10527, 0
      %v10661 = vsel %vm671, %v10536, 0
      %v10664 = vsel %vm671, %v10545, 0
      %v10667 = vsel %vm671, %v10554, 0
      %v10670 = vsel %vm671, %v10563, 0
      %v10673 = vsel %vm671, %v10572, 0
      %v10676 = vsel %vm671, %v10581, 0
      %v10679 = vsel %vm671, %v10590, 0
      %v10682 = vsel %vm671, %v10599, 0
      %v10685 = vsel %vm671, %v10608, 0
      %v10688 = vsel %vm671, %v10617, 0
      %v10691 = vsel %vm671, %v10626, 0
      %v10694 = vsel %vm671, %v10635, 0
      %10696 = vmatprep.subr.bf16.mxu0 0
      %10697 = vmatpush1.bf16.msra.mxu0 %v10640
      %10698 = vmatprep.subr.bf16.mxu0 0
      %10699 = vmatpush1.bf16.msra.mxu0 0
      %10700 = vmatprep.subr.bf16.mxu0 0
      %10701 = vmatpush1.bf16.msra.mxu0 0
      %10702 = vmatprep.subr.bf16.mxu0 0
      %10703 = vmatpush1.bf16.msra.mxu0 0
      %10704 = vmatprep.subr.bf16.mxu0 0
      %10705 = vmatpush1.bf16.msra.mxu0 0
      %10706 = vmatprep.subr.bf16.mxu0 0
      %10707 = vmatpush1.bf16.msra.mxu0 0
      %10708 = vmatprep.subr.bf16.mxu0 0
      %10709 = vmatpush1.bf16.msra.mxu0 0
      %10710 = vmatprep.subr.bf16.mxu0 0
      %10711 = vmatpush1.bf16.msra.mxu0 0
      %10712 = vmatprep.subr.bf16.mxu0 0
      %10713 = vmatpush1.bf16.msra.mxu0 0
      %10714 = vmatprep.subr.bf16.mxu0 0
      %10715 = vmatpush1.bf16.msra.mxu0 0
      %10716 = vmatprep.subr.bf16.mxu0 0
      %10717 = vmatpush1.bf16.msra.mxu0 0
      %10718 = vmatprep.subr.bf16.mxu0 0
      %10719 = vmatpush1.bf16.msra.mxu0 0
      %10720 = vmatprep.subr.bf16.mxu0 0
      %10721 = vmatpush1.bf16.msra.mxu0 0
      %10722 = vmatprep.subr.bf16.mxu0 0
      %10723 = vmatpush1.bf16.msra.mxu0 0
      %10724 = vmatprep.subr.bf16.mxu0 0
      %10725 = vmatpush1.bf16.msra.mxu0 0
      %10726 = vmatprep.subr.bf16.mxu0 0
      %10727 = vmatpush1.bf16.msra.mxu0 0
      %10728 = vmatprep.mubr.bf16.mxu0 0
      %10729 = vmatmul.mubr.bf16.gmra.mrb[0].mxu0 %v10643
      %v10730 = vpop.f32.mrb[0].mxu0
      %v10731 = vadd.f32 0.0, %v10730
      %v10732 = vpop.f32.mrb[0].mxu0
      %v10733 = vpop.f32.mrb[0].mxu0
      %v10734 = vadd.f32 0.0, %v10733
      %v10735 = vpop.f32.mrb[0].mxu0
      %10736 = vmatprep.mubr.bf16.mxu0 0
      %10737 = vmatmul.mubr.bf16.gmra.mrb[0].mxu0 %v10646
      %v10738 = vpop.f32.mrb[0].mxu0
      %v10739 = vadd.f32 0.0, %v10738
      %v10740 = vpop.f32.mrb[0].mxu0
      %v10741 = vpop.f32.mrb[0].mxu0
      %v10742 = vadd.f32 0.0, %v10741
      %v10743 = vpop.f32.mrb[0].mxu0
      %10744 = vmatprep.mubr.bf16.mxu0 0
      %10745 = vmatmul.mubr.bf16.gmra.mrb[0].mxu0 %v10649
      %v10746 = vpop.f32.mrb[0].mxu0
      %v10747 = vadd.f32 0.0, %v10746
      %v10748 = vpop.f32.mrb[0].mxu0
      %v10749 = vpop.f32.mrb[0].mxu0
      %v10750 = vadd.f32 0.0, %v10749
      %v10751 = vpop.f32.mrb[0].mxu0
      %10752 = vmatprep.mubr.bf16.mxu0 0
      %10753 = vmatmul.mubr.bf16.gmra.mrb[0].mxu0 %v10652
      %v10754 = vpop.f32.mrb[0].mxu0
      %v10755 = vadd.f32 0.0, %v10754
      %v10756 = vpop.f32.mrb[0].mxu0
      %v10757 = vpop.f32.mrb[0].mxu0
      %v10758 = vadd.f32 0.0, %v10757
      %v10759 = vpop.f32.mrb[0].mxu0
      %10760 = vmatprep.mubr.bf16.mxu0 0
      %10761 = vmatmul.mubr.bf16.gmra.mrb[0].mxu0 %v10655
      %v10762 = vpop.f32.mrb[0].mxu0
      %v10763 = vadd.f32 0.0, %v10762
      %v10764 = vpop.f32.mrb[0].mxu0
      %v10765 = vpop.f32.mrb[0].mxu0
      %v10766 = vadd.f32 0.0, %v10765
      %v10767 = vpop.f32.mrb[0].mxu0
      %10768 = vmatprep.mubr.bf16.mxu0 0
      %10769 = vmatmul.mubr.bf16.gmra.mrb[0].mxu0 %v10658
      %v10770 = vpop.f32.mrb[0].mxu0
      %v10771 = vadd.f32 0.0, %v10770
      %v10772 = vpop.f32.mrb[0].mxu0
      %v10773 = vpop.f32.mrb[0].mxu0
      %v10774 = vadd.f32 0.0, %v10773
      %v10775 = vpop.f32.mrb[0].mxu0
      %10776 = vmatprep.mubr.bf16.mxu0 0
      %10777 = vmatmul.mubr.bf16.gmra.mrb[0].mxu0 %v10661
      %v10778 = vpop.f32.mrb[0].mxu0
      %v10779 = vadd.f32 0.0, %v10778
      %v10780 = vpop.f32.mrb[0].mxu0
      %v10781 = vpop.f32.mrb[0].mxu0
      %v10782 = vadd.f32 0.0, %v10781
      %v10783 = vpop.f32.mrb[0].mxu0
      %10784 = vmatprep.mubr.bf16.mxu0 0
      %10785 = vmatmul.mubr.bf16.gmra.mrb[0].mxu0 %v10664
      %v10786 = vpop.f32.mrb[0].mxu0
      %v10787 = vadd.f32 0.0, %v10786
      %v10788 = vpop.f32.mrb[0].mxu0
      %v10789 = vpop.f32.mrb[0].mxu0
      %v10790 = vadd.f32 0.0, %v10789
      %v10791 = vpop.f32.mrb[0].mxu0
      %10792 = vmatprep.mubr.bf16.mxu0 0
      %10793 = vmatmul.mubr.bf16.gmra.mrb[0].mxu0 %v10667
      %v10794 = vpop.f32.mrb[0].mxu0
      %v10795 = vadd.f32 0.0, %v10794
      %v10796 = vpop.f32.mrb[0].mxu0
      %v10797 = vpop.f32.mrb[0].mxu0
      %v10798 = vadd.f32 0.0, %v10797
      %v10799 = vpop.f32.mrb[0].mxu0
      %10800 = vmatprep.mubr.bf16.mxu0 0
      %10801 = vmatmul.mubr.bf16.gmra.mrb[0].mxu0 %v10670
      %v10802 = vpop.f32.mrb[0].mxu0
      %v10803 = vadd.f32 0.0, %v10802
      %v10804 = vpop.f32.mrb[0].mxu0
      %v10805 = vpop.f32.mrb[0].mxu0
      %v10806 = vadd.f32 0.0, %v10805
      %v10807 = vpop.f32.mrb[0].mxu0
      %10808 = vmatprep.mubr.bf16.mxu0 0
      %10809 = vmatmul.mubr.bf16.gmra.mrb[0].mxu0 %v10673
      %v10810 = vpop.f32.mrb[0].mxu0
      %v10811 = vadd.f32 0.0, %v10810
      %v10812 = vpop.f32.mrb[0].mxu0
      %v10813 = vpop.f32.mrb[0].mxu0
      %v10814 = vadd.f32 0.0, %v10813
      %v10815 = vpop.f32.mrb[0].mxu0
      %10816 = vmatprep.mubr.bf16.mxu0 0
      %10817 = vmatmul.mubr.bf16.gmra.mrb[0].mxu0 %v10676
      %v10818 = vpop.f32.mrb[0].mxu0
      %v10819 = vadd.f32 0.0, %v10818
      %v10820 = vpop.f32.mrb[0].mxu0
      %v10821 = vpop.f32.mrb[0].mxu0
      %v10822 = vadd.f32 0.0, %v10821
      %v10823 = vpop.f32.mrb[0].mxu0
      %10824 = vmatprep.mubr.bf16.mxu0 0
      %10825 = vmatmul.mubr.bf16.gmra.mrb[0].mxu0 %v10679
      %v10826 = vpop.f32.mrb[0].mxu0
      %v10827 = vadd.f32 0.0, %v10826
      %v10828 = vpop.f32.mrb[0].mxu0
      %v10829 = vpop.f32.mrb[0].mxu0
      %v10830 = vadd.f32 0.0, %v10829
      %v10831 = vpop.f32.mrb[0].mxu0
      %10832 = vmatprep.mubr.bf16.mxu0 0
      %10833 = vmatmul.mubr.bf16.gmra.mrb[0].mxu0 %v10682
      %v10834 = vpop.f32.mrb[0].mxu0
      %v10835 = vadd.f32 0.0, %v10834
      %v10836 = vpop.f32.mrb[0].mxu0
      %v10837 = vpop.f32.mrb[0].mxu0
      %v10838 = vadd.f32 0.0, %v10837
      %v10839 = vpop.f32.mrb[0].mxu0
      %10840 = vmatprep.mubr.bf16.mxu0 0
      %10841 = vmatmul.mubr.bf16.gmra.mrb[0].mxu0 %v10685
      %v10842 = vpop.f32.mrb[0].mxu0
      %v10843 = vadd.f32 0.0, %v10842
      %v10844 = vpop.f32.mrb[0].mxu0
      %v10845 = vpop.f32.mrb[0].mxu0
      %v10846 = vadd.f32 0.0, %v10845
      %v10847 = vpop.f32.mrb[0].mxu0
      %10848 = vmatprep.mubr.bf16.mxu0 0
      %10849 = vmatmul.mubr.bf16.gmra.mrb[0].mxu0 %v10688
      %v10850 = vpop.f32.mrb[0].mxu0
      %v10851 = vadd.f32 0.0, %v10850
      %v10852 = vpop.f32.mrb[0].mxu0
      %v10853 = vpop.f32.mrb[0].mxu0
      %v10854 = vadd.f32 0.0, %v10853
      %v10855 = vpop.f32.mrb[0].mxu0
      %10856 = vmatprep.mubr.bf16.mxu0 0
      %10857 = vmatmul.mubr.bf16.gmra.mrb[0].mxu0 %v10691
      %v10858 = vpop.f32.mrb[0].mxu0
      %v10859 = vadd.f32 0.0, %v10858
      %v10860 = vpop.f32.mrb[0].mxu0
      %v10861 = vpop.f32.mrb[0].mxu0
      %v10862 = vadd.f32 0.0, %v10861
      %v10863 = vpop.f32.mrb[0].mxu0
      %10864 = vmatprep.mubr.bf16.mxu0 0
      %10865 = vmatmul.mubr.bf16.gmra.mrb[0].mxu0 %v10694
      %v10866 = vpop.f32.mrb[0].mxu0
      %v10867 = vadd.f32 0.0, %v10866
      %v10868 = vpop.f32.mrb[0].mxu0
      %v10869 = vpop.f32.mrb[0].mxu0
      %v10870 = vadd.f32 0.0, %v10869
      %v10871 = vpop.f32.mrb[0].mxu0
      %10872 = vdwg.mxu0
      %v10873 = vadd.f32 %v10424, %v10731
      %v10874 = vadd.f32 %v10425, %v10734
      %v10875 = vadd.f32 %v10426, %v10739
      %v10876 = vadd.f32 %v10427, %v10742
      %v10877 = vadd.f32 %v10428, %v10747
      %v10878 = vadd.f32 %v10429, %v10750
      %v10879 = vadd.f32 %v10430, %v10755
      %v10880 = vadd.f32 %v10431, %v10758
      %v10881 = vadd.f32 %v10432, %v10763
      %v10882 = vadd.f32 %v10433, %v10766
      %v10883 = vadd.f32 %v10434, %v10771
      %v10884 = vadd.f32 %v10435, %v10774
      %v10885 = vadd.f32 %v10436, %v10779
      %v10886 = vadd.f32 %v10437, %v10782
      %v10887 = vadd.f32 %v10438, %v10787
      %v10888 = vadd.f32 %v10439, %v10790
      %v10889 = vadd.f32 %v10440, %v10795
      %v10890 = vadd.f32 %v10441, %v10798
      %v10891 = vadd.f32 %v10442, %v10803
      %v10892 = vadd.f32 %v10443, %v10806
      %v10893 = vadd.f32 %v10444, %v10811
      %v10894 = vadd.f32 %v10445, %v10814
      %v10895 = vadd.f32 %v10446, %v10819
      %v10896 = vadd.f32 %v10447, %v10822
      %v10897 = vadd.f32 %v10448, %v10827
      %v10898 = vadd.f32 %v10449, %v10830
      %v10899 = vadd.f32 %v10450, %v10835
      %v10900 = vadd.f32 %v10451, %v10838
      %v10901 = vadd.f32 %v10452, %v10843
      %v10902 = vadd.f32 %v10453, %v10846
      %v10903 = vadd.f32 %v10454, %v10851
      %v10904 = vadd.f32 %v10455, %v10854
      %v10905 = vadd.f32 %v10456, %v10859
      %v10906 = vadd.f32 %v10457, %v10862
      %v10907 = vadd.f32 %v10458, %v10867
      %v10908 = vadd.f32 %v10459, %v10870
      %v10909 = vld [vmem:[%s366 + $0x10] sm:$0x8]
      %v10910 = vld [vmem:[%s3 + $0xd0] sm:$0xf]
      %v10911 = vld [vmem:[%s3 + $0xd4] sm:$0xf]
      %v10913 = vunpack.c.l.b16 %v10909
      %v10914 = vpack.c.b16 %v10095, %v10913
      %v10915 = vrot.slane %v10914, 3
      %v10916 = vrot.slane %v10132, 3
      %v10917 = vsel %vm3546, %v10915, %v10916
      %v10918 = vrot.slane %v10133, 3
      %v10919 = vsel %vm3546, %v10916, %v10918
      %v10920 = vrot.slane %v10134, 3
      %v10921 = vsel %vm3546, %v10918, %v10920
      %v10922 = vrot.slane %v10135, 3
      %v10923 = vsel %vm3546, %v10920, %v10922
      %v10924 = vrot.slane %v10136, 3
      %v10925 = vsel %vm3546, %v10922, %v10924
      %v10926 = vrot.slane %v10137, 3
      %v10927 = vsel %vm3546, %v10924, %v10926
      %v10928 = vrot.slane %v10138, 3
      %v10929 = vsel %vm3546, %v10926, %v10928
      %v10930 = vrot.slane %v10139, 3
      %v10931 = vsel %vm3546, %v10928, %v10930
      %v10932 = vrot.slane %v10140, 3
      %v10933 = vsel %vm3546, %v10930, %v10932
      %v10934 = vrot.slane %v10141, 3
      %v10935 = vsel %vm3546, %v10932, %v10934
      %v10936 = vrot.slane %v10142, 3
      %v10937 = vsel %vm3546, %v10934, %v10936
      %v10938 = vrot.slane %v10143, 3
      %v10939 = vsel %vm3546, %v10936, %v10938
      %v10940 = vrot.slane %v10144, 3
      %v10941 = vsel %vm3546, %v10938, %v10940
      %v10942 = vrot.slane %v10145, 3
      %v10943 = vsel %vm3546, %v10940, %v10942
      %v10944 = vrot.slane %v10146, 3
      %v10945 = vsel %vm3546, %v10942, %v10944
      %v10946 = vrot.slane %v10147, 3
      %v10947 = vsel %vm3546, %v10944, %v10946
      %v10948 = vrot.slane %v10148, 3
      %v10949 = vsel %vm3546, %v10946, %v10948
      %v10950 = vrot.slane %v10465, 3
      %v10951 = vsel %vm3546, %v10948, %v10950
      %v10954 = vunpack.c.l.b16 %v10910
      %v10955 = vunpack.c.l.b16 %v10911
      %v10956 = vpack.c.b16 %v10955, %v10954
      %v10959 = vsel %vm671, %v10917, 0
      %v10962 = vsel %vm671, %v10919, 0
      %v10965 = vsel %vm671, %v10921, 0
      %v10968 = vsel %vm671, %v10923, 0
      %v10971 = vsel %vm671, %v10925, 0
      %v10974 = vsel %vm671, %v10927, 0
      %v10977 = vsel %vm671, %v10929, 0
      %v10980 = vsel %vm671, %v10931, 0
      %v10983 = vsel %vm671, %v10933, 0
      %v10986 = vsel %vm671, %v10935, 0
      %v10989 = vsel %vm671, %v10937, 0
      %v10992 = vsel %vm671, %v10939, 0
      %v10995 = vsel %vm671, %v10941, 0
      %v10998 = vsel %vm671, %v10943, 0
      %v11001 = vsel %vm671, %v10945, 0
      %v11004 = vsel %vm671, %v10947, 0
      %v11007 = vsel %vm671, %v10949, 0
      %v11010 = vsel %vm671, %v10951, 0
      %11012 = vmatprep.subr.bf16.mxu0 0
      %11013 = vmatpush1.bf16.msra.mxu0 %v10956
      %11014 = vmatprep.subr.bf16.mxu0 0
      %11015 = vmatpush1.bf16.msra.mxu0 0
      %11016 = vmatprep.subr.bf16.mxu0 0
      %11017 = vmatpush1.bf16.msra.mxu0 0
      %11018 = vmatprep.subr.bf16.mxu0 0
      %11019 = vmatpush1.bf16.msra.mxu0 0
      %11020 = vmatprep.subr.bf16.mxu0 0
      %11021 = vmatpush1.bf16.msra.mxu0 0
      %11022 = vmatprep.subr.bf16.mxu0 0
      %11023 = vmatpush1.bf16.msra.mxu0 0
      %11024 = vmatprep.subr.bf16.mxu0 0
      %11025 = vmatpush1.bf16.msra.mxu0 0
      %11026 = vmatprep.subr.bf16.mxu0 0
      %11027 = vmatpush1.bf16.msra.mxu0 0
      %11028 = vmatprep.subr.bf16.mxu0 0
      %11029 = vmatpush1.bf16.msra.mxu0 0
      %11030 = vmatprep.subr.bf16.mxu0 0
      %11031 = vmatpush1.bf16.msra.mxu0 0
      %11032 = vmatprep.subr.bf16.mxu0 0
      %11033 = vmatpush1.bf16.msra.mxu0 0
      %11034 = vmatprep.subr.bf16.mxu0 0
      %11035 = vmatpush1.bf16.msra.mxu0 0
      %11036 = vmatprep.subr.bf16.mxu0 0
      %11037 = vmatpush1.bf16.msra.mxu0 0
      %11038 = vmatprep.subr.bf16.mxu0 0
      %11039 = vmatpush1.bf16.msra.mxu0 0
      %11040 = vmatprep.subr.bf16.mxu0 0
      %11041 = vmatpush1.bf16.msra.mxu0 0
      %11042 = vmatprep.subr.bf16.mxu0 0
      %11043 = vmatpush1.bf16.msra.mxu0 0
      %11044 = vmatprep.mubr.bf16.mxu0 0
      %11045 = vmatmul.mubr.bf16.gmra.mrb[0].mxu0 %v10959
      %v11046 = vpop.f32.mrb[0].mxu0
      %v11047 = vadd.f32 0.0, %v11046
      %v11048 = vpop.f32.mrb[0].mxu0
      %v11049 = vpop.f32.mrb[0].mxu0
      %v11050 = vadd.f32 0.0, %v11049
      %v11051 = vpop.f32.mrb[0].mxu0
      %11052 = vmatprep.mubr.bf16.mxu0 0
      %11053 = vmatmul.mubr.bf16.gmra.mrb[0].mxu0 %v10962
      %v11054 = vpop.f32.mrb[0].mxu0
      %v11055 = vadd.f32 0.0, %v11054
      %v11056 = vpop.f32.mrb[0].mxu0
      %v11057 = vpop.f32.mrb[0].mxu0
      %v11058 = vadd.f32 0.0, %v11057
      %v11059 = vpop.f32.mrb[0].mxu0
      %11060 = vmatprep.mubr.bf16.mxu0 0
      %11061 = vmatmul.mubr.bf16.gmra.mrb[0].mxu0 %v10965
      %v11062 = vpop.f32.mrb[0].mxu0
      %v11063 = vadd.f32 0.0, %v11062
      %v11064 = vpop.f32.mrb[0].mxu0
      %v11065 = vpop.f32.mrb[0].mxu0
      %v11066 = vadd.f32 0.0, %v11065
      %v11067 = vpop.f32.mrb[0].mxu0
      %11068 = vmatprep.mubr.bf16.mxu0 0
      %11069 = vmatmul.mubr.bf16.gmra.mrb[0].mxu0 %v10968
      %v11070 = vpop.f32.mrb[0].mxu0
      %v11071 = vadd.f32 0.0, %v11070
      %v11072 = vpop.f32.mrb[0].mxu0
      %v11073 = vpop.f32.mrb[0].mxu0
      %v11074 = vadd.f32 0.0, %v11073
      %v11075 = vpop.f32.mrb[0].mxu0
      %11076 = vmatprep.mubr.bf16.mxu0 0
      %11077 = vmatmul.mubr.bf16.gmra.mrb[0].mxu0 %v10971
      %v11078 = vpop.f32.mrb[0].mxu0
      %v11079 = vadd.f32 0.0, %v11078
      %v11080 = vpop.f32.mrb[0].mxu0
      %v11081 = vpop.f32.mrb[0].mxu0
      %v11082 = vadd.f32 0.0, %v11081
      %v11083 = vpop.f32.mrb[0].mxu0
      %11084 = vmatprep.mubr.bf16.mxu0 0
      %11085 = vmatmul.mubr.bf16.gmra.mrb[0].mxu0 %v10974
      %v11086 = vpop.f32.mrb[0].mxu0
      %v11087 = vadd.f32 0.0, %v11086
      %v11088 = vpop.f32.mrb[0].mxu0
      %v11089 = vpop.f32.mrb[0].mxu0
      %v11090 = vadd.f32 0.0, %v11089
      %v11091 = vpop.f32.mrb[0].mxu0
      %11092 = vmatprep.mubr.bf16.mxu0 0
      %11093 = vmatmul.mubr.bf16.gmra.mrb[0].mxu0 %v10977
      %v11094 = vpop.f32.mrb[0].mxu0
      %v11095 = vadd.f32 0.0, %v11094
      %v11096 = vpop.f32.mrb[0].mxu0
      %v11097 = vpop.f32.mrb[0].mxu0
      %v11098 = vadd.f32 0.0, %v11097
      %v11099 = vpop.f32.mrb[0].mxu0
      %11100 = vmatprep.mubr.bf16.mxu0 0
      %11101 = vmatmul.mubr.bf16.gmra.mrb[0].mxu0 %v10980
      %v11102 = vpop.f32.mrb[0].mxu0
      %v11103 = vadd.f32 0.0, %v11102
      %v11104 = vpop.f32.mrb[0].mxu0
      %v11105 = vpop.f32.mrb[0].mxu0
      %v11106 = vadd.f32 0.0, %v11105
      %v11107 = vpop.f32.mrb[0].mxu0
      %11108 = vmatprep.mubr.bf16.mxu0 0
      %11109 = vmatmul.mubr.bf16.gmra.mrb[0].mxu0 %v10983
      %v11110 = vpop.f32.mrb[0].mxu0
      %v11111 = vadd.f32 0.0, %v11110
      %v11112 = vpop.f32.mrb[0].mxu0
      %v11113 = vpop.f32.mrb[0].mxu0
      %v11114 = vadd.f32 0.0, %v11113
      %v11115 = vpop.f32.mrb[0].mxu0
      %11116 = vmatprep.mubr.bf16.mxu0 0
      %11117 = vmatmul.mubr.bf16.gmra.mrb[0].mxu0 %v10986
      %v11118 = vpop.f32.mrb[0].mxu0
      %v11119 = vadd.f32 0.0, %v11118
      %v11120 = vpop.f32.mrb[0].mxu0
      %v11121 = vpop.f32.mrb[0].mxu0
      %v11122 = vadd.f32 0.0, %v11121
      %v11123 = vpop.f32.mrb[0].mxu0
      %11124 = vmatprep.mubr.bf16.mxu0 0
      %11125 = vmatmul.mubr.bf16.gmra.mrb[0].mxu0 %v10989
      %v11126 = vpop.f32.mrb[0].mxu0
      %v11127 = vadd.f32 0.0, %v11126
      %v11128 = vpop.f32.mrb[0].mxu0
      %v11129 = vpop.f32.mrb[0].mxu0
      %v11130 = vadd.f32 0.0, %v11129
      %v11131 = vpop.f32.mrb[0].mxu0
      %11132 = vmatprep.mubr.bf16.mxu0 0
      %11133 = vmatmul.mubr.bf16.gmra.mrb[0].mxu0 %v10992
      %v11134 = vpop.f32.mrb[0].mxu0
      %v11135 = vadd.f32 0.0, %v11134
      %v11136 = vpop.f32.mrb[0].mxu0
      %v11137 = vpop.f32.mrb[0].mxu0
      %v11138 = vadd.f32 0.0, %v11137
      %v11139 = vpop.f32.mrb[0].mxu0
      %11140 = vmatprep.mubr.bf16.mxu0 0
      %11141 = vmatmul.mubr.bf16.gmra.mrb[0].mxu0 %v10995
      %v11142 = vpop.f32.mrb[0].mxu0
      %v11143 = vadd.f32 0.0, %v11142
      %v11144 = vpop.f32.mrb[0].mxu0
      %v11145 = vpop.f32.mrb[0].mxu0
      %v11146 = vadd.f32 0.0, %v11145
      %v11147 = vpop.f32.mrb[0].mxu0
      %11148 = vmatprep.mubr.bf16.mxu0 0
      %11149 = vmatmul.mubr.bf16.gmra.mrb[0].mxu0 %v10998
      %v11150 = vpop.f32.mrb[0].mxu0
      %v11151 = vadd.f32 0.0, %v11150
      %v11152 = vpop.f32.mrb[0].mxu0
      %v11153 = vpop.f32.mrb[0].mxu0
      %v11154 = vadd.f32 0.0, %v11153
      %v11155 = vpop.f32.mrb[0].mxu0
      %11156 = vmatprep.mubr.bf16.mxu0 0
      %11157 = vmatmul.mubr.bf16.gmra.mrb[0].mxu0 %v11001
      %v11158 = vpop.f32.mrb[0].mxu0
      %v11159 = vadd.f32 0.0, %v11158
      %v11160 = vpop.f32.mrb[0].mxu0
      %v11161 = vpop.f32.mrb[0].mxu0
      %v11162 = vadd.f32 0.0, %v11161
      %v11163 = vpop.f32.mrb[0].mxu0
      %11164 = vmatprep.mubr.bf16.mxu0 0
      %11165 = vmatmul.mubr.bf16.gmra.mrb[0].mxu0 %v11004
      %v11166 = vpop.f32.mrb[0].mxu0
      %v11167 = vadd.f32 0.0, %v11166
      %v11168 = vpop.f32.mrb[0].mxu0
      %v11169 = vpop.f32.mrb[0].mxu0
      %v11170 = vadd.f32 0.0, %v11169
      %v11171 = vpop.f32.mrb[0].mxu0
      %11172 = vmatprep.mubr.bf16.mxu0 0
      %11173 = vmatmul.mubr.bf16.gmra.mrb[0].mxu0 %v11007
      %v11174 = vpop.f32.mrb[0].mxu0
      %v11175 = vadd.f32 0.0, %v11174
      %v11176 = vpop.f32.mrb[0].mxu0
      %v11177 = vpop.f32.mrb[0].mxu0
      %v11178 = vadd.f32 0.0, %v11177
      %v11179 = vpop.f32.mrb[0].mxu0
      %11180 = vmatprep.mubr.bf16.mxu0 0
      %11181 = vmatmul.mubr.bf16.gmra.mrb[0].mxu0 %v11010
      %v11182 = vpop.f32.mrb[0].mxu0
      %v11183 = vadd.f32 0.0, %v11182
      %v11184 = vpop.f32.mrb[0].mxu0
      %v11185 = vpop.f32.mrb[0].mxu0
      %v11186 = vadd.f32 0.0, %v11185
      %v11187 = vpop.f32.mrb[0].mxu0
      %11188 = vdwg.mxu0
      %v11189 = vadd.f32 %v10873, %v11047
      %v11190 = vadd.f32 %v10874, %v11050
      %v11191 = vadd.f32 %v10875, %v11055
      %v11192 = vadd.f32 %v10876, %v11058
      %v11193 = vadd.f32 %v10877, %v11063
      %v11194 = vadd.f32 %v10878, %v11066
      %v11195 = vadd.f32 %v10879, %v11071
      %v11196 = vadd.f32 %v10880, %v11074
      %v11197 = vadd.f32 %v10881, %v11079
      %v11198 = vadd.f32 %v10882, %v11082
      %v11199 = vadd.f32 %v10883, %v11087
      %v11200 = vadd.f32 %v10884, %v11090
      %v11201 = vadd.f32 %v10885, %v11095
      %v11202 = vadd.f32 %v10886, %v11098
      %v11203 = vadd.f32 %v10887, %v11103
      %v11204 = vadd.f32 %v10888, %v11106
      %v11205 = vadd.f32 %v10889, %v11111
      %v11206 = vadd.f32 %v10890, %v11114
      %v11207 = vadd.f32 %v10891, %v11119
      %v11208 = vadd.f32 %v10892, %v11122
      %v11209 = vadd.f32 %v10893, %v11127
      %v11210 = vadd.f32 %v10894, %v11130
      %v11211 = vadd.f32 %v10895, %v11135
      %v11212 = vadd.f32 %v10896, %v11138
      %v11213 = vadd.f32 %v10897, %v11143
      %v11214 = vadd.f32 %v10898, %v11146
      %v11215 = vadd.f32 %v10899, %v11151
      %v11216 = vadd.f32 %v10900, %v11154
      %v11217 = vadd.f32 %v10901, %v11159
      %v11218 = vadd.f32 %v10902, %v11162
      %v11219 = vadd.f32 %v10903, %v11167
      %v11220 = vadd.f32 %v10904, %v11170
      %v11221 = vadd.f32 %v10905, %v11175
      %v11222 = vadd.f32 %v10906, %v11178
      %v11223 = vadd.f32 %v10907, %v11183
      %v11224 = vadd.f32 %v10908, %v11186
      %v11225 = vld [vmem:[%s4] sm:$0xff]
      %v11226 = vld [vmem:[%s4 + $0x8] sm:$0xff]
      %v11227 = vld [vmem:[%s4 + $0x10] sm:$0xff]
      %v11228 = vld [vmem:[%s4 + $0x18] sm:$0xff]
      %v11229 = vld [vmem:[%s4 + $0x20] sm:$0xff]
      %v11230 = vld [vmem:[%s4 + $0x28] sm:$0xff]
      %v11231 = vld [vmem:[%s4 + $0x30] sm:$0xff]
      %v11232 = vld [vmem:[%s4 + $0x38] sm:$0xff]
      %v11233 = vld [vmem:[%s4 + $0x40] sm:$0xff]
      %v11234 = vld [vmem:[%s4 + $0x48] sm:$0xff]
      %v11235 = vld [vmem:[%s4 + $0x50] sm:$0xff]
      %v11236 = vld [vmem:[%s4 + $0x58] sm:$0xff]
      %v11237 = vld [vmem:[%s4 + $0x60] sm:$0xff]
      %v11238 = vld [vmem:[%s4 + $0x68] sm:$0xff]
      %v11239 = vld [vmem:[%s4 + $0x70] sm:$0xff]
      %v11240 = vld [vmem:[%s4 + $0x78] sm:$0xff]
      %v11241 = vld [vmem:[%s4 + $0x80] sm:$0xff]
      %v11242 = vld [vmem:[%s4 + $0x88] sm:$0xff]
      %v11243 = vld [vmem:[%s4 + $0x90] sm:$0xff]
      %v11244 = vld [vmem:[%s4 + $0x98] sm:$0xff]
      %v11245 = vld [vmem:[%s4 + $0xa0] sm:$0xff]
      %v11246 = vld [vmem:[%s4 + $0xa8] sm:$0xff]
      %v11247 = vld [vmem:[%s4 + $0xb0] sm:$0xff]
      %v11248 = vld [vmem:[%s4 + $0xb8] sm:$0xff]
      %v11249 = vld [vmem:[%s4 + $0xc0] sm:$0xff]
      %v11250 = vld [vmem:[%s4 + $0xc8] sm:$0xff]
      %v11251 = vld [vmem:[%s4 + $0xd0] sm:$0xff]
      %v11252 = vld [vmem:[%s4 + $0xd8] sm:$0xff]
      %v11253 = vld [vmem:[%s4 + $0xe0] sm:$0xff]
      %v11254 = vld [vmem:[%s4 + $0xe8] sm:$0xff]
      %v11255 = vld [vmem:[%s4 + $0xf0] sm:$0xff]
      %v11256 = vld [vmem:[%s4 + $0xf8] sm:$0xff]
      %v11257 = vld [vmem:[%s4 + $0x100] sm:$0xff]
      %v11258 = vld [vmem:[%s4 + $0x108] sm:$0xff]
      %v11259 = vld [vmem:[%s4 + $0x110] sm:$0xff]
      %v11260 = vld [vmem:[%s4 + $0x118] sm:$0xff]
      %11262 = vset.pattern.permute.xlu0 0
      %11263 = vperm.xlu0 %11262, %v11225
      %v11264 = vpop.permute.xlu0 %11263
      %11267 = vset.pattern.permute.xlu0 0
      %11268 = vperm.xlu0 %11267, %v11226
      %v11269 = vpop.permute.xlu0 %11268
      %11272 = vset.pattern.permute.xlu0 0
      %11273 = vperm.xlu0 %11272, %v11227
      %v11274 = vpop.permute.xlu0 %11273
      %11277 = vset.pattern.permute.xlu0 0
      %11278 = vperm.xlu0 %11277, %v11228
      %v11279 = vpop.permute.xlu0 %11278
      %11282 = vset.pattern.permute.xlu0 0
      %11283 = vperm.xlu0 %11282, %v11229
      %v11284 = vpop.permute.xlu0 %11283
      %11287 = vset.pattern.permute.xlu0 0
      %11288 = vperm.xlu0 %11287, %v11230
      %v11289 = vpop.permute.xlu0 %11288
      %11292 = vset.pattern.permute.xlu0 0
      %11293 = vperm.xlu0 %11292, %v11231
      %v11294 = vpop.permute.xlu0 %11293
      %11297 = vset.pattern.permute.xlu0 0
      %11298 = vperm.xlu0 %11297, %v11232
      %v11299 = vpop.permute.xlu0 %11298
      %11302 = vset.pattern.permute.xlu0 0
      %11303 = vperm.xlu0 %11302, %v11233
      %v11304 = vpop.permute.xlu0 %11303
      %11307 = vset.pattern.permute.xlu0 0
      %11308 = vperm.xlu0 %11307, %v11234
      %v11309 = vpop.permute.xlu0 %11308
      %11312 = vset.pattern.permute.xlu0 0
      %11313 = vperm.xlu0 %11312, %v11235
      %v11314 = vpop.permute.xlu0 %11313
      %11317 = vset.pattern.permute.xlu0 0
      %11318 = vperm.xlu0 %11317, %v11236
      %v11319 = vpop.permute.xlu0 %11318
      %11322 = vset.pattern.permute.xlu0 0
      %11323 = vperm.xlu0 %11322, %v11237
      %v11324 = vpop.permute.xlu0 %11323
      %11327 = vset.pattern.permute.xlu0 0
      %11328 = vperm.xlu0 %11327, %v11238
      %v11329 = vpop.permute.xlu0 %11328
      %11332 = vset.pattern.permute.xlu0 0
      %11333 = vperm.xlu0 %11332, %v11239
      %v11334 = vpop.permute.xlu0 %11333
      %11337 = vset.pattern.permute.xlu0 0
      %11338 = vperm.xlu0 %11337, %v11240
      %v11339 = vpop.permute.xlu0 %11338
      %11342 = vset.pattern.permute.xlu0 0
      %11343 = vperm.xlu0 %11342, %v11241
      %v11344 = vpop.permute.xlu0 %11343
      %11347 = vset.pattern.permute.xlu0 0
      %11348 = vperm.xlu0 %11347, %v11242
      %v11349 = vpop.permute.xlu0 %11348
      %11352 = vset.pattern.permute.xlu0 0
      %11353 = vperm.xlu0 %11352, %v11243
      %v11354 = vpop.permute.xlu0 %11353
      %11357 = vset.pattern.permute.xlu0 0
      %11358 = vperm.xlu0 %11357, %v11244
      %v11359 = vpop.permute.xlu0 %11358
      %11362 = vset.pattern.permute.xlu0 0
      %11363 = vperm.xlu0 %11362, %v11245
      %v11364 = vpop.permute.xlu0 %11363
      %11367 = vset.pattern.permute.xlu0 0
      %11368 = vperm.xlu0 %11367, %v11246
      %v11369 = vpop.permute.xlu0 %11368
      %11372 = vset.pattern.permute.xlu0 0
      %11373 = vperm.xlu0 %11372, %v11247
      %v11374 = vpop.permute.xlu0 %11373
      %11377 = vset.pattern.permute.xlu0 0
      %11378 = vperm.xlu0 %11377, %v11248
      %v11379 = vpop.permute.xlu0 %11378
      %11382 = vset.pattern.permute.xlu0 0
      %11383 = vperm.xlu0 %11382, %v11249
      %v11384 = vpop.permute.xlu0 %11383
      %11387 = vset.pattern.permute.xlu0 0
      %11388 = vperm.xlu0 %11387, %v11250
      %v11389 = vpop.permute.xlu0 %11388
      %11392 = vset.pattern.permute.xlu0 0
      %11393 = vperm.xlu0 %11392, %v11251
      %v11394 = vpop.permute.xlu0 %11393
      %11397 = vset.pattern.permute.xlu0 0
      %11398 = vperm.xlu0 %11397, %v11252
      %v11399 = vpop.permute.xlu0 %11398
      %11402 = vset.pattern.permute.xlu0 0
      %11403 = vperm.xlu0 %11402, %v11253
      %v11404 = vpop.permute.xlu0 %11403
      %11407 = vset.pattern.permute.xlu0 0
      %11408 = vperm.xlu0 %11407, %v11254
      %v11409 = vpop.permute.xlu0 %11408
      %11412 = vset.pattern.permute.xlu0 0
      %11413 = vperm.xlu0 %11412, %v11255
      %v11414 = vpop.permute.xlu0 %11413
      %11417 = vset.pattern.permute.xlu0 0
      %11418 = vperm.xlu0 %11417, %v11256
      %v11419 = vpop.permute.xlu0 %11418
      %11422 = vset.pattern.permute.xlu0 0
      %11423 = vperm.xlu0 %11422, %v11257
      %v11424 = vpop.permute.xlu0 %11423
      %11427 = vset.pattern.permute.xlu0 0
      %11428 = vperm.xlu0 %11427, %v11258
      %v11429 = vpop.permute.xlu0 %11428
      %11432 = vset.pattern.permute.xlu0 0
      %11433 = vperm.xlu0 %11432, %v11259
      %v11434 = vpop.permute.xlu0 %11433
      %11437 = vset.pattern.permute.xlu0 0
      %11438 = vperm.xlu0 %11437, %v11260
      %v11439 = vpop.permute.xlu0 %11438
      %v11441 = vmul.f32 %v11189, %v11264
      %v11442 = vmul.f32 %v11190, %v11269
      %v11443 = vmul.f32 %v11191, %v11274
      %v11444 = vmul.f32 %v11192, %v11279
      %v11445 = vmul.f32 %v11193, %v11284
      %v11446 = vmul.f32 %v11194, %v11289
      %v11447 = vmul.f32 %v11195, %v11294
      %v11448 = vmul.f32 %v11196, %v11299
      %v11449 = vmul.f32 %v11197, %v11304
      %v11450 = vmul.f32 %v11198, %v11309
      %v11451 = vmul.f32 %v11199, %v11314
      %v11452 = vmul.f32 %v11200, %v11319
      %v11453 = vmul.f32 %v11201, %v11324
      %v11454 = vmul.f32 %v11202, %v11329
      %v11455 = vmul.f32 %v11203, %v11334
      %v11456 = vmul.f32 %v11204, %v11339
      %v11457 = vmul.f32 %v11205, %v11344
      %v11458 = vmul.f32 %v11206, %v11349
      %v11459 = vmul.f32 %v11207, %v11354
      %v11460 = vmul.f32 %v11208, %v11359
      %v11461 = vmul.f32 %v11209, %v11364
      %v11462 = vmul.f32 %v11210, %v11369
      %v11463 = vmul.f32 %v11211, %v11374
      %v11464 = vmul.f32 %v11212, %v11379
      %v11465 = vmul.f32 %v11213, %v11384
      %v11466 = vmul.f32 %v11214, %v11389
      %v11467 = vmul.f32 %v11215, %v11394
      %v11468 = vmul.f32 %v11216, %v11399
      %v11469 = vmul.f32 %v11217, %v11404
      %v11470 = vmul.f32 %v11218, %v11409
      %v11471 = vmul.f32 %v11219, %v11414
      %v11472 = vmul.f32 %v11220, %v11419
      %v11473 = vmul.f32 %v11221, %v11424
      %v11474 = vmul.f32 %v11222, %v11429
      %v11475 = vmul.f32 %v11223, %v11434
      %v11476 = vmul.f32 %v11224, %v11439
      %v11477 = vpack.c.bf16 %v11442, %v11441
      %v11478 = vpack.c.bf16 %v11444, %v11443
      %v11479 = vpack.c.bf16 %v11446, %v11445
      %v11480 = vpack.c.bf16 %v11448, %v11447
      %v11481 = vpack.c.bf16 %v11450, %v11449
      %v11482 = vpack.c.bf16 %v11452, %v11451
      %v11483 = vpack.c.bf16 %v11454, %v11453
      %v11484 = vpack.c.bf16 %v11456, %v11455
      %v11485 = vpack.c.bf16 %v11458, %v11457
      %v11486 = vpack.c.bf16 %v11460, %v11459
      %v11487 = vpack.c.bf16 %v11462, %v11461
      %v11488 = vpack.c.bf16 %v11464, %v11463
      %v11489 = vpack.c.bf16 %v11466, %v11465
      %v11490 = vpack.c.bf16 %v11468, %v11467
      %v11491 = vpack.c.bf16 %v11470, %v11469
      %v11492 = vpack.c.bf16 %v11472, %v11471
      %v11493 = vpack.c.bf16 %v11474, %v11473
      %v11494 = vpack.c.bf16 %v11476, %v11475
      %v11513 = vunpack.c.l.b16 %v11477
      %v11514 = vunpack.c.h.b16 %v11477
      %v11515 = vunpack.c.l.b16 %v11478
      %v11516 = vunpack.c.h.b16 %v11478
      %v11517 = vunpack.c.l.b16 %v11479
      %v11518 = vunpack.c.h.b16 %v11479
      %v11519 = vunpack.c.l.b16 %v11480
      %v11520 = vunpack.c.h.b16 %v11480
      %v11521 = vunpack.c.l.b16 %v11481
      %v11522 = vunpack.c.h.b16 %v11481
      %v11523 = vunpack.c.l.b16 %v11482
      %v11524 = vunpack.c.h.b16 %v11482
      %v11525 = vunpack.c.l.b16 %v11483
      %v11526 = vunpack.c.h.b16 %v11483
      %v11527 = vunpack.c.l.b16 %v11484
      %v11528 = vunpack.c.h.b16 %v11484
      %v11529 = vunpack.c.l.b16 %v11485
      %v11530 = vunpack.c.h.b16 %v11485
      %v11531 = vunpack.c.l.b16 %v11486
      %v11532 = vunpack.c.h.b16 %v11486
      %v11533 = vunpack.c.l.b16 %v11487
      %v11534 = vunpack.c.h.b16 %v11487
      %v11535 = vunpack.c.l.b16 %v11488
      %v11536 = vunpack.c.h.b16 %v11488
      %v11537 = vunpack.c.l.b16 %v11489
      %v11538 = vunpack.c.h.b16 %v11489
      %v11539 = vunpack.c.l.b16 %v11490
      %v11540 = vunpack.c.h.b16 %v11490
      %v11541 = vunpack.c.l.b16 %v11491
      %v11542 = vunpack.c.h.b16 %v11491
      %v11543 = vunpack.c.l.b16 %v11492
      %v11544 = vunpack.c.h.b16 %v11492
      %v11545 = vunpack.c.l.b16 %v11493
      %v11546 = vunpack.c.h.b16 %v11493
      %v11547 = vunpack.c.l.b16 %v11494
      %v11548 = vunpack.c.h.b16 %v11494
      %v11549 = vpack.c.b16 %v11513, %v11513
      %v11550 = vpack.c.b16 %v11514, %v11514
      %v11551 = vpack.c.b16 %v11515, %v11515
      %v11552 = vpack.c.b16 %v11516, %v11516
      %v11553 = vpack.c.b16 %v11517, %v11517
      %v11554 = vpack.c.b16 %v11518, %v11518
      %v11555 = vpack.c.b16 %v11519, %v11519
      %v11556 = vpack.c.b16 %v11520, %v11520
      %v11557 = vpack.c.b16 %v11521, %v11521
      %v11558 = vpack.c.b16 %v11522, %v11522
      %v11559 = vpack.c.b16 %v11523, %v11523
      %v11560 = vpack.c.b16 %v11524, %v11524
      %v11561 = vpack.c.b16 %v11525, %v11525
      %v11562 = vpack.c.b16 %v11526, %v11526
      %v11563 = vpack.c.b16 %v11527, %v11527
      %v11564 = vpack.c.b16 %v11528, %v11528
      %v11565 = vpack.c.b16 %v11529, %v11529
      %v11566 = vpack.c.b16 %v11530, %v11530
      %v11567 = vpack.c.b16 %v11531, %v11531
      %v11568 = vpack.c.b16 %v11532, %v11532
      %v11569 = vpack.c.b16 %v11533, %v11533
      %v11570 = vpack.c.b16 %v11534, %v11534
      %v11571 = vpack.c.b16 %v11535, %v11535
      %v11572 = vpack.c.b16 %v11536, %v11536
      %v11573 = vpack.c.b16 %v11537, %v11537
      %v11574 = vpack.c.b16 %v11538, %v11538
      %v11575 = vpack.c.b16 %v11539, %v11539
      %v11576 = vpack.c.b16 %v11540, %v11540
      %v11577 = vpack.c.b16 %v11541, %v11541
      %v11578 = vpack.c.b16 %v11542, %v11542
      %v11579 = vpack.c.b16 %v11543, %v11543
      %v11580 = vpack.c.b16 %v11544, %v11544
      %v11581 = vpack.c.b16 %v11545, %v11545
      %v11582 = vpack.c.b16 %v11546, %v11546
      %v11583 = vpack.c.b16 %v11547, %v11547
      %v11584 = vpack.c.b16 %v11548, %v11548
      %vm11621 = vcmask 257024
      %11622 = vst.msk [vmem:[%s376] sm:$0xf] %vm11621, %v11549
      %11623 = vst.msk [vmem:[%s376 + $0x4] sm:$0xf] %vm11621, %v11550
      %11624 = vst.msk [vmem:[%s376 + $0x8] sm:$0xf] %vm11621, %v11551
      %11625 = vst.msk [vmem:[%s376 + $0xc] sm:$0xf] %vm11621, %v11552
      %11626 = vst.msk [vmem:[%s376 + $0x10] sm:$0xf] %vm11621, %v11553
      %11627 = vst.msk [vmem:[%s376 + $0x14] sm:$0xf] %vm11621, %v11554
      %11628 = vst.msk [vmem:[%s376 + $0x18] sm:$0xf] %vm11621, %v11555
      %11629 = vst.msk [vmem:[%s376 + $0x1c] sm:$0xf] %vm11621, %v11556
      %11630 = vst.msk [vmem:[%s376 + $0x20] sm:$0xf] %vm11621, %v11557
      %11631 = vst.msk [vmem:[%s376 + $0x24] sm:$0xf] %vm11621, %v11558
      %11632 = vst.msk [vmem:[%s376 + $0x28] sm:$0xf] %vm11621, %v11559
      %11633 = vst.msk [vmem:[%s376 + $0x2c] sm:$0xf] %vm11621, %v11560
      %11634 = vst.msk [vmem:[%s376 + $0x30] sm:$0xf] %vm11621, %v11561
      %11635 = vst.msk [vmem:[%s376 + $0x34] sm:$0xf] %vm11621, %v11562
      %11636 = vst.msk [vmem:[%s376 + $0x38] sm:$0xf] %vm11621, %v11563
      %11637 = vst.msk [vmem:[%s376 + $0x3c] sm:$0xf] %vm11621, %v11564
      %11638 = vst.msk [vmem:[%s376 + $0x40] sm:$0xf] %vm11621, %v11565
      %11639 = vst.msk [vmem:[%s376 + $0x44] sm:$0xf] %vm11621, %v11566
      %11640 = vst.msk [vmem:[%s376 + $0x48] sm:$0xf] %vm11621, %v11567
      %11641 = vst.msk [vmem:[%s376 + $0x4c] sm:$0xf] %vm11621, %v11568
      %11642 = vst.msk [vmem:[%s376 + $0x50] sm:$0xf] %vm11621, %v11569
      %11643 = vst.msk [vmem:[%s376 + $0x54] sm:$0xf] %vm11621, %v11570
      %11644 = vst.msk [vmem:[%s376 + $0x58] sm:$0xf] %vm11621, %v11571
      %11645 = vst.msk [vmem:[%s376 + $0x5c] sm:$0xf] %vm11621, %v11572
      %11646 = vst.msk [vmem:[%s376 + $0x60] sm:$0xf] %vm11621, %v11573
      %11647 = vst.msk [vmem:[%s376 + $0x64] sm:$0xf] %vm11621, %v11574
      %11648 = vst.msk [vmem:[%s376 + $0x68] sm:$0xf] %vm11621, %v11575
      %11649 = vst.msk [vmem:[%s376 + $0x6c] sm:$0xf] %vm11621, %v11576
      %11650 = vst.msk [vmem:[%s376 + $0x70] sm:$0xf] %vm11621, %v11577
      %11651 = vst.msk [vmem:[%s376 + $0x74] sm:$0xf] %vm11621, %v11578
      %11652 = vst.msk [vmem:[%s376 + $0x78] sm:$0xf] %vm11621, %v11579
      %11653 = vst.msk [vmem:[%s376 + $0x7c] sm:$0xf] %vm11621, %v11580
      %11654 = vst.msk [vmem:[%s376 + $0x80] sm:$0xf] %vm11621, %v11581
      %11655 = vst.msk [vmem:[%s376 + $0x84] sm:$0xf] %vm11621, %v11582
      %11656 = vst.msk [vmem:[%s376 + $0x88] sm:$0xf] %vm11621, %v11583
      %11657 = vst.msk [vmem:[%s376 + $0x8c] sm:$0xf] %vm11621, %v11584
      %vm11658 = vcmask 261120
      %v11659 = vsel %vm11658, %v11441, 0.0
      %v11660 = vsel %vm11658, %v11442, 0.0
      %v11661 = vadd.f32 %v11659, %v11660
      %v11662 = vsel %vm11658, %v11443, 0.0
      %v11663 = vadd.f32 %v11661, %v11662
      %v11664 = vsel %vm11658, %v11444, 0.0
      %v11665 = vadd.f32 %v11663, %v11664
      %v11666 = vsel %vm11658, %v11445, 0.0
      %v11667 = vadd.f32 %v11665, %v11666
      %v11668 = vsel %vm11658, %v11446, 0.0
      %v11669 = vadd.f32 %v11667, %v11668
      %v11670 = vsel %vm11658, %v11447, 0.0
      %v11671 = vadd.f32 %v11669, %v11670
      %v11672 = vsel %vm11658, %v11448, 0.0
      %v11673 = vadd.f32 %v11671, %v11672
      %v11674 = vsel %vm11658, %v11449, 0.0
      %v11675 = vadd.f32 %v11673, %v11674
      %v11676 = vsel %vm11658, %v11450, 0.0
      %v11677 = vadd.f32 %v11675, %v11676
      %v11678 = vsel %vm11658, %v11451, 0.0
      %v11679 = vadd.f32 %v11677, %v11678
      %v11680 = vsel %vm11658, %v11452, 0.0
      %v11681 = vadd.f32 %v11679, %v11680
      %v11682 = vsel %vm11658, %v11453, 0.0
      %v11683 = vadd.f32 %v11681, %v11682
      %v11684 = vsel %vm11658, %v11454, 0.0
      %v11685 = vadd.f32 %v11683, %v11684
      %v11686 = vsel %vm11658, %v11455, 0.0
      %v11687 = vadd.f32 %v11685, %v11686
      %v11688 = vsel %vm11658, %v11456, 0.0
      %v11689 = vadd.f32 %v11687, %v11688
      %v11690 = vsel %vm11658, %v11457, 0.0
      %v11691 = vadd.f32 %v11689, %v11690
      %v11692 = vsel %vm11658, %v11458, 0.0
      %v11693 = vadd.f32 %v11691, %v11692
      %v11694 = vsel %vm11658, %v11459, 0.0
      %v11695 = vadd.f32 %v11693, %v11694
      %v11696 = vsel %vm11658, %v11460, 0.0
      %v11697 = vadd.f32 %v11695, %v11696
      %v11698 = vsel %vm11658, %v11461, 0.0
      %v11699 = vadd.f32 %v11697, %v11698
      %v11700 = vsel %vm11658, %v11462, 0.0
      %v11701 = vadd.f32 %v11699, %v11700
      %v11702 = vsel %vm11658, %v11463, 0.0
      %v11703 = vadd.f32 %v11701, %v11702
      %v11704 = vsel %vm11658, %v11464, 0.0
      %v11705 = vadd.f32 %v11703, %v11704
      %v11706 = vsel %vm11658, %v11465, 0.0
      %v11707 = vadd.f32 %v11705, %v11706
      %v11708 = vsel %vm11658, %v11466, 0.0
      %v11709 = vadd.f32 %v11707, %v11708
      %v11710 = vsel %vm11658, %v11467, 0.0
      %v11711 = vadd.f32 %v11709, %v11710
      %v11712 = vsel %vm11658, %v11468, 0.0
      %v11713 = vadd.f32 %v11711, %v11712
      %v11714 = vsel %vm11658, %v11469, 0.0
      %v11715 = vadd.f32 %v11713, %v11714
      %v11716 = vsel %vm11658, %v11470, 0.0
      %v11717 = vadd.f32 %v11715, %v11716
      %v11718 = vsel %vm11658, %v11471, 0.0
      %v11719 = vadd.f32 %v11717, %v11718
      %v11720 = vsel %vm11658, %v11472, 0.0
      %v11721 = vadd.f32 %v11719, %v11720
      %v11722 = vsel %vm11658, %v11473, 0.0
      %v11723 = vadd.f32 %v11721, %v11722
      %v11724 = vsel %vm11658, %v11474, 0.0
      %v11725 = vadd.f32 %v11723, %v11724
      %v11726 = vsel %vm11658, %v11475, 0.0
      %v11727 = vadd.f32 %v11725, %v11726
      %v11728 = vsel %vm11658, %v11476, 0.0
      %v11729 = vadd.f32 %v11727, %v11728
      %v11730 = vrot.slane %v11729, 4
      %v11731 = vadd.f32 %v11729, %v11730
      %v11732 = vrot.slane %v11731, 2
      %v11733 = vadd.f32 %v11731, %v11732
      %v11734 = vrot.slane %v11733, 1
      %v11735 = vadd.f32 %v11733, %v11734
      %v11736 = vmul.f32 %v11441, %v11441
      %v11737 = vmul.f32 %v11442, %v11442
      %v11738 = vmul.f32 %v11443, %v11443
      %v11739 = vmul.f32 %v11444, %v11444
      %v11740 = vmul.f32 %v11445, %v11445
      %v11741 = vmul.f32 %v11446, %v11446
      %v11742 = vmul.f32 %v11447, %v11447
      %v11743 = vmul.f32 %v11448, %v11448
      %v11744 = vmul.f32 %v11449, %v11449
      %v11745 = vmul.f32 %v11450, %v11450
      %v11746 = vmul.f32 %v11451, %v11451
      %v11747 = vmul.f32 %v11452, %v11452
      %v11748 = vmul.f32 %v11453, %v11453
      %v11749 = vmul.f32 %v11454, %v11454
      %v11750 = vmul.f32 %v11455, %v11455
      %v11751 = vmul.f32 %v11456, %v11456
      %v11752 = vmul.f32 %v11457, %v11457
      %v11753 = vmul.f32 %v11458, %v11458
      %v11754 = vmul.f32 %v11459, %v11459
      %v11755 = vmul.f32 %v11460, %v11460
      %v11756 = vmul.f32 %v11461, %v11461
      %v11757 = vmul.f32 %v11462, %v11462
      %v11758 = vmul.f32 %v11463, %v11463
      %v11759 = vmul.f32 %v11464, %v11464
      %v11760 = vmul.f32 %v11465, %v11465
      %v11761 = vmul.f32 %v11466, %v11466
      %v11762 = vmul.f32 %v11467, %v11467
      %v11763 = vmul.f32 %v11468, %v11468
      %v11764 = vmul.f32 %v11469, %v11469
      %v11765 = vmul.f32 %v11470, %v11470
      %v11766 = vmul.f32 %v11471, %v11471
      %v11767 = vmul.f32 %v11472, %v11472
      %v11768 = vmul.f32 %v11473, %v11473
      %v11769 = vmul.f32 %v11474, %v11474
      %v11770 = vmul.f32 %v11475, %v11475
      %v11771 = vmul.f32 %v11476, %v11476
      %v11772 = vsel %vm11658, %v11736, 0.0
      %v11773 = vsel %vm11658, %v11737, 0.0
      %v11774 = vadd.f32 %v11772, %v11773
      %v11775 = vsel %vm11658, %v11738, 0.0
      %v11776 = vadd.f32 %v11774, %v11775
      %v11777 = vsel %vm11658, %v11739, 0.0
      %v11778 = vadd.f32 %v11776, %v11777
      %v11779 = vsel %vm11658, %v11740, 0.0
      %v11780 = vadd.f32 %v11778, %v11779
      %v11781 = vsel %vm11658, %v11741, 0.0
      %v11782 = vadd.f32 %v11780, %v11781
      %v11783 = vsel %vm11658, %v11742, 0.0
      %v11784 = vadd.f32 %v11782, %v11783
      %v11785 = vsel %vm11658, %v11743, 0.0
      %v11786 = vadd.f32 %v11784, %v11785
      %v11787 = vsel %vm11658, %v11744, 0.0
      %v11788 = vadd.f32 %v11786, %v11787
      %v11789 = vsel %vm11658, %v11745, 0.0
      %v11790 = vadd.f32 %v11788, %v11789
      %v11791 = vsel %vm11658, %v11746, 0.0
      %v11792 = vadd.f32 %v11790, %v11791
      %v11793 = vsel %vm11658, %v11747, 0.0
      %v11794 = vadd.f32 %v11792, %v11793
      %v11795 = vsel %vm11658, %v11748, 0.0
      %v11796 = vadd.f32 %v11794, %v11795
      %v11797 = vsel %vm11658, %v11749, 0.0
      %v11798 = vadd.f32 %v11796, %v11797
      %v11799 = vsel %vm11658, %v11750, 0.0
      %v11800 = vadd.f32 %v11798, %v11799
      %v11801 = vsel %vm11658, %v11751, 0.0
      %v11802 = vadd.f32 %v11800, %v11801
      %v11803 = vsel %vm11658, %v11752, 0.0
      %v11804 = vadd.f32 %v11802, %v11803
      %v11805 = vsel %vm11658, %v11753, 0.0
      %v11806 = vadd.f32 %v11804, %v11805
      %v11807 = vsel %vm11658, %v11754, 0.0
      %v11808 = vadd.f32 %v11806, %v11807
      %v11809 = vsel %vm11658, %v11755, 0.0
      %v11810 = vadd.f32 %v11808, %v11809
      %v11811 = vsel %vm11658, %v11756, 0.0
      %v11812 = vadd.f32 %v11810, %v11811
      %v11813 = vsel %vm11658, %v11757, 0.0
      %v11814 = vadd.f32 %v11812, %v11813
      %v11815 = vsel %vm11658, %v11758, 0.0
      %v11816 = vadd.f32 %v11814, %v11815
      %v11817 = vsel %vm11658, %v11759, 0.0
      %v11818 = vadd.f32 %v11816, %v11817
      %v11819 = vsel %vm11658, %v11760, 0.0
      %v11820 = vadd.f32 %v11818, %v11819
      %v11821 = vsel %vm11658, %v11761, 0.0
      %v11822 = vadd.f32 %v11820, %v11821
      %v11823 = vsel %vm11658, %v11762, 0.0
      %v11824 = vadd.f32 %v11822, %v11823
      %v11825 = vsel %vm11658, %v11763, 0.0
      %v11826 = vadd.f32 %v11824, %v11825
      %v11827 = vsel %vm11658, %v11764, 0.0
      %v11828 = vadd.f32 %v11826, %v11827
      %v11829 = vsel %vm11658, %v11765, 0.0
      %v11830 = vadd.f32 %v11828, %v11829
      %v11831 = vsel %vm11658, %v11766, 0.0
      %v11832 = vadd.f32 %v11830, %v11831
      %v11833 = vsel %vm11658, %v11767, 0.0
      %v11834 = vadd.f32 %v11832, %v11833
      %v11835 = vsel %vm11658, %v11768, 0.0
      %v11836 = vadd.f32 %v11834, %v11835
      %v11837 = vsel %vm11658, %v11769, 0.0
      %v11838 = vadd.f32 %v11836, %v11837
      %v11839 = vsel %vm11658, %v11770, 0.0
      %v11840 = vadd.f32 %v11838, %v11839
      %v11841 = vsel %vm11658, %v11771, 0.0
      %v11842 = vadd.f32 %v11840, %v11841
      %v11843 = vrot.slane %v11842, 4
      %v11844 = vadd.f32 %v11842, %v11843
      %v11845 = vrot.slane %v11844, 2
      %v11846 = vadd.f32 %v11844, %v11845
      %v11847 = vrot.slane %v11846, 1
      %v11848 = vadd.f32 %v11846, %v11847
      %vm11849 = vcmask 1040384
      %v11850 = vsel %vm11849, %v11735, %v11848
      %p11851 = scmp.eq.s32.totalorder %s23, 0
      // Predicated region
      $region41: #{general_conv3d_forward.2} parent=39 // pred_check
        %p11852 = pneg %p11851
      $region42: #{general_conv3d_forward.2} parent=39 // pred_check_branch
        %11854 = sbr.rel (%p11852) target = $region44
      $region43: #{general_conv3d_forward.2} parent=39 // pred_region
        %vm11855 = vcmask 254976
        %11856 = vst.msk [vmem:[%s380] sm:$0x3] %vm11855, 0.0
      $region44: #{general_conv3d_forward.2} parent=39 // pred_fallthru
        _
      %v11857 = vld [vmem:[%s380] sm:$0x3]
      %v11858 = vadd.f32 %v11857, %v11850
      %vm11859 = vcmask 254976
      %11860 = vst.msk [vmem:[%s380] sm:$0x3] %vm11859, %v11858
      %p11861 = scmp.lt.s32.totalorder %s22, 1
      %s11862 = scalar_select %p11861, %s22, 1
      %p11863 = scmp.lt.s32.totalorder %s23, 15
      %s11864 = scalar_select %p11863, %s23, 15
      %s11865 = smul.addr %s11864, 36
      %s11866 = smul.addr %s11862, 576
      %s11867 = sadd.s32 %s11865, %s11866
      %s11868 = smul.addr %s11867, 4
      %s11869 = scalar_lea.vmem %s5, %s11868
      %p11870 = scmp.lt.s32.totalorder %s22, 1
      %s11871 = scalar_select %p11870, %s22, 1
      %s11872 = smul.addr %s11871, 2
      %s11873 = scalar_lea.vmem %s6, %s11872
      // Predicated region
      $region45: #{general_conv3d_forward.2} parent=39 // pred_check
        %p11874 = pneg %p180
      $region46: #{general_conv3d_forward.2} parent=39 // pred_check_branch
        %11876 = sbr.rel (%p11874) target = $region48
      $region47: #{general_conv3d_forward.2} parent=39 // pred_region
        _
      $region48: #{general_conv3d_forward.2} parent=39 // pred_fallthru
        _
      // Predicated region
      $region49: #{general_conv3d_forward.2} parent=39 // pred_check
        %p11877 = pneg %p206
      $region50: #{general_conv3d_forward.2} parent=39 // pred_check_branch
        %11879 = sbr.rel (%p11877) target = $region52
      $region51: #{general_conv3d_forward.2} parent=39 // pred_region
        _
      $region52: #{general_conv3d_forward.2} parent=39 // pred_fallthru
        _
    $region40: #{general_conv3d_forward.2} parent=5 // pred_fallthru
      _
    %p11880 = scmp.le.s32.totalorder 2, %s13
    // Predicated region
    $region53: #{general_conv3d_forward.2} parent=5 // pred_check
      %p11881 = pneg %p11880
    $region54: #{general_conv3d_forward.2} parent=5 // pred_check_branch
      %11883 = sbr.rel (%p11881) target = $region56
    $region55: #{general_conv3d_forward.2} parent=5 // pred_region
      %s11884 = ssub.s32 %s13, 2
      // Predicated region
      $region57: #{general_conv3d_forward.2} parent=55 // pred_check
        %p11885 = pneg %p186
      $region58: #{general_conv3d_forward.2} parent=55 // pred_check_branch
        %11887 = sbr.rel (%p11885) target = $region60
      $region59: #{general_conv3d_forward.2} parent=55 // pred_region
        %p11888 = scmp.lt.s32.totalorder %s24, 1
        %s11889 = scalar_select %p11888, %s24, 1
        %p11890 = scmp.lt.s32.totalorder %s25, 15
        %s11891 = scalar_select %p11890, %s25, 15
        %s11892 = smul.addr %s11891, 36
        %s11893 = smul.addr %s11889, 576
        %s11894 = sadd.s32 %s11892, %s11893
        %s11895 = smul.addr %s11894, 4
        %s11896 = scalar_lea.vmem %s5, %s11895
      $region60: #{general_conv3d_forward.2} parent=55 // pred_fallthru
        _
      // Predicated region
      $region61: #{general_conv3d_forward.2} parent=55 // pred_check
        %p11897 = pneg %p212
      $region62: #{general_conv3d_forward.2} parent=55 // pred_check_branch
        %11899 = sbr.rel (%p11897) target = $region64
      $region63: #{general_conv3d_forward.2} parent=55 // pred_region
        %p11900 = scmp.lt.s32.totalorder %s24, 1
        %s11901 = scalar_select %p11900, %s24, 1
        %s11902 = smul.addr %s11901, 2
        %s11903 = scalar_lea.vmem %s6, %s11902
      $region64: #{general_conv3d_forward.2} parent=55 // pred_fallthru
        _
    $region56: #{general_conv3d_forward.2} parent=5 // pred_fallthru
      _
  $region6: #{general_conv3d_forward.2} parent=0 // loop_footer
    %s17 = sadd.s32 1, %s13
  $region7: #{general_conv3d_forward.2} parent=0 // loop_footer_branch
    %12 = sbr.rel target = $region3
  $region8: #{general_conv3d_forward.2} parent=0 // loop_exit
    _

</llo_original>
